<compile_context>
chip_gen: v7x
topology: tpu7x:2x2x1
jax: 0.10.0
libtpu: 0.0.40
codegen_flags: <defaults>
</compile_context>

<pallas_src>
import functools

import numpy as np
import jax
import jax.numpy as jnp
from jax import lax
from jax.experimental import pallas as pl
from jax.experimental.pallas import tpu as pltpu

# f32 keeps exact parity with the f32 PyTorch-equivalent reference below.
# Set to jnp.bfloat16 on v6e/v7x (and loosen the tolerance) for MXU throughput.
MXU_INPUT_DTYPE = jnp.float32


def _fused_cnn_kernel(*refs, cfgs):
    """Whole CnnBranch forward; batch folded into the lane (spatial) axis.

    refs layout:
      [a0,                      (C0p, N*Hp0*Wp0)  padded, flattened input
       w_0..w_{L-1},            (c_out, kh*kw*c_in) transposed im2col weights
       b_0..b_{L-1},            (c_out, 1) biases
       aux_0..aux_{L-1},        per-layer {0,1} mask or selection matrix
       o_ref,                   (c_f, N*hf*wf) output
       act_1..act_{L-1}]        padded flat activation scratch (VMEM)
    """
    L = len(cfgs)
    a0 = refs[0]
    w_refs = refs[1:1 + L]
    b_refs = refs[1 + L:1 + 2 * L]
    aux_refs = refs[1 + 2 * L:1 + 3 * L]
    o_ref = refs[1 + 3 * L]
    act_refs = refs[2 + 3 * L:]
    bufs = [a0] + list(act_refs)

    for li, cfg in enumerate(cfgs):
        a_in = bufs[li]
        c_in, wp, ls = cfg["c_in"], cfg["wp"], cfg["l_slice"]

        # ---- conv: kh*kw tap matmuls accumulated in registers (no im2col
        # buffer).  Each tap's RHS is a contiguous lane-dense window of the
        # flattened padded activation.
        acc = None
        for t in range(cfg["kh"] * cfg["kw"]):
            ky, kx = divmod(t, cfg["kw"])
            off = ky * wp + kx
            w_t = w_refs[li][:, t * c_in:(t + 1) * c_in].astype(MXU_INPUT_DTYPE)
            a_t = a_in[:, off:off + ls].astype(MXU_INPUT_DTYPE)
            p = jnp.dot(w_t, a_t, preferred_element_type=jnp.float32)
            acc = p if acc is None else acc + p
        acc = acc + b_refs[li][...]                      # bias (c_out,1) bcast

        if cfg["pool"]:
            # 2x2 / stride-2 max pool via overlapping lane slices (no reshape,
            # no relayout); pooled values end up at lanes n*HpWp + 2h'*wp + 2w'.
            wmax = jnp.maximum(acc[:, :-1], acc[:, 1:])
            hmax = jnp.maximum(wmax[:, :-wp], wmax[:, wp:])
            val = jnp.maximum(hmax, 0.0)                 # ReLU (after pool)
        else:
            val = acc

        if cfg["kind"] == "window":
            # 'same' conv with preserved padded width: store the whole result
            # as ONE lane-dense window into the next padded buffer; a {0,1}
            # mask zeroes columns that land on halo positions.  Only tiny
            # head/tail halo strips need an explicit zero store.
            shift, total = cfg["shift"], cfg["n_hpwp_next"]
            nxt = bufs[li + 1]
            nxt[:, shift:shift + ls] = val * aux_refs[li][...]
            if shift > 0:
                nxt[:, 0:shift] = jnp.zeros((val.shape[0], shift), jnp.float32)
            tail = total - (shift + ls)
            if tail > 0:
                nxt[:, shift + ls:] = jnp.zeros((val.shape[0], tail), jnp.float32)
        else:
            # Placement matmul: one MXU gemm against a {0,1} selection matrix
            # compacts the (pooled) values AND scatters them straight into the
            # padded flat layout of the next buffer (zero columns -> zero
            # halos for free), or into the final output layout.
            dest = o_ref if li == L - 1 else bufs[li + 1]
            res = jnp.dot(val, aux_refs[li][...],
                          preferred_element_type=jnp.float32)
            dest[...] = res.astype(dest.dtype)


def cnn_branch_forward(x_nchw, params, *, padding, depth):
    """PyTorch CnnBranch.forward (NCHW in / NCHW out), one fused pallas_call."""
    n, c_in0, h, w = x_nchw.shape
    names = ["in"] + [f"blk{i}" for i in range(depth)] + ["out"]
    pools = [False] + [True] * depth + [False]

    c0p = ((c_in0 + 7) // 8) * 8                       # channel-pad input to x8

    cfgs, w_flat, b_col, aux = [], [], [], []
    cur_h, cur_w = h, w
    for idx, (name, pool) in enumerate(zip(names, pools)):
        wgt, bias = params[name]                       # HWIO, (c_out,)
        kh, kw, ci, c_out = wgt.shape
        if idx == 0 and c0p != ci:
            wgt = jnp.pad(wgt, ((0, 0), (0, 0), (0, c0p - ci), (0, 0)))
            ci = c0p
        hp, wp = cur_h + 2 * padding, cur_w + 2 * padding
        hc, wc = hp - kh + 1, wp - kw + 1              # conv output spatial
        hpwp = hp * wp
        lq = (hc - 1) * wp + wc                        # per-sample window len
        ls = (n - 1) * hpwp + lq                       # batch-folded window len
        if pool:
            assert hc % 2 == 0 and wc % 2 == 0, "MaxPool2d(2) needs even dims"
            ho, wo = hc // 2, wc // 2
        else:
            ho, wo = hc, wc
        last = idx == len(names) - 1

        cfg = dict(c_in=ci, c_out=c_out, kh=kh, kw=kw, wp=wp,
                   l_slice=ls, pool=pool, kind="place")
        if not last:
            hp_n, wp_n = ho + 2 * padding, wo + 2 * padding
            hpwp_n = hp_n * wp_n
            cfg["n_hpwp_next"] = n * hpwp_n

        if last:
            # select valid conv outputs -> (sample, hf*wf) output layout
            s = np.zeros((ls, n * ho * wo), np.float32)
            for i in range(n):
                for hh in range(hc):
                    for ww in range(wc):
                        s[i * hpwp + hh * wp + ww,
                          i * ho * wo + hh * wo + ww] = 1.0
            aux.append(jnp.asarray(s))
        elif pool:
            rows = ls - wp - 1                          # length of hmax
            s = np.zeros((rows, n * hpwp_n), np.float32)
            for i in range(n):
                for hh in range(ho):
                    for ww in range(wo):
                        s[i * hpwp + 2 * hh * wp + 2 * ww,
                          i * hpwp_n + (hh + padding) * wp_n + (ww + padding)] = 1.0
            aux.append(jnp.asarray(s))
        elif wp_n == wp and hp_n == hp:
            # stride-preserving 'same' conv -> single masked window store
            cfg["kind"] = "window"
            cfg["shift"] = padding * wp_n + padding
            q = np.arange(ls)
            ql = q % hpwp
            valid = ((ql % wp) < wc) & ((ql // wp) < hc)
            aux.append(jnp.asarray(valid.astype(np.float32)[None, :]))
        else:
            # general fallback: place conv output into padded next buffer
            s = np.zeros((ls, n * hpwp_n), np.float32)
            for i in range(n):
                for hh in range(hc):
                    for ww in range(wc):
                        s[i * hpwp + hh * wp + ww,
                          i * hpwp_n + (hh + padding) * wp_n + (ww + padding)] = 1.0
            aux.append(jnp.asarray(s))

        # (c_out, K) transposed im2col weights, K index = (ky*kw+kx)*c_in + ci
        w_flat.append(jnp.transpose(wgt.reshape(kh * kw * ci, c_out)))
        b_col.append(bias.reshape(c_out, 1))
        cfgs.append(cfg)
        cur_h, cur_w = ho, wo

    hf, wf, cf = cur_h, cur_w, cfgs[-1]["c_out"]

    # Padded, channel-major, spatially-flattened network input (built in XLA,
    # so the kernel never touches fragmented 4-channel strips).
    xp = x_nchw
    if c0p != c_in0:
        xp = jnp.pad(xp, ((0, 0), (0, c0p - c_in0), (0, 0), (0, 0)))
    xp = jnp.pad(xp, ((0, 0), (0, 0), (padding, padding), (padding, padding)))
    a0 = jnp.transpose(xp, (1, 0, 2, 3)).reshape(
        c0p, n * (h + 2 * padding) * (w + 2 * padding))

    flat_in = [a0] + w_flat + b_col + aux
    in_specs = [pl.BlockSpec(v.shape, lambda i: (0, 0)) for v in flat_in]
    scratch = [pltpu.VMEM((cfgs[li]["c_out"], cfgs[li]["n_hpwp_next"]),
                          jnp.float32)
               for li in range(len(cfgs) - 1)]

    out = pl.pallas_call(
        functools.partial(_fused_cnn_kernel, cfgs=cfgs),
        out_shape=jax.ShapeDtypeStruct((cf, n * hf * wf), jnp.float32),
        grid=(1,),
        in_specs=in_specs,
        out_specs=pl.BlockSpec((cf, n * hf * wf), lambda i: (0, 0)),
        scratch_shapes=scratch,
        compiler_params=pltpu.CompilerParams(
            dimension_semantics=("arbitrary",)),
    )(*flat_in)

    out = out.reshape(cf, n, hf, wf)
    return jnp.transpose(out, (1, 0, 2, 3))            # NCHW


def init_params(key, in_chan, kernel_size, depth):
    """Deterministic synthetic params matching nn.Conv2d default init shapes."""
    def conv_init(k, cin, cout):
        kw1, kw2 = jax.random.split(k)
        bound = 1.0 / (cin * kernel_size * kernel_size) ** 0.5
        wgt = jax.random.uniform(kw1, (kernel_size, kernel_size, cin, cout),
                                 jnp.float32, -bound, bound)    # HWIO
        bb = jax.random.uniform(kw2, (cout,), jnp.float32, -bound, bound)
        return wgt, bb

    keys = jax.random.split(key, depth + 2)
    params = {"in": conv_init(keys[0], in_chan, 32)}
    for i in range(depth):
        params[f"blk{i}"] = conv_init(keys[1 + i], 32, 32)
    params["out"] = conv_init(keys[depth + 1], 32, 32)
    return params


def reference_forward(x_nchw, params, *, padding, depth):
    """Pure-JAX reference for correctness checking."""
    def conv(x, wgt, b):
        y = lax.conv_general_dilated(x, wgt, (1, 1), [(padding, padding)] * 2,
                                     dimension_numbers=("NHWC", "HWIO", "NHWC"))
        return y + b

    x = jnp.transpose(x_nchw, (0, 2, 3, 1))
    wgt, b = params["in"]
    x = conv(x, wgt, b)
    for i in range(depth):
        wgt, b = params[f"blk{i}"]
        x = conv(x, wgt, b)
        x = lax.reduce_window(x, -jnp.inf, lax.max,
                              (1, 2, 2, 1), (1, 2, 2, 1), "VALID")
        x = jnp.maximum(x, 0.0)
    wgt, b = params["out"]
    x = conv(x, wgt, b)
    return jnp.transpose(x, (0, 3, 1, 2))


if __name__ == "__main__":
    IN_CHAN, KSIZE, PAD, DEPTH = 4, 3, 1, 4
    N, H, W = 2, 16, 16                      # 16 -> (4 pool stages) -> 1 spatial

    key = jax.random.PRNGKey(0)
    kp, kx = jax.random.split(key)
    params = init_params(kp, IN_CHAN, KSIZE, DEPTH)
    x = jax.random.normal(kx, (N, IN_CHAN, H, W), jnp.float32)   # NCHW input

    fwd = jax.jit(functools.partial(cnn_branch_forward, padding=PAD, depth=DEPTH))
    out = jax.block_until_ready(fwd(x, params))

    ref = reference_forward(x, params, padding=PAD, depth=DEPTH)
    assert out.shape == (N, 32, 1, 1), out.shape
    err = float(jnp.max(jnp.abs(out - ref)))
    assert jnp.allclose(out, ref, atol=1e-4, rtol=1e-4), err
    print("KERNEL_OK")
</pallas_src>

<mosaic_0001>
module attributes {stable_mosaic.version = 11 : i64} {
  func.func @_fused_cnn_kernel(%arg0: i32, %arg1: memref<8x648xf32, #tpu.memory_space<vmem>>, %arg2: memref<32x72xf32, #tpu.memory_space<vmem>>, %arg3: memref<32x288xf32, #tpu.memory_space<vmem>>, %arg4: memref<32x288xf32, #tpu.memory_space<vmem>>, %arg5: memref<32x288xf32, #tpu.memory_space<vmem>>, %arg6: memref<32x288xf32, #tpu.memory_space<vmem>>, %arg7: memref<32x288xf32, #tpu.memory_space<vmem>>, %arg8: memref<32x1xf32, #tpu.memory_space<vmem>>, %arg9: memref<32x1xf32, #tpu.memory_space<vmem>>, %arg10: memref<32x1xf32, #tpu.memory_space<vmem>>, %arg11: memref<32x1xf32, #tpu.memory_space<vmem>>, %arg12: memref<32x1xf32, #tpu.memory_space<vmem>>, %arg13: memref<32x1xf32, #tpu.memory_space<vmem>>, %arg14: memref<1x610xf32, #tpu.memory_space<vmem>>, %arg15: memref<591x200xf32, #tpu.memory_space<vmem>>, %arg16: memref<167x72xf32, #tpu.memory_space<vmem>>, %arg17: memref<51x32xf32, #tpu.memory_space<vmem>>, %arg18: memref<17x18xf32, #tpu.memory_space<vmem>>, %arg19: memref<10x2xf32, #tpu.memory_space<vmem>>, %arg20: memref<32x2xf32, #tpu.memory_space<vmem>>, %arg21: memref<32x648xf32, #tpu.memory_space<vmem>>, %arg22: memref<32x200xf32, #tpu.memory_space<vmem>>, %arg23: memref<32x72xf32, #tpu.memory_space<vmem>>, %arg24: memref<32x32xf32, #tpu.memory_space<vmem>>, %arg25: memref<32x18xf32, #tpu.memory_space<vmem>>) attributes {dimension_semantics = [#tpu.dimension_semantics<arbitrary>], iteration_bounds = array<i64: 1>, scalar_prefetch = 0 : i64, scratch_operands = 5 : i64, tpu.core_type = #tpu.core_type<tc>, window_params = [{pipeline_mode = #tpu.pipeline_mode<synchronous>, transform_indices = @transform_0, window_bounds = array<i64: 8, 648>}, {pipeline_mode = #tpu.pipeline_mode<synchronous>, transform_indices = @transform_1, window_bounds = array<i64: 32, 72>}, {pipeline_mode = #tpu.pipeline_mode<synchronous>, transform_indices = @transform_2, window_bounds = array<i64: 32, 288>}, {pipeline_mode = #tpu.pipeline_mode<synchronous>, transform_indices = @transform_3, window_bounds = array<i64: 32, 288>}, {pipeline_mode = #tpu.pipeline_mode<synchronous>, transform_indices = @transform_4, window_bounds = array<i64: 32, 288>}, {pipeline_mode = #tpu.pipeline_mode<synchronous>, transform_indices = @transform_5, window_bounds = array<i64: 32, 288>}, {pipeline_mode = #tpu.pipeline_mode<synchronous>, transform_indices = @transform_6, window_bounds = array<i64: 32, 288>}, {pipeline_mode = #tpu.pipeline_mode<synchronous>, transform_indices = @transform_7, window_bounds = array<i64: 32, 1>}, {pipeline_mode = #tpu.pipeline_mode<synchronous>, transform_indices = @transform_8, window_bounds = array<i64: 32, 1>}, {pipeline_mode = #tpu.pipeline_mode<synchronous>, transform_indices = @transform_9, window_bounds = array<i64: 32, 1>}, {pipeline_mode = #tpu.pipeline_mode<synchronous>, transform_indices = @transform_10, window_bounds = array<i64: 32, 1>}, {pipeline_mode = #tpu.pipeline_mode<synchronous>, transform_indices = @transform_11, window_bounds = array<i64: 32, 1>}, {pipeline_mode = #tpu.pipeline_mode<synchronous>, transform_indices = @transform_12, window_bounds = array<i64: 32, 1>}, {pipeline_mode = #tpu.pipeline_mode<synchronous>, transform_indices = @transform_13, window_bounds = array<i64: 1, 610>}, {pipeline_mode = #tpu.pipeline_mode<synchronous>, transform_indices = @transform_14, window_bounds = array<i64: 591, 200>}, {pipeline_mode = #tpu.pipeline_mode<synchronous>, transform_indices = @transform_15, window_bounds = array<i64: 167, 72>}, {pipeline_mode = #tpu.pipeline_mode<synchronous>, transform_indices = @transform_16, window_bounds = array<i64: 51, 32>}, {pipeline_mode = #tpu.pipeline_mode<synchronous>, transform_indices = @transform_17, window_bounds = array<i64: 17, 18>}, {pipeline_mode = #tpu.pipeline_mode<synchronous>, transform_indices = @transform_18, window_bounds = array<i64: 10, 2>}, {pipeline_mode = #tpu.pipeline_mode<synchronous>, transform_indices = @transform_19, window_bounds = array<i64: 32, 2>}]} {
    %c0 = arith.constant 0 : index
    %c0_0 = arith.constant 0 : index
    %0 = vector.load %arg2[%c0, %c0_0] : memref<32x72xf32, #tpu.memory_space<vmem>>, vector<32x8xf32>
    %c0_1 = arith.constant 0 : index
    %c0_2 = arith.constant 0 : index
    %1 = vector.load %arg1[%c0_1, %c0_2] : memref<8x648xf32, #tpu.memory_space<vmem>>, vector<8x610xf32>
    %cst = arith.constant dense<0.000000e+00> : vector<32x610xf32>
    %2 = tpu.matmul %0, %1, %cst {dimension_numbers = #tpu.dot_dimension_numbers<[1], [0], [0], [1], [0, 0, 1, 1], [], []>} : vector<32x8xf32>, vector<8x610xf32>, vector<32x610xf32> -> vector<32x610xf32>
    %c0_3 = arith.constant 0 : index
    %c8 = arith.constant 8 : index
    %3 = vector.load %arg2[%c0_3, %c8] : memref<32x72xf32, #tpu.memory_space<vmem>>, vector<32x8xf32>
    %c0_4 = arith.constant 0 : index
    %c1 = arith.constant 1 : index
    %4 = vector.load %arg1[%c0_4, %c1] : memref<8x648xf32, #tpu.memory_space<vmem>>, vector<8x610xf32>
    %cst_5 = arith.constant dense<0.000000e+00> : vector<32x610xf32>
    %5 = tpu.matmul %3, %4, %cst_5 {dimension_numbers = #tpu.dot_dimension_numbers<[1], [0], [0], [1], [0, 0, 1, 1], [], []>} : vector<32x8xf32>, vector<8x610xf32>, vector<32x610xf32> -> vector<32x610xf32>
    %6 = arith.addf %2, %5 : vector<32x610xf32>
    %c0_6 = arith.constant 0 : index
    %c16 = arith.constant 16 : index
    %7 = vector.load %arg2[%c0_6, %c16] : memref<32x72xf32, #tpu.memory_space<vmem>>, vector<32x8xf32>
    %c0_7 = arith.constant 0 : index
    %c2 = arith.constant 2 : index
    %8 = vector.load %arg1[%c0_7, %c2] : memref<8x648xf32, #tpu.memory_space<vmem>>, vector<8x610xf32>
    %cst_8 = arith.constant dense<0.000000e+00> : vector<32x610xf32>
    %9 = tpu.matmul %7, %8, %cst_8 {dimension_numbers = #tpu.dot_dimension_numbers<[1], [0], [0], [1], [0, 0, 1, 1], [], []>} : vector<32x8xf32>, vector<8x610xf32>, vector<32x610xf32> -> vector<32x610xf32>
    %10 = arith.addf %6, %9 : vector<32x610xf32>
    %c0_9 = arith.constant 0 : index
    %c24 = arith.constant 24 : index
    %11 = vector.load %arg2[%c0_9, %c24] : memref<32x72xf32, #tpu.memory_space<vmem>>, vector<32x8xf32>
    %c0_10 = arith.constant 0 : index
    %c18 = arith.constant 18 : index
    %12 = vector.load %arg1[%c0_10, %c18] : memref<8x648xf32, #tpu.memory_space<vmem>>, vector<8x610xf32>
    %cst_11 = arith.constant dense<0.000000e+00> : vector<32x610xf32>
    %13 = tpu.matmul %11, %12, %cst_11 {dimension_numbers = #tpu.dot_dimension_numbers<[1], [0], [0], [1], [0, 0, 1, 1], [], []>} : vector<32x8xf32>, vector<8x610xf32>, vector<32x610xf32> -> vector<32x610xf32>
    %14 = arith.addf %10, %13 : vector<32x610xf32>
    %c0_12 = arith.constant 0 : index
    %c32 = arith.constant 32 : index
    %15 = vector.load %arg2[%c0_12, %c32] : memref<32x72xf32, #tpu.memory_space<vmem>>, vector<32x8xf32>
    %c0_13 = arith.constant 0 : index
    %c19 = arith.constant 19 : index
    %16 = vector.load %arg1[%c0_13, %c19] : memref<8x648xf32, #tpu.memory_space<vmem>>, vector<8x610xf32>
    %cst_14 = arith.constant dense<0.000000e+00> : vector<32x610xf32>
    %17 = tpu.matmul %15, %16, %cst_14 {dimension_numbers = #tpu.dot_dimension_numbers<[1], [0], [0], [1], [0, 0, 1, 1], [], []>} : vector<32x8xf32>, vector<8x610xf32>, vector<32x610xf32> -> vector<32x610xf32>
    %18 = arith.addf %14, %17 : vector<32x610xf32>
    %c0_15 = arith.constant 0 : index
    %c40 = arith.constant 40 : index
    %19 = vector.load %arg2[%c0_15, %c40] : memref<32x72xf32, #tpu.memory_space<vmem>>, vector<32x8xf32>
    %c0_16 = arith.constant 0 : index
    %c20 = arith.constant 20 : index
    %20 = vector.load %arg1[%c0_16, %c20] : memref<8x648xf32, #tpu.memory_space<vmem>>, vector<8x610xf32>
    %cst_17 = arith.constant dense<0.000000e+00> : vector<32x610xf32>
    %21 = tpu.matmul %19, %20, %cst_17 {dimension_numbers = #tpu.dot_dimension_numbers<[1], [0], [0], [1], [0, 0, 1, 1], [], []>} : vector<32x8xf32>, vector<8x610xf32>, vector<32x610xf32> -> vector<32x610xf32>
    %22 = arith.addf %18, %21 : vector<32x610xf32>
    %c0_18 = arith.constant 0 : index
    %c48 = arith.constant 48 : index
    %23 = vector.load %arg2[%c0_18, %c48] : memref<32x72xf32, #tpu.memory_space<vmem>>, vector<32x8xf32>
    %c0_19 = arith.constant 0 : index
    %c36 = arith.constant 36 : index
    %24 = vector.load %arg1[%c0_19, %c36] : memref<8x648xf32, #tpu.memory_space<vmem>>, vector<8x610xf32>
    %cst_20 = arith.constant dense<0.000000e+00> : vector<32x610xf32>
    %25 = tpu.matmul %23, %24, %cst_20 {dimension_numbers = #tpu.dot_dimension_numbers<[1], [0], [0], [1], [0, 0, 1, 1], [], []>} : vector<32x8xf32>, vector<8x610xf32>, vector<32x610xf32> -> vector<32x610xf32>
    %26 = arith.addf %22, %25 : vector<32x610xf32>
    %c0_21 = arith.constant 0 : index
    %c56 = arith.constant 56 : index
    %27 = vector.load %arg2[%c0_21, %c56] : memref<32x72xf32, #tpu.memory_space<vmem>>, vector<32x8xf32>
    %c0_22 = arith.constant 0 : index
    %c37 = arith.constant 37 : index
    %28 = vector.load %arg1[%c0_22, %c37] : memref<8x648xf32, #tpu.memory_space<vmem>>, vector<8x610xf32>
    %cst_23 = arith.constant dense<0.000000e+00> : vector<32x610xf32>
    %29 = tpu.matmul %27, %28, %cst_23 {dimension_numbers = #tpu.dot_dimension_numbers<[1], [0], [0], [1], [0, 0, 1, 1], [], []>} : vector<32x8xf32>, vector<8x610xf32>, vector<32x610xf32> -> vector<32x610xf32>
    %30 = arith.addf %26, %29 : vector<32x610xf32>
    %c0_24 = arith.constant 0 : index
    %c64 = arith.constant 64 : index
    %31 = vector.load %arg2[%c0_24, %c64] : memref<32x72xf32, #tpu.memory_space<vmem>>, vector<32x8xf32>
    %c0_25 = arith.constant 0 : index
    %c38 = arith.constant 38 : index
    %32 = vector.load %arg1[%c0_25, %c38] : memref<8x648xf32, #tpu.memory_space<vmem>>, vector<8x610xf32>
    %cst_26 = arith.constant dense<0.000000e+00> : vector<32x610xf32>
    %33 = tpu.matmul %31, %32, %cst_26 {dimension_numbers = #tpu.dot_dimension_numbers<[1], [0], [0], [1], [0, 0, 1, 1], [], []>} : vector<32x8xf32>, vector<8x610xf32>, vector<32x610xf32> -> vector<32x610xf32>
    %34 = arith.addf %30, %33 : vector<32x610xf32>
    %c0_27 = arith.constant 0 : index
    %c0_28 = arith.constant 0 : index
    %35 = vector.load %arg8[%c0_27, %c0_28] : memref<32x1xf32, #tpu.memory_space<vmem>>, vector<32x1xf32>
    %36 = vector.broadcast %35 : vector<32x1xf32> to vector<32x610xf32>
    %37 = arith.addf %34, %36 : vector<32x610xf32>
    %c0_29 = arith.constant 0 : index
    %c0_30 = arith.constant 0 : index
    %38 = vector.load %arg14[%c0_29, %c0_30] : memref<1x610xf32, #tpu.memory_space<vmem>>, vector<1x610xf32>
    %39 = vector.broadcast %38 : vector<1x610xf32> to vector<32x610xf32>
    %40 = arith.mulf %37, %39 : vector<32x610xf32>
    %c0_31 = arith.constant 0 : index
    %c19_32 = arith.constant 19 : index
    %41 = vector.load %arg21[%c0_31, %c19_32] : memref<32x648xf32, #tpu.memory_space<vmem>>, vector<32x610xf32>
    tpu.vector_store %arg21[%c0_31, %c19_32], %40 {strides = array<i32>} : memref<32x648xf32, #tpu.memory_space<vmem>>, vector<32x610xf32>,
    %cst_33 = arith.constant 0.000000e+00 : f32
    %42 = vector.broadcast %cst_33 : f32 to vector<32x19xf32>
    %c0_34 = arith.constant 0 : index
    %c0_35 = arith.constant 0 : index
    %43 = vector.load %arg21[%c0_34, %c0_35] : memref<32x648xf32, #tpu.memory_space<vmem>>, vector<32x19xf32>
    tpu.vector_store %arg21[%c0_34, %c0_35], %42 {strides = array<i32>} : memref<32x648xf32, #tpu.memory_space<vmem>>, vector<32x19xf32>,
    %cst_36 = arith.constant 0.000000e+00 : f32
    %44 = vector.broadcast %cst_36 : f32 to vector<32x19xf32>
    %c0_37 = arith.constant 0 : index
    %c629 = arith.constant 629 : index
    %45 = vector.load %arg21[%c0_37, %c629] : memref<32x648xf32, #tpu.memory_space<vmem>>, vector<32x19xf32>
    tpu.vector_store %arg21[%c0_37, %c629], %44 {strides = array<i32>} : memref<32x648xf32, #tpu.memory_space<vmem>>, vector<32x19xf32>,
    %c0_38 = arith.constant 0 : index
    %c0_39 = arith.constant 0 : index
    %46 = vector.load %arg3[%c0_38, %c0_39] : memref<32x288xf32, #tpu.memory_space<vmem>>, vector<32x32xf32>
    %c0_40 = arith.constant 0 : index
    %c0_41 = arith.constant 0 : index
    %47 = vector.load %arg21[%c0_40, %c0_41] : memref<32x648xf32, #tpu.memory_space<vmem>>, vector<32x610xf32>
    %cst_42 = arith.constant dense<0.000000e+00> : vector<32x610xf32>
    %48 = tpu.matmul %46, %47, %cst_42 {dimension_numbers = #tpu.dot_dimension_numbers<[1], [0], [0], [1], [0, 0, 1, 1], [], []>} : vector<32x32xf32>, vector<32x610xf32>, vector<32x610xf32> -> vector<32x610xf32>
    %c0_43 = arith.constant 0 : index
    %c32_44 = arith.constant 32 : index
    %49 = vector.load %arg3[%c0_43, %c32_44] : memref<32x288xf32, #tpu.memory_space<vmem>>, vector<32x32xf32>
    %c0_45 = arith.constant 0 : index
    %c1_46 = arith.constant 1 : index
    %50 = vector.load %arg21[%c0_45, %c1_46] : memref<32x648xf32, #tpu.memory_space<vmem>>, vector<32x610xf32>
    %cst_47 = arith.constant dense<0.000000e+00> : vector<32x610xf32>
    %51 = tpu.matmul %49, %50, %cst_47 {dimension_numbers = #tpu.dot_dimension_numbers<[1], [0], [0], [1], [0, 0, 1, 1], [], []>} : vector<32x32xf32>, vector<32x610xf32>, vector<32x610xf32> -> vector<32x610xf32>
    %52 = arith.addf %48, %51 : vector<32x610xf32>
    %c0_48 = arith.constant 0 : index
    %c64_49 = arith.constant 64 : index
    %53 = vector.load %arg3[%c0_48, %c64_49] : memref<32x288xf32, #tpu.memory_space<vmem>>, vector<32x32xf32>
    %c0_50 = arith.constant 0 : index
    %c2_51 = arith.constant 2 : index
    %54 = vector.load %arg21[%c0_50, %c2_51] : memref<32x648xf32, #tpu.memory_space<vmem>>, vector<32x610xf32>
    %cst_52 = arith.constant dense<0.000000e+00> : vector<32x610xf32>
    %55 = tpu.matmul %53, %54, %cst_52 {dimension_numbers = #tpu.dot_dimension_numbers<[1], [0], [0], [1], [0, 0, 1, 1], [], []>} : vector<32x32xf32>, vector<32x610xf32>, vector<32x610xf32> -> vector<32x610xf32>
    %56 = arith.addf %52, %55 : vector<32x610xf32>
    %c0_53 = arith.constant 0 : index
    %c96 = arith.constant 96 : index
    %57 = vector.load %arg3[%c0_53, %c96] : memref<32x288xf32, #tpu.memory_space<vmem>>, vector<32x32xf32>
    %c0_54 = arith.constant 0 : index
    %c18_55 = arith.constant 18 : index
    %58 = vector.load %arg21[%c0_54, %c18_55] : memref<32x648xf32, #tpu.memory_space<vmem>>, vector<32x610xf32>
    %cst_56 = arith.constant dense<0.000000e+00> : vector<32x610xf32>
    %59 = tpu.matmul %57, %58, %cst_56 {dimension_numbers = #tpu.dot_dimension_numbers<[1], [0], [0], [1], [0, 0, 1, 1], [], []>} : vector<32x32xf32>, vector<32x610xf32>, vector<32x610xf32> -> vector<32x610xf32>
    %60 = arith.addf %56, %59 : vector<32x610xf32>
    %c0_57 = arith.constant 0 : index
    %c128 = arith.constant 128 : index
    %61 = vector.load %arg3[%c0_57, %c128] : memref<32x288xf32, #tpu.memory_space<vmem>>, vector<32x32xf32>
    %c0_58 = arith.constant 0 : index
    %c19_59 = arith.constant 19 : index
    %62 = vector.load %arg21[%c0_58, %c19_59] : memref<32x648xf32, #tpu.memory_space<vmem>>, vector<32x610xf32>
    %cst_60 = arith.constant dense<0.000000e+00> : vector<32x610xf32>
    %63 = tpu.matmul %61, %62, %cst_60 {dimension_numbers = #tpu.dot_dimension_numbers<[1], [0], [0], [1], [0, 0, 1, 1], [], []>} : vector<32x32xf32>, vector<32x610xf32>, vector<32x610xf32> -> vector<32x610xf32>
    %64 = arith.addf %60, %63 : vector<32x610xf32>
    %c0_61 = arith.constant 0 : index
    %c160 = arith.constant 160 : index
    %65 = vector.load %arg3[%c0_61, %c160] : memref<32x288xf32, #tpu.memory_space<vmem>>, vector<32x32xf32>
    %c0_62 = arith.constant 0 : index
    %c20_63 = arith.constant 20 : index
    %66 = vector.load %arg21[%c0_62, %c20_63] : memref<32x648xf32, #tpu.memory_space<vmem>>, vector<32x610xf32>
    %cst_64 = arith.constant dense<0.000000e+00> : vector<32x610xf32>
    %67 = tpu.matmul %65, %66, %cst_64 {dimension_numbers = #tpu.dot_dimension_numbers<[1], [0], [0], [1], [0, 0, 1, 1], [], []>} : vector<32x32xf32>, vector<32x610xf32>, vector<32x610xf32> -> vector<32x610xf32>
    %68 = arith.addf %64, %67 : vector<32x610xf32>
    %c0_65 = arith.constant 0 : index
    %c192 = arith.constant 192 : index
    %69 = vector.load %arg3[%c0_65, %c192] : memref<32x288xf32, #tpu.memory_space<vmem>>, vector<32x32xf32>
    %c0_66 = arith.constant 0 : index
    %c36_67 = arith.constant 36 : index
    %70 = vector.load %arg21[%c0_66, %c36_67] : memref<32x648xf32, #tpu.memory_space<vmem>>, vector<32x610xf32>
    %cst_68 = arith.constant dense<0.000000e+00> : vector<32x610xf32>
    %71 = tpu.matmul %69, %70, %cst_68 {dimension_numbers = #tpu.dot_dimension_numbers<[1], [0], [0], [1], [0, 0, 1, 1], [], []>} : vector<32x32xf32>, vector<32x610xf32>, vector<32x610xf32> -> vector<32x610xf32>
    %72 = arith.addf %68, %71 : vector<32x610xf32>
    %c0_69 = arith.constant 0 : index
    %c224 = arith.constant 224 : index
    %73 = vector.load %arg3[%c0_69, %c224] : memref<32x288xf32, #tpu.memory_space<vmem>>, vector<32x32xf32>
    %c0_70 = arith.constant 0 : index
    %c37_71 = arith.constant 37 : index
    %74 = vector.load %arg21[%c0_70, %c37_71] : memref<32x648xf32, #tpu.memory_space<vmem>>, vector<32x610xf32>
    %cst_72 = arith.constant dense<0.000000e+00> : vector<32x610xf32>
    %75 = tpu.matmul %73, %74, %cst_72 {dimension_numbers = #tpu.dot_dimension_numbers<[1], [0], [0], [1], [0, 0, 1, 1], [], []>} : vector<32x32xf32>, vector<32x610xf32>, vector<32x610xf32> -> vector<32x610xf32>
    %76 = arith.addf %72, %75 : vector<32x610xf32>
    %c0_73 = arith.constant 0 : index
    %c256 = arith.constant 256 : index
    %77 = vector.load %arg3[%c0_73, %c256] : memref<32x288xf32, #tpu.memory_space<vmem>>, vector<32x32xf32>
    %c0_74 = arith.constant 0 : index
    %c38_75 = arith.constant 38 : index
    %78 = vector.load %arg21[%c0_74, %c38_75] : memref<32x648xf32, #tpu.memory_space<vmem>>, vector<32x610xf32>
    %cst_76 = arith.constant dense<0.000000e+00> : vector<32x610xf32>
    %79 = tpu.matmul %77, %78, %cst_76 {dimension_numbers = #tpu.dot_dimension_numbers<[1], [0], [0], [1], [0, 0, 1, 1], [], []>} : vector<32x32xf32>, vector<32x610xf32>, vector<32x610xf32> -> vector<32x610xf32>
    %80 = arith.addf %76, %79 : vector<32x610xf32>
    %c0_77 = arith.constant 0 : index
    %c0_78 = arith.constant 0 : index
    %81 = vector.load %arg9[%c0_77, %c0_78] : memref<32x1xf32, #tpu.memory_space<vmem>>, vector<32x1xf32>
    %82 = vector.broadcast %81 : vector<32x1xf32> to vector<32x610xf32>
    %83 = arith.addf %80, %82 : vector<32x610xf32>
    %84 = vector.extract_strided_slice %83 {offsets = [0, 0], sizes = [32, 609], strides = [1, 1]} : vector<32x610xf32> to vector<32x609xf32>
    %85 = vector.extract_strided_slice %83 {offsets = [0, 1], sizes = [32, 609], strides = [1, 1]} : vector<32x610xf32> to vector<32x609xf32>
    %86 = arith.maximumf %84, %85 : vector<32x609xf32>
    %87 = vector.extract_strided_slice %86 {offsets = [0, 0], sizes = [32, 591], strides = [1, 1]} : vector<32x609xf32> to vector<32x591xf32>
    %88 = vector.extract_strided_slice %86 {offsets = [0, 18], sizes = [32, 591], strides = [1, 1]} : vector<32x609xf32> to vector<32x591xf32>
    %89 = arith.maximumf %87, %88 : vector<32x591xf32>
    %cst_79 = arith.constant 0.000000e+00 : f32
    %90 = vector.broadcast %cst_79 : f32 to vector<32x591xf32>
    %91 = arith.maximumf %89, %90 : vector<32x591xf32>
    %c0_80 = arith.constant 0 : index
    %c0_81 = arith.constant 0 : index
    %92 = vector.load %arg15[%c0_80, %c0_81] : memref<591x200xf32, #tpu.memory_space<vmem>>, vector<591x200xf32>
    %cst_82 = arith.constant dense<0.000000e+00> : vector<32x200xf32>
    %93 = tpu.matmul %91, %92, %cst_82 {dimension_numbers = #tpu.dot_dimension_numbers<[1], [0], [0], [1], [0, 0, 1, 1], [], []>} : vector<32x591xf32>, vector<591x200xf32>, vector<32x200xf32> -> vector<32x200xf32>
    %c0_83 = arith.constant 0 : index
    %c0_84 = arith.constant 0 : index
    %94 = vector.load %arg22[%c0_83, %c0_84] : memref<32x200xf32, #tpu.memory_space<vmem>>, vector<32x200xf32>
    tpu.vector_store %arg22[%c0_83, %c0_84], %93 {strides = array<i32>} : memref<32x200xf32, #tpu.memory_space<vmem>>, vector<32x200xf32>,
    %c0_85 = arith.constant 0 : index
    %c0_86 = arith.constant 0 : index
    %95 = vector.load %arg4[%c0_85, %c0_86] : memref<32x288xf32, #tpu.memory_space<vmem>>, vector<32x32xf32>
    %c0_87 = arith.constant 0 : index
    %c0_88 = arith.constant 0 : index
    %96 = vector.load %arg22[%c0_87, %c0_88] : memref<32x200xf32, #tpu.memory_space<vmem>>, vector<32x178xf32>
    %cst_89 = arith.constant dense<0.000000e+00> : vector<32x178xf32>
    %97 = tpu.matmul %95, %96, %cst_89 {dimension_numbers = #tpu.dot_dimension_numbers<[1], [0], [0], [1], [0, 0, 1, 1], [], []>} : vector<32x32xf32>, vector<32x178xf32>, vector<32x178xf32> -> vector<32x178xf32>
    %c0_90 = arith.constant 0 : index
    %c32_91 = arith.constant 32 : index
    %98 = vector.load %arg4[%c0_90, %c32_91] : memref<32x288xf32, #tpu.memory_space<vmem>>, vector<32x32xf32>
    %c0_92 = arith.constant 0 : index
    %c1_93 = arith.constant 1 : index
    %99 = vector.load %arg22[%c0_92, %c1_93] : memref<32x200xf32, #tpu.memory_space<vmem>>, vector<32x178xf32>
    %cst_94 = arith.constant dense<0.000000e+00> : vector<32x178xf32>
    %100 = tpu.matmul %98, %99, %cst_94 {dimension_numbers = #tpu.dot_dimension_numbers<[1], [0], [0], [1], [0, 0, 1, 1], [], []>} : vector<32x32xf32>, vector<32x178xf32>, vector<32x178xf32> -> vector<32x178xf32>
    %101 = arith.addf %97, %100 : vector<32x178xf32>
    %c0_95 = arith.constant 0 : index
    %c64_96 = arith.constant 64 : index
    %102 = vector.load %arg4[%c0_95, %c64_96] : memref<32x288xf32, #tpu.memory_space<vmem>>, vector<32x32xf32>
    %c0_97 = arith.constant 0 : index
    %c2_98 = arith.constant 2 : index
    %103 = vector.load %arg22[%c0_97, %c2_98] : memref<32x200xf32, #tpu.memory_space<vmem>>, vector<32x178xf32>
    %cst_99 = arith.constant dense<0.000000e+00> : vector<32x178xf32>
    %104 = tpu.matmul %102, %103, %cst_99 {dimension_numbers = #tpu.dot_dimension_numbers<[1], [0], [0], [1], [0, 0, 1, 1], [], []>} : vector<32x32xf32>, vector<32x178xf32>, vector<32x178xf32> -> vector<32x178xf32>
    %105 = arith.addf %101, %104 : vector<32x178xf32>
    %c0_100 = arith.constant 0 : index
    %c96_101 = arith.constant 96 : index
    %106 = vector.load %arg4[%c0_100, %c96_101] : memref<32x288xf32, #tpu.memory_space<vmem>>, vector<32x32xf32>
    %c0_102 = arith.constant 0 : index
    %c10 = arith.constant 10 : index
    %107 = vector.load %arg22[%c0_102, %c10] : memref<32x200xf32, #tpu.memory_space<vmem>>, vector<32x178xf32>
    %cst_103 = arith.constant dense<0.000000e+00> : vector<32x178xf32>
    %108 = tpu.matmul %106, %107, %cst_103 {dimension_numbers = #tpu.dot_dimension_numbers<[1], [0], [0], [1], [0, 0, 1, 1], [], []>} : vector<32x32xf32>, vector<32x178xf32>, vector<32x178xf32> -> vector<32x178xf32>
    %109 = arith.addf %105, %108 : vector<32x178xf32>
    %c0_104 = arith.constant 0 : index
    %c128_105 = arith.constant 128 : index
    %110 = vector.load %arg4[%c0_104, %c128_105] : memref<32x288xf32, #tpu.memory_space<vmem>>, vector<32x32xf32>
    %c0_106 = arith.constant 0 : index
    %c11 = arith.constant 11 : index
    %111 = vector.load %arg22[%c0_106, %c11] : memref<32x200xf32, #tpu.memory_space<vmem>>, vector<32x178xf32>
    %cst_107 = arith.constant dense<0.000000e+00> : vector<32x178xf32>
    %112 = tpu.matmul %110, %111, %cst_107 {dimension_numbers = #tpu.dot_dimension_numbers<[1], [0], [0], [1], [0, 0, 1, 1], [], []>} : vector<32x32xf32>, vector<32x178xf32>, vector<32x178xf32> -> vector<32x178xf32>
    %113 = arith.addf %109, %112 : vector<32x178xf32>
    %c0_108 = arith.constant 0 : index
    %c160_109 = arith.constant 160 : index
    %114 = vector.load %arg4[%c0_108, %c160_109] : memref<32x288xf32, #tpu.memory_space<vmem>>, vector<32x32xf32>
    %c0_110 = arith.constant 0 : index
    %c12 = arith.constant 12 : index
    %115 = vector.load %arg22[%c0_110, %c12] : memref<32x200xf32, #tpu.memory_space<vmem>>, vector<32x178xf32>
    %cst_111 = arith.constant dense<0.000000e+00> : vector<32x178xf32>
    %116 = tpu.matmul %114, %115, %cst_111 {dimension_numbers = #tpu.dot_dimension_numbers<[1], [0], [0], [1], [0, 0, 1, 1], [], []>} : vector<32x32xf32>, vector<32x178xf32>, vector<32x178xf32> -> vector<32x178xf32>
    %117 = arith.addf %113, %116 : vector<32x178xf32>
    %c0_112 = arith.constant 0 : index
    %c192_113 = arith.constant 192 : index
    %118 = vector.load %arg4[%c0_112, %c192_113] : memref<32x288xf32, #tpu.memory_space<vmem>>, vector<32x32xf32>
    %c0_114 = arith.constant 0 : index
    %c20_115 = arith.constant 20 : index
    %119 = vector.load %arg22[%c0_114, %c20_115] : memref<32x200xf32, #tpu.memory_space<vmem>>, vector<32x178xf32>
    %cst_116 = arith.constant dense<0.000000e+00> : vector<32x178xf32>
    %120 = tpu.matmul %118, %119, %cst_116 {dimension_numbers = #tpu.dot_dimension_numbers<[1], [0], [0], [1], [0, 0, 1, 1], [], []>} : vector<32x32xf32>, vector<32x178xf32>, vector<32x178xf32> -> vector<32x178xf32>
    %121 = arith.addf %117, %120 : vector<32x178xf32>
    %c0_117 = arith.constant 0 : index
    %c224_118 = arith.constant 224 : index
    %122 = vector.load %arg4[%c0_117, %c224_118] : memref<32x288xf32, #tpu.memory_space<vmem>>, vector<32x32xf32>
    %c0_119 = arith.constant 0 : index
    %c21 = arith.constant 21 : index
    %123 = vector.load %arg22[%c0_119, %c21] : memref<32x200xf32, #tpu.memory_space<vmem>>, vector<32x178xf32>
    %cst_120 = arith.constant dense<0.000000e+00> : vector<32x178xf32>
    %124 = tpu.matmul %122, %123, %cst_120 {dimension_numbers = #tpu.dot_dimension_numbers<[1], [0], [0], [1], [0, 0, 1, 1], [], []>} : vector<32x32xf32>, vector<32x178xf32>, vector<32x178xf32> -> vector<32x178xf32>
    %125 = arith.addf %121, %124 : vector<32x178xf32>
    %c0_121 = arith.constant 0 : index
    %c256_122 = arith.constant 256 : index
    %126 = vector.load %arg4[%c0_121, %c256_122] : memref<32x288xf32, #tpu.memory_space<vmem>>, vector<32x32xf32>
    %c0_123 = arith.constant 0 : index
    %c22 = arith.constant 22 : index
    %127 = vector.load %arg22[%c0_123, %c22] : memref<32x200xf32, #tpu.memory_space<vmem>>, vector<32x178xf32>
    %cst_124 = arith.constant dense<0.000000e+00> : vector<32x178xf32>
    %128 = tpu.matmul %126, %127, %cst_124 {dimension_numbers = #tpu.dot_dimension_numbers<[1], [0], [0], [1], [0, 0, 1, 1], [], []>} : vector<32x32xf32>, vector<32x178xf32>, vector<32x178xf32> -> vector<32x178xf32>
    %129 = arith.addf %125, %128 : vector<32x178xf32>
    %c0_125 = arith.constant 0 : index
    %c0_126 = arith.constant 0 : index
    %130 = vector.load %arg10[%c0_125, %c0_126] : memref<32x1xf32, #tpu.memory_space<vmem>>, vector<32x1xf32>
    %131 = vector.broadcast %130 : vector<32x1xf32> to vector<32x178xf32>
    %132 = arith.addf %129, %131 : vector<32x178xf32>
    %133 = vector.extract_strided_slice %132 {offsets = [0, 0], sizes = [32, 177], strides = [1, 1]} : vector<32x178xf32> to vector<32x177xf32>
    %134 = vector.extract_strided_slice %132 {offsets = [0, 1], sizes = [32, 177], strides = [1, 1]} : vector<32x178xf32> to vector<32x177xf32>
    %135 = arith.maximumf %133, %134 : vector<32x177xf32>
    %136 = vector.extract_strided_slice %135 {offsets = [0, 0], sizes = [32, 167], strides = [1, 1]} : vector<32x177xf32> to vector<32x167xf32>
    %137 = vector.extract_strided_slice %135 {offsets = [0, 10], sizes = [32, 167], strides = [1, 1]} : vector<32x177xf32> to vector<32x167xf32>
    %138 = arith.maximumf %136, %137 : vector<32x167xf32>
    %cst_127 = arith.constant 0.000000e+00 : f32
    %139 = vector.broadcast %cst_127 : f32 to vector<32x167xf32>
    %140 = arith.maximumf %138, %139 : vector<32x167xf32>
    %c0_128 = arith.constant 0 : index
    %c0_129 = arith.constant 0 : index
    %141 = vector.load %arg16[%c0_128, %c0_129] : memref<167x72xf32, #tpu.memory_space<vmem>>, vector<167x72xf32>
    %cst_130 = arith.constant dense<0.000000e+00> : vector<32x72xf32>
    %142 = tpu.matmul %140, %141, %cst_130 {dimension_numbers = #tpu.dot_dimension_numbers<[1], [0], [0], [1], [0, 0, 1, 1], [], []>} : vector<32x167xf32>, vector<167x72xf32>, vector<32x72xf32> -> vector<32x72xf32>
    %c0_131 = arith.constant 0 : index
    %c0_132 = arith.constant 0 : index
    %143 = vector.load %arg23[%c0_131, %c0_132] : memref<32x72xf32, #tpu.memory_space<vmem>>, vector<32x72xf32>
    tpu.vector_store %arg23[%c0_131, %c0_132], %142 {strides = array<i32>} : memref<32x72xf32, #tpu.memory_space<vmem>>, vector<32x72xf32>,
    %c0_133 = arith.constant 0 : index
    %c0_134 = arith.constant 0 : index
    %144 = vector.load %arg5[%c0_133, %c0_134] : memref<32x288xf32, #tpu.memory_space<vmem>>, vector<32x32xf32>
    %c0_135 = arith.constant 0 : index
    %c0_136 = arith.constant 0 : index
    %145 = vector.load %arg23[%c0_135, %c0_136] : memref<32x72xf32, #tpu.memory_space<vmem>>, vector<32x58xf32>
    %cst_137 = arith.constant dense<0.000000e+00> : vector<32x58xf32>
    %146 = tpu.matmul %144, %145, %cst_137 {dimension_numbers = #tpu.dot_dimension_numbers<[1], [0], [0], [1], [0, 0, 1, 1], [], []>} : vector<32x32xf32>, vector<32x58xf32>, vector<32x58xf32> -> vector<32x58xf32>
    %c0_138 = arith.constant 0 : index
    %c32_139 = arith.constant 32 : index
    %147 = vector.load %arg5[%c0_138, %c32_139] : memref<32x288xf32, #tpu.memory_space<vmem>>, vector<32x32xf32>
    %c0_140 = arith.constant 0 : index
    %c1_141 = arith.constant 1 : index
    %148 = vector.load %arg23[%c0_140, %c1_141] : memref<32x72xf32, #tpu.memory_space<vmem>>, vector<32x58xf32>
    %cst_142 = arith.constant dense<0.000000e+00> : vector<32x58xf32>
    %149 = tpu.matmul %147, %148, %cst_142 {dimension_numbers = #tpu.dot_dimension_numbers<[1], [0], [0], [1], [0, 0, 1, 1], [], []>} : vector<32x32xf32>, vector<32x58xf32>, vector<32x58xf32> -> vector<32x58xf32>
    %150 = arith.addf %146, %149 : vector<32x58xf32>
    %c0_143 = arith.constant 0 : index
    %c64_144 = arith.constant 64 : index
    %151 = vector.load %arg5[%c0_143, %c64_144] : memref<32x288xf32, #tpu.memory_space<vmem>>, vector<32x32xf32>
    %c0_145 = arith.constant 0 : index
    %c2_146 = arith.constant 2 : index
    %152 = vector.load %arg23[%c0_145, %c2_146] : memref<32x72xf32, #tpu.memory_space<vmem>>, vector<32x58xf32>
    %cst_147 = arith.constant dense<0.000000e+00> : vector<32x58xf32>
    %153 = tpu.matmul %151, %152, %cst_147 {dimension_numbers = #tpu.dot_dimension_numbers<[1], [0], [0], [1], [0, 0, 1, 1], [], []>} : vector<32x32xf32>, vector<32x58xf32>, vector<32x58xf32> -> vector<32x58xf32>
    %154 = arith.addf %150, %153 : vector<32x58xf32>
    %c0_148 = arith.constant 0 : index
    %c96_149 = arith.constant 96 : index
    %155 = vector.load %arg5[%c0_148, %c96_149] : memref<32x288xf32, #tpu.memory_space<vmem>>, vector<32x32xf32>
    %c0_150 = arith.constant 0 : index
    %c6 = arith.constant 6 : index
    %156 = vector.load %arg23[%c0_150, %c6] : memref<32x72xf32, #tpu.memory_space<vmem>>, vector<32x58xf32>
    %cst_151 = arith.constant dense<0.000000e+00> : vector<32x58xf32>
    %157 = tpu.matmul %155, %156, %cst_151 {dimension_numbers = #tpu.dot_dimension_numbers<[1], [0], [0], [1], [0, 0, 1, 1], [], []>} : vector<32x32xf32>, vector<32x58xf32>, vector<32x58xf32> -> vector<32x58xf32>
    %158 = arith.addf %154, %157 : vector<32x58xf32>
    %c0_152 = arith.constant 0 : index
    %c128_153 = arith.constant 128 : index
    %159 = vector.load %arg5[%c0_152, %c128_153] : memref<32x288xf32, #tpu.memory_space<vmem>>, vector<32x32xf32>
    %c0_154 = arith.constant 0 : index
    %c7 = arith.constant 7 : index
    %160 = vector.load %arg23[%c0_154, %c7] : memref<32x72xf32, #tpu.memory_space<vmem>>, vector<32x58xf32>
    %cst_155 = arith.constant dense<0.000000e+00> : vector<32x58xf32>
    %161 = tpu.matmul %159, %160, %cst_155 {dimension_numbers = #tpu.dot_dimension_numbers<[1], [0], [0], [1], [0, 0, 1, 1], [], []>} : vector<32x32xf32>, vector<32x58xf32>, vector<32x58xf32> -> vector<32x58xf32>
    %162 = arith.addf %158, %161 : vector<32x58xf32>
    %c0_156 = arith.constant 0 : index
    %c160_157 = arith.constant 160 : index
    %163 = vector.load %arg5[%c0_156, %c160_157] : memref<32x288xf32, #tpu.memory_space<vmem>>, vector<32x32xf32>
    %c0_158 = arith.constant 0 : index
    %c8_159 = arith.constant 8 : index
    %164 = vector.load %arg23[%c0_158, %c8_159] : memref<32x72xf32, #tpu.memory_space<vmem>>, vector<32x58xf32>
    %cst_160 = arith.constant dense<0.000000e+00> : vector<32x58xf32>
    %165 = tpu.matmul %163, %164, %cst_160 {dimension_numbers = #tpu.dot_dimension_numbers<[1], [0], [0], [1], [0, 0, 1, 1], [], []>} : vector<32x32xf32>, vector<32x58xf32>, vector<32x58xf32> -> vector<32x58xf32>
    %166 = arith.addf %162, %165 : vector<32x58xf32>
    %c0_161 = arith.constant 0 : index
    %c192_162 = arith.constant 192 : index
    %167 = vector.load %arg5[%c0_161, %c192_162] : memref<32x288xf32, #tpu.memory_space<vmem>>, vector<32x32xf32>
    %c0_163 = arith.constant 0 : index
    %c12_164 = arith.constant 12 : index
    %168 = vector.load %arg23[%c0_163, %c12_164] : memref<32x72xf32, #tpu.memory_space<vmem>>, vector<32x58xf32>
    %cst_165 = arith.constant dense<0.000000e+00> : vector<32x58xf32>
    %169 = tpu.matmul %167, %168, %cst_165 {dimension_numbers = #tpu.dot_dimension_numbers<[1], [0], [0], [1], [0, 0, 1, 1], [], []>} : vector<32x32xf32>, vector<32x58xf32>, vector<32x58xf32> -> vector<32x58xf32>
    %170 = arith.addf %166, %169 : vector<32x58xf32>
    %c0_166 = arith.constant 0 : index
    %c224_167 = arith.constant 224 : index
    %171 = vector.load %arg5[%c0_166, %c224_167] : memref<32x288xf32, #tpu.memory_space<vmem>>, vector<32x32xf32>
    %c0_168 = arith.constant 0 : index
    %c13 = arith.constant 13 : index
    %172 = vector.load %arg23[%c0_168, %c13] : memref<32x72xf32, #tpu.memory_space<vmem>>, vector<32x58xf32>
    %cst_169 = arith.constant dense<0.000000e+00> : vector<32x58xf32>
    %173 = tpu.matmul %171, %172, %cst_169 {dimension_numbers = #tpu.dot_dimension_numbers<[1], [0], [0], [1], [0, 0, 1, 1], [], []>} : vector<32x32xf32>, vector<32x58xf32>, vector<32x58xf32> -> vector<32x58xf32>
    %174 = arith.addf %170, %173 : vector<32x58xf32>
    %c0_170 = arith.constant 0 : index
    %c256_171 = arith.constant 256 : index
    %175 = vector.load %arg5[%c0_170, %c256_171] : memref<32x288xf32, #tpu.memory_space<vmem>>, vector<32x32xf32>
    %c0_172 = arith.constant 0 : index
    %c14 = arith.constant 14 : index
    %176 = vector.load %arg23[%c0_172, %c14] : memref<32x72xf32, #tpu.memory_space<vmem>>, vector<32x58xf32>
    %cst_173 = arith.constant dense<0.000000e+00> : vector<32x58xf32>
    %177 = tpu.matmul %175, %176, %cst_173 {dimension_numbers = #tpu.dot_dimension_numbers<[1], [0], [0], [1], [0, 0, 1, 1], [], []>} : vector<32x32xf32>, vector<32x58xf32>, vector<32x58xf32> -> vector<32x58xf32>
    %178 = arith.addf %174, %177 : vector<32x58xf32>
    %c0_174 = arith.constant 0 : index
    %c0_175 = arith.constant 0 : index
    %179 = vector.load %arg11[%c0_174, %c0_175] : memref<32x1xf32, #tpu.memory_space<vmem>>, vector<32x1xf32>
    %180 = vector.broadcast %179 : vector<32x1xf32> to vector<32x58xf32>
    %181 = arith.addf %178, %180 : vector<32x58xf32>
    %182 = vector.extract_strided_slice %181 {offsets = [0, 0], sizes = [32, 57], strides = [1, 1]} : vector<32x58xf32> to vector<32x57xf32>
    %183 = vector.extract_strided_slice %181 {offsets = [0, 1], sizes = [32, 57], strides = [1, 1]} : vector<32x58xf32> to vector<32x57xf32>
    %184 = arith.maximumf %182, %183 : vector<32x57xf32>
    %185 = vector.extract_strided_slice %184 {offsets = [0, 0], sizes = [32, 51], strides = [1, 1]} : vector<32x57xf32> to vector<32x51xf32>
    %186 = vector.extract_strided_slice %184 {offsets = [0, 6], sizes = [32, 51], strides = [1, 1]} : vector<32x57xf32> to vector<32x51xf32>
    %187 = arith.maximumf %185, %186 : vector<32x51xf32>
    %cst_176 = arith.constant 0.000000e+00 : f32
    %188 = vector.broadcast %cst_176 : f32 to vector<32x51xf32>
    %189 = arith.maximumf %187, %188 : vector<32x51xf32>
    %c0_177 = arith.constant 0 : index
    %c0_178 = arith.constant 0 : index
    %190 = vector.load %arg17[%c0_177, %c0_178] : memref<51x32xf32, #tpu.memory_space<vmem>>, vector<51x32xf32>
    %cst_179 = arith.constant dense<0.000000e+00> : vector<32x32xf32>
    %191 = tpu.matmul %189, %190, %cst_179 {dimension_numbers = #tpu.dot_dimension_numbers<[1], [0], [0], [1], [0, 0, 1, 1], [], []>} : vector<32x51xf32>, vector<51x32xf32>, vector<32x32xf32> -> vector<32x32xf32>
    %c0_180 = arith.constant 0 : index
    %c0_181 = arith.constant 0 : index
    %192 = vector.load %arg24[%c0_180, %c0_181] : memref<32x32xf32, #tpu.memory_space<vmem>>, vector<32x32xf32>
    tpu.vector_store %arg24[%c0_180, %c0_181], %191 {strides = array<i32>} : memref<32x32xf32, #tpu.memory_space<vmem>>, vector<32x32xf32>,
    %c0_182 = arith.constant 0 : index
    %c0_183 = arith.constant 0 : index
    %193 = vector.load %arg6[%c0_182, %c0_183] : memref<32x288xf32, #tpu.memory_space<vmem>>, vector<32x32xf32>
    %c0_184 = arith.constant 0 : index
    %c0_185 = arith.constant 0 : index
    %194 = vector.load %arg24[%c0_184, %c0_185] : memref<32x32xf32, #tpu.memory_space<vmem>>, vector<32x22xf32>
    %cst_186 = arith.constant dense<0.000000e+00> : vector<32x22xf32>
    %195 = tpu.matmul %193, %194, %cst_186 {dimension_numbers = #tpu.dot_dimension_numbers<[1], [0], [0], [1], [0, 0, 1, 1], [], []>} : vector<32x32xf32>, vector<32x22xf32>, vector<32x22xf32> -> vector<32x22xf32>
    %c0_187 = arith.constant 0 : index
    %c32_188 = arith.constant 32 : index
    %196 = vector.load %arg6[%c0_187, %c32_188] : memref<32x288xf32, #tpu.memory_space<vmem>>, vector<32x32xf32>
    %c0_189 = arith.constant 0 : index
    %c1_190 = arith.constant 1 : index
    %197 = vector.load %arg24[%c0_189, %c1_190] : memref<32x32xf32, #tpu.memory_space<vmem>>, vector<32x22xf32>
    %cst_191 = arith.constant dense<0.000000e+00> : vector<32x22xf32>
    %198 = tpu.matmul %196, %197, %cst_191 {dimension_numbers = #tpu.dot_dimension_numbers<[1], [0], [0], [1], [0, 0, 1, 1], [], []>} : vector<32x32xf32>, vector<32x22xf32>, vector<32x22xf32> -> vector<32x22xf32>
    %199 = arith.addf %195, %198 : vector<32x22xf32>
    %c0_192 = arith.constant 0 : index
    %c64_193 = arith.constant 64 : index
    %200 = vector.load %arg6[%c0_192, %c64_193] : memref<32x288xf32, #tpu.memory_space<vmem>>, vector<32x32xf32>
    %c0_194 = arith.constant 0 : index
    %c2_195 = arith.constant 2 : index
    %201 = vector.load %arg24[%c0_194, %c2_195] : memref<32x32xf32, #tpu.memory_space<vmem>>, vector<32x22xf32>
    %cst_196 = arith.constant dense<0.000000e+00> : vector<32x22xf32>
    %202 = tpu.matmul %200, %201, %cst_196 {dimension_numbers = #tpu.dot_dimension_numbers<[1], [0], [0], [1], [0, 0, 1, 1], [], []>} : vector<32x32xf32>, vector<32x22xf32>, vector<32x22xf32> -> vector<32x22xf32>
    %203 = arith.addf %199, %202 : vector<32x22xf32>
    %c0_197 = arith.constant 0 : index
    %c96_198 = arith.constant 96 : index
    %204 = vector.load %arg6[%c0_197, %c96_198] : memref<32x288xf32, #tpu.memory_space<vmem>>, vector<32x32xf32>
    %c0_199 = arith.constant 0 : index
    %c4 = arith.constant 4 : index
    %205 = vector.load %arg24[%c0_199, %c4] : memref<32x32xf32, #tpu.memory_space<vmem>>, vector<32x22xf32>
    %cst_200 = arith.constant dense<0.000000e+00> : vector<32x22xf32>
    %206 = tpu.matmul %204, %205, %cst_200 {dimension_numbers = #tpu.dot_dimension_numbers<[1], [0], [0], [1], [0, 0, 1, 1], [], []>} : vector<32x32xf32>, vector<32x22xf32>, vector<32x22xf32> -> vector<32x22xf32>
    %207 = arith.addf %203, %206 : vector<32x22xf32>
    %c0_201 = arith.constant 0 : index
    %c128_202 = arith.constant 128 : index
    %208 = vector.load %arg6[%c0_201, %c128_202] : memref<32x288xf32, #tpu.memory_space<vmem>>, vector<32x32xf32>
    %c0_203 = arith.constant 0 : index
    %c5 = arith.constant 5 : index
    %209 = vector.load %arg24[%c0_203, %c5] : memref<32x32xf32, #tpu.memory_space<vmem>>, vector<32x22xf32>
    %cst_204 = arith.constant dense<0.000000e+00> : vector<32x22xf32>
    %210 = tpu.matmul %208, %209, %cst_204 {dimension_numbers = #tpu.dot_dimension_numbers<[1], [0], [0], [1], [0, 0, 1, 1], [], []>} : vector<32x32xf32>, vector<32x22xf32>, vector<32x22xf32> -> vector<32x22xf32>
    %211 = arith.addf %207, %210 : vector<32x22xf32>
    %c0_205 = arith.constant 0 : index
    %c160_206 = arith.constant 160 : index
    %212 = vector.load %arg6[%c0_205, %c160_206] : memref<32x288xf32, #tpu.memory_space<vmem>>, vector<32x32xf32>
    %c0_207 = arith.constant 0 : index
    %c6_208 = arith.constant 6 : index
    %213 = vector.load %arg24[%c0_207, %c6_208] : memref<32x32xf32, #tpu.memory_space<vmem>>, vector<32x22xf32>
    %cst_209 = arith.constant dense<0.000000e+00> : vector<32x22xf32>
    %214 = tpu.matmul %212, %213, %cst_209 {dimension_numbers = #tpu.dot_dimension_numbers<[1], [0], [0], [1], [0, 0, 1, 1], [], []>} : vector<32x32xf32>, vector<32x22xf32>, vector<32x22xf32> -> vector<32x22xf32>
    %215 = arith.addf %211, %214 : vector<32x22xf32>
    %c0_210 = arith.constant 0 : index
    %c192_211 = arith.constant 192 : index
    %216 = vector.load %arg6[%c0_210, %c192_211] : memref<32x288xf32, #tpu.memory_space<vmem>>, vector<32x32xf32>
    %c0_212 = arith.constant 0 : index
    %c8_213 = arith.constant 8 : index
    %217 = vector.load %arg24[%c0_212, %c8_213] : memref<32x32xf32, #tpu.memory_space<vmem>>, vector<32x22xf32>
    %cst_214 = arith.constant dense<0.000000e+00> : vector<32x22xf32>
    %218 = tpu.matmul %216, %217, %cst_214 {dimension_numbers = #tpu.dot_dimension_numbers<[1], [0], [0], [1], [0, 0, 1, 1], [], []>} : vector<32x32xf32>, vector<32x22xf32>, vector<32x22xf32> -> vector<32x22xf32>
    %219 = arith.addf %215, %218 : vector<32x22xf32>
    %c0_215 = arith.constant 0 : index
    %c224_216 = arith.constant 224 : index
    %220 = vector.load %arg6[%c0_215, %c224_216] : memref<32x288xf32, #tpu.memory_space<vmem>>, vector<32x32xf32>
    %c0_217 = arith.constant 0 : index
    %c9 = arith.constant 9 : index
    %221 = vector.load %arg24[%c0_217, %c9] : memref<32x32xf32, #tpu.memory_space<vmem>>, vector<32x22xf32>
    %cst_218 = arith.constant dense<0.000000e+00> : vector<32x22xf32>
    %222 = tpu.matmul %220, %221, %cst_218 {dimension_numbers = #tpu.dot_dimension_numbers<[1], [0], [0], [1], [0, 0, 1, 1], [], []>} : vector<32x32xf32>, vector<32x22xf32>, vector<32x22xf32> -> vector<32x22xf32>
    %223 = arith.addf %219, %222 : vector<32x22xf32>
    %c0_219 = arith.constant 0 : index
    %c256_220 = arith.constant 256 : index
    %224 = vector.load %arg6[%c0_219, %c256_220] : memref<32x288xf32, #tpu.memory_space<vmem>>, vector<32x32xf32>
    %c0_221 = arith.constant 0 : index
    %c10_222 = arith.constant 10 : index
    %225 = vector.load %arg24[%c0_221, %c10_222] : memref<32x32xf32, #tpu.memory_space<vmem>>, vector<32x22xf32>
    %cst_223 = arith.constant dense<0.000000e+00> : vector<32x22xf32>
    %226 = tpu.matmul %224, %225, %cst_223 {dimension_numbers = #tpu.dot_dimension_numbers<[1], [0], [0], [1], [0, 0, 1, 1], [], []>} : vector<32x32xf32>, vector<32x22xf32>, vector<32x22xf32> -> vector<32x22xf32>
    %227 = arith.addf %223, %226 : vector<32x22xf32>
    %c0_224 = arith.constant 0 : index
    %c0_225 = arith.constant 0 : index
    %228 = vector.load %arg12[%c0_224, %c0_225] : memref<32x1xf32, #tpu.memory_space<vmem>>, vector<32x1xf32>
    %229 = vector.broadcast %228 : vector<32x1xf32> to vector<32x22xf32>
    %230 = arith.addf %227, %229 : vector<32x22xf32>
    %231 = vector.extract_strided_slice %230 {offsets = [0, 0], sizes = [32, 21], strides = [1, 1]} : vector<32x22xf32> to vector<32x21xf32>
    %232 = vector.extract_strided_slice %230 {offsets = [0, 1], sizes = [32, 21], strides = [1, 1]} : vector<32x22xf32> to vector<32x21xf32>
    %233 = arith.maximumf %231, %232 : vector<32x21xf32>
    %234 = vector.extract_strided_slice %233 {offsets = [0, 0], sizes = [32, 17], strides = [1, 1]} : vector<32x21xf32> to vector<32x17xf32>
    %235 = vector.extract_strided_slice %233 {offsets = [0, 4], sizes = [32, 17], strides = [1, 1]} : vector<32x21xf32> to vector<32x17xf32>
    %236 = arith.maximumf %234, %235 : vector<32x17xf32>
    %cst_226 = arith.constant 0.000000e+00 : f32
    %237 = vector.broadcast %cst_226 : f32 to vector<32x17xf32>
    %238 = arith.maximumf %236, %237 : vector<32x17xf32>
    %c0_227 = arith.constant 0 : index
    %c0_228 = arith.constant 0 : index
    %239 = vector.load %arg18[%c0_227, %c0_228] : memref<17x18xf32, #tpu.memory_space<vmem>>, vector<17x18xf32>
    %cst_229 = arith.constant dense<0.000000e+00> : vector<32x18xf32>
    %240 = tpu.matmul %238, %239, %cst_229 {dimension_numbers = #tpu.dot_dimension_numbers<[1], [0], [0], [1], [0, 0, 1, 1], [], []>} : vector<32x17xf32>, vector<17x18xf32>, vector<32x18xf32> -> vector<32x18xf32>
    %c0_230 = arith.constant 0 : index
    %c0_231 = arith.constant 0 : index
    %241 = vector.load %arg25[%c0_230, %c0_231] : memref<32x18xf32, #tpu.memory_space<vmem>>, vector<32x18xf32>
    tpu.vector_store %arg25[%c0_230, %c0_231], %240 {strides = array<i32>} : memref<32x18xf32, #tpu.memory_space<vmem>>, vector<32x18xf32>,
    %c0_232 = arith.constant 0 : index
    %c0_233 = arith.constant 0 : index
    %242 = vector.load %arg7[%c0_232, %c0_233] : memref<32x288xf32, #tpu.memory_space<vmem>>, vector<32x32xf32>
    %c0_234 = arith.constant 0 : index
    %c0_235 = arith.constant 0 : index
    %243 = vector.load %arg25[%c0_234, %c0_235] : memref<32x18xf32, #tpu.memory_space<vmem>>, vector<32x10xf32>
    %cst_236 = arith.constant dense<0.000000e+00> : vector<32x10xf32>
    %244 = tpu.matmul %242, %243, %cst_236 {dimension_numbers = #tpu.dot_dimension_numbers<[1], [0], [0], [1], [0, 0, 1, 1], [], []>} : vector<32x32xf32>, vector<32x10xf32>, vector<32x10xf32> -> vector<32x10xf32>
    %c0_237 = arith.constant 0 : index
    %c32_238 = arith.constant 32 : index
    %245 = vector.load %arg7[%c0_237, %c32_238] : memref<32x288xf32, #tpu.memory_space<vmem>>, vector<32x32xf32>
    %c0_239 = arith.constant 0 : index
    %c1_240 = arith.constant 1 : index
    %246 = vector.load %arg25[%c0_239, %c1_240] : memref<32x18xf32, #tpu.memory_space<vmem>>, vector<32x10xf32>
    %cst_241 = arith.constant dense<0.000000e+00> : vector<32x10xf32>
    %247 = tpu.matmul %245, %246, %cst_241 {dimension_numbers = #tpu.dot_dimension_numbers<[1], [0], [0], [1], [0, 0, 1, 1], [], []>} : vector<32x32xf32>, vector<32x10xf32>, vector<32x10xf32> -> vector<32x10xf32>
    %248 = arith.addf %244, %247 : vector<32x10xf32>
    %c0_242 = arith.constant 0 : index
    %c64_243 = arith.constant 64 : index
    %249 = vector.load %arg7[%c0_242, %c64_243] : memref<32x288xf32, #tpu.memory_space<vmem>>, vector<32x32xf32>
    %c0_244 = arith.constant 0 : index
    %c2_245 = arith.constant 2 : index
    %250 = vector.load %arg25[%c0_244, %c2_245] : memref<32x18xf32, #tpu.memory_space<vmem>>, vector<32x10xf32>
    %cst_246 = arith.constant dense<0.000000e+00> : vector<32x10xf32>
    %251 = tpu.matmul %249, %250, %cst_246 {dimension_numbers = #tpu.dot_dimension_numbers<[1], [0], [0], [1], [0, 0, 1, 1], [], []>} : vector<32x32xf32>, vector<32x10xf32>, vector<32x10xf32> -> vector<32x10xf32>
    %252 = arith.addf %248, %251 : vector<32x10xf32>
    %c0_247 = arith.constant 0 : index
    %c96_248 = arith.constant 96 : index
    %253 = vector.load %arg7[%c0_247, %c96_248] : memref<32x288xf32, #tpu.memory_space<vmem>>, vector<32x32xf32>
    %c0_249 = arith.constant 0 : index
    %c3 = arith.constant 3 : index
    %254 = vector.load %arg25[%c0_249, %c3] : memref<32x18xf32, #tpu.memory_space<vmem>>, vector<32x10xf32>
    %cst_250 = arith.constant dense<0.000000e+00> : vector<32x10xf32>
    %255 = tpu.matmul %253, %254, %cst_250 {dimension_numbers = #tpu.dot_dimension_numbers<[1], [0], [0], [1], [0, 0, 1, 1], [], []>} : vector<32x32xf32>, vector<32x10xf32>, vector<32x10xf32> -> vector<32x10xf32>
    %256 = arith.addf %252, %255 : vector<32x10xf32>
    %c0_251 = arith.constant 0 : index
    %c128_252 = arith.constant 128 : index
    %257 = vector.load %arg7[%c0_251, %c128_252] : memref<32x288xf32, #tpu.memory_space<vmem>>, vector<32x32xf32>
    %c0_253 = arith.constant 0 : index
    %c4_254 = arith.constant 4 : index
    %258 = vector.load %arg25[%c0_253, %c4_254] : memref<32x18xf32, #tpu.memory_space<vmem>>, vector<32x10xf32>
    %cst_255 = arith.constant dense<0.000000e+00> : vector<32x10xf32>
    %259 = tpu.matmul %257, %258, %cst_255 {dimension_numbers = #tpu.dot_dimension_numbers<[1], [0], [0], [1], [0, 0, 1, 1], [], []>} : vector<32x32xf32>, vector<32x10xf32>, vector<32x10xf32> -> vector<32x10xf32>
    %260 = arith.addf %256, %259 : vector<32x10xf32>
    %c0_256 = arith.constant 0 : index
    %c160_257 = arith.constant 160 : index
    %261 = vector.load %arg7[%c0_256, %c160_257] : memref<32x288xf32, #tpu.memory_space<vmem>>, vector<32x32xf32>
    %c0_258 = arith.constant 0 : index
    %c5_259 = arith.constant 5 : index
    %262 = vector.load %arg25[%c0_258, %c5_259] : memref<32x18xf32, #tpu.memory_space<vmem>>, vector<32x10xf32>
    %cst_260 = arith.constant dense<0.000000e+00> : vector<32x10xf32>
    %263 = tpu.matmul %261, %262, %cst_260 {dimension_numbers = #tpu.dot_dimension_numbers<[1], [0], [0], [1], [0, 0, 1, 1], [], []>} : vector<32x32xf32>, vector<32x10xf32>, vector<32x10xf32> -> vector<32x10xf32>
    %264 = arith.addf %260, %263 : vector<32x10xf32>
    %c0_261 = arith.constant 0 : index
    %c192_262 = arith.constant 192 : index
    %265 = vector.load %arg7[%c0_261, %c192_262] : memref<32x288xf32, #tpu.memory_space<vmem>>, vector<32x32xf32>
    %c0_263 = arith.constant 0 : index
    %c6_264 = arith.constant 6 : index
    %266 = vector.load %arg25[%c0_263, %c6_264] : memref<32x18xf32, #tpu.memory_space<vmem>>, vector<32x10xf32>
    %cst_265 = arith.constant dense<0.000000e+00> : vector<32x10xf32>
    %267 = tpu.matmul %265, %266, %cst_265 {dimension_numbers = #tpu.dot_dimension_numbers<[1], [0], [0], [1], [0, 0, 1, 1], [], []>} : vector<32x32xf32>, vector<32x10xf32>, vector<32x10xf32> -> vector<32x10xf32>
    %268 = arith.addf %264, %267 : vector<32x10xf32>
    %c0_266 = arith.constant 0 : index
    %c224_267 = arith.constant 224 : index
    %269 = vector.load %arg7[%c0_266, %c224_267] : memref<32x288xf32, #tpu.memory_space<vmem>>, vector<32x32xf32>
    %c0_268 = arith.constant 0 : index
    %c7_269 = arith.constant 7 : index
    %270 = vector.load %arg25[%c0_268, %c7_269] : memref<32x18xf32, #tpu.memory_space<vmem>>, vector<32x10xf32>
    %cst_270 = arith.constant dense<0.000000e+00> : vector<32x10xf32>
    %271 = tpu.matmul %269, %270, %cst_270 {dimension_numbers = #tpu.dot_dimension_numbers<[1], [0], [0], [1], [0, 0, 1, 1], [], []>} : vector<32x32xf32>, vector<32x10xf32>, vector<32x10xf32> -> vector<32x10xf32>
    %272 = arith.addf %268, %271 : vector<32x10xf32>
    %c0_271 = arith.constant 0 : index
    %c256_272 = arith.constant 256 : index
    %273 = vector.load %arg7[%c0_271, %c256_272] : memref<32x288xf32, #tpu.memory_space<vmem>>, vector<32x32xf32>
    %c0_273 = arith.constant 0 : index
    %c8_274 = arith.constant 8 : index
    %274 = vector.load %arg25[%c0_273, %c8_274] : memref<32x18xf32, #tpu.memory_space<vmem>>, vector<32x10xf32>
    %cst_275 = arith.constant dense<0.000000e+00> : vector<32x10xf32>
    %275 = tpu.matmul %273, %274, %cst_275 {dimension_numbers = #tpu.dot_dimension_numbers<[1], [0], [0], [1], [0, 0, 1, 1], [], []>} : vector<32x32xf32>, vector<32x10xf32>, vector<32x10xf32> -> vector<32x10xf32>
    %276 = arith.addf %272, %275 : vector<32x10xf32>
    %c0_276 = arith.constant 0 : index
    %c0_277 = arith.constant 0 : index
    %277 = vector.load %arg13[%c0_276, %c0_277] : memref<32x1xf32, #tpu.memory_space<vmem>>, vector<32x1xf32>
    %278 = vector.broadcast %277 : vector<32x1xf32> to vector<32x10xf32>
    %279 = arith.addf %276, %278 : vector<32x10xf32>
    %c0_278 = arith.constant 0 : index
    %c0_279 = arith.constant 0 : index
    %280 = vector.load %arg19[%c0_278, %c0_279] : memref<10x2xf32, #tpu.memory_space<vmem>>, vector<10x2xf32>
    %cst_280 = arith.constant dense<0.000000e+00> : vector<32x2xf32>
    %281 = tpu.matmul %279, %280, %cst_280 {dimension_numbers = #tpu.dot_dimension_numbers<[1], [0], [0], [1], [0, 0, 1, 1], [], []>} : vector<32x10xf32>, vector<10x2xf32>, vector<32x2xf32> -> vector<32x2xf32>
    %c0_281 = arith.constant 0 : index
    %c0_282 = arith.constant 0 : index
    %282 = vector.load %arg20[%c0_281, %c0_282] : memref<32x2xf32, #tpu.memory_space<vmem>>, vector<32x2xf32>
    tpu.vector_store %arg20[%c0_281, %c0_282], %281 {strides = array<i32>} : memref<32x2xf32, #tpu.memory_space<vmem>>, vector<32x2xf32>,
    return
  }
  func.func @transform_0(%arg0: i32) -> (i32, i32) {
    %c0_i32 = arith.constant 0 : i32
    %c0_i32_0 = arith.constant 0 : i32
    %c0_i32_1 = arith.constant 0 : i32
    return %c0_i32, %c0_i32_0 : i32, i32
  }
  func.func @transform_1(%arg0: i32) -> (i32, i32) {
    %c0_i32 = arith.constant 0 : i32
    %c0_i32_0 = arith.constant 0 : i32
    %c0_i32_1 = arith.constant 0 : i32
    return %c0_i32, %c0_i32_0 : i32, i32
  }
  func.func @transform_2(%arg0: i32) -> (i32, i32) {
    %c0_i32 = arith.constant 0 : i32
    %c0_i32_0 = arith.constant 0 : i32
    %c0_i32_1 = arith.constant 0 : i32
    return %c0_i32, %c0_i32_0 : i32, i32
  }
  func.func @transform_3(%arg0: i32) -> (i32, i32) {
    %c0_i32 = arith.constant 0 : i32
    %c0_i32_0 = arith.constant 0 : i32
    %c0_i32_1 = arith.constant 0 : i32
    return %c0_i32, %c0_i32_0 : i32, i32
  }
  func.func @transform_4(%arg0: i32) -> (i32, i32) {
    %c0_i32 = arith.constant 0 : i32
    %c0_i32_0 = arith.constant 0 : i32
    %c0_i32_1 = arith.constant 0 : i32
    return %c0_i32, %c0_i32_0 : i32, i32
  }
  func.func @transform_5(%arg0: i32) -> (i32, i32) {
    %c0_i32 = arith.constant 0 : i32
    %c0_i32_0 = arith.constant 0 : i32
    %c0_i32_1 = arith.constant 0 : i32
    return %c0_i32, %c0_i32_0 : i32, i32
  }
  func.func @transform_6(%arg0: i32) -> (i32, i32) {
    %c0_i32 = arith.constant 0 : i32
    %c0_i32_0 = arith.constant 0 : i32
    %c0_i32_1 = arith.constant 0 : i32
    return %c0_i32, %c0_i32_0 : i32, i32
  }
  func.func @transform_7(%arg0: i32) -> (i32, i32) {
    %c0_i32 = arith.constant 0 : i32
    %c0_i32_0 = arith.constant 0 : i32
    %c0_i32_1 = arith.constant 0 : i32
    return %c0_i32, %c0_i32_0 : i32, i32
  }
  func.func @transform_8(%arg0: i32) -> (i32, i32) {
    %c0_i32 = arith.constant 0 : i32
    %c0_i32_0 = arith.constant 0 : i32
    %c0_i32_1 = arith.constant 0 : i32
    return %c0_i32, %c0_i32_0 : i32, i32
  }
  func.func @transform_9(%arg0: i32) -> (i32, i32) {
    %c0_i32 = arith.constant 0 : i32
    %c0_i32_0 = arith.constant 0 : i32
    %c0_i32_1 = arith.constant 0 : i32
    return %c0_i32, %c0_i32_0 : i32, i32
  }
  func.func @transform_10(%arg0: i32) -> (i32, i32) {
    %c0_i32 = arith.constant 0 : i32
    %c0_i32_0 = arith.constant 0 : i32
    %c0_i32_1 = arith.constant 0 : i32
    return %c0_i32, %c0_i32_0 : i32, i32
  }
  func.func @transform_11(%arg0: i32) -> (i32, i32) {
    %c0_i32 = arith.constant 0 : i32
    %c0_i32_0 = arith.constant 0 : i32
    %c0_i32_1 = arith.constant 0 : i32
    return %c0_i32, %c0_i32_0 : i32, i32
  }
  func.func @transform_12(%arg0: i32) -> (i32, i32) {
    %c0_i32 = arith.constant 0 : i32
    %c0_i32_0 = arith.constant 0 : i32
    %c0_i32_1 = arith.constant 0 : i32
    return %c0_i32, %c0_i32_0 : i32, i32
  }
  func.func @transform_13(%arg0: i32) -> (i32, i32) {
    %c0_i32 = arith.constant 0 : i32
    %c0_i32_0 = arith.constant 0 : i32
    %c0_i32_1 = arith.constant 0 : i32
    return %c0_i32, %c0_i32_0 : i32, i32
  }
  func.func @transform_14(%arg0: i32) -> (i32, i32) {
    %c0_i32 = arith.constant 0 : i32
    %c0_i32_0 = arith.constant 0 : i32
    %c0_i32_1 = arith.constant 0 : i32
    return %c0_i32, %c0_i32_0 : i32, i32
  }
  func.func @transform_15(%arg0: i32) -> (i32, i32) {
    %c0_i32 = arith.constant 0 : i32
    %c0_i32_0 = arith.constant 0 : i32
    %c0_i32_1 = arith.constant 0 : i32
    return %c0_i32, %c0_i32_0 : i32, i32
  }
  func.func @transform_16(%arg0: i32) -> (i32, i32) {
    %c0_i32 = arith.constant 0 : i32
    %c0_i32_0 = arith.constant 0 : i32
    %c0_i32_1 = arith.constant 0 : i32
    return %c0_i32, %c0_i32_0 : i32, i32
  }
  func.func @transform_17(%arg0: i32) -> (i32, i32) {
    %c0_i32 = arith.constant 0 : i32
    %c0_i32_0 = arith.constant 0 : i32
    %c0_i32_1 = arith.constant 0 : i32
    return %c0_i32, %c0_i32_0 : i32, i32
  }
  func.func @transform_18(%arg0: i32) -> (i32, i32) {
    %c0_i32 = arith.constant 0 : i32
    %c0_i32_0 = arith.constant 0 : i32
    %c0_i32_1 = arith.constant 0 : i32
    return %c0_i32, %c0_i32_0 : i32, i32
  }
  func.func @transform_19(%arg0: i32) -> (i32, i32) {
    %c0_i32 = arith.constant 0 : i32
    %c0_i32_0 = arith.constant 0 : i32
    %c0_i32_1 = arith.constant 0 : i32
    return %c0_i32, %c0_i32_0 : i32, i32
  }
}

</mosaic_0001>

<llo_original>
// kernel: cnn_branch_forward.1
$region0: #{cnn_branch_forward.1}
  #allocation0 [shape = 'u32[]', space=smem, size = 0x4, offset = 0x4, fixed_abs, tag = 'smem constant byte address 0x4 - core index']
  #allocation1 [shape = 'u32[144,128]{1,0:T(1,128)}', space=vmem, size = 0x12000, scoped, tag = 'internal scratch']
  #allocation2 [shape = 'f32[32,648]{1,0:T(8,128)}', space=vmem, size = 0x18000, scoped, tag = 'scratch operand']
  #allocation3 [shape = 'f32[32,200]{1,0:T(8,128)}', space=vmem, size = 0x8000, scoped, tag = 'scratch operand']
  #allocation4 [shape = 'f32[32,72]{1,0:T(8,128)}', space=vmem, size = 0x4000, scoped, tag = 'scratch operand']
  #allocation5 [shape = 'f32[32,32]{1,0:T(8,128)}', space=vmem, size = 0x4000, scoped, tag = 'scratch operand']
  #allocation6 [shape = 'f32[32,18]{1,0:T(8,128)}', space=vmem, size = 0x4000, scoped, tag = 'scratch operand']
  %s0 = inlined_call_operand.vmem [shape: f32[8,648], index: 0, kind: input, shape index: {}]
  %s1 = inlined_call_operand.vmem [shape: f32[32,72], index: 1, kind: input, shape index: {}]
  %s2 = inlined_call_operand.vmem [shape: f32[32,288], index: 2, kind: input, shape index: {}]
  %s3 = inlined_call_operand.vmem [shape: f32[32,288], index: 3, kind: input, shape index: {}]
  %s4 = inlined_call_operand.vmem [shape: f32[32,288], index: 4, kind: input, shape index: {}]
  %s5 = inlined_call_operand.vmem [shape: f32[32,288], index: 5, kind: input, shape index: {}]
  %s6 = inlined_call_operand.vmem [shape: f32[32,288], index: 6, kind: input, shape index: {}]
  %s7 = inlined_call_operand.vmem [shape: f32[32,1], index: 7, kind: input, shape index: {}]
  %s8 = inlined_call_operand.vmem [shape: f32[32,1], index: 8, kind: input, shape index: {}]
  %s9 = inlined_call_operand.vmem [shape: f32[32,1], index: 9, kind: input, shape index: {}]
  %s10 = inlined_call_operand.vmem [shape: f32[32,1], index: 10, kind: input, shape index: {}]
  %s11 = inlined_call_operand.vmem [shape: f32[32,1], index: 11, kind: input, shape index: {}]
  %s12 = inlined_call_operand.vmem [shape: f32[32,1], index: 12, kind: input, shape index: {}]
  %s13 = inlined_call_operand.vmem [shape: f32[1,610], index: 13, kind: input, shape index: {}]
  %s14 = inlined_call_operand.vmem [shape: f32[591,200], index: 14, kind: input, shape index: {}]
  %s15 = inlined_call_operand.vmem [shape: f32[167,72], index: 15, kind: input, shape index: {}]
  %s16 = inlined_call_operand.vmem [shape: f32[51,32], index: 16, kind: input, shape index: {}]
  %s17 = inlined_call_operand.vmem [shape: f32[17,18], index: 17, kind: input, shape index: {}]
  %s18 = inlined_call_operand.vmem [shape: f32[10,2], index: 18, kind: input, shape index: {}]
  %s19 = inlined_call_operand.vmem [shape: f32[32,2], index: 19, kind: output, shape index: {}]
  %s20 = sld [smem:[#allocation0]]
  $region86: #{cnn_branch_forward.1} parent=0
    _
  %s22 = ssub.s32 1, %s20
  %s23 = scalar_select 0, %s22, %s20
  // Predicated region
  $region2: #{cnn_branch_forward.1} parent=0 // pred_check
    _
  $region3: #{cnn_branch_forward.1} parent=0 // pred_check_branch
    %25 = sbr.rel (0) target = $region5
  $region4: #{cnn_branch_forward.1} parent=0 // pred_region
    _
  $region5: #{cnn_branch_forward.1} parent=0 // pred_fallthru
    _
  // Predicated region
  $region6: #{cnn_branch_forward.1} parent=0 // pred_check
    _
  $region7: #{cnn_branch_forward.1} parent=0 // pred_check_branch
    %27 = sbr.rel (0) target = $region9
  $region8: #{cnn_branch_forward.1} parent=0 // pred_region
    _
  $region9: #{cnn_branch_forward.1} parent=0 // pred_fallthru
    _
  // Predicated region
  $region10: #{cnn_branch_forward.1} parent=0 // pred_check
    _
  $region11: #{cnn_branch_forward.1} parent=0 // pred_check_branch
    %29 = sbr.rel (0) target = $region13
  $region12: #{cnn_branch_forward.1} parent=0 // pred_region
    _
  $region13: #{cnn_branch_forward.1} parent=0 // pred_fallthru
    _
  // Predicated region
  $region14: #{cnn_branch_forward.1} parent=0 // pred_check
    _
  $region15: #{cnn_branch_forward.1} parent=0 // pred_check_branch
    %31 = sbr.rel (0) target = $region17
  $region16: #{cnn_branch_forward.1} parent=0 // pred_region
    _
  $region17: #{cnn_branch_forward.1} parent=0 // pred_fallthru
    _
  // Predicated region
  $region18: #{cnn_branch_forward.1} parent=0 // pred_check
    _
  $region19: #{cnn_branch_forward.1} parent=0 // pred_check_branch
    %33 = sbr.rel (0) target = $region21
  $region20: #{cnn_branch_forward.1} parent=0 // pred_region
    _
  $region21: #{cnn_branch_forward.1} parent=0 // pred_fallthru
    _
  // Predicated region
  $region22: #{cnn_branch_forward.1} parent=0 // pred_check
    _
  $region23: #{cnn_branch_forward.1} parent=0 // pred_check_branch
    %35 = sbr.rel (0) target = $region25
  $region24: #{cnn_branch_forward.1} parent=0 // pred_region
    _
  $region25: #{cnn_branch_forward.1} parent=0 // pred_fallthru
    _
  // Predicated region
  $region26: #{cnn_branch_forward.1} parent=0 // pred_check
    _
  $region27: #{cnn_branch_forward.1} parent=0 // pred_check_branch
    %37 = sbr.rel (0) target = $region29
  $region28: #{cnn_branch_forward.1} parent=0 // pred_region
    _
  $region29: #{cnn_branch_forward.1} parent=0 // pred_fallthru
    _
  // Predicated region
  $region30: #{cnn_branch_forward.1} parent=0 // pred_check
    _
  $region31: #{cnn_branch_forward.1} parent=0 // pred_check_branch
    %39 = sbr.rel (0) target = $region33
  $region32: #{cnn_branch_forward.1} parent=0 // pred_region
    _
  $region33: #{cnn_branch_forward.1} parent=0 // pred_fallthru
    _
  // Predicated region
  $region34: #{cnn_branch_forward.1} parent=0 // pred_check
    _
  $region35: #{cnn_branch_forward.1} parent=0 // pred_check_branch
    %41 = sbr.rel (0) target = $region37
  $region36: #{cnn_branch_forward.1} parent=0 // pred_region
    _
  $region37: #{cnn_branch_forward.1} parent=0 // pred_fallthru
    _
  // Predicated region
  $region38: #{cnn_branch_forward.1} parent=0 // pred_check
    _
  $region39: #{cnn_branch_forward.1} parent=0 // pred_check_branch
    %43 = sbr.rel (0) target = $region41
  $region40: #{cnn_branch_forward.1} parent=0 // pred_region
    _
  $region41: #{cnn_branch_forward.1} parent=0 // pred_fallthru
    _
  // Predicated region
  $region42: #{cnn_branch_forward.1} parent=0 // pred_check
    _
  $region43: #{cnn_branch_forward.1} parent=0 // pred_check_branch
    %45 = sbr.rel (0) target = $region45
  $region44: #{cnn_branch_forward.1} parent=0 // pred_region
    _
  $region45: #{cnn_branch_forward.1} parent=0 // pred_fallthru
    _
  // Predicated region
  $region46: #{cnn_branch_forward.1} parent=0 // pred_check
    _
  $region47: #{cnn_branch_forward.1} parent=0 // pred_check_branch
    %47 = sbr.rel (0) target = $region49
  $region48: #{cnn_branch_forward.1} parent=0 // pred_region
    _
  $region49: #{cnn_branch_forward.1} parent=0 // pred_fallthru
    _
  // Predicated region
  $region50: #{cnn_branch_forward.1} parent=0 // pred_check
    _
  $region51: #{cnn_branch_forward.1} parent=0 // pred_check_branch
    %49 = sbr.rel (0) target = $region53
  $region52: #{cnn_branch_forward.1} parent=0 // pred_region
    _
  $region53: #{cnn_branch_forward.1} parent=0 // pred_fallthru
    _
  // Predicated region
  $region54: #{cnn_branch_forward.1} parent=0 // pred_check
    _
  $region55: #{cnn_branch_forward.1} parent=0 // pred_check_branch
    %51 = sbr.rel (0) target = $region57
  $region56: #{cnn_branch_forward.1} parent=0 // pred_region
    _
  $region57: #{cnn_branch_forward.1} parent=0 // pred_fallthru
    _
  // Predicated region
  $region58: #{cnn_branch_forward.1} parent=0 // pred_check
    _
  $region59: #{cnn_branch_forward.1} parent=0 // pred_check_branch
    %53 = sbr.rel (0) target = $region61
  $region60: #{cnn_branch_forward.1} parent=0 // pred_region
    _
  $region61: #{cnn_branch_forward.1} parent=0 // pred_fallthru
    _
  // Predicated region
  $region62: #{cnn_branch_forward.1} parent=0 // pred_check
    _
  $region63: #{cnn_branch_forward.1} parent=0 // pred_check_branch
    %55 = sbr.rel (0) target = $region65
  $region64: #{cnn_branch_forward.1} parent=0 // pred_region
    _
  $region65: #{cnn_branch_forward.1} parent=0 // pred_fallthru
    _
  // Predicated region
  $region66: #{cnn_branch_forward.1} parent=0 // pred_check
    _
  $region67: #{cnn_branch_forward.1} parent=0 // pred_check_branch
    %57 = sbr.rel (0) target = $region69
  $region68: #{cnn_branch_forward.1} parent=0 // pred_region
    _
  $region69: #{cnn_branch_forward.1} parent=0 // pred_fallthru
    _
  // Predicated region
  $region70: #{cnn_branch_forward.1} parent=0 // pred_check
    _
  $region71: #{cnn_branch_forward.1} parent=0 // pred_check_branch
    %59 = sbr.rel (0) target = $region73
  $region72: #{cnn_branch_forward.1} parent=0 // pred_region
    _
  $region73: #{cnn_branch_forward.1} parent=0 // pred_fallthru
    _
  // Predicated region
  $region74: #{cnn_branch_forward.1} parent=0 // pred_check
    _
  $region75: #{cnn_branch_forward.1} parent=0 // pred_check_branch
    %61 = sbr.rel (0) target = $region77
  $region76: #{cnn_branch_forward.1} parent=0 // pred_region
    _
  $region77: #{cnn_branch_forward.1} parent=0 // pred_fallthru
    _
  %v62 = vld [vmem:[%s1] sm:$0xff]
  %v63 = vld [vmem:[%s1 + $0x8] sm:$0xff]
  %v64 = vld [vmem:[%s1 + $0x10] sm:$0xff]
  %v65 = vld [vmem:[%s1 + $0x18] sm:$0xff]
  %v66 = vld [vmem:[%s0] sm:$0xff]
  %v67 = vld [vmem:[%s0 + $0x8] sm:$0xff]
  %v68 = vld [vmem:[%s0 + $0x10] sm:$0xff]
  %v69 = vld [vmem:[%s0 + $0x18] sm:$0xff]
  %v70 = vld [vmem:[%s0 + $0x20] sm:$0xff]
  %75 = vrot.lane.b32.xlu0 %v62, 120
  %v76 = vpop.permute.xlu0 %75
  %77 = vrot.lane.b32.xlu0 %v63, 120
  %v78 = vpop.permute.xlu0 %77
  %79 = vrot.lane.b32.xlu0 %v64, 120
  %v80 = vpop.permute.xlu0 %79
  %81 = vrot.lane.b32.xlu0 %v65, 120
  %v82 = vpop.permute.xlu0 %81
  %88 = vrot.lane.b32.xlu0 %v66, 127
  %v89 = vpop.permute.xlu0 %88
  %90 = vrot.lane.b32.xlu0 %v67, 127
  %v91 = vpop.permute.xlu0 %90
  %92 = vrot.lane.b32.xlu0 %v68, 127
  %v93 = vpop.permute.xlu0 %92
  %94 = vrot.lane.b32.xlu0 %v69, 127
  %v95 = vpop.permute.xlu0 %94
  %96 = vrot.lane.b32.xlu0 %v70, 127
  %v97 = vpop.permute.xlu0 %96
  %vm98 = vcmask 1039360
  %v99 = vsel %vm98, %v89, %v91
  %v100 = vsel %vm98, %v91, %v93
  %v101 = vsel %vm98, %v93, %v95
  %v102 = vsel %vm98, %v95, %v97
  %vm108 = vcmask 64512
  %v109 = vsel %vm108, %v76, 0
  %v111 = vsel %vm108, %v78, 0
  %v113 = vsel %vm108, %v80, 0
  %v115 = vsel %vm108, %v82, 0
  %117 = vmatprep.subr.mxu0 %v100
  %118 = vmatpush1.msra.mxu0 %v99
  %119 = vmatprep.subr.mxu0 0.0
  %120 = vmatpush1.msra.mxu0 0.0
  %121 = vmatprep.subr.mxu0 0.0
  %122 = vmatpush1.msra.mxu0 0.0
  %123 = vmatprep.subr.mxu0 0.0
  %124 = vmatpush1.msra.mxu0 0.0
  %125 = vmatprep.subr.mxu0 0.0
  %126 = vmatpush1.msra.mxu0 0.0
  %127 = vmatprep.subr.mxu0 0.0
  %128 = vmatpush1.msra.mxu0 0.0
  %129 = vmatprep.subr.mxu0 0.0
  %130 = vmatpush1.msra.mxu0 0.0
  %131 = vmatprep.subr.mxu0 0.0
  %132 = vmatpush1.msra.mxu0 0.0
  %133 = vmatprep.subr.mxu0 0.0
  %134 = vmatpush1.msra.mxu0 0.0
  %135 = vmatprep.subr.mxu0 0.0
  %136 = vmatpush1.msra.mxu0 0.0
  %137 = vmatprep.subr.mxu0 0.0
  %138 = vmatpush1.msra.mxu0 0.0
  %139 = vmatprep.subr.mxu0 0.0
  %140 = vmatpush1.msra.mxu0 0.0
  %141 = vmatprep.subr.mxu0 0.0
  %142 = vmatpush1.msra.mxu0 0.0
  %143 = vmatprep.subr.mxu0 0.0
  %144 = vmatpush1.msra.mxu0 0.0
  %145 = vmatprep.subr.mxu0 0.0
  %146 = vmatpush1.msra.mxu0 0.0
  %147 = vmatprep.subr.mxu0 0.0
  %148 = vmatpush1.msra.mxu0 0.0
  %149 = vmatprep.subr.mxu0 0.0
  %150 = vmatpush1.msra.mxu0 0.0
  %151 = vmatprep.subr.mxu0 0.0
  %152 = vmatpush1.msra.mxu0 0.0
  %153 = vmatprep.subr.mxu0 0.0
  %154 = vmatpush1.msra.mxu0 0.0
  %155 = vmatprep.subr.mxu0 0.0
  %156 = vmatpush1.msra.mxu0 0.0
  %157 = vmatprep.subr.mxu0 0.0
  %158 = vmatpush1.msra.mxu0 0.0
  %159 = vmatprep.subr.mxu0 0.0
  %160 = vmatpush1.msra.mxu0 0.0
  %161 = vmatprep.subr.mxu0 0.0
  %162 = vmatpush1.msra.mxu0 0.0
  %163 = vmatprep.subr.mxu0 0.0
  %164 = vmatpush1.msra.mxu0 0.0
  %165 = vmatprep.subr.mxu0 0.0
  %166 = vmatpush1.msra.mxu0 0.0
  %167 = vmatprep.subr.mxu0 0.0
  %168 = vmatpush1.msra.mxu0 0.0
  %169 = vmatprep.subr.mxu0 0.0
  %170 = vmatpush1.msra.mxu0 0.0
  %171 = vmatprep.subr.mxu0 0.0
  %172 = vmatpush1.msra.mxu0 0.0
  %173 = vmatprep.subr.mxu0 0.0
  %174 = vmatpush1.msra.mxu0 0.0
  %175 = vmatprep.subr.mxu0 0.0
  %176 = vmatpush1.msra.mxu0 0.0
  %177 = vmatprep.subr.mxu0 0.0
  %178 = vmatpush1.msra.mxu0 0.0
  %179 = vmatprep.subr.mxu0 0.0
  %180 = vmatpush1.msra.mxu0 0.0
  %181 = vmatprep.mubr.f32.mxu0 0.0
  %182 = vmatmul.mubr.f32.gmra.mrb[0].mxu0 %v109
  %v183 = vpop.f32.mrb[0].mxu0
  %v184 = vadd.f32 0.0, %v183
  %v185 = vpop.f32.mrb[0].mxu0
  %v186 = vadd.f32 0.0, %v185
  %187 = vmatprep.mubr.f32.mxu0 0.0
  %188 = vmatmul.mubr.f32.gmra.mrb[0].mxu0 %v111
  %v189 = vpop.f32.mrb[0].mxu0
  %v190 = vadd.f32 0.0, %v189
  %v191 = vpop.f32.mrb[0].mxu0
  %v192 = vadd.f32 0.0, %v191
  %193 = vmatprep.mubr.f32.mxu0 0.0
  %194 = vmatmul.mubr.f32.gmra.mrb[0].mxu0 %v113
  %v195 = vpop.f32.mrb[0].mxu0
  %v196 = vadd.f32 0.0, %v195
  %v197 = vpop.f32.mrb[0].mxu0
  %v198 = vadd.f32 0.0, %v197
  %199 = vmatprep.mubr.f32.mxu0 0.0
  %200 = vmatmul.mubr.f32.gmra.mrb[0].mxu0 %v115
  %v201 = vpop.f32.mrb[0].mxu0
  %v202 = vadd.f32 0.0, %v201
  %v203 = vpop.f32.mrb[0].mxu0
  %v204 = vadd.f32 0.0, %v203
  %205 = vdwg.mxu0
  %206 = vmatprep.subr.mxu0 %v102
  %207 = vmatpush1.msra.mxu0 %v101
  %208 = vmatprep.subr.mxu0 0.0
  %209 = vmatpush1.msra.mxu0 0.0
  %210 = vmatprep.subr.mxu0 0.0
  %211 = vmatpush1.msra.mxu0 0.0
  %212 = vmatprep.subr.mxu0 0.0
  %213 = vmatpush1.msra.mxu0 0.0
  %214 = vmatprep.subr.mxu0 0.0
  %215 = vmatpush1.msra.mxu0 0.0
  %216 = vmatprep.subr.mxu0 0.0
  %217 = vmatpush1.msra.mxu0 0.0
  %218 = vmatprep.subr.mxu0 0.0
  %219 = vmatpush1.msra.mxu0 0.0
  %220 = vmatprep.subr.mxu0 0.0
  %221 = vmatpush1.msra.mxu0 0.0
  %222 = vmatprep.subr.mxu0 0.0
  %223 = vmatpush1.msra.mxu0 0.0
  %224 = vmatprep.subr.mxu0 0.0
  %225 = vmatpush1.msra.mxu0 0.0
  %226 = vmatprep.subr.mxu0 0.0
  %227 = vmatpush1.msra.mxu0 0.0
  %228 = vmatprep.subr.mxu0 0.0
  %229 = vmatpush1.msra.mxu0 0.0
  %230 = vmatprep.subr.mxu0 0.0
  %231 = vmatpush1.msra.mxu0 0.0
  %232 = vmatprep.subr.mxu0 0.0
  %233 = vmatpush1.msra.mxu0 0.0
  %234 = vmatprep.subr.mxu0 0.0
  %235 = vmatpush1.msra.mxu0 0.0
  %236 = vmatprep.subr.mxu0 0.0
  %237 = vmatpush1.msra.mxu0 0.0
  %238 = vmatprep.subr.mxu0 0.0
  %239 = vmatpush1.msra.mxu0 0.0
  %240 = vmatprep.subr.mxu0 0.0
  %241 = vmatpush1.msra.mxu0 0.0
  %242 = vmatprep.subr.mxu0 0.0
  %243 = vmatpush1.msra.mxu0 0.0
  %244 = vmatprep.subr.mxu0 0.0
  %245 = vmatpush1.msra.mxu0 0.0
  %246 = vmatprep.subr.mxu0 0.0
  %247 = vmatpush1.msra.mxu0 0.0
  %248 = vmatprep.subr.mxu0 0.0
  %249 = vmatpush1.msra.mxu0 0.0
  %250 = vmatprep.subr.mxu0 0.0
  %251 = vmatpush1.msra.mxu0 0.0
  %252 = vmatprep.subr.mxu0 0.0
  %253 = vmatpush1.msra.mxu0 0.0
  %254 = vmatprep.subr.mxu0 0.0
  %255 = vmatpush1.msra.mxu0 0.0
  %256 = vmatprep.subr.mxu0 0.0
  %257 = vmatpush1.msra.mxu0 0.0
  %258 = vmatprep.subr.mxu0 0.0
  %259 = vmatpush1.msra.mxu0 0.0
  %260 = vmatprep.subr.mxu0 0.0
  %261 = vmatpush1.msra.mxu0 0.0
  %262 = vmatprep.subr.mxu0 0.0
  %263 = vmatpush1.msra.mxu0 0.0
  %264 = vmatprep.subr.mxu0 0.0
  %265 = vmatpush1.msra.mxu0 0.0
  %266 = vmatprep.subr.mxu0 0.0
  %267 = vmatpush1.msra.mxu0 0.0
  %268 = vmatprep.subr.mxu0 0.0
  %269 = vmatpush1.msra.mxu0 0.0
  %270 = vmatprep.mubr.f32.mxu0 0.0
  %271 = vmatmul.mubr.f32.gmra.mrb[0].mxu0 %v109
  %v272 = vpop.f32.mrb[0].mxu0
  %v273 = vadd.f32 0.0, %v272
  %v274 = vpop.f32.mrb[0].mxu0
  %v275 = vadd.f32 0.0, %v274
  %276 = vmatprep.mubr.f32.mxu0 0.0
  %277 = vmatmul.mubr.f32.gmra.mrb[0].mxu0 %v111
  %v278 = vpop.f32.mrb[0].mxu0
  %v279 = vadd.f32 0.0, %v278
  %v280 = vpop.f32.mrb[0].mxu0
  %v281 = vadd.f32 0.0, %v280
  %282 = vmatprep.mubr.f32.mxu0 0.0
  %283 = vmatmul.mubr.f32.gmra.mrb[0].mxu0 %v113
  %v284 = vpop.f32.mrb[0].mxu0
  %v285 = vadd.f32 0.0, %v284
  %v286 = vpop.f32.mrb[0].mxu0
  %v287 = vadd.f32 0.0, %v286
  %288 = vmatprep.mubr.f32.mxu0 0.0
  %289 = vmatmul.mubr.f32.gmra.mrb[0].mxu0 %v115
  %v290 = vpop.f32.mrb[0].mxu0
  %v291 = vadd.f32 0.0, %v290
  %v292 = vpop.f32.mrb[0].mxu0
  %v293 = vadd.f32 0.0, %v292
  %294 = vdwg.mxu0
  %295 = vmatprep.subr.mxu0 0.0
  %296 = vmatpush1.msra.mxu0 %v97
  %297 = vmatprep.subr.mxu0 0.0
  %298 = vmatpush1.msra.mxu0 0.0
  %299 = vmatprep.subr.mxu0 0.0
  %300 = vmatpush1.msra.mxu0 0.0
  %301 = vmatprep.subr.mxu0 0.0
  %302 = vmatpush1.msra.mxu0 0.0
  %303 = vmatprep.subr.mxu0 0.0
  %304 = vmatpush1.msra.mxu0 0.0
  %305 = vmatprep.subr.mxu0 0.0
  %306 = vmatpush1.msra.mxu0 0.0
  %307 = vmatprep.subr.mxu0 0.0
  %308 = vmatpush1.msra.mxu0 0.0
  %309 = vmatprep.subr.mxu0 0.0
  %310 = vmatpush1.msra.mxu0 0.0
  %311 = vmatprep.subr.mxu0 0.0
  %312 = vmatpush1.msra.mxu0 0.0
  %313 = vmatprep.subr.mxu0 0.0
  %314 = vmatpush1.msra.mxu0 0.0
  %315 = vmatprep.subr.mxu0 0.0
  %316 = vmatpush1.msra.mxu0 0.0
  %317 = vmatprep.subr.mxu0 0.0
  %318 = vmatpush1.msra.mxu0 0.0
  %319 = vmatprep.subr.mxu0 0.0
  %320 = vmatpush1.msra.mxu0 0.0
  %321 = vmatprep.subr.mxu0 0.0
  %322 = vmatpush1.msra.mxu0 0.0
  %323 = vmatprep.subr.mxu0 0.0
  %324 = vmatpush1.msra.mxu0 0.0
  %325 = vmatprep.subr.mxu0 0.0
  %326 = vmatpush1.msra.mxu0 0.0
  %327 = vmatprep.subr.mxu0 0.0
  %328 = vmatpush1.msra.mxu0 0.0
  %329 = vmatprep.subr.mxu0 0.0
  %330 = vmatpush1.msra.mxu0 0.0
  %331 = vmatprep.subr.mxu0 0.0
  %332 = vmatpush1.msra.mxu0 0.0
  %333 = vmatprep.subr.mxu0 0.0
  %334 = vmatpush1.msra.mxu0 0.0
  %335 = vmatprep.subr.mxu0 0.0
  %336 = vmatpush1.msra.mxu0 0.0
  %337 = vmatprep.subr.mxu0 0.0
  %338 = vmatpush1.msra.mxu0 0.0
  %339 = vmatprep.subr.mxu0 0.0
  %340 = vmatpush1.msra.mxu0 0.0
  %341 = vmatprep.subr.mxu0 0.0
  %342 = vmatpush1.msra.mxu0 0.0
  %343 = vmatprep.subr.mxu0 0.0
  %344 = vmatpush1.msra.mxu0 0.0
  %345 = vmatprep.subr.mxu0 0.0
  %346 = vmatpush1.msra.mxu0 0.0
  %347 = vmatprep.subr.mxu0 0.0
  %348 = vmatpush1.msra.mxu0 0.0
  %349 = vmatprep.subr.mxu0 0.0
  %350 = vmatpush1.msra.mxu0 0.0
  %351 = vmatprep.subr.mxu0 0.0
  %352 = vmatpush1.msra.mxu0 0.0
  %353 = vmatprep.subr.mxu0 0.0
  %354 = vmatpush1.msra.mxu0 0.0
  %355 = vmatprep.subr.mxu0 0.0
  %356 = vmatpush1.msra.mxu0 0.0
  %357 = vmatprep.subr.mxu0 0.0
  %358 = vmatpush1.msra.mxu0 0.0
  %359 = vmatprep.mubr.f32.mxu0 0.0
  %360 = vmatmul.mubr.f32.gmra.mrb[0].mxu0 %v109
  %v361 = vpop.f32.mrb[0].mxu0
  %v362 = vadd.f32 0.0, %v361
  %v363 = vpop.f32.mrb[0].mxu0
  %364 = vmatprep.mubr.f32.mxu0 0.0
  %365 = vmatmul.mubr.f32.gmra.mrb[0].mxu0 %v111
  %v366 = vpop.f32.mrb[0].mxu0
  %v367 = vadd.f32 0.0, %v366
  %v368 = vpop.f32.mrb[0].mxu0
  %369 = vmatprep.mubr.f32.mxu0 0.0
  %370 = vmatmul.mubr.f32.gmra.mrb[0].mxu0 %v113
  %v371 = vpop.f32.mrb[0].mxu0
  %v372 = vadd.f32 0.0, %v371
  %v373 = vpop.f32.mrb[0].mxu0
  %374 = vmatprep.mubr.f32.mxu0 0.0
  %375 = vmatmul.mubr.f32.gmra.mrb[0].mxu0 %v115
  %v376 = vpop.f32.mrb[0].mxu0
  %v377 = vadd.f32 0.0, %v376
  %v378 = vpop.f32.mrb[0].mxu0
  %379 = vdwg.mxu0
  %v380 = vsel %vm108, %v62, 0
  %v382 = vsel %vm108, %v63, 0
  %v384 = vsel %vm108, %v64, 0
  %v386 = vsel %vm108, %v65, 0
  %388 = vmatprep.subr.mxu0 %v67
  %389 = vmatpush1.msra.mxu0 %v66
  %390 = vmatprep.subr.mxu0 0.0
  %391 = vmatpush1.msra.mxu0 0.0
  %392 = vmatprep.subr.mxu0 0.0
  %393 = vmatpush1.msra.mxu0 0.0
  %394 = vmatprep.subr.mxu0 0.0
  %395 = vmatpush1.msra.mxu0 0.0
  %396 = vmatprep.subr.mxu0 0.0
  %397 = vmatpush1.msra.mxu0 0.0
  %398 = vmatprep.subr.mxu0 0.0
  %399 = vmatpush1.msra.mxu0 0.0
  %400 = vmatprep.subr.mxu0 0.0
  %401 = vmatpush1.msra.mxu0 0.0
  %402 = vmatprep.subr.mxu0 0.0
  %403 = vmatpush1.msra.mxu0 0.0
  %404 = vmatprep.subr.mxu0 0.0
  %405 = vmatpush1.msra.mxu0 0.0
  %406 = vmatprep.subr.mxu0 0.0
  %407 = vmatpush1.msra.mxu0 0.0
  %408 = vmatprep.subr.mxu0 0.0
  %409 = vmatpush1.msra.mxu0 0.0
  %410 = vmatprep.subr.mxu0 0.0
  %411 = vmatpush1.msra.mxu0 0.0
  %412 = vmatprep.subr.mxu0 0.0
  %413 = vmatpush1.msra.mxu0 0.0
  %414 = vmatprep.subr.mxu0 0.0
  %415 = vmatpush1.msra.mxu0 0.0
  %416 = vmatprep.subr.mxu0 0.0
  %417 = vmatpush1.msra.mxu0 0.0
  %418 = vmatprep.subr.mxu0 0.0
  %419 = vmatpush1.msra.mxu0 0.0
  %420 = vmatprep.subr.mxu0 0.0
  %421 = vmatpush1.msra.mxu0 0.0
  %422 = vmatprep.subr.mxu0 0.0
  %423 = vmatpush1.msra.mxu0 0.0
  %424 = vmatprep.subr.mxu0 0.0
  %425 = vmatpush1.msra.mxu0 0.0
  %426 = vmatprep.subr.mxu0 0.0
  %427 = vmatpush1.msra.mxu0 0.0
  %428 = vmatprep.subr.mxu0 0.0
  %429 = vmatpush1.msra.mxu0 0.0
  %430 = vmatprep.subr.mxu0 0.0
  %431 = vmatpush1.msra.mxu0 0.0
  %432 = vmatprep.subr.mxu0 0.0
  %433 = vmatpush1.msra.mxu0 0.0
  %434 = vmatprep.subr.mxu0 0.0
  %435 = vmatpush1.msra.mxu0 0.0
  %436 = vmatprep.subr.mxu0 0.0
  %437 = vmatpush1.msra.mxu0 0.0
  %438 = vmatprep.subr.mxu0 0.0
  %439 = vmatpush1.msra.mxu0 0.0
  %440 = vmatprep.subr.mxu0 0.0
  %441 = vmatpush1.msra.mxu0 0.0
  %442 = vmatprep.subr.mxu0 0.0
  %443 = vmatpush1.msra.mxu0 0.0
  %444 = vmatprep.subr.mxu0 0.0
  %445 = vmatpush1.msra.mxu0 0.0
  %446 = vmatprep.subr.mxu0 0.0
  %447 = vmatpush1.msra.mxu0 0.0
  %448 = vmatprep.subr.mxu0 0.0
  %449 = vmatpush1.msra.mxu0 0.0
  %450 = vmatprep.subr.mxu0 0.0
  %451 = vmatpush1.msra.mxu0 0.0
  %452 = vmatprep.mubr.f32.mxu0 0.0
  %453 = vmatmul.mubr.f32.gmra.mrb[0].mxu0 %v380
  %v454 = vpop.f32.mrb[0].mxu0
  %v455 = vadd.f32 %v184, %v454
  %v456 = vpop.f32.mrb[0].mxu0
  %v457 = vadd.f32 %v186, %v456
  %458 = vmatprep.mubr.f32.mxu0 0.0
  %459 = vmatmul.mubr.f32.gmra.mrb[0].mxu0 %v382
  %v460 = vpop.f32.mrb[0].mxu0
  %v461 = vadd.f32 %v190, %v460
  %v462 = vpop.f32.mrb[0].mxu0
  %v463 = vadd.f32 %v192, %v462
  %464 = vmatprep.mubr.f32.mxu0 0.0
  %465 = vmatmul.mubr.f32.gmra.mrb[0].mxu0 %v384
  %v466 = vpop.f32.mrb[0].mxu0
  %v467 = vadd.f32 %v196, %v466
  %v468 = vpop.f32.mrb[0].mxu0
  %v469 = vadd.f32 %v198, %v468
  %470 = vmatprep.mubr.f32.mxu0 0.0
  %471 = vmatmul.mubr.f32.gmra.mrb[0].mxu0 %v386
  %v472 = vpop.f32.mrb[0].mxu0
  %v473 = vadd.f32 %v202, %v472
  %v474 = vpop.f32.mrb[0].mxu0
  %v475 = vadd.f32 %v204, %v474
  %476 = vdwg.mxu0
  %477 = vmatprep.subr.mxu0 %v69
  %478 = vmatpush1.msra.mxu0 %v68
  %479 = vmatprep.subr.mxu0 0.0
  %480 = vmatpush1.msra.mxu0 0.0
  %481 = vmatprep.subr.mxu0 0.0
  %482 = vmatpush1.msra.mxu0 0.0
  %483 = vmatprep.subr.mxu0 0.0
  %484 = vmatpush1.msra.mxu0 0.0
  %485 = vmatprep.subr.mxu0 0.0
  %486 = vmatpush1.msra.mxu0 0.0
  %487 = vmatprep.subr.mxu0 0.0
  %488 = vmatpush1.msra.mxu0 0.0
  %489 = vmatprep.subr.mxu0 0.0
  %490 = vmatpush1.msra.mxu0 0.0
  %491 = vmatprep.subr.mxu0 0.0
  %492 = vmatpush1.msra.mxu0 0.0
  %493 = vmatprep.subr.mxu0 0.0
  %494 = vmatpush1.msra.mxu0 0.0
  %495 = vmatprep.subr.mxu0 0.0
  %496 = vmatpush1.msra.mxu0 0.0
  %497 = vmatprep.subr.mxu0 0.0
  %498 = vmatpush1.msra.mxu0 0.0
  %499 = vmatprep.subr.mxu0 0.0
  %500 = vmatpush1.msra.mxu0 0.0
  %501 = vmatprep.subr.mxu0 0.0
  %502 = vmatpush1.msra.mxu0 0.0
  %503 = vmatprep.subr.mxu0 0.0
  %504 = vmatpush1.msra.mxu0 0.0
  %505 = vmatprep.subr.mxu0 0.0
  %506 = vmatpush1.msra.mxu0 0.0
  %507 = vmatprep.subr.mxu0 0.0
  %508 = vmatpush1.msra.mxu0 0.0
  %509 = vmatprep.subr.mxu0 0.0
  %510 = vmatpush1.msra.mxu0 0.0
  %511 = vmatprep.subr.mxu0 0.0
  %512 = vmatpush1.msra.mxu0 0.0
  %513 = vmatprep.subr.mxu0 0.0
  %514 = vmatpush1.msra.mxu0 0.0
  %515 = vmatprep.subr.mxu0 0.0
  %516 = vmatpush1.msra.mxu0 0.0
  %517 = vmatprep.subr.mxu0 0.0
  %518 = vmatpush1.msra.mxu0 0.0
  %519 = vmatprep.subr.mxu0 0.0
  %520 = vmatpush1.msra.mxu0 0.0
  %521 = vmatprep.subr.mxu0 0.0
  %522 = vmatpush1.msra.mxu0 0.0
  %523 = vmatprep.subr.mxu0 0.0
  %524 = vmatpush1.msra.mxu0 0.0
  %525 = vmatprep.subr.mxu0 0.0
  %526 = vmatpush1.msra.mxu0 0.0
  %527 = vmatprep.subr.mxu0 0.0
  %528 = vmatpush1.msra.mxu0 0.0
  %529 = vmatprep.subr.mxu0 0.0
  %530 = vmatpush1.msra.mxu0 0.0
  %531 = vmatprep.subr.mxu0 0.0
  %532 = vmatpush1.msra.mxu0 0.0
  %533 = vmatprep.subr.mxu0 0.0
  %534 = vmatpush1.msra.mxu0 0.0
  %535 = vmatprep.subr.mxu0 0.0
  %536 = vmatpush1.msra.mxu0 0.0
  %537 = vmatprep.subr.mxu0 0.0
  %538 = vmatpush1.msra.mxu0 0.0
  %539 = vmatprep.subr.mxu0 0.0
  %540 = vmatpush1.msra.mxu0 0.0
  %541 = vmatprep.mubr.f32.mxu0 0.0
  %542 = vmatmul.mubr.f32.gmra.mrb[0].mxu0 %v380
  %v543 = vpop.f32.mrb[0].mxu0
  %v544 = vadd.f32 %v273, %v543
  %v545 = vpop.f32.mrb[0].mxu0
  %v546 = vadd.f32 %v275, %v545
  %547 = vmatprep.mubr.f32.mxu0 0.0
  %548 = vmatmul.mubr.f32.gmra.mrb[0].mxu0 %v382
  %v549 = vpop.f32.mrb[0].mxu0
  %v550 = vadd.f32 %v279, %v549
  %v551 = vpop.f32.mrb[0].mxu0
  %v552 = vadd.f32 %v281, %v551
  %553 = vmatprep.mubr.f32.mxu0 0.0
  %554 = vmatmul.mubr.f32.gmra.mrb[0].mxu0 %v384
  %v555 = vpop.f32.mrb[0].mxu0
  %v556 = vadd.f32 %v285, %v555
  %v557 = vpop.f32.mrb[0].mxu0
  %v558 = vadd.f32 %v287, %v557
  %559 = vmatprep.mubr.f32.mxu0 0.0
  %560 = vmatmul.mubr.f32.gmra.mrb[0].mxu0 %v386
  %v561 = vpop.f32.mrb[0].mxu0
  %v562 = vadd.f32 %v291, %v561
  %v563 = vpop.f32.mrb[0].mxu0
  %v564 = vadd.f32 %v293, %v563
  %565 = vdwg.mxu0
  %566 = vmatprep.subr.mxu0 0.0
  %567 = vmatpush1.msra.mxu0 %v70
  %568 = vmatprep.subr.mxu0 0.0
  %569 = vmatpush1.msra.mxu0 0.0
  %570 = vmatprep.subr.mxu0 0.0
  %571 = vmatpush1.msra.mxu0 0.0
  %572 = vmatprep.subr.mxu0 0.0
  %573 = vmatpush1.msra.mxu0 0.0
  %574 = vmatprep.subr.mxu0 0.0
  %575 = vmatpush1.msra.mxu0 0.0
  %576 = vmatprep.subr.mxu0 0.0
  %577 = vmatpush1.msra.mxu0 0.0
  %578 = vmatprep.subr.mxu0 0.0
  %579 = vmatpush1.msra.mxu0 0.0
  %580 = vmatprep.subr.mxu0 0.0
  %581 = vmatpush1.msra.mxu0 0.0
  %582 = vmatprep.subr.mxu0 0.0
  %583 = vmatpush1.msra.mxu0 0.0
  %584 = vmatprep.subr.mxu0 0.0
  %585 = vmatpush1.msra.mxu0 0.0
  %586 = vmatprep.subr.mxu0 0.0
  %587 = vmatpush1.msra.mxu0 0.0
  %588 = vmatprep.subr.mxu0 0.0
  %589 = vmatpush1.msra.mxu0 0.0
  %590 = vmatprep.subr.mxu0 0.0
  %591 = vmatpush1.msra.mxu0 0.0
  %592 = vmatprep.subr.mxu0 0.0
  %593 = vmatpush1.msra.mxu0 0.0
  %594 = vmatprep.subr.mxu0 0.0
  %595 = vmatpush1.msra.mxu0 0.0
  %596 = vmatprep.subr.mxu0 0.0
  %597 = vmatpush1.msra.mxu0 0.0
  %598 = vmatprep.subr.mxu0 0.0
  %599 = vmatpush1.msra.mxu0 0.0
  %600 = vmatprep.subr.mxu0 0.0
  %601 = vmatpush1.msra.mxu0 0.0
  %602 = vmatprep.subr.mxu0 0.0
  %603 = vmatpush1.msra.mxu0 0.0
  %604 = vmatprep.subr.mxu0 0.0
  %605 = vmatpush1.msra.mxu0 0.0
  %606 = vmatprep.subr.mxu0 0.0
  %607 = vmatpush1.msra.mxu0 0.0
  %608 = vmatprep.subr.mxu0 0.0
  %609 = vmatpush1.msra.mxu0 0.0
  %610 = vmatprep.subr.mxu0 0.0
  %611 = vmatpush1.msra.mxu0 0.0
  %612 = vmatprep.subr.mxu0 0.0
  %613 = vmatpush1.msra.mxu0 0.0
  %614 = vmatprep.subr.mxu0 0.0
  %615 = vmatpush1.msra.mxu0 0.0
  %616 = vmatprep.subr.mxu0 0.0
  %617 = vmatpush1.msra.mxu0 0.0
  %618 = vmatprep.subr.mxu0 0.0
  %619 = vmatpush1.msra.mxu0 0.0
  %620 = vmatprep.subr.mxu0 0.0
  %621 = vmatpush1.msra.mxu0 0.0
  %622 = vmatprep.subr.mxu0 0.0
  %623 = vmatpush1.msra.mxu0 0.0
  %624 = vmatprep.subr.mxu0 0.0
  %625 = vmatpush1.msra.mxu0 0.0
  %626 = vmatprep.subr.mxu0 0.0
  %627 = vmatpush1.msra.mxu0 0.0
  %628 = vmatprep.subr.mxu0 0.0
  %629 = vmatpush1.msra.mxu0 0.0
  %630 = vmatprep.mubr.f32.mxu0 0.0
  %631 = vmatmul.mubr.f32.gmra.mrb[0].mxu0 %v380
  %v632 = vpop.f32.mrb[0].mxu0
  %v633 = vadd.f32 %v362, %v632
  %v634 = vpop.f32.mrb[0].mxu0
  %635 = vmatprep.mubr.f32.mxu0 0.0
  %636 = vmatmul.mubr.f32.gmra.mrb[0].mxu0 %v382
  %v637 = vpop.f32.mrb[0].mxu0
  %v638 = vadd.f32 %v367, %v637
  %v639 = vpop.f32.mrb[0].mxu0
  %640 = vmatprep.mubr.f32.mxu0 0.0
  %641 = vmatmul.mubr.f32.gmra.mrb[0].mxu0 %v384
  %v642 = vpop.f32.mrb[0].mxu0
  %v643 = vadd.f32 %v372, %v642
  %v644 = vpop.f32.mrb[0].mxu0
  %645 = vmatprep.mubr.f32.mxu0 0.0
  %646 = vmatmul.mubr.f32.gmra.mrb[0].mxu0 %v386
  %v647 = vpop.f32.mrb[0].mxu0
  %v648 = vadd.f32 %v377, %v647
  %v649 = vpop.f32.mrb[0].mxu0
  %650 = vdwg.mxu0
  %651 = vrot.lane.b32.xlu0 %v62, 112
  %v652 = vpop.permute.xlu0 %651
  %653 = vrot.lane.b32.xlu0 %v63, 112
  %v654 = vpop.permute.xlu0 %653
  %655 = vrot.lane.b32.xlu0 %v64, 112
  %v656 = vpop.permute.xlu0 %655
  %657 = vrot.lane.b32.xlu0 %v65, 112
  %v658 = vpop.permute.xlu0 %657
  %659 = vrot.lane.b32.xlu0 %v66, 126
  %v660 = vpop.permute.xlu0 %659
  %661 = vrot.lane.b32.xlu0 %v67, 126
  %v662 = vpop.permute.xlu0 %661
  %663 = vrot.lane.b32.xlu0 %v68, 126
  %v664 = vpop.permute.xlu0 %663
  %665 = vrot.lane.b32.xlu0 %v69, 126
  %v666 = vpop.permute.xlu0 %665
  %667 = vrot.lane.b32.xlu0 %v70, 126
  %v668 = vpop.permute.xlu0 %667
  %vm669 = vcmask 1031168
  %v670 = vsel %vm669, %v660, %v662
  %v671 = vsel %vm669, %v662, %v664
  %v672 = vsel %vm669, %v664, %v666
  %v673 = vsel %vm669, %v666, %v668
  %v679 = vsel %vm108, %v652, 0
  %v681 = vsel %vm108, %v654, 0
  %v683 = vsel %vm108, %v656, 0
  %v685 = vsel %vm108, %v658, 0
  %687 = vmatprep.subr.mxu0 %v671
  %688 = vmatpush1.msra.mxu0 %v670
  %689 = vmatprep.subr.mxu0 0.0
  %690 = vmatpush1.msra.mxu0 0.0
  %691 = vmatprep.subr.mxu0 0.0
  %692 = vmatpush1.msra.mxu0 0.0
  %693 = vmatprep.subr.mxu0 0.0
  %694 = vmatpush1.msra.mxu0 0.0
  %695 = vmatprep.subr.mxu0 0.0
  %696 = vmatpush1.msra.mxu0 0.0
  %697 = vmatprep.subr.mxu0 0.0
  %698 = vmatpush1.msra.mxu0 0.0
  %699 = vmatprep.subr.mxu0 0.0
  %700 = vmatpush1.msra.mxu0 0.0
  %701 = vmatprep.subr.mxu0 0.0
  %702 = vmatpush1.msra.mxu0 0.0
  %703 = vmatprep.subr.mxu0 0.0
  %704 = vmatpush1.msra.mxu0 0.0
  %705 = vmatprep.subr.mxu0 0.0
  %706 = vmatpush1.msra.mxu0 0.0
  %707 = vmatprep.subr.mxu0 0.0
  %708 = vmatpush1.msra.mxu0 0.0
  %709 = vmatprep.subr.mxu0 0.0
  %710 = vmatpush1.msra.mxu0 0.0
  %711 = vmatprep.subr.mxu0 0.0
  %712 = vmatpush1.msra.mxu0 0.0
  %713 = vmatprep.subr.mxu0 0.0
  %714 = vmatpush1.msra.mxu0 0.0
  %715 = vmatprep.subr.mxu0 0.0
  %716 = vmatpush1.msra.mxu0 0.0
  %717 = vmatprep.subr.mxu0 0.0
  %718 = vmatpush1.msra.mxu0 0.0
  %719 = vmatprep.subr.mxu0 0.0
  %720 = vmatpush1.msra.mxu0 0.0
  %721 = vmatprep.subr.mxu0 0.0
  %722 = vmatpush1.msra.mxu0 0.0
  %723 = vmatprep.subr.mxu0 0.0
  %724 = vmatpush1.msra.mxu0 0.0
  %725 = vmatprep.subr.mxu0 0.0
  %726 = vmatpush1.msra.mxu0 0.0
  %727 = vmatprep.subr.mxu0 0.0
  %728 = vmatpush1.msra.mxu0 0.0
  %729 = vmatprep.subr.mxu0 0.0
  %730 = vmatpush1.msra.mxu0 0.0
  %731 = vmatprep.subr.mxu0 0.0
  %732 = vmatpush1.msra.mxu0 0.0
  %733 = vmatprep.subr.mxu0 0.0
  %734 = vmatpush1.msra.mxu0 0.0
  %735 = vmatprep.subr.mxu0 0.0
  %736 = vmatpush1.msra.mxu0 0.0
  %737 = vmatprep.subr.mxu0 0.0
  %738 = vmatpush1.msra.mxu0 0.0
  %739 = vmatprep.subr.mxu0 0.0
  %740 = vmatpush1.msra.mxu0 0.0
  %741 = vmatprep.subr.mxu0 0.0
  %742 = vmatpush1.msra.mxu0 0.0
  %743 = vmatprep.subr.mxu0 0.0
  %744 = vmatpush1.msra.mxu0 0.0
  %745 = vmatprep.subr.mxu0 0.0
  %746 = vmatpush1.msra.mxu0 0.0
  %747 = vmatprep.subr.mxu0 0.0
  %748 = vmatpush1.msra.mxu0 0.0
  %749 = vmatprep.subr.mxu0 0.0
  %750 = vmatpush1.msra.mxu0 0.0
  %751 = vmatprep.mubr.f32.mxu0 0.0
  %752 = vmatmul.mubr.f32.gmra.mrb[0].mxu0 %v679
  %v753 = vpop.f32.mrb[0].mxu0
  %v754 = vadd.f32 0.0, %v753
  %v755 = vpop.f32.mrb[0].mxu0
  %v756 = vadd.f32 0.0, %v755
  %757 = vmatprep.mubr.f32.mxu0 0.0
  %758 = vmatmul.mubr.f32.gmra.mrb[0].mxu0 %v681
  %v759 = vpop.f32.mrb[0].mxu0
  %v760 = vadd.f32 0.0, %v759
  %v761 = vpop.f32.mrb[0].mxu0
  %v762 = vadd.f32 0.0, %v761
  %763 = vmatprep.mubr.f32.mxu0 0.0
  %764 = vmatmul.mubr.f32.gmra.mrb[0].mxu0 %v683
  %v765 = vpop.f32.mrb[0].mxu0
  %v766 = vadd.f32 0.0, %v765
  %v767 = vpop.f32.mrb[0].mxu0
  %v768 = vadd.f32 0.0, %v767
  %769 = vmatprep.mubr.f32.mxu0 0.0
  %770 = vmatmul.mubr.f32.gmra.mrb[0].mxu0 %v685
  %v771 = vpop.f32.mrb[0].mxu0
  %v772 = vadd.f32 0.0, %v771
  %v773 = vpop.f32.mrb[0].mxu0
  %v774 = vadd.f32 0.0, %v773
  %775 = vdwg.mxu0
  %776 = vmatprep.subr.mxu0 %v673
  %777 = vmatpush1.msra.mxu0 %v672
  %778 = vmatprep.subr.mxu0 0.0
  %779 = vmatpush1.msra.mxu0 0.0
  %780 = vmatprep.subr.mxu0 0.0
  %781 = vmatpush1.msra.mxu0 0.0
  %782 = vmatprep.subr.mxu0 0.0
  %783 = vmatpush1.msra.mxu0 0.0
  %784 = vmatprep.subr.mxu0 0.0
  %785 = vmatpush1.msra.mxu0 0.0
  %786 = vmatprep.subr.mxu0 0.0
  %787 = vmatpush1.msra.mxu0 0.0
  %788 = vmatprep.subr.mxu0 0.0
  %789 = vmatpush1.msra.mxu0 0.0
  %790 = vmatprep.subr.mxu0 0.0
  %791 = vmatpush1.msra.mxu0 0.0
  %792 = vmatprep.subr.mxu0 0.0
  %793 = vmatpush1.msra.mxu0 0.0
  %794 = vmatprep.subr.mxu0 0.0
  %795 = vmatpush1.msra.mxu0 0.0
  %796 = vmatprep.subr.mxu0 0.0
  %797 = vmatpush1.msra.mxu0 0.0
  %798 = vmatprep.subr.mxu0 0.0
  %799 = vmatpush1.msra.mxu0 0.0
  %800 = vmatprep.subr.mxu0 0.0
  %801 = vmatpush1.msra.mxu0 0.0
  %802 = vmatprep.subr.mxu0 0.0
  %803 = vmatpush1.msra.mxu0 0.0
  %804 = vmatprep.subr.mxu0 0.0
  %805 = vmatpush1.msra.mxu0 0.0
  %806 = vmatprep.subr.mxu0 0.0
  %807 = vmatpush1.msra.mxu0 0.0
  %808 = vmatprep.subr.mxu0 0.0
  %809 = vmatpush1.msra.mxu0 0.0
  %810 = vmatprep.subr.mxu0 0.0
  %811 = vmatpush1.msra.mxu0 0.0
  %812 = vmatprep.subr.mxu0 0.0
  %813 = vmatpush1.msra.mxu0 0.0
  %814 = vmatprep.subr.mxu0 0.0
  %815 = vmatpush1.msra.mxu0 0.0
  %816 = vmatprep.subr.mxu0 0.0
  %817 = vmatpush1.msra.mxu0 0.0
  %818 = vmatprep.subr.mxu0 0.0
  %819 = vmatpush1.msra.mxu0 0.0
  %820 = vmatprep.subr.mxu0 0.0
  %821 = vmatpush1.msra.mxu0 0.0
  %822 = vmatprep.subr.mxu0 0.0
  %823 = vmatpush1.msra.mxu0 0.0
  %824 = vmatprep.subr.mxu0 0.0
  %825 = vmatpush1.msra.mxu0 0.0
  %826 = vmatprep.subr.mxu0 0.0
  %827 = vmatpush1.msra.mxu0 0.0
  %828 = vmatprep.subr.mxu0 0.0
  %829 = vmatpush1.msra.mxu0 0.0
  %830 = vmatprep.subr.mxu0 0.0
  %831 = vmatpush1.msra.mxu0 0.0
  %832 = vmatprep.subr.mxu0 0.0
  %833 = vmatpush1.msra.mxu0 0.0
  %834 = vmatprep.subr.mxu0 0.0
  %835 = vmatpush1.msra.mxu0 0.0
  %836 = vmatprep.subr.mxu0 0.0
  %837 = vmatpush1.msra.mxu0 0.0
  %838 = vmatprep.subr.mxu0 0.0
  %839 = vmatpush1.msra.mxu0 0.0
  %840 = vmatprep.mubr.f32.mxu0 0.0
  %841 = vmatmul.mubr.f32.gmra.mrb[0].mxu0 %v679
  %v842 = vpop.f32.mrb[0].mxu0
  %v843 = vadd.f32 0.0, %v842
  %v844 = vpop.f32.mrb[0].mxu0
  %v845 = vadd.f32 0.0, %v844
  %846 = vmatprep.mubr.f32.mxu0 0.0
  %847 = vmatmul.mubr.f32.gmra.mrb[0].mxu0 %v681
  %v848 = vpop.f32.mrb[0].mxu0
  %v849 = vadd.f32 0.0, %v848
  %v850 = vpop.f32.mrb[0].mxu0
  %v851 = vadd.f32 0.0, %v850
  %852 = vmatprep.mubr.f32.mxu0 0.0
  %853 = vmatmul.mubr.f32.gmra.mrb[0].mxu0 %v683
  %v854 = vpop.f32.mrb[0].mxu0
  %v855 = vadd.f32 0.0, %v854
  %v856 = vpop.f32.mrb[0].mxu0
  %v857 = vadd.f32 0.0, %v856
  %858 = vmatprep.mubr.f32.mxu0 0.0
  %859 = vmatmul.mubr.f32.gmra.mrb[0].mxu0 %v685
  %v860 = vpop.f32.mrb[0].mxu0
  %v861 = vadd.f32 0.0, %v860
  %v862 = vpop.f32.mrb[0].mxu0
  %v863 = vadd.f32 0.0, %v862
  %864 = vdwg.mxu0
  %865 = vmatprep.subr.mxu0 0.0
  %866 = vmatpush1.msra.mxu0 %v668
  %867 = vmatprep.subr.mxu0 0.0
  %868 = vmatpush1.msra.mxu0 0.0
  %869 = vmatprep.subr.mxu0 0.0
  %870 = vmatpush1.msra.mxu0 0.0
  %871 = vmatprep.subr.mxu0 0.0
  %872 = vmatpush1.msra.mxu0 0.0
  %873 = vmatprep.subr.mxu0 0.0
  %874 = vmatpush1.msra.mxu0 0.0
  %875 = vmatprep.subr.mxu0 0.0
  %876 = vmatpush1.msra.mxu0 0.0
  %877 = vmatprep.subr.mxu0 0.0
  %878 = vmatpush1.msra.mxu0 0.0
  %879 = vmatprep.subr.mxu0 0.0
  %880 = vmatpush1.msra.mxu0 0.0
  %881 = vmatprep.subr.mxu0 0.0
  %882 = vmatpush1.msra.mxu0 0.0
  %883 = vmatprep.subr.mxu0 0.0
  %884 = vmatpush1.msra.mxu0 0.0
  %885 = vmatprep.subr.mxu0 0.0
  %886 = vmatpush1.msra.mxu0 0.0
  %887 = vmatprep.subr.mxu0 0.0
  %888 = vmatpush1.msra.mxu0 0.0
  %889 = vmatprep.subr.mxu0 0.0
  %890 = vmatpush1.msra.mxu0 0.0
  %891 = vmatprep.subr.mxu0 0.0
  %892 = vmatpush1.msra.mxu0 0.0
  %893 = vmatprep.subr.mxu0 0.0
  %894 = vmatpush1.msra.mxu0 0.0
  %895 = vmatprep.subr.mxu0 0.0
  %896 = vmatpush1.msra.mxu0 0.0
  %897 = vmatprep.subr.mxu0 0.0
  %898 = vmatpush1.msra.mxu0 0.0
  %899 = vmatprep.subr.mxu0 0.0
  %900 = vmatpush1.msra.mxu0 0.0
  %901 = vmatprep.subr.mxu0 0.0
  %902 = vmatpush1.msra.mxu0 0.0
  %903 = vmatprep.subr.mxu0 0.0
  %904 = vmatpush1.msra.mxu0 0.0
  %905 = vmatprep.subr.mxu0 0.0
  %906 = vmatpush1.msra.mxu0 0.0
  %907 = vmatprep.subr.mxu0 0.0
  %908 = vmatpush1.msra.mxu0 0.0
  %909 = vmatprep.subr.mxu0 0.0
  %910 = vmatpush1.msra.mxu0 0.0
  %911 = vmatprep.subr.mxu0 0.0
  %912 = vmatpush1.msra.mxu0 0.0
  %913 = vmatprep.subr.mxu0 0.0
  %914 = vmatpush1.msra.mxu0 0.0
  %915 = vmatprep.subr.mxu0 0.0
  %916 = vmatpush1.msra.mxu0 0.0
  %917 = vmatprep.subr.mxu0 0.0
  %918 = vmatpush1.msra.mxu0 0.0
  %919 = vmatprep.subr.mxu0 0.0
  %920 = vmatpush1.msra.mxu0 0.0
  %921 = vmatprep.subr.mxu0 0.0
  %922 = vmatpush1.msra.mxu0 0.0
  %923 = vmatprep.subr.mxu0 0.0
  %924 = vmatpush1.msra.mxu0 0.0
  %925 = vmatprep.subr.mxu0 0.0
  %926 = vmatpush1.msra.mxu0 0.0
  %927 = vmatprep.subr.mxu0 0.0
  %928 = vmatpush1.msra.mxu0 0.0
  %929 = vmatprep.mubr.f32.mxu0 0.0
  %930 = vmatmul.mubr.f32.gmra.mrb[0].mxu0 %v679
  %v931 = vpop.f32.mrb[0].mxu0
  %v932 = vadd.f32 0.0, %v931
  %v933 = vpop.f32.mrb[0].mxu0
  %934 = vmatprep.mubr.f32.mxu0 0.0
  %935 = vmatmul.mubr.f32.gmra.mrb[0].mxu0 %v681
  %v936 = vpop.f32.mrb[0].mxu0
  %v937 = vadd.f32 0.0, %v936
  %v938 = vpop.f32.mrb[0].mxu0
  %939 = vmatprep.mubr.f32.mxu0 0.0
  %940 = vmatmul.mubr.f32.gmra.mrb[0].mxu0 %v683
  %v941 = vpop.f32.mrb[0].mxu0
  %v942 = vadd.f32 0.0, %v941
  %v943 = vpop.f32.mrb[0].mxu0
  %944 = vmatprep.mubr.f32.mxu0 0.0
  %945 = vmatmul.mubr.f32.gmra.mrb[0].mxu0 %v685
  %v946 = vpop.f32.mrb[0].mxu0
  %v947 = vadd.f32 0.0, %v946
  %v948 = vpop.f32.mrb[0].mxu0
  %949 = vdwg.mxu0
  %v950 = vadd.f32 %v455, %v754
  %v951 = vadd.f32 %v457, %v756
  %v952 = vadd.f32 %v544, %v843
  %v953 = vadd.f32 %v546, %v845
  %v954 = vadd.f32 %v633, %v932
  %v955 = vadd.f32 %v461, %v760
  %v956 = vadd.f32 %v463, %v762
  %v957 = vadd.f32 %v550, %v849
  %v958 = vadd.f32 %v552, %v851
  %v959 = vadd.f32 %v638, %v937
  %v960 = vadd.f32 %v467, %v766
  %v961 = vadd.f32 %v469, %v768
  %v962 = vadd.f32 %v556, %v855
  %v963 = vadd.f32 %v558, %v857
  %v964 = vadd.f32 %v643, %v942
  %v965 = vadd.f32 %v473, %v772
  %v966 = vadd.f32 %v475, %v774
  %v967 = vadd.f32 %v562, %v861
  %v968 = vadd.f32 %v564, %v863
  %v969 = vadd.f32 %v648, %v947
  %970 = vrot.lane.b32.xlu0 %v62, 104
  %v971 = vpop.permute.xlu0 %970
  %972 = vrot.lane.b32.xlu0 %v63, 104
  %v973 = vpop.permute.xlu0 %972
  %974 = vrot.lane.b32.xlu0 %v64, 104
  %v975 = vpop.permute.xlu0 %974
  %976 = vrot.lane.b32.xlu0 %v65, 104
  %v977 = vpop.permute.xlu0 %976
  %978 = vrot.lane.b32.xlu0 %v66, 110
  %v979 = vpop.permute.xlu0 %978
  %980 = vrot.lane.b32.xlu0 %v67, 110
  %v981 = vpop.permute.xlu0 %980
  %982 = vrot.lane.b32.xlu0 %v68, 110
  %v983 = vpop.permute.xlu0 %982
  %984 = vrot.lane.b32.xlu0 %v69, 110
  %v985 = vpop.permute.xlu0 %984
  %986 = vrot.lane.b32.xlu0 %v70, 110
  %v987 = vpop.permute.xlu0 %986
  %vm988 = vcmask 900096
  %v989 = vsel %vm988, %v979, %v981
  %v990 = vsel %vm988, %v981, %v983
  %v991 = vsel %vm988, %v983, %v985
  %v992 = vsel %vm988, %v985, %v987
  %v998 = vsel %vm108, %v971, 0
  %v1000 = vsel %vm108, %v973, 0
  %v1002 = vsel %vm108, %v975, 0
  %v1004 = vsel %vm108, %v977, 0
  %1006 = vmatprep.subr.mxu0 %v990
  %1007 = vmatpush1.msra.mxu0 %v989
  %1008 = vmatprep.subr.mxu0 0.0
  %1009 = vmatpush1.msra.mxu0 0.0
  %1010 = vmatprep.subr.mxu0 0.0
  %1011 = vmatpush1.msra.mxu0 0.0
  %1012 = vmatprep.subr.mxu0 0.0
  %1013 = vmatpush1.msra.mxu0 0.0
  %1014 = vmatprep.subr.mxu0 0.0
  %1015 = vmatpush1.msra.mxu0 0.0
  %1016 = vmatprep.subr.mxu0 0.0
  %1017 = vmatpush1.msra.mxu0 0.0
  %1018 = vmatprep.subr.mxu0 0.0
  %1019 = vmatpush1.msra.mxu0 0.0
  %1020 = vmatprep.subr.mxu0 0.0
  %1021 = vmatpush1.msra.mxu0 0.0
  %1022 = vmatprep.subr.mxu0 0.0
  %1023 = vmatpush1.msra.mxu0 0.0
  %1024 = vmatprep.subr.mxu0 0.0
  %1025 = vmatpush1.msra.mxu0 0.0
  %1026 = vmatprep.subr.mxu0 0.0
  %1027 = vmatpush1.msra.mxu0 0.0
  %1028 = vmatprep.subr.mxu0 0.0
  %1029 = vmatpush1.msra.mxu0 0.0
  %1030 = vmatprep.subr.mxu0 0.0
  %1031 = vmatpush1.msra.mxu0 0.0
  %1032 = vmatprep.subr.mxu0 0.0
  %1033 = vmatpush1.msra.mxu0 0.0
  %1034 = vmatprep.subr.mxu0 0.0
  %1035 = vmatpush1.msra.mxu0 0.0
  %1036 = vmatprep.subr.mxu0 0.0
  %1037 = vmatpush1.msra.mxu0 0.0
  %1038 = vmatprep.subr.mxu0 0.0
  %1039 = vmatpush1.msra.mxu0 0.0
  %1040 = vmatprep.subr.mxu0 0.0
  %1041 = vmatpush1.msra.mxu0 0.0
  %1042 = vmatprep.subr.mxu0 0.0
  %1043 = vmatpush1.msra.mxu0 0.0
  %1044 = vmatprep.subr.mxu0 0.0
  %1045 = vmatpush1.msra.mxu0 0.0
  %1046 = vmatprep.subr.mxu0 0.0
  %1047 = vmatpush1.msra.mxu0 0.0
  %1048 = vmatprep.subr.mxu0 0.0
  %1049 = vmatpush1.msra.mxu0 0.0
  %1050 = vmatprep.subr.mxu0 0.0
  %1051 = vmatpush1.msra.mxu0 0.0
  %1052 = vmatprep.subr.mxu0 0.0
  %1053 = vmatpush1.msra.mxu0 0.0
  %1054 = vmatprep.subr.mxu0 0.0
  %1055 = vmatpush1.msra.mxu0 0.0
  %1056 = vmatprep.subr.mxu0 0.0
  %1057 = vmatpush1.msra.mxu0 0.0
  %1058 = vmatprep.subr.mxu0 0.0
  %1059 = vmatpush1.msra.mxu0 0.0
  %1060 = vmatprep.subr.mxu0 0.0
  %1061 = vmatpush1.msra.mxu0 0.0
  %1062 = vmatprep.subr.mxu0 0.0
  %1063 = vmatpush1.msra.mxu0 0.0
  %1064 = vmatprep.subr.mxu0 0.0
  %1065 = vmatpush1.msra.mxu0 0.0
  %1066 = vmatprep.subr.mxu0 0.0
  %1067 = vmatpush1.msra.mxu0 0.0
  %1068 = vmatprep.subr.mxu0 0.0
  %1069 = vmatpush1.msra.mxu0 0.0
  %1070 = vmatprep.mubr.f32.mxu0 0.0
  %1071 = vmatmul.mubr.f32.gmra.mrb[0].mxu0 %v998
  %v1072 = vpop.f32.mrb[0].mxu0
  %v1073 = vadd.f32 0.0, %v1072
  %v1074 = vpop.f32.mrb[0].mxu0
  %v1075 = vadd.f32 0.0, %v1074
  %1076 = vmatprep.mubr.f32.mxu0 0.0
  %1077 = vmatmul.mubr.f32.gmra.mrb[0].mxu0 %v1000
  %v1078 = vpop.f32.mrb[0].mxu0
  %v1079 = vadd.f32 0.0, %v1078
  %v1080 = vpop.f32.mrb[0].mxu0
  %v1081 = vadd.f32 0.0, %v1080
  %1082 = vmatprep.mubr.f32.mxu0 0.0
  %1083 = vmatmul.mubr.f32.gmra.mrb[0].mxu0 %v1002
  %v1084 = vpop.f32.mrb[0].mxu0
  %v1085 = vadd.f32 0.0, %v1084
  %v1086 = vpop.f32.mrb[0].mxu0
  %v1087 = vadd.f32 0.0, %v1086
  %1088 = vmatprep.mubr.f32.mxu0 0.0
  %1089 = vmatmul.mubr.f32.gmra.mrb[0].mxu0 %v1004
  %v1090 = vpop.f32.mrb[0].mxu0
  %v1091 = vadd.f32 0.0, %v1090
  %v1092 = vpop.f32.mrb[0].mxu0
  %v1093 = vadd.f32 0.0, %v1092
  %1094 = vdwg.mxu0
  %1095 = vmatprep.subr.mxu0 %v992
  %1096 = vmatpush1.msra.mxu0 %v991
  %1097 = vmatprep.subr.mxu0 0.0
  %1098 = vmatpush1.msra.mxu0 0.0
  %1099 = vmatprep.subr.mxu0 0.0
  %1100 = vmatpush1.msra.mxu0 0.0
  %1101 = vmatprep.subr.mxu0 0.0
  %1102 = vmatpush1.msra.mxu0 0.0
  %1103 = vmatprep.subr.mxu0 0.0
  %1104 = vmatpush1.msra.mxu0 0.0
  %1105 = vmatprep.subr.mxu0 0.0
  %1106 = vmatpush1.msra.mxu0 0.0
  %1107 = vmatprep.subr.mxu0 0.0
  %1108 = vmatpush1.msra.mxu0 0.0
  %1109 = vmatprep.subr.mxu0 0.0
  %1110 = vmatpush1.msra.mxu0 0.0
  %1111 = vmatprep.subr.mxu0 0.0
  %1112 = vmatpush1.msra.mxu0 0.0
  %1113 = vmatprep.subr.mxu0 0.0
  %1114 = vmatpush1.msra.mxu0 0.0
  %1115 = vmatprep.subr.mxu0 0.0
  %1116 = vmatpush1.msra.mxu0 0.0
  %1117 = vmatprep.subr.mxu0 0.0
  %1118 = vmatpush1.msra.mxu0 0.0
  %1119 = vmatprep.subr.mxu0 0.0
  %1120 = vmatpush1.msra.mxu0 0.0
  %1121 = vmatprep.subr.mxu0 0.0
  %1122 = vmatpush1.msra.mxu0 0.0
  %1123 = vmatprep.subr.mxu0 0.0
  %1124 = vmatpush1.msra.mxu0 0.0
  %1125 = vmatprep.subr.mxu0 0.0
  %1126 = vmatpush1.msra.mxu0 0.0
  %1127 = vmatprep.subr.mxu0 0.0
  %1128 = vmatpush1.msra.mxu0 0.0
  %1129 = vmatprep.subr.mxu0 0.0
  %1130 = vmatpush1.msra.mxu0 0.0
  %1131 = vmatprep.subr.mxu0 0.0
  %1132 = vmatpush1.msra.mxu0 0.0
  %1133 = vmatprep.subr.mxu0 0.0
  %1134 = vmatpush1.msra.mxu0 0.0
  %1135 = vmatprep.subr.mxu0 0.0
  %1136 = vmatpush1.msra.mxu0 0.0
  %1137 = vmatprep.subr.mxu0 0.0
  %1138 = vmatpush1.msra.mxu0 0.0
  %1139 = vmatprep.subr.mxu0 0.0
  %1140 = vmatpush1.msra.mxu0 0.0
  %1141 = vmatprep.subr.mxu0 0.0
  %1142 = vmatpush1.msra.mxu0 0.0
  %1143 = vmatprep.subr.mxu0 0.0
  %1144 = vmatpush1.msra.mxu0 0.0
  %1145 = vmatprep.subr.mxu0 0.0
  %1146 = vmatpush1.msra.mxu0 0.0
  %1147 = vmatprep.subr.mxu0 0.0
  %1148 = vmatpush1.msra.mxu0 0.0
  %1149 = vmatprep.subr.mxu0 0.0
  %1150 = vmatpush1.msra.mxu0 0.0
  %1151 = vmatprep.subr.mxu0 0.0
  %1152 = vmatpush1.msra.mxu0 0.0
  %1153 = vmatprep.subr.mxu0 0.0
  %1154 = vmatpush1.msra.mxu0 0.0
  %1155 = vmatprep.subr.mxu0 0.0
  %1156 = vmatpush1.msra.mxu0 0.0
  %1157 = vmatprep.subr.mxu0 0.0
  %1158 = vmatpush1.msra.mxu0 0.0
  %1159 = vmatprep.mubr.f32.mxu0 0.0
  %1160 = vmatmul.mubr.f32.gmra.mrb[0].mxu0 %v998
  %v1161 = vpop.f32.mrb[0].mxu0
  %v1162 = vadd.f32 0.0, %v1161
  %v1163 = vpop.f32.mrb[0].mxu0
  %v1164 = vadd.f32 0.0, %v1163
  %1165 = vmatprep.mubr.f32.mxu0 0.0
  %1166 = vmatmul.mubr.f32.gmra.mrb[0].mxu0 %v1000
  %v1167 = vpop.f32.mrb[0].mxu0
  %v1168 = vadd.f32 0.0, %v1167
  %v1169 = vpop.f32.mrb[0].mxu0
  %v1170 = vadd.f32 0.0, %v1169
  %1171 = vmatprep.mubr.f32.mxu0 0.0
  %1172 = vmatmul.mubr.f32.gmra.mrb[0].mxu0 %v1002
  %v1173 = vpop.f32.mrb[0].mxu0
  %v1174 = vadd.f32 0.0, %v1173
  %v1175 = vpop.f32.mrb[0].mxu0
  %v1176 = vadd.f32 0.0, %v1175
  %1177 = vmatprep.mubr.f32.mxu0 0.0
  %1178 = vmatmul.mubr.f32.gmra.mrb[0].mxu0 %v1004
  %v1179 = vpop.f32.mrb[0].mxu0
  %v1180 = vadd.f32 0.0, %v1179
  %v1181 = vpop.f32.mrb[0].mxu0
  %v1182 = vadd.f32 0.0, %v1181
  %1183 = vdwg.mxu0
  %1184 = vmatprep.subr.mxu0 0.0
  %1185 = vmatpush1.msra.mxu0 %v987
  %1186 = vmatprep.subr.mxu0 0.0
  %1187 = vmatpush1.msra.mxu0 0.0
  %1188 = vmatprep.subr.mxu0 0.0
  %1189 = vmatpush1.msra.mxu0 0.0
  %1190 = vmatprep.subr.mxu0 0.0
  %1191 = vmatpush1.msra.mxu0 0.0
  %1192 = vmatprep.subr.mxu0 0.0
  %1193 = vmatpush1.msra.mxu0 0.0
  %1194 = vmatprep.subr.mxu0 0.0
  %1195 = vmatpush1.msra.mxu0 0.0
  %1196 = vmatprep.subr.mxu0 0.0
  %1197 = vmatpush1.msra.mxu0 0.0
  %1198 = vmatprep.subr.mxu0 0.0
  %1199 = vmatpush1.msra.mxu0 0.0
  %1200 = vmatprep.subr.mxu0 0.0
  %1201 = vmatpush1.msra.mxu0 0.0
  %1202 = vmatprep.subr.mxu0 0.0
  %1203 = vmatpush1.msra.mxu0 0.0
  %1204 = vmatprep.subr.mxu0 0.0
  %1205 = vmatpush1.msra.mxu0 0.0
  %1206 = vmatprep.subr.mxu0 0.0
  %1207 = vmatpush1.msra.mxu0 0.0
  %1208 = vmatprep.subr.mxu0 0.0
  %1209 = vmatpush1.msra.mxu0 0.0
  %1210 = vmatprep.subr.mxu0 0.0
  %1211 = vmatpush1.msra.mxu0 0.0
  %1212 = vmatprep.subr.mxu0 0.0
  %1213 = vmatpush1.msra.mxu0 0.0
  %1214 = vmatprep.subr.mxu0 0.0
  %1215 = vmatpush1.msra.mxu0 0.0
  %1216 = vmatprep.subr.mxu0 0.0
  %1217 = vmatpush1.msra.mxu0 0.0
  %1218 = vmatprep.subr.mxu0 0.0
  %1219 = vmatpush1.msra.mxu0 0.0
  %1220 = vmatprep.subr.mxu0 0.0
  %1221 = vmatpush1.msra.mxu0 0.0
  %1222 = vmatprep.subr.mxu0 0.0
  %1223 = vmatpush1.msra.mxu0 0.0
  %1224 = vmatprep.subr.mxu0 0.0
  %1225 = vmatpush1.msra.mxu0 0.0
  %1226 = vmatprep.subr.mxu0 0.0
  %1227 = vmatpush1.msra.mxu0 0.0
  %1228 = vmatprep.subr.mxu0 0.0
  %1229 = vmatpush1.msra.mxu0 0.0
  %1230 = vmatprep.subr.mxu0 0.0
  %1231 = vmatpush1.msra.mxu0 0.0
  %1232 = vmatprep.subr.mxu0 0.0
  %1233 = vmatpush1.msra.mxu0 0.0
  %1234 = vmatprep.subr.mxu0 0.0
  %1235 = vmatpush1.msra.mxu0 0.0
  %1236 = vmatprep.subr.mxu0 0.0
  %1237 = vmatpush1.msra.mxu0 0.0
  %1238 = vmatprep.subr.mxu0 0.0
  %1239 = vmatpush1.msra.mxu0 0.0
  %1240 = vmatprep.subr.mxu0 0.0
  %1241 = vmatpush1.msra.mxu0 0.0
  %1242 = vmatprep.subr.mxu0 0.0
  %1243 = vmatpush1.msra.mxu0 0.0
  %1244 = vmatprep.subr.mxu0 0.0
  %1245 = vmatpush1.msra.mxu0 0.0
  %1246 = vmatprep.subr.mxu0 0.0
  %1247 = vmatpush1.msra.mxu0 0.0
  %1248 = vmatprep.mubr.f32.mxu0 0.0
  %1249 = vmatmul.mubr.f32.gmra.mrb[0].mxu0 %v998
  %v1250 = vpop.f32.mrb[0].mxu0
  %v1251 = vadd.f32 0.0, %v1250
  %v1252 = vpop.f32.mrb[0].mxu0
  %1253 = vmatprep.mubr.f32.mxu0 0.0
  %1254 = vmatmul.mubr.f32.gmra.mrb[0].mxu0 %v1000
  %v1255 = vpop.f32.mrb[0].mxu0
  %v1256 = vadd.f32 0.0, %v1255
  %v1257 = vpop.f32.mrb[0].mxu0
  %1258 = vmatprep.mubr.f32.mxu0 0.0
  %1259 = vmatmul.mubr.f32.gmra.mrb[0].mxu0 %v1002
  %v1260 = vpop.f32.mrb[0].mxu0
  %v1261 = vadd.f32 0.0, %v1260
  %v1262 = vpop.f32.mrb[0].mxu0
  %1263 = vmatprep.mubr.f32.mxu0 0.0
  %1264 = vmatmul.mubr.f32.gmra.mrb[0].mxu0 %v1004
  %v1265 = vpop.f32.mrb[0].mxu0
  %v1266 = vadd.f32 0.0, %v1265
  %v1267 = vpop.f32.mrb[0].mxu0
  %1268 = vdwg.mxu0
  %v1269 = vadd.f32 %v950, %v1073
  %v1270 = vadd.f32 %v951, %v1075
  %v1271 = vadd.f32 %v952, %v1162
  %v1272 = vadd.f32 %v953, %v1164
  %v1273 = vadd.f32 %v954, %v1251
  %v1274 = vadd.f32 %v955, %v1079
  %v1275 = vadd.f32 %v956, %v1081
  %v1276 = vadd.f32 %v957, %v1168
  %v1277 = vadd.f32 %v958, %v1170
  %v1278 = vadd.f32 %v959, %v1256
  %v1279 = vadd.f32 %v960, %v1085
  %v1280 = vadd.f32 %v961, %v1087
  %v1281 = vadd.f32 %v962, %v1174
  %v1282 = vadd.f32 %v963, %v1176
  %v1283 = vadd.f32 %v964, %v1261
  %v1284 = vadd.f32 %v965, %v1091
  %v1285 = vadd.f32 %v966, %v1093
  %v1286 = vadd.f32 %v967, %v1180
  %v1287 = vadd.f32 %v968, %v1182
  %v1288 = vadd.f32 %v969, %v1266
  %1289 = vrot.lane.b32.xlu0 %v62, 96
  %v1290 = vpop.permute.xlu0 %1289
  %1291 = vrot.lane.b32.xlu0 %v63, 96
  %v1292 = vpop.permute.xlu0 %1291
  %1293 = vrot.lane.b32.xlu0 %v64, 96
  %v1294 = vpop.permute.xlu0 %1293
  %1295 = vrot.lane.b32.xlu0 %v65, 96
  %v1296 = vpop.permute.xlu0 %1295
  %1297 = vrot.lane.b32.xlu0 %v66, 109
  %v1298 = vpop.permute.xlu0 %1297
  %1299 = vrot.lane.b32.xlu0 %v67, 109
  %v1300 = vpop.permute.xlu0 %1299
  %1301 = vrot.lane.b32.xlu0 %v68, 109
  %v1302 = vpop.permute.xlu0 %1301
  %1303 = vrot.lane.b32.xlu0 %v69, 109
  %v1304 = vpop.permute.xlu0 %1303
  %1305 = vrot.lane.b32.xlu0 %v70, 109
  %v1306 = vpop.permute.xlu0 %1305
  %vm1307 = vcmask 891904
  %v1308 = vsel %vm1307, %v1298, %v1300
  %v1309 = vsel %vm1307, %v1300, %v1302
  %v1310 = vsel %vm1307, %v1302, %v1304
  %v1311 = vsel %vm1307, %v1304, %v1306
  %v1317 = vsel %vm108, %v1290, 0
  %v1319 = vsel %vm108, %v1292, 0
  %v1321 = vsel %vm108, %v1294, 0
  %v1323 = vsel %vm108, %v1296, 0
  %1325 = vmatprep.subr.mxu0 %v1309
  %1326 = vmatpush1.msra.mxu0 %v1308
  %1327 = vmatprep.subr.mxu0 0.0
  %1328 = vmatpush1.msra.mxu0 0.0
  %1329 = vmatprep.subr.mxu0 0.0
  %1330 = vmatpush1.msra.mxu0 0.0
  %1331 = vmatprep.subr.mxu0 0.0
  %1332 = vmatpush1.msra.mxu0 0.0
  %1333 = vmatprep.subr.mxu0 0.0
  %1334 = vmatpush1.msra.mxu0 0.0
  %1335 = vmatprep.subr.mxu0 0.0
  %1336 = vmatpush1.msra.mxu0 0.0
  %1337 = vmatprep.subr.mxu0 0.0
  %1338 = vmatpush1.msra.mxu0 0.0
  %1339 = vmatprep.subr.mxu0 0.0
  %1340 = vmatpush1.msra.mxu0 0.0
  %1341 = vmatprep.subr.mxu0 0.0
  %1342 = vmatpush1.msra.mxu0 0.0
  %1343 = vmatprep.subr.mxu0 0.0
  %1344 = vmatpush1.msra.mxu0 0.0
  %1345 = vmatprep.subr.mxu0 0.0
  %1346 = vmatpush1.msra.mxu0 0.0
  %1347 = vmatprep.subr.mxu0 0.0
  %1348 = vmatpush1.msra.mxu0 0.0
  %1349 = vmatprep.subr.mxu0 0.0
  %1350 = vmatpush1.msra.mxu0 0.0
  %1351 = vmatprep.subr.mxu0 0.0
  %1352 = vmatpush1.msra.mxu0 0.0
  %1353 = vmatprep.subr.mxu0 0.0
  %1354 = vmatpush1.msra.mxu0 0.0
  %1355 = vmatprep.subr.mxu0 0.0
  %1356 = vmatpush1.msra.mxu0 0.0
  %1357 = vmatprep.subr.mxu0 0.0
  %1358 = vmatpush1.msra.mxu0 0.0
  %1359 = vmatprep.subr.mxu0 0.0
  %1360 = vmatpush1.msra.mxu0 0.0
  %1361 = vmatprep.subr.mxu0 0.0
  %1362 = vmatpush1.msra.mxu0 0.0
  %1363 = vmatprep.subr.mxu0 0.0
  %1364 = vmatpush1.msra.mxu0 0.0
  %1365 = vmatprep.subr.mxu0 0.0
  %1366 = vmatpush1.msra.mxu0 0.0
  %1367 = vmatprep.subr.mxu0 0.0
  %1368 = vmatpush1.msra.mxu0 0.0
  %1369 = vmatprep.subr.mxu0 0.0
  %1370 = vmatpush1.msra.mxu0 0.0
  %1371 = vmatprep.subr.mxu0 0.0
  %1372 = vmatpush1.msra.mxu0 0.0
  %1373 = vmatprep.subr.mxu0 0.0
  %1374 = vmatpush1.msra.mxu0 0.0
  %1375 = vmatprep.subr.mxu0 0.0
  %1376 = vmatpush1.msra.mxu0 0.0
  %1377 = vmatprep.subr.mxu0 0.0
  %1378 = vmatpush1.msra.mxu0 0.0
  %1379 = vmatprep.subr.mxu0 0.0
  %1380 = vmatpush1.msra.mxu0 0.0
  %1381 = vmatprep.subr.mxu0 0.0
  %1382 = vmatpush1.msra.mxu0 0.0
  %1383 = vmatprep.subr.mxu0 0.0
  %1384 = vmatpush1.msra.mxu0 0.0
  %1385 = vmatprep.subr.mxu0 0.0
  %1386 = vmatpush1.msra.mxu0 0.0
  %1387 = vmatprep.subr.mxu0 0.0
  %1388 = vmatpush1.msra.mxu0 0.0
  %1389 = vmatprep.mubr.f32.mxu0 0.0
  %1390 = vmatmul.mubr.f32.gmra.mrb[0].mxu0 %v1317
  %v1391 = vpop.f32.mrb[0].mxu0
  %v1392 = vadd.f32 0.0, %v1391
  %v1393 = vpop.f32.mrb[0].mxu0
  %v1394 = vadd.f32 0.0, %v1393
  %1395 = vmatprep.mubr.f32.mxu0 0.0
  %1396 = vmatmul.mubr.f32.gmra.mrb[0].mxu0 %v1319
  %v1397 = vpop.f32.mrb[0].mxu0
  %v1398 = vadd.f32 0.0, %v1397
  %v1399 = vpop.f32.mrb[0].mxu0
  %v1400 = vadd.f32 0.0, %v1399
  %1401 = vmatprep.mubr.f32.mxu0 0.0
  %1402 = vmatmul.mubr.f32.gmra.mrb[0].mxu0 %v1321
  %v1403 = vpop.f32.mrb[0].mxu0
  %v1404 = vadd.f32 0.0, %v1403
  %v1405 = vpop.f32.mrb[0].mxu0
  %v1406 = vadd.f32 0.0, %v1405
  %1407 = vmatprep.mubr.f32.mxu0 0.0
  %1408 = vmatmul.mubr.f32.gmra.mrb[0].mxu0 %v1323
  %v1409 = vpop.f32.mrb[0].mxu0
  %v1410 = vadd.f32 0.0, %v1409
  %v1411 = vpop.f32.mrb[0].mxu0
  %v1412 = vadd.f32 0.0, %v1411
  %1413 = vdwg.mxu0
  %1414 = vmatprep.subr.mxu0 %v1311
  %1415 = vmatpush1.msra.mxu0 %v1310
  %1416 = vmatprep.subr.mxu0 0.0
  %1417 = vmatpush1.msra.mxu0 0.0
  %1418 = vmatprep.subr.mxu0 0.0
  %1419 = vmatpush1.msra.mxu0 0.0
  %1420 = vmatprep.subr.mxu0 0.0
  %1421 = vmatpush1.msra.mxu0 0.0
  %1422 = vmatprep.subr.mxu0 0.0
  %1423 = vmatpush1.msra.mxu0 0.0
  %1424 = vmatprep.subr.mxu0 0.0
  %1425 = vmatpush1.msra.mxu0 0.0
  %1426 = vmatprep.subr.mxu0 0.0
  %1427 = vmatpush1.msra.mxu0 0.0
  %1428 = vmatprep.subr.mxu0 0.0
  %1429 = vmatpush1.msra.mxu0 0.0
  %1430 = vmatprep.subr.mxu0 0.0
  %1431 = vmatpush1.msra.mxu0 0.0
  %1432 = vmatprep.subr.mxu0 0.0
  %1433 = vmatpush1.msra.mxu0 0.0
  %1434 = vmatprep.subr.mxu0 0.0
  %1435 = vmatpush1.msra.mxu0 0.0
  %1436 = vmatprep.subr.mxu0 0.0
  %1437 = vmatpush1.msra.mxu0 0.0
  %1438 = vmatprep.subr.mxu0 0.0
  %1439 = vmatpush1.msra.mxu0 0.0
  %1440 = vmatprep.subr.mxu0 0.0
  %1441 = vmatpush1.msra.mxu0 0.0
  %1442 = vmatprep.subr.mxu0 0.0
  %1443 = vmatpush1.msra.mxu0 0.0
  %1444 = vmatprep.subr.mxu0 0.0
  %1445 = vmatpush1.msra.mxu0 0.0
  %1446 = vmatprep.subr.mxu0 0.0
  %1447 = vmatpush1.msra.mxu0 0.0
  %1448 = vmatprep.subr.mxu0 0.0
  %1449 = vmatpush1.msra.mxu0 0.0
  %1450 = vmatprep.subr.mxu0 0.0
  %1451 = vmatpush1.msra.mxu0 0.0
  %1452 = vmatprep.subr.mxu0 0.0
  %1453 = vmatpush1.msra.mxu0 0.0
  %1454 = vmatprep.subr.mxu0 0.0
  %1455 = vmatpush1.msra.mxu0 0.0
  %1456 = vmatprep.subr.mxu0 0.0
  %1457 = vmatpush1.msra.mxu0 0.0
  %1458 = vmatprep.subr.mxu0 0.0
  %1459 = vmatpush1.msra.mxu0 0.0
  %1460 = vmatprep.subr.mxu0 0.0
  %1461 = vmatpush1.msra.mxu0 0.0
  %1462 = vmatprep.subr.mxu0 0.0
  %1463 = vmatpush1.msra.mxu0 0.0
  %1464 = vmatprep.subr.mxu0 0.0
  %1465 = vmatpush1.msra.mxu0 0.0
  %1466 = vmatprep.subr.mxu0 0.0
  %1467 = vmatpush1.msra.mxu0 0.0
  %1468 = vmatprep.subr.mxu0 0.0
  %1469 = vmatpush1.msra.mxu0 0.0
  %1470 = vmatprep.subr.mxu0 0.0
  %1471 = vmatpush1.msra.mxu0 0.0
  %1472 = vmatprep.subr.mxu0 0.0
  %1473 = vmatpush1.msra.mxu0 0.0
  %1474 = vmatprep.subr.mxu0 0.0
  %1475 = vmatpush1.msra.mxu0 0.0
  %1476 = vmatprep.subr.mxu0 0.0
  %1477 = vmatpush1.msra.mxu0 0.0
  %1478 = vmatprep.mubr.f32.mxu0 0.0
  %1479 = vmatmul.mubr.f32.gmra.mrb[0].mxu0 %v1317
  %v1480 = vpop.f32.mrb[0].mxu0
  %v1481 = vadd.f32 0.0, %v1480
  %v1482 = vpop.f32.mrb[0].mxu0
  %v1483 = vadd.f32 0.0, %v1482
  %1484 = vmatprep.mubr.f32.mxu0 0.0
  %1485 = vmatmul.mubr.f32.gmra.mrb[0].mxu0 %v1319
  %v1486 = vpop.f32.mrb[0].mxu0
  %v1487 = vadd.f32 0.0, %v1486
  %v1488 = vpop.f32.mrb[0].mxu0
  %v1489 = vadd.f32 0.0, %v1488
  %1490 = vmatprep.mubr.f32.mxu0 0.0
  %1491 = vmatmul.mubr.f32.gmra.mrb[0].mxu0 %v1321
  %v1492 = vpop.f32.mrb[0].mxu0
  %v1493 = vadd.f32 0.0, %v1492
  %v1494 = vpop.f32.mrb[0].mxu0
  %v1495 = vadd.f32 0.0, %v1494
  %1496 = vmatprep.mubr.f32.mxu0 0.0
  %1497 = vmatmul.mubr.f32.gmra.mrb[0].mxu0 %v1323
  %v1498 = vpop.f32.mrb[0].mxu0
  %v1499 = vadd.f32 0.0, %v1498
  %v1500 = vpop.f32.mrb[0].mxu0
  %v1501 = vadd.f32 0.0, %v1500
  %1502 = vdwg.mxu0
  %1503 = vmatprep.subr.mxu0 0.0
  %1504 = vmatpush1.msra.mxu0 %v1306
  %1505 = vmatprep.subr.mxu0 0.0
  %1506 = vmatpush1.msra.mxu0 0.0
  %1507 = vmatprep.subr.mxu0 0.0
  %1508 = vmatpush1.msra.mxu0 0.0
  %1509 = vmatprep.subr.mxu0 0.0
  %1510 = vmatpush1.msra.mxu0 0.0
  %1511 = vmatprep.subr.mxu0 0.0
  %1512 = vmatpush1.msra.mxu0 0.0
  %1513 = vmatprep.subr.mxu0 0.0
  %1514 = vmatpush1.msra.mxu0 0.0
  %1515 = vmatprep.subr.mxu0 0.0
  %1516 = vmatpush1.msra.mxu0 0.0
  %1517 = vmatprep.subr.mxu0 0.0
  %1518 = vmatpush1.msra.mxu0 0.0
  %1519 = vmatprep.subr.mxu0 0.0
  %1520 = vmatpush1.msra.mxu0 0.0
  %1521 = vmatprep.subr.mxu0 0.0
  %1522 = vmatpush1.msra.mxu0 0.0
  %1523 = vmatprep.subr.mxu0 0.0
  %1524 = vmatpush1.msra.mxu0 0.0
  %1525 = vmatprep.subr.mxu0 0.0
  %1526 = vmatpush1.msra.mxu0 0.0
  %1527 = vmatprep.subr.mxu0 0.0
  %1528 = vmatpush1.msra.mxu0 0.0
  %1529 = vmatprep.subr.mxu0 0.0
  %1530 = vmatpush1.msra.mxu0 0.0
  %1531 = vmatprep.subr.mxu0 0.0
  %1532 = vmatpush1.msra.mxu0 0.0
  %1533 = vmatprep.subr.mxu0 0.0
  %1534 = vmatpush1.msra.mxu0 0.0
  %1535 = vmatprep.subr.mxu0 0.0
  %1536 = vmatpush1.msra.mxu0 0.0
  %1537 = vmatprep.subr.mxu0 0.0
  %1538 = vmatpush1.msra.mxu0 0.0
  %1539 = vmatprep.subr.mxu0 0.0
  %1540 = vmatpush1.msra.mxu0 0.0
  %1541 = vmatprep.subr.mxu0 0.0
  %1542 = vmatpush1.msra.mxu0 0.0
  %1543 = vmatprep.subr.mxu0 0.0
  %1544 = vmatpush1.msra.mxu0 0.0
  %1545 = vmatprep.subr.mxu0 0.0
  %1546 = vmatpush1.msra.mxu0 0.0
  %1547 = vmatprep.subr.mxu0 0.0
  %1548 = vmatpush1.msra.mxu0 0.0
  %1549 = vmatprep.subr.mxu0 0.0
  %1550 = vmatpush1.msra.mxu0 0.0
  %1551 = vmatprep.subr.mxu0 0.0
  %1552 = vmatpush1.msra.mxu0 0.0
  %1553 = vmatprep.subr.mxu0 0.0
  %1554 = vmatpush1.msra.mxu0 0.0
  %1555 = vmatprep.subr.mxu0 0.0
  %1556 = vmatpush1.msra.mxu0 0.0
  %1557 = vmatprep.subr.mxu0 0.0
  %1558 = vmatpush1.msra.mxu0 0.0
  %1559 = vmatprep.subr.mxu0 0.0
  %1560 = vmatpush1.msra.mxu0 0.0
  %1561 = vmatprep.subr.mxu0 0.0
  %1562 = vmatpush1.msra.mxu0 0.0
  %1563 = vmatprep.subr.mxu0 0.0
  %1564 = vmatpush1.msra.mxu0 0.0
  %1565 = vmatprep.subr.mxu0 0.0
  %1566 = vmatpush1.msra.mxu0 0.0
  %1567 = vmatprep.mubr.f32.mxu0 0.0
  %1568 = vmatmul.mubr.f32.gmra.mrb[0].mxu0 %v1317
  %v1569 = vpop.f32.mrb[0].mxu0
  %v1570 = vadd.f32 0.0, %v1569
  %v1571 = vpop.f32.mrb[0].mxu0
  %1572 = vmatprep.mubr.f32.mxu0 0.0
  %1573 = vmatmul.mubr.f32.gmra.mrb[0].mxu0 %v1319
  %v1574 = vpop.f32.mrb[0].mxu0
  %v1575 = vadd.f32 0.0, %v1574
  %v1576 = vpop.f32.mrb[0].mxu0
  %1577 = vmatprep.mubr.f32.mxu0 0.0
  %1578 = vmatmul.mubr.f32.gmra.mrb[0].mxu0 %v1321
  %v1579 = vpop.f32.mrb[0].mxu0
  %v1580 = vadd.f32 0.0, %v1579
  %v1581 = vpop.f32.mrb[0].mxu0
  %1582 = vmatprep.mubr.f32.mxu0 0.0
  %1583 = vmatmul.mubr.f32.gmra.mrb[0].mxu0 %v1323
  %v1584 = vpop.f32.mrb[0].mxu0
  %v1585 = vadd.f32 0.0, %v1584
  %v1586 = vpop.f32.mrb[0].mxu0
  %1587 = vdwg.mxu0
  %v1588 = vadd.f32 %v1269, %v1392
  %v1589 = vadd.f32 %v1270, %v1394
  %v1590 = vadd.f32 %v1271, %v1481
  %v1591 = vadd.f32 %v1272, %v1483
  %v1592 = vadd.f32 %v1273, %v1570
  %v1593 = vadd.f32 %v1274, %v1398
  %v1594 = vadd.f32 %v1275, %v1400
  %v1595 = vadd.f32 %v1276, %v1487
  %v1596 = vadd.f32 %v1277, %v1489
  %v1597 = vadd.f32 %v1278, %v1575
  %v1598 = vadd.f32 %v1279, %v1404
  %v1599 = vadd.f32 %v1280, %v1406
  %v1600 = vadd.f32 %v1281, %v1493
  %v1601 = vadd.f32 %v1282, %v1495
  %v1602 = vadd.f32 %v1283, %v1580
  %v1603 = vadd.f32 %v1284, %v1410
  %v1604 = vadd.f32 %v1285, %v1412
  %v1605 = vadd.f32 %v1286, %v1499
  %v1606 = vadd.f32 %v1287, %v1501
  %v1607 = vadd.f32 %v1288, %v1585
  %1608 = vrot.lane.b32.xlu0 %v62, 88
  %v1609 = vpop.permute.xlu0 %1608
  %1610 = vrot.lane.b32.xlu0 %v63, 88
  %v1611 = vpop.permute.xlu0 %1610
  %1612 = vrot.lane.b32.xlu0 %v64, 88
  %v1613 = vpop.permute.xlu0 %1612
  %1614 = vrot.lane.b32.xlu0 %v65, 88
  %v1615 = vpop.permute.xlu0 %1614
  %1616 = vrot.lane.b32.xlu0 %v66, 108
  %v1617 = vpop.permute.xlu0 %1616
  %1618 = vrot.lane.b32.xlu0 %v67, 108
  %v1619 = vpop.permute.xlu0 %1618
  %1620 = vrot.lane.b32.xlu0 %v68, 108
  %v1621 = vpop.permute.xlu0 %1620
  %1622 = vrot.lane.b32.xlu0 %v69, 108
  %v1623 = vpop.permute.xlu0 %1622
  %1624 = vrot.lane.b32.xlu0 %v70, 108
  %v1625 = vpop.permute.xlu0 %1624
  %vm1626 = vcmask 883712
  %v1627 = vsel %vm1626, %v1617, %v1619
  %v1628 = vsel %vm1626, %v1619, %v1621
  %v1629 = vsel %vm1626, %v1621, %v1623
  %v1630 = vsel %vm1626, %v1623, %v1625
  %v1636 = vsel %vm108, %v1609, 0
  %v1638 = vsel %vm108, %v1611, 0
  %v1640 = vsel %vm108, %v1613, 0
  %v1642 = vsel %vm108, %v1615, 0
  %1644 = vmatprep.subr.mxu0 %v1628
  %1645 = vmatpush1.msra.mxu0 %v1627
  %1646 = vmatprep.subr.mxu0 0.0
  %1647 = vmatpush1.msra.mxu0 0.0
  %1648 = vmatprep.subr.mxu0 0.0
  %1649 = vmatpush1.msra.mxu0 0.0
  %1650 = vmatprep.subr.mxu0 0.0
  %1651 = vmatpush1.msra.mxu0 0.0
  %1652 = vmatprep.subr.mxu0 0.0
  %1653 = vmatpush1.msra.mxu0 0.0
  %1654 = vmatprep.subr.mxu0 0.0
  %1655 = vmatpush1.msra.mxu0 0.0
  %1656 = vmatprep.subr.mxu0 0.0
  %1657 = vmatpush1.msra.mxu0 0.0
  %1658 = vmatprep.subr.mxu0 0.0
  %1659 = vmatpush1.msra.mxu0 0.0
  %1660 = vmatprep.subr.mxu0 0.0
  %1661 = vmatpush1.msra.mxu0 0.0
  %1662 = vmatprep.subr.mxu0 0.0
  %1663 = vmatpush1.msra.mxu0 0.0
  %1664 = vmatprep.subr.mxu0 0.0
  %1665 = vmatpush1.msra.mxu0 0.0
  %1666 = vmatprep.subr.mxu0 0.0
  %1667 = vmatpush1.msra.mxu0 0.0
  %1668 = vmatprep.subr.mxu0 0.0
  %1669 = vmatpush1.msra.mxu0 0.0
  %1670 = vmatprep.subr.mxu0 0.0
  %1671 = vmatpush1.msra.mxu0 0.0
  %1672 = vmatprep.subr.mxu0 0.0
  %1673 = vmatpush1.msra.mxu0 0.0
  %1674 = vmatprep.subr.mxu0 0.0
  %1675 = vmatpush1.msra.mxu0 0.0
  %1676 = vmatprep.subr.mxu0 0.0
  %1677 = vmatpush1.msra.mxu0 0.0
  %1678 = vmatprep.subr.mxu0 0.0
  %1679 = vmatpush1.msra.mxu0 0.0
  %1680 = vmatprep.subr.mxu0 0.0
  %1681 = vmatpush1.msra.mxu0 0.0
  %1682 = vmatprep.subr.mxu0 0.0
  %1683 = vmatpush1.msra.mxu0 0.0
  %1684 = vmatprep.subr.mxu0 0.0
  %1685 = vmatpush1.msra.mxu0 0.0
  %1686 = vmatprep.subr.mxu0 0.0
  %1687 = vmatpush1.msra.mxu0 0.0
  %1688 = vmatprep.subr.mxu0 0.0
  %1689 = vmatpush1.msra.mxu0 0.0
  %1690 = vmatprep.subr.mxu0 0.0
  %1691 = vmatpush1.msra.mxu0 0.0
  %1692 = vmatprep.subr.mxu0 0.0
  %1693 = vmatpush1.msra.mxu0 0.0
  %1694 = vmatprep.subr.mxu0 0.0
  %1695 = vmatpush1.msra.mxu0 0.0
  %1696 = vmatprep.subr.mxu0 0.0
  %1697 = vmatpush1.msra.mxu0 0.0
  %1698 = vmatprep.subr.mxu0 0.0
  %1699 = vmatpush1.msra.mxu0 0.0
  %1700 = vmatprep.subr.mxu0 0.0
  %1701 = vmatpush1.msra.mxu0 0.0
  %1702 = vmatprep.subr.mxu0 0.0
  %1703 = vmatpush1.msra.mxu0 0.0
  %1704 = vmatprep.subr.mxu0 0.0
  %1705 = vmatpush1.msra.mxu0 0.0
  %1706 = vmatprep.subr.mxu0 0.0
  %1707 = vmatpush1.msra.mxu0 0.0
  %1708 = vmatprep.mubr.f32.mxu0 0.0
  %1709 = vmatmul.mubr.f32.gmra.mrb[0].mxu0 %v1636
  %v1710 = vpop.f32.mrb[0].mxu0
  %v1711 = vadd.f32 0.0, %v1710
  %v1712 = vpop.f32.mrb[0].mxu0
  %v1713 = vadd.f32 0.0, %v1712
  %1714 = vmatprep.mubr.f32.mxu0 0.0
  %1715 = vmatmul.mubr.f32.gmra.mrb[0].mxu0 %v1638
  %v1716 = vpop.f32.mrb[0].mxu0
  %v1717 = vadd.f32 0.0, %v1716
  %v1718 = vpop.f32.mrb[0].mxu0
  %v1719 = vadd.f32 0.0, %v1718
  %1720 = vmatprep.mubr.f32.mxu0 0.0
  %1721 = vmatmul.mubr.f32.gmra.mrb[0].mxu0 %v1640
  %v1722 = vpop.f32.mrb[0].mxu0
  %v1723 = vadd.f32 0.0, %v1722
  %v1724 = vpop.f32.mrb[0].mxu0
  %v1725 = vadd.f32 0.0, %v1724
  %1726 = vmatprep.mubr.f32.mxu0 0.0
  %1727 = vmatmul.mubr.f32.gmra.mrb[0].mxu0 %v1642
  %v1728 = vpop.f32.mrb[0].mxu0
  %v1729 = vadd.f32 0.0, %v1728
  %v1730 = vpop.f32.mrb[0].mxu0
  %v1731 = vadd.f32 0.0, %v1730
  %1732 = vdwg.mxu0
  %1733 = vmatprep.subr.mxu0 %v1630
  %1734 = vmatpush1.msra.mxu0 %v1629
  %1735 = vmatprep.subr.mxu0 0.0
  %1736 = vmatpush1.msra.mxu0 0.0
  %1737 = vmatprep.subr.mxu0 0.0
  %1738 = vmatpush1.msra.mxu0 0.0
  %1739 = vmatprep.subr.mxu0 0.0
  %1740 = vmatpush1.msra.mxu0 0.0
  %1741 = vmatprep.subr.mxu0 0.0
  %1742 = vmatpush1.msra.mxu0 0.0
  %1743 = vmatprep.subr.mxu0 0.0
  %1744 = vmatpush1.msra.mxu0 0.0
  %1745 = vmatprep.subr.mxu0 0.0
  %1746 = vmatpush1.msra.mxu0 0.0
  %1747 = vmatprep.subr.mxu0 0.0
  %1748 = vmatpush1.msra.mxu0 0.0
  %1749 = vmatprep.subr.mxu0 0.0
  %1750 = vmatpush1.msra.mxu0 0.0
  %1751 = vmatprep.subr.mxu0 0.0
  %1752 = vmatpush1.msra.mxu0 0.0
  %1753 = vmatprep.subr.mxu0 0.0
  %1754 = vmatpush1.msra.mxu0 0.0
  %1755 = vmatprep.subr.mxu0 0.0
  %1756 = vmatpush1.msra.mxu0 0.0
  %1757 = vmatprep.subr.mxu0 0.0
  %1758 = vmatpush1.msra.mxu0 0.0
  %1759 = vmatprep.subr.mxu0 0.0
  %1760 = vmatpush1.msra.mxu0 0.0
  %1761 = vmatprep.subr.mxu0 0.0
  %1762 = vmatpush1.msra.mxu0 0.0
  %1763 = vmatprep.subr.mxu0 0.0
  %1764 = vmatpush1.msra.mxu0 0.0
  %1765 = vmatprep.subr.mxu0 0.0
  %1766 = vmatpush1.msra.mxu0 0.0
  %1767 = vmatprep.subr.mxu0 0.0
  %1768 = vmatpush1.msra.mxu0 0.0
  %1769 = vmatprep.subr.mxu0 0.0
  %1770 = vmatpush1.msra.mxu0 0.0
  %1771 = vmatprep.subr.mxu0 0.0
  %1772 = vmatpush1.msra.mxu0 0.0
  %1773 = vmatprep.subr.mxu0 0.0
  %1774 = vmatpush1.msra.mxu0 0.0
  %1775 = vmatprep.subr.mxu0 0.0
  %1776 = vmatpush1.msra.mxu0 0.0
  %1777 = vmatprep.subr.mxu0 0.0
  %1778 = vmatpush1.msra.mxu0 0.0
  %1779 = vmatprep.subr.mxu0 0.0
  %1780 = vmatpush1.msra.mxu0 0.0
  %1781 = vmatprep.subr.mxu0 0.0
  %1782 = vmatpush1.msra.mxu0 0.0
  %1783 = vmatprep.subr.mxu0 0.0
  %1784 = vmatpush1.msra.mxu0 0.0
  %1785 = vmatprep.subr.mxu0 0.0
  %1786 = vmatpush1.msra.mxu0 0.0
  %1787 = vmatprep.subr.mxu0 0.0
  %1788 = vmatpush1.msra.mxu0 0.0
  %1789 = vmatprep.subr.mxu0 0.0
  %1790 = vmatpush1.msra.mxu0 0.0
  %1791 = vmatprep.subr.mxu0 0.0
  %1792 = vmatpush1.msra.mxu0 0.0
  %1793 = vmatprep.subr.mxu0 0.0
  %1794 = vmatpush1.msra.mxu0 0.0
  %1795 = vmatprep.subr.mxu0 0.0
  %1796 = vmatpush1.msra.mxu0 0.0
  %1797 = vmatprep.mubr.f32.mxu0 0.0
  %1798 = vmatmul.mubr.f32.gmra.mrb[0].mxu0 %v1636
  %v1799 = vpop.f32.mrb[0].mxu0
  %v1800 = vadd.f32 0.0, %v1799
  %v1801 = vpop.f32.mrb[0].mxu0
  %v1802 = vadd.f32 0.0, %v1801
  %1803 = vmatprep.mubr.f32.mxu0 0.0
  %1804 = vmatmul.mubr.f32.gmra.mrb[0].mxu0 %v1638
  %v1805 = vpop.f32.mrb[0].mxu0
  %v1806 = vadd.f32 0.0, %v1805
  %v1807 = vpop.f32.mrb[0].mxu0
  %v1808 = vadd.f32 0.0, %v1807
  %1809 = vmatprep.mubr.f32.mxu0 0.0
  %1810 = vmatmul.mubr.f32.gmra.mrb[0].mxu0 %v1640
  %v1811 = vpop.f32.mrb[0].mxu0
  %v1812 = vadd.f32 0.0, %v1811
  %v1813 = vpop.f32.mrb[0].mxu0
  %v1814 = vadd.f32 0.0, %v1813
  %1815 = vmatprep.mubr.f32.mxu0 0.0
  %1816 = vmatmul.mubr.f32.gmra.mrb[0].mxu0 %v1642
  %v1817 = vpop.f32.mrb[0].mxu0
  %v1818 = vadd.f32 0.0, %v1817
  %v1819 = vpop.f32.mrb[0].mxu0
  %v1820 = vadd.f32 0.0, %v1819
  %1821 = vdwg.mxu0
  %1822 = vmatprep.subr.mxu0 0.0
  %1823 = vmatpush1.msra.mxu0 %v1625
  %1824 = vmatprep.subr.mxu0 0.0
  %1825 = vmatpush1.msra.mxu0 0.0
  %1826 = vmatprep.subr.mxu0 0.0
  %1827 = vmatpush1.msra.mxu0 0.0
  %1828 = vmatprep.subr.mxu0 0.0
  %1829 = vmatpush1.msra.mxu0 0.0
  %1830 = vmatprep.subr.mxu0 0.0
  %1831 = vmatpush1.msra.mxu0 0.0
  %1832 = vmatprep.subr.mxu0 0.0
  %1833 = vmatpush1.msra.mxu0 0.0
  %1834 = vmatprep.subr.mxu0 0.0
  %1835 = vmatpush1.msra.mxu0 0.0
  %1836 = vmatprep.subr.mxu0 0.0
  %1837 = vmatpush1.msra.mxu0 0.0
  %1838 = vmatprep.subr.mxu0 0.0
  %1839 = vmatpush1.msra.mxu0 0.0
  %1840 = vmatprep.subr.mxu0 0.0
  %1841 = vmatpush1.msra.mxu0 0.0
  %1842 = vmatprep.subr.mxu0 0.0
  %1843 = vmatpush1.msra.mxu0 0.0
  %1844 = vmatprep.subr.mxu0 0.0
  %1845 = vmatpush1.msra.mxu0 0.0
  %1846 = vmatprep.subr.mxu0 0.0
  %1847 = vmatpush1.msra.mxu0 0.0
  %1848 = vmatprep.subr.mxu0 0.0
  %1849 = vmatpush1.msra.mxu0 0.0
  %1850 = vmatprep.subr.mxu0 0.0
  %1851 = vmatpush1.msra.mxu0 0.0
  %1852 = vmatprep.subr.mxu0 0.0
  %1853 = vmatpush1.msra.mxu0 0.0
  %1854 = vmatprep.subr.mxu0 0.0
  %1855 = vmatpush1.msra.mxu0 0.0
  %1856 = vmatprep.subr.mxu0 0.0
  %1857 = vmatpush1.msra.mxu0 0.0
  %1858 = vmatprep.subr.mxu0 0.0
  %1859 = vmatpush1.msra.mxu0 0.0
  %1860 = vmatprep.subr.mxu0 0.0
  %1861 = vmatpush1.msra.mxu0 0.0
  %1862 = vmatprep.subr.mxu0 0.0
  %1863 = vmatpush1.msra.mxu0 0.0
  %1864 = vmatprep.subr.mxu0 0.0
  %1865 = vmatpush1.msra.mxu0 0.0
  %1866 = vmatprep.subr.mxu0 0.0
  %1867 = vmatpush1.msra.mxu0 0.0
  %1868 = vmatprep.subr.mxu0 0.0
  %1869 = vmatpush1.msra.mxu0 0.0
  %1870 = vmatprep.subr.mxu0 0.0
  %1871 = vmatpush1.msra.mxu0 0.0
  %1872 = vmatprep.subr.mxu0 0.0
  %1873 = vmatpush1.msra.mxu0 0.0
  %1874 = vmatprep.subr.mxu0 0.0
  %1875 = vmatpush1.msra.mxu0 0.0
  %1876 = vmatprep.subr.mxu0 0.0
  %1877 = vmatpush1.msra.mxu0 0.0
  %1878 = vmatprep.subr.mxu0 0.0
  %1879 = vmatpush1.msra.mxu0 0.0
  %1880 = vmatprep.subr.mxu0 0.0
  %1881 = vmatpush1.msra.mxu0 0.0
  %1882 = vmatprep.subr.mxu0 0.0
  %1883 = vmatpush1.msra.mxu0 0.0
  %1884 = vmatprep.subr.mxu0 0.0
  %1885 = vmatpush1.msra.mxu0 0.0
  %1886 = vmatprep.mubr.f32.mxu0 0.0
  %1887 = vmatmul.mubr.f32.gmra.mrb[0].mxu0 %v1636
  %v1888 = vpop.f32.mrb[0].mxu0
  %v1889 = vadd.f32 0.0, %v1888
  %v1890 = vpop.f32.mrb[0].mxu0
  %1891 = vmatprep.mubr.f32.mxu0 0.0
  %1892 = vmatmul.mubr.f32.gmra.mrb[0].mxu0 %v1638
  %v1893 = vpop.f32.mrb[0].mxu0
  %v1894 = vadd.f32 0.0, %v1893
  %v1895 = vpop.f32.mrb[0].mxu0
  %1896 = vmatprep.mubr.f32.mxu0 0.0
  %1897 = vmatmul.mubr.f32.gmra.mrb[0].mxu0 %v1640
  %v1898 = vpop.f32.mrb[0].mxu0
  %v1899 = vadd.f32 0.0, %v1898
  %v1900 = vpop.f32.mrb[0].mxu0
  %1901 = vmatprep.mubr.f32.mxu0 0.0
  %1902 = vmatmul.mubr.f32.gmra.mrb[0].mxu0 %v1642
  %v1903 = vpop.f32.mrb[0].mxu0
  %v1904 = vadd.f32 0.0, %v1903
  %v1905 = vpop.f32.mrb[0].mxu0
  %1906 = vdwg.mxu0
  %v1907 = vadd.f32 %v1588, %v1711
  %v1908 = vadd.f32 %v1589, %v1713
  %v1909 = vadd.f32 %v1590, %v1800
  %v1910 = vadd.f32 %v1591, %v1802
  %v1911 = vadd.f32 %v1592, %v1889
  %v1912 = vadd.f32 %v1593, %v1717
  %v1913 = vadd.f32 %v1594, %v1719
  %v1914 = vadd.f32 %v1595, %v1806
  %v1915 = vadd.f32 %v1596, %v1808
  %v1916 = vadd.f32 %v1597, %v1894
  %v1917 = vadd.f32 %v1598, %v1723
  %v1918 = vadd.f32 %v1599, %v1725
  %v1919 = vadd.f32 %v1600, %v1812
  %v1920 = vadd.f32 %v1601, %v1814
  %v1921 = vadd.f32 %v1602, %v1899
  %v1922 = vadd.f32 %v1603, %v1729
  %v1923 = vadd.f32 %v1604, %v1731
  %v1924 = vadd.f32 %v1605, %v1818
  %v1925 = vadd.f32 %v1606, %v1820
  %v1926 = vadd.f32 %v1607, %v1904
  %v1927 = vld [vmem:[%s0] sm:$0xff]
  %v1928 = vld [vmem:[%s0 + $0x8] sm:$0xff]
  %v1929 = vld [vmem:[%s0 + $0x10] sm:$0xff]
  %v1930 = vld [vmem:[%s0 + $0x18] sm:$0xff]
  %v1931 = vld [vmem:[%s0 + $0x20] sm:$0xff]
  %v1932 = vld [vmem:[%s0 + $0x28] sm:$0xff]
  %1933 = vrot.lane.b32.xlu0 %v62, 80
  %v1934 = vpop.permute.xlu0 %1933
  %1935 = vrot.lane.b32.xlu0 %v63, 80
  %v1936 = vpop.permute.xlu0 %1935
  %1937 = vrot.lane.b32.xlu0 %v64, 80
  %v1938 = vpop.permute.xlu0 %1937
  %1939 = vrot.lane.b32.xlu0 %v65, 80
  %v1940 = vpop.permute.xlu0 %1939
  %1947 = vrot.lane.b32.xlu0 %v1927, 92
  %v1948 = vpop.permute.xlu0 %1947
  %1949 = vrot.lane.b32.xlu0 %v1928, 92
  %v1950 = vpop.permute.xlu0 %1949
  %1951 = vrot.lane.b32.xlu0 %v1929, 92
  %v1952 = vpop.permute.xlu0 %1951
  %1953 = vrot.lane.b32.xlu0 %v1930, 92
  %v1954 = vpop.permute.xlu0 %1953
  %1955 = vrot.lane.b32.xlu0 %v1931, 92
  %v1956 = vpop.permute.xlu0 %1955
  %1957 = vrot.lane.b32.xlu0 %v1932, 92
  %v1958 = vpop.permute.xlu0 %1957
  %vm1959 = vcmask 752640
  %v1960 = vsel %vm1959, %v1948, %v1950
  %v1961 = vsel %vm1959, %v1950, %v1952
  %v1962 = vsel %vm1959, %v1952, %v1954
  %v1963 = vsel %vm1959, %v1954, %v1956
  %v1964 = vsel %vm1959, %v1956, %v1958
  %v1970 = vsel %vm108, %v1934, 0
  %v1972 = vsel %vm108, %v1936, 0
  %v1974 = vsel %vm108, %v1938, 0
  %v1976 = vsel %vm108, %v1940, 0
  %1978 = vmatprep.subr.mxu0 %v1961
  %1979 = vmatpush1.msra.mxu0 %v1960
  %1980 = vmatprep.subr.mxu0 0.0
  %1981 = vmatpush1.msra.mxu0 0.0
  %1982 = vmatprep.subr.mxu0 0.0
  %1983 = vmatpush1.msra.mxu0 0.0
  %1984 = vmatprep.subr.mxu0 0.0
  %1985 = vmatpush1.msra.mxu0 0.0
  %1986 = vmatprep.subr.mxu0 0.0
  %1987 = vmatpush1.msra.mxu0 0.0
  %1988 = vmatprep.subr.mxu0 0.0
  %1989 = vmatpush1.msra.mxu0 0.0
  %1990 = vmatprep.subr.mxu0 0.0
  %1991 = vmatpush1.msra.mxu0 0.0
  %1992 = vmatprep.subr.mxu0 0.0
  %1993 = vmatpush1.msra.mxu0 0.0
  %1994 = vmatprep.subr.mxu0 0.0
  %1995 = vmatpush1.msra.mxu0 0.0
  %1996 = vmatprep.subr.mxu0 0.0
  %1997 = vmatpush1.msra.mxu0 0.0
  %1998 = vmatprep.subr.mxu0 0.0
  %1999 = vmatpush1.msra.mxu0 0.0
  %2000 = vmatprep.subr.mxu0 0.0
  %2001 = vmatpush1.msra.mxu0 0.0
  %2002 = vmatprep.subr.mxu0 0.0
  %2003 = vmatpush1.msra.mxu0 0.0
  %2004 = vmatprep.subr.mxu0 0.0
  %2005 = vmatpush1.msra.mxu0 0.0
  %2006 = vmatprep.subr.mxu0 0.0
  %2007 = vmatpush1.msra.mxu0 0.0
  %2008 = vmatprep.subr.mxu0 0.0
  %2009 = vmatpush1.msra.mxu0 0.0
  %2010 = vmatprep.subr.mxu0 0.0
  %2011 = vmatpush1.msra.mxu0 0.0
  %2012 = vmatprep.subr.mxu0 0.0
  %2013 = vmatpush1.msra.mxu0 0.0
  %2014 = vmatprep.subr.mxu0 0.0
  %2015 = vmatpush1.msra.mxu0 0.0
  %2016 = vmatprep.subr.mxu0 0.0
  %2017 = vmatpush1.msra.mxu0 0.0
  %2018 = vmatprep.subr.mxu0 0.0
  %2019 = vmatpush1.msra.mxu0 0.0
  %2020 = vmatprep.subr.mxu0 0.0
  %2021 = vmatpush1.msra.mxu0 0.0
  %2022 = vmatprep.subr.mxu0 0.0
  %2023 = vmatpush1.msra.mxu0 0.0
  %2024 = vmatprep.subr.mxu0 0.0
  %2025 = vmatpush1.msra.mxu0 0.0
  %2026 = vmatprep.subr.mxu0 0.0
  %2027 = vmatpush1.msra.mxu0 0.0
  %2028 = vmatprep.subr.mxu0 0.0
  %2029 = vmatpush1.msra.mxu0 0.0
  %2030 = vmatprep.subr.mxu0 0.0
  %2031 = vmatpush1.msra.mxu0 0.0
  %2032 = vmatprep.subr.mxu0 0.0
  %2033 = vmatpush1.msra.mxu0 0.0
  %2034 = vmatprep.subr.mxu0 0.0
  %2035 = vmatpush1.msra.mxu0 0.0
  %2036 = vmatprep.subr.mxu0 0.0
  %2037 = vmatpush1.msra.mxu0 0.0
  %2038 = vmatprep.subr.mxu0 0.0
  %2039 = vmatpush1.msra.mxu0 0.0
  %2040 = vmatprep.subr.mxu0 0.0
  %2041 = vmatpush1.msra.mxu0 0.0
  %2042 = vmatprep.mubr.f32.mxu0 0.0
  %2043 = vmatmul.mubr.f32.gmra.mrb[0].mxu0 %v1970
  %v2044 = vpop.f32.mrb[0].mxu0
  %v2045 = vadd.f32 0.0, %v2044
  %v2046 = vpop.f32.mrb[0].mxu0
  %v2047 = vadd.f32 0.0, %v2046
  %2048 = vmatprep.mubr.f32.mxu0 0.0
  %2049 = vmatmul.mubr.f32.gmra.mrb[0].mxu0 %v1972
  %v2050 = vpop.f32.mrb[0].mxu0
  %v2051 = vadd.f32 0.0, %v2050
  %v2052 = vpop.f32.mrb[0].mxu0
  %v2053 = vadd.f32 0.0, %v2052
  %2054 = vmatprep.mubr.f32.mxu0 0.0
  %2055 = vmatmul.mubr.f32.gmra.mrb[0].mxu0 %v1974
  %v2056 = vpop.f32.mrb[0].mxu0
  %v2057 = vadd.f32 0.0, %v2056
  %v2058 = vpop.f32.mrb[0].mxu0
  %v2059 = vadd.f32 0.0, %v2058
  %2060 = vmatprep.mubr.f32.mxu0 0.0
  %2061 = vmatmul.mubr.f32.gmra.mrb[0].mxu0 %v1976
  %v2062 = vpop.f32.mrb[0].mxu0
  %v2063 = vadd.f32 0.0, %v2062
  %v2064 = vpop.f32.mrb[0].mxu0
  %v2065 = vadd.f32 0.0, %v2064
  %2066 = vdwg.mxu0
  %2067 = vmatprep.subr.mxu0 %v1963
  %2068 = vmatpush1.msra.mxu0 %v1962
  %2069 = vmatprep.subr.mxu0 0.0
  %2070 = vmatpush1.msra.mxu0 0.0
  %2071 = vmatprep.subr.mxu0 0.0
  %2072 = vmatpush1.msra.mxu0 0.0
  %2073 = vmatprep.subr.mxu0 0.0
  %2074 = vmatpush1.msra.mxu0 0.0
  %2075 = vmatprep.subr.mxu0 0.0
  %2076 = vmatpush1.msra.mxu0 0.0
  %2077 = vmatprep.subr.mxu0 0.0
  %2078 = vmatpush1.msra.mxu0 0.0
  %2079 = vmatprep.subr.mxu0 0.0
  %2080 = vmatpush1.msra.mxu0 0.0
  %2081 = vmatprep.subr.mxu0 0.0
  %2082 = vmatpush1.msra.mxu0 0.0
  %2083 = vmatprep.subr.mxu0 0.0
  %2084 = vmatpush1.msra.mxu0 0.0
  %2085 = vmatprep.subr.mxu0 0.0
  %2086 = vmatpush1.msra.mxu0 0.0
  %2087 = vmatprep.subr.mxu0 0.0
  %2088 = vmatpush1.msra.mxu0 0.0
  %2089 = vmatprep.subr.mxu0 0.0
  %2090 = vmatpush1.msra.mxu0 0.0
  %2091 = vmatprep.subr.mxu0 0.0
  %2092 = vmatpush1.msra.mxu0 0.0
  %2093 = vmatprep.subr.mxu0 0.0
  %2094 = vmatpush1.msra.mxu0 0.0
  %2095 = vmatprep.subr.mxu0 0.0
  %2096 = vmatpush1.msra.mxu0 0.0
  %2097 = vmatprep.subr.mxu0 0.0
  %2098 = vmatpush1.msra.mxu0 0.0
  %2099 = vmatprep.subr.mxu0 0.0
  %2100 = vmatpush1.msra.mxu0 0.0
  %2101 = vmatprep.subr.mxu0 0.0
  %2102 = vmatpush1.msra.mxu0 0.0
  %2103 = vmatprep.subr.mxu0 0.0
  %2104 = vmatpush1.msra.mxu0 0.0
  %2105 = vmatprep.subr.mxu0 0.0
  %2106 = vmatpush1.msra.mxu0 0.0
  %2107 = vmatprep.subr.mxu0 0.0
  %2108 = vmatpush1.msra.mxu0 0.0
  %2109 = vmatprep.subr.mxu0 0.0
  %2110 = vmatpush1.msra.mxu0 0.0
  %2111 = vmatprep.subr.mxu0 0.0
  %2112 = vmatpush1.msra.mxu0 0.0
  %2113 = vmatprep.subr.mxu0 0.0
  %2114 = vmatpush1.msra.mxu0 0.0
  %2115 = vmatprep.subr.mxu0 0.0
  %2116 = vmatpush1.msra.mxu0 0.0
  %2117 = vmatprep.subr.mxu0 0.0
  %2118 = vmatpush1.msra.mxu0 0.0
  %2119 = vmatprep.subr.mxu0 0.0
  %2120 = vmatpush1.msra.mxu0 0.0
  %2121 = vmatprep.subr.mxu0 0.0
  %2122 = vmatpush1.msra.mxu0 0.0
  %2123 = vmatprep.subr.mxu0 0.0
  %2124 = vmatpush1.msra.mxu0 0.0
  %2125 = vmatprep.subr.mxu0 0.0
  %2126 = vmatpush1.msra.mxu0 0.0
  %2127 = vmatprep.subr.mxu0 0.0
  %2128 = vmatpush1.msra.mxu0 0.0
  %2129 = vmatprep.subr.mxu0 0.0
  %2130 = vmatpush1.msra.mxu0 0.0
  %2131 = vmatprep.mubr.f32.mxu0 0.0
  %2132 = vmatmul.mubr.f32.gmra.mrb[0].mxu0 %v1970
  %v2133 = vpop.f32.mrb[0].mxu0
  %v2134 = vadd.f32 0.0, %v2133
  %v2135 = vpop.f32.mrb[0].mxu0
  %v2136 = vadd.f32 0.0, %v2135
  %2137 = vmatprep.mubr.f32.mxu0 0.0
  %2138 = vmatmul.mubr.f32.gmra.mrb[0].mxu0 %v1972
  %v2139 = vpop.f32.mrb[0].mxu0
  %v2140 = vadd.f32 0.0, %v2139
  %v2141 = vpop.f32.mrb[0].mxu0
  %v2142 = vadd.f32 0.0, %v2141
  %2143 = vmatprep.mubr.f32.mxu0 0.0
  %2144 = vmatmul.mubr.f32.gmra.mrb[0].mxu0 %v1974
  %v2145 = vpop.f32.mrb[0].mxu0
  %v2146 = vadd.f32 0.0, %v2145
  %v2147 = vpop.f32.mrb[0].mxu0
  %v2148 = vadd.f32 0.0, %v2147
  %2149 = vmatprep.mubr.f32.mxu0 0.0
  %2150 = vmatmul.mubr.f32.gmra.mrb[0].mxu0 %v1976
  %v2151 = vpop.f32.mrb[0].mxu0
  %v2152 = vadd.f32 0.0, %v2151
  %v2153 = vpop.f32.mrb[0].mxu0
  %v2154 = vadd.f32 0.0, %v2153
  %2155 = vdwg.mxu0
  %2156 = vmatprep.subr.mxu0 0.0
  %2157 = vmatpush1.msra.mxu0 %v1964
  %2158 = vmatprep.subr.mxu0 0.0
  %2159 = vmatpush1.msra.mxu0 0.0
  %2160 = vmatprep.subr.mxu0 0.0
  %2161 = vmatpush1.msra.mxu0 0.0
  %2162 = vmatprep.subr.mxu0 0.0
  %2163 = vmatpush1.msra.mxu0 0.0
  %2164 = vmatprep.subr.mxu0 0.0
  %2165 = vmatpush1.msra.mxu0 0.0
  %2166 = vmatprep.subr.mxu0 0.0
  %2167 = vmatpush1.msra.mxu0 0.0
  %2168 = vmatprep.subr.mxu0 0.0
  %2169 = vmatpush1.msra.mxu0 0.0
  %2170 = vmatprep.subr.mxu0 0.0
  %2171 = vmatpush1.msra.mxu0 0.0
  %2172 = vmatprep.subr.mxu0 0.0
  %2173 = vmatpush1.msra.mxu0 0.0
  %2174 = vmatprep.subr.mxu0 0.0
  %2175 = vmatpush1.msra.mxu0 0.0
  %2176 = vmatprep.subr.mxu0 0.0
  %2177 = vmatpush1.msra.mxu0 0.0
  %2178 = vmatprep.subr.mxu0 0.0
  %2179 = vmatpush1.msra.mxu0 0.0
  %2180 = vmatprep.subr.mxu0 0.0
  %2181 = vmatpush1.msra.mxu0 0.0
  %2182 = vmatprep.subr.mxu0 0.0
  %2183 = vmatpush1.msra.mxu0 0.0
  %2184 = vmatprep.subr.mxu0 0.0
  %2185 = vmatpush1.msra.mxu0 0.0
  %2186 = vmatprep.subr.mxu0 0.0
  %2187 = vmatpush1.msra.mxu0 0.0
  %2188 = vmatprep.subr.mxu0 0.0
  %2189 = vmatpush1.msra.mxu0 0.0
  %2190 = vmatprep.subr.mxu0 0.0
  %2191 = vmatpush1.msra.mxu0 0.0
  %2192 = vmatprep.subr.mxu0 0.0
  %2193 = vmatpush1.msra.mxu0 0.0
  %2194 = vmatprep.subr.mxu0 0.0
  %2195 = vmatpush1.msra.mxu0 0.0
  %2196 = vmatprep.subr.mxu0 0.0
  %2197 = vmatpush1.msra.mxu0 0.0
  %2198 = vmatprep.subr.mxu0 0.0
  %2199 = vmatpush1.msra.mxu0 0.0
  %2200 = vmatprep.subr.mxu0 0.0
  %2201 = vmatpush1.msra.mxu0 0.0
  %2202 = vmatprep.subr.mxu0 0.0
  %2203 = vmatpush1.msra.mxu0 0.0
  %2204 = vmatprep.subr.mxu0 0.0
  %2205 = vmatpush1.msra.mxu0 0.0
  %2206 = vmatprep.subr.mxu0 0.0
  %2207 = vmatpush1.msra.mxu0 0.0
  %2208 = vmatprep.subr.mxu0 0.0
  %2209 = vmatpush1.msra.mxu0 0.0
  %2210 = vmatprep.subr.mxu0 0.0
  %2211 = vmatpush1.msra.mxu0 0.0
  %2212 = vmatprep.subr.mxu0 0.0
  %2213 = vmatpush1.msra.mxu0 0.0
  %2214 = vmatprep.subr.mxu0 0.0
  %2215 = vmatpush1.msra.mxu0 0.0
  %2216 = vmatprep.subr.mxu0 0.0
  %2217 = vmatpush1.msra.mxu0 0.0
  %2218 = vmatprep.subr.mxu0 0.0
  %2219 = vmatpush1.msra.mxu0 0.0
  %2220 = vmatprep.mubr.f32.mxu0 0.0
  %2221 = vmatmul.mubr.f32.gmra.mrb[0].mxu0 %v1970
  %v2222 = vpop.f32.mrb[0].mxu0
  %v2223 = vadd.f32 0.0, %v2222
  %v2224 = vpop.f32.mrb[0].mxu0
  %2225 = vmatprep.mubr.f32.mxu0 0.0
  %2226 = vmatmul.mubr.f32.gmra.mrb[0].mxu0 %v1972
  %v2227 = vpop.f32.mrb[0].mxu0
  %v2228 = vadd.f32 0.0, %v2227
  %v2229 = vpop.f32.mrb[0].mxu0
  %2230 = vmatprep.mubr.f32.mxu0 0.0
  %2231 = vmatmul.mubr.f32.gmra.mrb[0].mxu0 %v1974
  %v2232 = vpop.f32.mrb[0].mxu0
  %v2233 = vadd.f32 0.0, %v2232
  %v2234 = vpop.f32.mrb[0].mxu0
  %2235 = vmatprep.mubr.f32.mxu0 0.0
  %2236 = vmatmul.mubr.f32.gmra.mrb[0].mxu0 %v1976
  %v2237 = vpop.f32.mrb[0].mxu0
  %v2238 = vadd.f32 0.0, %v2237
  %v2239 = vpop.f32.mrb[0].mxu0
  %2240 = vdwg.mxu0
  %v2241 = vadd.f32 %v1907, %v2045
  %v2242 = vadd.f32 %v1908, %v2047
  %v2243 = vadd.f32 %v1909, %v2134
  %v2244 = vadd.f32 %v1910, %v2136
  %v2245 = vadd.f32 %v1911, %v2223
  %v2246 = vadd.f32 %v1912, %v2051
  %v2247 = vadd.f32 %v1913, %v2053
  %v2248 = vadd.f32 %v1914, %v2140
  %v2249 = vadd.f32 %v1915, %v2142
  %v2250 = vadd.f32 %v1916, %v2228
  %v2251 = vadd.f32 %v1917, %v2057
  %v2252 = vadd.f32 %v1918, %v2059
  %v2253 = vadd.f32 %v1919, %v2146
  %v2254 = vadd.f32 %v1920, %v2148
  %v2255 = vadd.f32 %v1921, %v2233
  %v2256 = vadd.f32 %v1922, %v2063
  %v2257 = vadd.f32 %v1923, %v2065
  %v2258 = vadd.f32 %v1924, %v2152
  %v2259 = vadd.f32 %v1925, %v2154
  %v2260 = vadd.f32 %v1926, %v2238
  %2261 = vrot.lane.b32.xlu0 %v62, 72
  %v2262 = vpop.permute.xlu0 %2261
  %2263 = vrot.lane.b32.xlu0 %v63, 72
  %v2264 = vpop.permute.xlu0 %2263
  %2265 = vrot.lane.b32.xlu0 %v64, 72
  %v2266 = vpop.permute.xlu0 %2265
  %2267 = vrot.lane.b32.xlu0 %v65, 72
  %v2268 = vpop.permute.xlu0 %2267
  %2269 = vrot.lane.b32.xlu0 %v1927, 91
  %v2270 = vpop.permute.xlu0 %2269
  %2271 = vrot.lane.b32.xlu0 %v1928, 91
  %v2272 = vpop.permute.xlu0 %2271
  %2273 = vrot.lane.b32.xlu0 %v1929, 91
  %v2274 = vpop.permute.xlu0 %2273
  %2275 = vrot.lane.b32.xlu0 %v1930, 91
  %v2276 = vpop.permute.xlu0 %2275
  %2277 = vrot.lane.b32.xlu0 %v1931, 91
  %v2278 = vpop.permute.xlu0 %2277
  %2279 = vrot.lane.b32.xlu0 %v1932, 91
  %v2280 = vpop.permute.xlu0 %2279
  %vm2281 = vcmask 744448
  %v2282 = vsel %vm2281, %v2270, %v2272
  %v2283 = vsel %vm2281, %v2272, %v2274
  %v2284 = vsel %vm2281, %v2274, %v2276
  %v2285 = vsel %vm2281, %v2276, %v2278
  %v2286 = vsel %vm2281, %v2278, %v2280
  %v2292 = vsel %vm108, %v2262, 0
  %v2294 = vsel %vm108, %v2264, 0
  %v2296 = vsel %vm108, %v2266, 0
  %v2298 = vsel %vm108, %v2268, 0
  %2300 = vmatprep.subr.mxu0 %v2283
  %2301 = vmatpush1.msra.mxu0 %v2282
  %2302 = vmatprep.subr.mxu0 0.0
  %2303 = vmatpush1.msra.mxu0 0.0
  %2304 = vmatprep.subr.mxu0 0.0
  %2305 = vmatpush1.msra.mxu0 0.0
  %2306 = vmatprep.subr.mxu0 0.0
  %2307 = vmatpush1.msra.mxu0 0.0
  %2308 = vmatprep.subr.mxu0 0.0
  %2309 = vmatpush1.msra.mxu0 0.0
  %2310 = vmatprep.subr.mxu0 0.0
  %2311 = vmatpush1.msra.mxu0 0.0
  %2312 = vmatprep.subr.mxu0 0.0
  %2313 = vmatpush1.msra.mxu0 0.0
  %2314 = vmatprep.subr.mxu0 0.0
  %2315 = vmatpush1.msra.mxu0 0.0
  %2316 = vmatprep.subr.mxu0 0.0
  %2317 = vmatpush1.msra.mxu0 0.0
  %2318 = vmatprep.subr.mxu0 0.0
  %2319 = vmatpush1.msra.mxu0 0.0
  %2320 = vmatprep.subr.mxu0 0.0
  %2321 = vmatpush1.msra.mxu0 0.0
  %2322 = vmatprep.subr.mxu0 0.0
  %2323 = vmatpush1.msra.mxu0 0.0
  %2324 = vmatprep.subr.mxu0 0.0
  %2325 = vmatpush1.msra.mxu0 0.0
  %2326 = vmatprep.subr.mxu0 0.0
  %2327 = vmatpush1.msra.mxu0 0.0
  %2328 = vmatprep.subr.mxu0 0.0
  %2329 = vmatpush1.msra.mxu0 0.0
  %2330 = vmatprep.subr.mxu0 0.0
  %2331 = vmatpush1.msra.mxu0 0.0
  %2332 = vmatprep.subr.mxu0 0.0
  %2333 = vmatpush1.msra.mxu0 0.0
  %2334 = vmatprep.subr.mxu0 0.0
  %2335 = vmatpush1.msra.mxu0 0.0
  %2336 = vmatprep.subr.mxu0 0.0
  %2337 = vmatpush1.msra.mxu0 0.0
  %2338 = vmatprep.subr.mxu0 0.0
  %2339 = vmatpush1.msra.mxu0 0.0
  %2340 = vmatprep.subr.mxu0 0.0
  %2341 = vmatpush1.msra.mxu0 0.0
  %2342 = vmatprep.subr.mxu0 0.0
  %2343 = vmatpush1.msra.mxu0 0.0
  %2344 = vmatprep.subr.mxu0 0.0
  %2345 = vmatpush1.msra.mxu0 0.0
  %2346 = vmatprep.subr.mxu0 0.0
  %2347 = vmatpush1.msra.mxu0 0.0
  %2348 = vmatprep.subr.mxu0 0.0
  %2349 = vmatpush1.msra.mxu0 0.0
  %2350 = vmatprep.subr.mxu0 0.0
  %2351 = vmatpush1.msra.mxu0 0.0
  %2352 = vmatprep.subr.mxu0 0.0
  %2353 = vmatpush1.msra.mxu0 0.0
  %2354 = vmatprep.subr.mxu0 0.0
  %2355 = vmatpush1.msra.mxu0 0.0
  %2356 = vmatprep.subr.mxu0 0.0
  %2357 = vmatpush1.msra.mxu0 0.0
  %2358 = vmatprep.subr.mxu0 0.0
  %2359 = vmatpush1.msra.mxu0 0.0
  %2360 = vmatprep.subr.mxu0 0.0
  %2361 = vmatpush1.msra.mxu0 0.0
  %2362 = vmatprep.subr.mxu0 0.0
  %2363 = vmatpush1.msra.mxu0 0.0
  %2364 = vmatprep.mubr.f32.mxu0 0.0
  %2365 = vmatmul.mubr.f32.gmra.mrb[0].mxu0 %v2292
  %v2366 = vpop.f32.mrb[0].mxu0
  %v2367 = vadd.f32 0.0, %v2366
  %v2368 = vpop.f32.mrb[0].mxu0
  %v2369 = vadd.f32 0.0, %v2368
  %2370 = vmatprep.mubr.f32.mxu0 0.0
  %2371 = vmatmul.mubr.f32.gmra.mrb[0].mxu0 %v2294
  %v2372 = vpop.f32.mrb[0].mxu0
  %v2373 = vadd.f32 0.0, %v2372
  %v2374 = vpop.f32.mrb[0].mxu0
  %v2375 = vadd.f32 0.0, %v2374
  %2376 = vmatprep.mubr.f32.mxu0 0.0
  %2377 = vmatmul.mubr.f32.gmra.mrb[0].mxu0 %v2296
  %v2378 = vpop.f32.mrb[0].mxu0
  %v2379 = vadd.f32 0.0, %v2378
  %v2380 = vpop.f32.mrb[0].mxu0
  %v2381 = vadd.f32 0.0, %v2380
  %2382 = vmatprep.mubr.f32.mxu0 0.0
  %2383 = vmatmul.mubr.f32.gmra.mrb[0].mxu0 %v2298
  %v2384 = vpop.f32.mrb[0].mxu0
  %v2385 = vadd.f32 0.0, %v2384
  %v2386 = vpop.f32.mrb[0].mxu0
  %v2387 = vadd.f32 0.0, %v2386
  %2388 = vdwg.mxu0
  %2389 = vmatprep.subr.mxu0 %v2285
  %2390 = vmatpush1.msra.mxu0 %v2284
  %2391 = vmatprep.subr.mxu0 0.0
  %2392 = vmatpush1.msra.mxu0 0.0
  %2393 = vmatprep.subr.mxu0 0.0
  %2394 = vmatpush1.msra.mxu0 0.0
  %2395 = vmatprep.subr.mxu0 0.0
  %2396 = vmatpush1.msra.mxu0 0.0
  %2397 = vmatprep.subr.mxu0 0.0
  %2398 = vmatpush1.msra.mxu0 0.0
  %2399 = vmatprep.subr.mxu0 0.0
  %2400 = vmatpush1.msra.mxu0 0.0
  %2401 = vmatprep.subr.mxu0 0.0
  %2402 = vmatpush1.msra.mxu0 0.0
  %2403 = vmatprep.subr.mxu0 0.0
  %2404 = vmatpush1.msra.mxu0 0.0
  %2405 = vmatprep.subr.mxu0 0.0
  %2406 = vmatpush1.msra.mxu0 0.0
  %2407 = vmatprep.subr.mxu0 0.0
  %2408 = vmatpush1.msra.mxu0 0.0
  %2409 = vmatprep.subr.mxu0 0.0
  %2410 = vmatpush1.msra.mxu0 0.0
  %2411 = vmatprep.subr.mxu0 0.0
  %2412 = vmatpush1.msra.mxu0 0.0
  %2413 = vmatprep.subr.mxu0 0.0
  %2414 = vmatpush1.msra.mxu0 0.0
  %2415 = vmatprep.subr.mxu0 0.0
  %2416 = vmatpush1.msra.mxu0 0.0
  %2417 = vmatprep.subr.mxu0 0.0
  %2418 = vmatpush1.msra.mxu0 0.0
  %2419 = vmatprep.subr.mxu0 0.0
  %2420 = vmatpush1.msra.mxu0 0.0
  %2421 = vmatprep.subr.mxu0 0.0
  %2422 = vmatpush1.msra.mxu0 0.0
  %2423 = vmatprep.subr.mxu0 0.0
  %2424 = vmatpush1.msra.mxu0 0.0
  %2425 = vmatprep.subr.mxu0 0.0
  %2426 = vmatpush1.msra.mxu0 0.0
  %2427 = vmatprep.subr.mxu0 0.0
  %2428 = vmatpush1.msra.mxu0 0.0
  %2429 = vmatprep.subr.mxu0 0.0
  %2430 = vmatpush1.msra.mxu0 0.0
  %2431 = vmatprep.subr.mxu0 0.0
  %2432 = vmatpush1.msra.mxu0 0.0
  %2433 = vmatprep.subr.mxu0 0.0
  %2434 = vmatpush1.msra.mxu0 0.0
  %2435 = vmatprep.subr.mxu0 0.0
  %2436 = vmatpush1.msra.mxu0 0.0
  %2437 = vmatprep.subr.mxu0 0.0
  %2438 = vmatpush1.msra.mxu0 0.0
  %2439 = vmatprep.subr.mxu0 0.0
  %2440 = vmatpush1.msra.mxu0 0.0
  %2441 = vmatprep.subr.mxu0 0.0
  %2442 = vmatpush1.msra.mxu0 0.0
  %2443 = vmatprep.subr.mxu0 0.0
  %2444 = vmatpush1.msra.mxu0 0.0
  %2445 = vmatprep.subr.mxu0 0.0
  %2446 = vmatpush1.msra.mxu0 0.0
  %2447 = vmatprep.subr.mxu0 0.0
  %2448 = vmatpush1.msra.mxu0 0.0
  %2449 = vmatprep.subr.mxu0 0.0
  %2450 = vmatpush1.msra.mxu0 0.0
  %2451 = vmatprep.subr.mxu0 0.0
  %2452 = vmatpush1.msra.mxu0 0.0
  %2453 = vmatprep.mubr.f32.mxu0 0.0
  %2454 = vmatmul.mubr.f32.gmra.mrb[0].mxu0 %v2292
  %v2455 = vpop.f32.mrb[0].mxu0
  %v2456 = vadd.f32 0.0, %v2455
  %v2457 = vpop.f32.mrb[0].mxu0
  %v2458 = vadd.f32 0.0, %v2457
  %2459 = vmatprep.mubr.f32.mxu0 0.0
  %2460 = vmatmul.mubr.f32.gmra.mrb[0].mxu0 %v2294
  %v2461 = vpop.f32.mrb[0].mxu0
  %v2462 = vadd.f32 0.0, %v2461
  %v2463 = vpop.f32.mrb[0].mxu0
  %v2464 = vadd.f32 0.0, %v2463
  %2465 = vmatprep.mubr.f32.mxu0 0.0
  %2466 = vmatmul.mubr.f32.gmra.mrb[0].mxu0 %v2296
  %v2467 = vpop.f32.mrb[0].mxu0
  %v2468 = vadd.f32 0.0, %v2467
  %v2469 = vpop.f32.mrb[0].mxu0
  %v2470 = vadd.f32 0.0, %v2469
  %2471 = vmatprep.mubr.f32.mxu0 0.0
  %2472 = vmatmul.mubr.f32.gmra.mrb[0].mxu0 %v2298
  %v2473 = vpop.f32.mrb[0].mxu0
  %v2474 = vadd.f32 0.0, %v2473
  %v2475 = vpop.f32.mrb[0].mxu0
  %v2476 = vadd.f32 0.0, %v2475
  %2477 = vdwg.mxu0
  %2478 = vmatprep.subr.mxu0 0.0
  %2479 = vmatpush1.msra.mxu0 %v2286
  %2480 = vmatprep.subr.mxu0 0.0
  %2481 = vmatpush1.msra.mxu0 0.0
  %2482 = vmatprep.subr.mxu0 0.0
  %2483 = vmatpush1.msra.mxu0 0.0
  %2484 = vmatprep.subr.mxu0 0.0
  %2485 = vmatpush1.msra.mxu0 0.0
  %2486 = vmatprep.subr.mxu0 0.0
  %2487 = vmatpush1.msra.mxu0 0.0
  %2488 = vmatprep.subr.mxu0 0.0
  %2489 = vmatpush1.msra.mxu0 0.0
  %2490 = vmatprep.subr.mxu0 0.0
  %2491 = vmatpush1.msra.mxu0 0.0
  %2492 = vmatprep.subr.mxu0 0.0
  %2493 = vmatpush1.msra.mxu0 0.0
  %2494 = vmatprep.subr.mxu0 0.0
  %2495 = vmatpush1.msra.mxu0 0.0
  %2496 = vmatprep.subr.mxu0 0.0
  %2497 = vmatpush1.msra.mxu0 0.0
  %2498 = vmatprep.subr.mxu0 0.0
  %2499 = vmatpush1.msra.mxu0 0.0
  %2500 = vmatprep.subr.mxu0 0.0
  %2501 = vmatpush1.msra.mxu0 0.0
  %2502 = vmatprep.subr.mxu0 0.0
  %2503 = vmatpush1.msra.mxu0 0.0
  %2504 = vmatprep.subr.mxu0 0.0
  %2505 = vmatpush1.msra.mxu0 0.0
  %2506 = vmatprep.subr.mxu0 0.0
  %2507 = vmatpush1.msra.mxu0 0.0
  %2508 = vmatprep.subr.mxu0 0.0
  %2509 = vmatpush1.msra.mxu0 0.0
  %2510 = vmatprep.subr.mxu0 0.0
  %2511 = vmatpush1.msra.mxu0 0.0
  %2512 = vmatprep.subr.mxu0 0.0
  %2513 = vmatpush1.msra.mxu0 0.0
  %2514 = vmatprep.subr.mxu0 0.0
  %2515 = vmatpush1.msra.mxu0 0.0
  %2516 = vmatprep.subr.mxu0 0.0
  %2517 = vmatpush1.msra.mxu0 0.0
  %2518 = vmatprep.subr.mxu0 0.0
  %2519 = vmatpush1.msra.mxu0 0.0
  %2520 = vmatprep.subr.mxu0 0.0
  %2521 = vmatpush1.msra.mxu0 0.0
  %2522 = vmatprep.subr.mxu0 0.0
  %2523 = vmatpush1.msra.mxu0 0.0
  %2524 = vmatprep.subr.mxu0 0.0
  %2525 = vmatpush1.msra.mxu0 0.0
  %2526 = vmatprep.subr.mxu0 0.0
  %2527 = vmatpush1.msra.mxu0 0.0
  %2528 = vmatprep.subr.mxu0 0.0
  %2529 = vmatpush1.msra.mxu0 0.0
  %2530 = vmatprep.subr.mxu0 0.0
  %2531 = vmatpush1.msra.mxu0 0.0
  %2532 = vmatprep.subr.mxu0 0.0
  %2533 = vmatpush1.msra.mxu0 0.0
  %2534 = vmatprep.subr.mxu0 0.0
  %2535 = vmatpush1.msra.mxu0 0.0
  %2536 = vmatprep.subr.mxu0 0.0
  %2537 = vmatpush1.msra.mxu0 0.0
  %2538 = vmatprep.subr.mxu0 0.0
  %2539 = vmatpush1.msra.mxu0 0.0
  %2540 = vmatprep.subr.mxu0 0.0
  %2541 = vmatpush1.msra.mxu0 0.0
  %2542 = vmatprep.mubr.f32.mxu0 0.0
  %2543 = vmatmul.mubr.f32.gmra.mrb[0].mxu0 %v2292
  %v2544 = vpop.f32.mrb[0].mxu0
  %v2545 = vadd.f32 0.0, %v2544
  %v2546 = vpop.f32.mrb[0].mxu0
  %2547 = vmatprep.mubr.f32.mxu0 0.0
  %2548 = vmatmul.mubr.f32.gmra.mrb[0].mxu0 %v2294
  %v2549 = vpop.f32.mrb[0].mxu0
  %v2550 = vadd.f32 0.0, %v2549
  %v2551 = vpop.f32.mrb[0].mxu0
  %2552 = vmatprep.mubr.f32.mxu0 0.0
  %2553 = vmatmul.mubr.f32.gmra.mrb[0].mxu0 %v2296
  %v2554 = vpop.f32.mrb[0].mxu0
  %v2555 = vadd.f32 0.0, %v2554
  %v2556 = vpop.f32.mrb[0].mxu0
  %2557 = vmatprep.mubr.f32.mxu0 0.0
  %2558 = vmatmul.mubr.f32.gmra.mrb[0].mxu0 %v2298
  %v2559 = vpop.f32.mrb[0].mxu0
  %v2560 = vadd.f32 0.0, %v2559
  %v2561 = vpop.f32.mrb[0].mxu0
  %2562 = vdwg.mxu0
  %v2563 = vadd.f32 %v2241, %v2367
  %v2564 = vadd.f32 %v2242, %v2369
  %v2565 = vadd.f32 %v2243, %v2456
  %v2566 = vadd.f32 %v2244, %v2458
  %v2567 = vadd.f32 %v2245, %v2545
  %v2568 = vadd.f32 %v2246, %v2373
  %v2569 = vadd.f32 %v2247, %v2375
  %v2570 = vadd.f32 %v2248, %v2462
  %v2571 = vadd.f32 %v2249, %v2464
  %v2572 = vadd.f32 %v2250, %v2550
  %v2573 = vadd.f32 %v2251, %v2379
  %v2574 = vadd.f32 %v2252, %v2381
  %v2575 = vadd.f32 %v2253, %v2468
  %v2576 = vadd.f32 %v2254, %v2470
  %v2577 = vadd.f32 %v2255, %v2555
  %v2578 = vadd.f32 %v2256, %v2385
  %v2579 = vadd.f32 %v2257, %v2387
  %v2580 = vadd.f32 %v2258, %v2474
  %v2581 = vadd.f32 %v2259, %v2476
  %v2582 = vadd.f32 %v2260, %v2560
  %2583 = vrot.lane.b32.xlu0 %v62, 64
  %v2584 = vpop.permute.xlu0 %2583
  %2585 = vrot.lane.b32.xlu0 %v63, 64
  %v2586 = vpop.permute.xlu0 %2585
  %2587 = vrot.lane.b32.xlu0 %v64, 64
  %v2588 = vpop.permute.xlu0 %2587
  %2589 = vrot.lane.b32.xlu0 %v65, 64
  %v2590 = vpop.permute.xlu0 %2589
  %2591 = vrot.lane.b32.xlu0 %v1927, 90
  %v2592 = vpop.permute.xlu0 %2591
  %2593 = vrot.lane.b32.xlu0 %v1928, 90
  %v2594 = vpop.permute.xlu0 %2593
  %2595 = vrot.lane.b32.xlu0 %v1929, 90
  %v2596 = vpop.permute.xlu0 %2595
  %2597 = vrot.lane.b32.xlu0 %v1930, 90
  %v2598 = vpop.permute.xlu0 %2597
  %2599 = vrot.lane.b32.xlu0 %v1931, 90
  %v2600 = vpop.permute.xlu0 %2599
  %2601 = vrot.lane.b32.xlu0 %v1932, 90
  %v2602 = vpop.permute.xlu0 %2601
  %vm2603 = vcmask 736256
  %v2604 = vsel %vm2603, %v2592, %v2594
  %v2605 = vsel %vm2603, %v2594, %v2596
  %v2606 = vsel %vm2603, %v2596, %v2598
  %v2607 = vsel %vm2603, %v2598, %v2600
  %v2608 = vsel %vm2603, %v2600, %v2602
  %v2614 = vsel %vm108, %v2584, 0
  %v2616 = vsel %vm108, %v2586, 0
  %v2618 = vsel %vm108, %v2588, 0
  %v2620 = vsel %vm108, %v2590, 0
  %2622 = vmatprep.subr.mxu0 %v2605
  %2623 = vmatpush1.msra.mxu0 %v2604
  %2624 = vmatprep.subr.mxu0 0.0
  %2625 = vmatpush1.msra.mxu0 0.0
  %2626 = vmatprep.subr.mxu0 0.0
  %2627 = vmatpush1.msra.mxu0 0.0
  %2628 = vmatprep.subr.mxu0 0.0
  %2629 = vmatpush1.msra.mxu0 0.0
  %2630 = vmatprep.subr.mxu0 0.0
  %2631 = vmatpush1.msra.mxu0 0.0
  %2632 = vmatprep.subr.mxu0 0.0
  %2633 = vmatpush1.msra.mxu0 0.0
  %2634 = vmatprep.subr.mxu0 0.0
  %2635 = vmatpush1.msra.mxu0 0.0
  %2636 = vmatprep.subr.mxu0 0.0
  %2637 = vmatpush1.msra.mxu0 0.0
  %2638 = vmatprep.subr.mxu0 0.0
  %2639 = vmatpush1.msra.mxu0 0.0
  %2640 = vmatprep.subr.mxu0 0.0
  %2641 = vmatpush1.msra.mxu0 0.0
  %2642 = vmatprep.subr.mxu0 0.0
  %2643 = vmatpush1.msra.mxu0 0.0
  %2644 = vmatprep.subr.mxu0 0.0
  %2645 = vmatpush1.msra.mxu0 0.0
  %2646 = vmatprep.subr.mxu0 0.0
  %2647 = vmatpush1.msra.mxu0 0.0
  %2648 = vmatprep.subr.mxu0 0.0
  %2649 = vmatpush1.msra.mxu0 0.0
  %2650 = vmatprep.subr.mxu0 0.0
  %2651 = vmatpush1.msra.mxu0 0.0
  %2652 = vmatprep.subr.mxu0 0.0
  %2653 = vmatpush1.msra.mxu0 0.0
  %2654 = vmatprep.subr.mxu0 0.0
  %2655 = vmatpush1.msra.mxu0 0.0
  %2656 = vmatprep.subr.mxu0 0.0
  %2657 = vmatpush1.msra.mxu0 0.0
  %2658 = vmatprep.subr.mxu0 0.0
  %2659 = vmatpush1.msra.mxu0 0.0
  %2660 = vmatprep.subr.mxu0 0.0
  %2661 = vmatpush1.msra.mxu0 0.0
  %2662 = vmatprep.subr.mxu0 0.0
  %2663 = vmatpush1.msra.mxu0 0.0
  %2664 = vmatprep.subr.mxu0 0.0
  %2665 = vmatpush1.msra.mxu0 0.0
  %2666 = vmatprep.subr.mxu0 0.0
  %2667 = vmatpush1.msra.mxu0 0.0
  %2668 = vmatprep.subr.mxu0 0.0
  %2669 = vmatpush1.msra.mxu0 0.0
  %2670 = vmatprep.subr.mxu0 0.0
  %2671 = vmatpush1.msra.mxu0 0.0
  %2672 = vmatprep.subr.mxu0 0.0
  %2673 = vmatpush1.msra.mxu0 0.0
  %2674 = vmatprep.subr.mxu0 0.0
  %2675 = vmatpush1.msra.mxu0 0.0
  %2676 = vmatprep.subr.mxu0 0.0
  %2677 = vmatpush1.msra.mxu0 0.0
  %2678 = vmatprep.subr.mxu0 0.0
  %2679 = vmatpush1.msra.mxu0 0.0
  %2680 = vmatprep.subr.mxu0 0.0
  %2681 = vmatpush1.msra.mxu0 0.0
  %2682 = vmatprep.subr.mxu0 0.0
  %2683 = vmatpush1.msra.mxu0 0.0
  %2684 = vmatprep.subr.mxu0 0.0
  %2685 = vmatpush1.msra.mxu0 0.0
  %2686 = vmatprep.mubr.f32.mxu0 0.0
  %2687 = vmatmul.mubr.f32.gmra.mrb[0].mxu0 %v2614
  %v2688 = vpop.f32.mrb[0].mxu0
  %v2689 = vadd.f32 0.0, %v2688
  %v2690 = vpop.f32.mrb[0].mxu0
  %v2691 = vadd.f32 0.0, %v2690
  %2692 = vmatprep.mubr.f32.mxu0 0.0
  %2693 = vmatmul.mubr.f32.gmra.mrb[0].mxu0 %v2616
  %v2694 = vpop.f32.mrb[0].mxu0
  %v2695 = vadd.f32 0.0, %v2694
  %v2696 = vpop.f32.mrb[0].mxu0
  %v2697 = vadd.f32 0.0, %v2696
  %2698 = vmatprep.mubr.f32.mxu0 0.0
  %2699 = vmatmul.mubr.f32.gmra.mrb[0].mxu0 %v2618
  %v2700 = vpop.f32.mrb[0].mxu0
  %v2701 = vadd.f32 0.0, %v2700
  %v2702 = vpop.f32.mrb[0].mxu0
  %v2703 = vadd.f32 0.0, %v2702
  %2704 = vmatprep.mubr.f32.mxu0 0.0
  %2705 = vmatmul.mubr.f32.gmra.mrb[0].mxu0 %v2620
  %v2706 = vpop.f32.mrb[0].mxu0
  %v2707 = vadd.f32 0.0, %v2706
  %v2708 = vpop.f32.mrb[0].mxu0
  %v2709 = vadd.f32 0.0, %v2708
  %2710 = vdwg.mxu0
  %2711 = vmatprep.subr.mxu0 %v2607
  %2712 = vmatpush1.msra.mxu0 %v2606
  %2713 = vmatprep.subr.mxu0 0.0
  %2714 = vmatpush1.msra.mxu0 0.0
  %2715 = vmatprep.subr.mxu0 0.0
  %2716 = vmatpush1.msra.mxu0 0.0
  %2717 = vmatprep.subr.mxu0 0.0
  %2718 = vmatpush1.msra.mxu0 0.0
  %2719 = vmatprep.subr.mxu0 0.0
  %2720 = vmatpush1.msra.mxu0 0.0
  %2721 = vmatprep.subr.mxu0 0.0
  %2722 = vmatpush1.msra.mxu0 0.0
  %2723 = vmatprep.subr.mxu0 0.0
  %2724 = vmatpush1.msra.mxu0 0.0
  %2725 = vmatprep.subr.mxu0 0.0
  %2726 = vmatpush1.msra.mxu0 0.0
  %2727 = vmatprep.subr.mxu0 0.0
  %2728 = vmatpush1.msra.mxu0 0.0
  %2729 = vmatprep.subr.mxu0 0.0
  %2730 = vmatpush1.msra.mxu0 0.0
  %2731 = vmatprep.subr.mxu0 0.0
  %2732 = vmatpush1.msra.mxu0 0.0
  %2733 = vmatprep.subr.mxu0 0.0
  %2734 = vmatpush1.msra.mxu0 0.0
  %2735 = vmatprep.subr.mxu0 0.0
  %2736 = vmatpush1.msra.mxu0 0.0
  %2737 = vmatprep.subr.mxu0 0.0
  %2738 = vmatpush1.msra.mxu0 0.0
  %2739 = vmatprep.subr.mxu0 0.0
  %2740 = vmatpush1.msra.mxu0 0.0
  %2741 = vmatprep.subr.mxu0 0.0
  %2742 = vmatpush1.msra.mxu0 0.0
  %2743 = vmatprep.subr.mxu0 0.0
  %2744 = vmatpush1.msra.mxu0 0.0
  %2745 = vmatprep.subr.mxu0 0.0
  %2746 = vmatpush1.msra.mxu0 0.0
  %2747 = vmatprep.subr.mxu0 0.0
  %2748 = vmatpush1.msra.mxu0 0.0
  %2749 = vmatprep.subr.mxu0 0.0
  %2750 = vmatpush1.msra.mxu0 0.0
  %2751 = vmatprep.subr.mxu0 0.0
  %2752 = vmatpush1.msra.mxu0 0.0
  %2753 = vmatprep.subr.mxu0 0.0
  %2754 = vmatpush1.msra.mxu0 0.0
  %2755 = vmatprep.subr.mxu0 0.0
  %2756 = vmatpush1.msra.mxu0 0.0
  %2757 = vmatprep.subr.mxu0 0.0
  %2758 = vmatpush1.msra.mxu0 0.0
  %2759 = vmatprep.subr.mxu0 0.0
  %2760 = vmatpush1.msra.mxu0 0.0
  %2761 = vmatprep.subr.mxu0 0.0
  %2762 = vmatpush1.msra.mxu0 0.0
  %2763 = vmatprep.subr.mxu0 0.0
  %2764 = vmatpush1.msra.mxu0 0.0
  %2765 = vmatprep.subr.mxu0 0.0
  %2766 = vmatpush1.msra.mxu0 0.0
  %2767 = vmatprep.subr.mxu0 0.0
  %2768 = vmatpush1.msra.mxu0 0.0
  %2769 = vmatprep.subr.mxu0 0.0
  %2770 = vmatpush1.msra.mxu0 0.0
  %2771 = vmatprep.subr.mxu0 0.0
  %2772 = vmatpush1.msra.mxu0 0.0
  %2773 = vmatprep.subr.mxu0 0.0
  %2774 = vmatpush1.msra.mxu0 0.0
  %2775 = vmatprep.mubr.f32.mxu0 0.0
  %2776 = vmatmul.mubr.f32.gmra.mrb[0].mxu0 %v2614
  %v2777 = vpop.f32.mrb[0].mxu0
  %v2778 = vadd.f32 0.0, %v2777
  %v2779 = vpop.f32.mrb[0].mxu0
  %v2780 = vadd.f32 0.0, %v2779
  %2781 = vmatprep.mubr.f32.mxu0 0.0
  %2782 = vmatmul.mubr.f32.gmra.mrb[0].mxu0 %v2616
  %v2783 = vpop.f32.mrb[0].mxu0
  %v2784 = vadd.f32 0.0, %v2783
  %v2785 = vpop.f32.mrb[0].mxu0
  %v2786 = vadd.f32 0.0, %v2785
  %2787 = vmatprep.mubr.f32.mxu0 0.0
  %2788 = vmatmul.mubr.f32.gmra.mrb[0].mxu0 %v2618
  %v2789 = vpop.f32.mrb[0].mxu0
  %v2790 = vadd.f32 0.0, %v2789
  %v2791 = vpop.f32.mrb[0].mxu0
  %v2792 = vadd.f32 0.0, %v2791
  %2793 = vmatprep.mubr.f32.mxu0 0.0
  %2794 = vmatmul.mubr.f32.gmra.mrb[0].mxu0 %v2620
  %v2795 = vpop.f32.mrb[0].mxu0
  %v2796 = vadd.f32 0.0, %v2795
  %v2797 = vpop.f32.mrb[0].mxu0
  %v2798 = vadd.f32 0.0, %v2797
  %2799 = vdwg.mxu0
  %2800 = vmatprep.subr.mxu0 0.0
  %2801 = vmatpush1.msra.mxu0 %v2608
  %2802 = vmatprep.subr.mxu0 0.0
  %2803 = vmatpush1.msra.mxu0 0.0
  %2804 = vmatprep.subr.mxu0 0.0
  %2805 = vmatpush1.msra.mxu0 0.0
  %2806 = vmatprep.subr.mxu0 0.0
  %2807 = vmatpush1.msra.mxu0 0.0
  %2808 = vmatprep.subr.mxu0 0.0
  %2809 = vmatpush1.msra.mxu0 0.0
  %2810 = vmatprep.subr.mxu0 0.0
  %2811 = vmatpush1.msra.mxu0 0.0
  %2812 = vmatprep.subr.mxu0 0.0
  %2813 = vmatpush1.msra.mxu0 0.0
  %2814 = vmatprep.subr.mxu0 0.0
  %2815 = vmatpush1.msra.mxu0 0.0
  %2816 = vmatprep.subr.mxu0 0.0
  %2817 = vmatpush1.msra.mxu0 0.0
  %2818 = vmatprep.subr.mxu0 0.0
  %2819 = vmatpush1.msra.mxu0 0.0
  %2820 = vmatprep.subr.mxu0 0.0
  %2821 = vmatpush1.msra.mxu0 0.0
  %2822 = vmatprep.subr.mxu0 0.0
  %2823 = vmatpush1.msra.mxu0 0.0
  %2824 = vmatprep.subr.mxu0 0.0
  %2825 = vmatpush1.msra.mxu0 0.0
  %2826 = vmatprep.subr.mxu0 0.0
  %2827 = vmatpush1.msra.mxu0 0.0
  %2828 = vmatprep.subr.mxu0 0.0
  %2829 = vmatpush1.msra.mxu0 0.0
  %2830 = vmatprep.subr.mxu0 0.0
  %2831 = vmatpush1.msra.mxu0 0.0
  %2832 = vmatprep.subr.mxu0 0.0
  %2833 = vmatpush1.msra.mxu0 0.0
  %2834 = vmatprep.subr.mxu0 0.0
  %2835 = vmatpush1.msra.mxu0 0.0
  %2836 = vmatprep.subr.mxu0 0.0
  %2837 = vmatpush1.msra.mxu0 0.0
  %2838 = vmatprep.subr.mxu0 0.0
  %2839 = vmatpush1.msra.mxu0 0.0
  %2840 = vmatprep.subr.mxu0 0.0
  %2841 = vmatpush1.msra.mxu0 0.0
  %2842 = vmatprep.subr.mxu0 0.0
  %2843 = vmatpush1.msra.mxu0 0.0
  %2844 = vmatprep.subr.mxu0 0.0
  %2845 = vmatpush1.msra.mxu0 0.0
  %2846 = vmatprep.subr.mxu0 0.0
  %2847 = vmatpush1.msra.mxu0 0.0
  %2848 = vmatprep.subr.mxu0 0.0
  %2849 = vmatpush1.msra.mxu0 0.0
  %2850 = vmatprep.subr.mxu0 0.0
  %2851 = vmatpush1.msra.mxu0 0.0
  %2852 = vmatprep.subr.mxu0 0.0
  %2853 = vmatpush1.msra.mxu0 0.0
  %2854 = vmatprep.subr.mxu0 0.0
  %2855 = vmatpush1.msra.mxu0 0.0
  %2856 = vmatprep.subr.mxu0 0.0
  %2857 = vmatpush1.msra.mxu0 0.0
  %2858 = vmatprep.subr.mxu0 0.0
  %2859 = vmatpush1.msra.mxu0 0.0
  %2860 = vmatprep.subr.mxu0 0.0
  %2861 = vmatpush1.msra.mxu0 0.0
  %2862 = vmatprep.subr.mxu0 0.0
  %2863 = vmatpush1.msra.mxu0 0.0
  %2864 = vmatprep.mubr.f32.mxu0 0.0
  %2865 = vmatmul.mubr.f32.gmra.mrb[0].mxu0 %v2614
  %v2866 = vpop.f32.mrb[0].mxu0
  %v2867 = vadd.f32 0.0, %v2866
  %v2868 = vpop.f32.mrb[0].mxu0
  %2869 = vmatprep.mubr.f32.mxu0 0.0
  %2870 = vmatmul.mubr.f32.gmra.mrb[0].mxu0 %v2616
  %v2871 = vpop.f32.mrb[0].mxu0
  %v2872 = vadd.f32 0.0, %v2871
  %v2873 = vpop.f32.mrb[0].mxu0
  %2874 = vmatprep.mubr.f32.mxu0 0.0
  %2875 = vmatmul.mubr.f32.gmra.mrb[0].mxu0 %v2618
  %v2876 = vpop.f32.mrb[0].mxu0
  %v2877 = vadd.f32 0.0, %v2876
  %v2878 = vpop.f32.mrb[0].mxu0
  %2879 = vmatprep.mubr.f32.mxu0 0.0
  %2880 = vmatmul.mubr.f32.gmra.mrb[0].mxu0 %v2620
  %v2881 = vpop.f32.mrb[0].mxu0
  %v2882 = vadd.f32 0.0, %v2881
  %v2883 = vpop.f32.mrb[0].mxu0
  %2884 = vdwg.mxu0
  %v2885 = vadd.f32 %v2563, %v2689
  %v2886 = vadd.f32 %v2564, %v2691
  %v2887 = vadd.f32 %v2565, %v2778
  %v2888 = vadd.f32 %v2566, %v2780
  %v2889 = vadd.f32 %v2567, %v2867
  %v2890 = vadd.f32 %v2568, %v2695
  %v2891 = vadd.f32 %v2569, %v2697
  %v2892 = vadd.f32 %v2570, %v2784
  %v2893 = vadd.f32 %v2571, %v2786
  %v2894 = vadd.f32 %v2572, %v2872
  %v2895 = vadd.f32 %v2573, %v2701
  %v2896 = vadd.f32 %v2574, %v2703
  %v2897 = vadd.f32 %v2575, %v2790
  %v2898 = vadd.f32 %v2576, %v2792
  %v2899 = vadd.f32 %v2577, %v2877
  %v2900 = vadd.f32 %v2578, %v2707
  %v2901 = vadd.f32 %v2579, %v2709
  %v2902 = vadd.f32 %v2580, %v2796
  %v2903 = vadd.f32 %v2581, %v2798
  %v2904 = vadd.f32 %v2582, %v2882
  %v2905 = vld [vmem:[%s7] sm:$0xff]
  %v2906 = vld [vmem:[%s7 + $0x8] sm:$0xff]
  %v2907 = vld [vmem:[%s7 + $0x10] sm:$0xff]
  %v2908 = vld [vmem:[%s7 + $0x18] sm:$0xff]
  %2910 = vset.pattern.permute.xlu0 0
  %2911 = vperm.xlu0 %2910, %v2905
  %v2912 = vpop.permute.xlu0 %2911
  %2915 = vset.pattern.permute.xlu0 0
  %2916 = vperm.xlu0 %2915, %v2906
  %v2917 = vpop.permute.xlu0 %2916
  %2920 = vset.pattern.permute.xlu0 0
  %2921 = vperm.xlu0 %2920, %v2907
  %v2922 = vpop.permute.xlu0 %2921
  %2925 = vset.pattern.permute.xlu0 0
  %2926 = vperm.xlu0 %2925, %v2908
  %v2927 = vpop.permute.xlu0 %2926
  %v2929 = vadd.f32 %v2885, %v2912
  %v2930 = vadd.f32 %v2886, %v2912
  %v2931 = vadd.f32 %v2887, %v2912
  %v2932 = vadd.f32 %v2888, %v2912
  %v2933 = vadd.f32 %v2889, %v2912
  %v2934 = vadd.f32 %v2890, %v2917
  %v2935 = vadd.f32 %v2891, %v2917
  %v2936 = vadd.f32 %v2892, %v2917
  %v2937 = vadd.f32 %v2893, %v2917
  %v2938 = vadd.f32 %v2894, %v2917
  %v2939 = vadd.f32 %v2895, %v2922
  %v2940 = vadd.f32 %v2896, %v2922
  %v2941 = vadd.f32 %v2897, %v2922
  %v2942 = vadd.f32 %v2898, %v2922
  %v2943 = vadd.f32 %v2899, %v2922
  %v2944 = vadd.f32 %v2900, %v2927
  %v2945 = vadd.f32 %v2901, %v2927
  %v2946 = vadd.f32 %v2902, %v2927
  %v2947 = vadd.f32 %v2903, %v2927
  %v2948 = vadd.f32 %v2904, %v2927
  %v2949 = vld [vmem:[%s13] sm:$0x1f]
  %v2951 = vlaneseq
  %v2952 = vshrl.u32 %v2951, 7
  %v2953 = vsub.s32 0, %v2952
  %v2954 = vrot.slane %v2949, %v2953
  %v2955 = vlaneseq
  %v2956 = vshrl.u32 %v2955, 7
  %v2957 = vsub.s32 1, %v2956
  %v2958 = vrot.slane %v2949, %v2957
  %v2959 = vlaneseq
  %v2960 = vshrl.u32 %v2959, 7
  %v2961 = vsub.s32 2, %v2960
  %v2962 = vrot.slane %v2949, %v2961
  %v2963 = vlaneseq
  %v2964 = vshrl.u32 %v2963, 7
  %v2965 = vsub.s32 3, %v2964
  %v2966 = vrot.slane %v2949, %v2965
  %v2967 = vlaneseq
  %v2968 = vshrl.u32 %v2967, 7
  %v2969 = vsub.s32 4, %v2968
  %v2970 = vrot.slane %v2949, %v2969
  %v2976 = vmul.f32 %v2929, %v2954
  %v2977 = vmul.f32 %v2930, %v2958
  %v2978 = vmul.f32 %v2931, %v2962
  %v2979 = vmul.f32 %v2932, %v2966
  %v2980 = vmul.f32 %v2933, %v2970
  %v2981 = vmul.f32 %v2934, %v2954
  %v2982 = vmul.f32 %v2935, %v2958
  %v2983 = vmul.f32 %v2936, %v2962
  %v2984 = vmul.f32 %v2937, %v2966
  %v2985 = vmul.f32 %v2938, %v2970
  %v2986 = vmul.f32 %v2939, %v2954
  %v2987 = vmul.f32 %v2940, %v2958
  %v2988 = vmul.f32 %v2941, %v2962
  %v2989 = vmul.f32 %v2942, %v2966
  %v2990 = vmul.f32 %v2943, %v2970
  %v2991 = vmul.f32 %v2944, %v2954
  %v2992 = vmul.f32 %v2945, %v2958
  %v2993 = vmul.f32 %v2946, %v2962
  %v2994 = vmul.f32 %v2947, %v2966
  %v2995 = vmul.f32 %v2948, %v2970
  %3016 = vrot.lane.b32.xlu0 %v2976, 19
  %v3017 = vpop.permute.xlu0 %3016
  %3018 = vrot.lane.b32.xlu0 %v2977, 19
  %v3019 = vpop.permute.xlu0 %3018
  %3020 = vrot.lane.b32.xlu0 %v2978, 19
  %v3021 = vpop.permute.xlu0 %3020
  %3022 = vrot.lane.b32.xlu0 %v2979, 19
  %v3023 = vpop.permute.xlu0 %3022
  %3024 = vrot.lane.b32.xlu0 %v2980, 19
  %v3025 = vpop.permute.xlu0 %3024
  %3026 = vrot.lane.b32.xlu0 %v2981, 19
  %v3027 = vpop.permute.xlu0 %3026
  %3028 = vrot.lane.b32.xlu0 %v2982, 19
  %v3029 = vpop.permute.xlu0 %3028
  %3030 = vrot.lane.b32.xlu0 %v2983, 19
  %v3031 = vpop.permute.xlu0 %3030
  %3032 = vrot.lane.b32.xlu0 %v2984, 19
  %v3033 = vpop.permute.xlu0 %3032
  %3034 = vrot.lane.b32.xlu0 %v2985, 19
  %v3035 = vpop.permute.xlu0 %3034
  %3036 = vrot.lane.b32.xlu0 %v2986, 19
  %v3037 = vpop.permute.xlu0 %3036
  %3038 = vrot.lane.b32.xlu0 %v2987, 19
  %v3039 = vpop.permute.xlu0 %3038
  %3040 = vrot.lane.b32.xlu0 %v2988, 19
  %v3041 = vpop.permute.xlu0 %3040
  %3042 = vrot.lane.b32.xlu0 %v2989, 19
  %v3043 = vpop.permute.xlu0 %3042
  %3044 = vrot.lane.b32.xlu0 %v2990, 19
  %v3045 = vpop.permute.xlu0 %3044
  %3046 = vrot.lane.b32.xlu0 %v2991, 19
  %v3047 = vpop.permute.xlu0 %3046
  %3048 = vrot.lane.b32.xlu0 %v2992, 19
  %v3049 = vpop.permute.xlu0 %3048
  %3050 = vrot.lane.b32.xlu0 %v2993, 19
  %v3051 = vpop.permute.xlu0 %3050
  %3052 = vrot.lane.b32.xlu0 %v2994, 19
  %v3053 = vpop.permute.xlu0 %3052
  %3054 = vrot.lane.b32.xlu0 %v2995, 19
  %v3055 = vpop.permute.xlu0 %3054
  %vm3056 = vcmask 154624
  %v3057 = vsel %vm3056, %v3017, %v3019
  %v3058 = vsel %vm3056, %v3019, %v3021
  %v3059 = vsel %vm3056, %v3021, %v3023
  %v3060 = vsel %vm3056, %v3023, %v3025
  %v3061 = vsel %vm3056, %v3027, %v3029
  %v3062 = vsel %vm3056, %v3029, %v3031
  %v3063 = vsel %vm3056, %v3031, %v3033
  %v3064 = vsel %vm3056, %v3033, %v3035
  %v3065 = vsel %vm3056, %v3037, %v3039
  %v3066 = vsel %vm3056, %v3039, %v3041
  %v3067 = vsel %vm3056, %v3041, %v3043
  %v3068 = vsel %vm3056, %v3043, %v3045
  %v3069 = vsel %vm3056, %v3047, %v3049
  %v3070 = vsel %vm3056, %v3049, %v3051
  %v3071 = vsel %vm3056, %v3051, %v3053
  %v3072 = vsel %vm3056, %v3053, %v3055
  %vm3093 = vcmask 1047704
  %3094 = vst.msk [vmem:[#allocation2] sm:$0xff] %vm3093, %v3017
  %3095 = vst [vmem:[#allocation2 + $0x8] sm:$0xff] %v3057
  %3096 = vst [vmem:[#allocation2 + $0x10] sm:$0xff] %v3058
  %3097 = vst [vmem:[#allocation2 + $0x18] sm:$0xff] %v3059
  %vm3098 = vcmask 957440
  %3099 = vst.msk [vmem:[#allocation2 + $0x20] sm:$0xff] %vm3098, %v3060
  %3100 = vst.msk [vmem:[#allocation2 + $0x30] sm:$0xff] %vm3093, %v3027
  %3101 = vst [vmem:[#allocation2 + $0x38] sm:$0xff] %v3061
  %3102 = vst [vmem:[#allocation2 + $0x40] sm:$0xff] %v3062
  %3103 = vst [vmem:[#allocation2 + $0x48] sm:$0xff] %v3063
  %3104 = vst.msk [vmem:[#allocation2 + $0x50] sm:$0xff] %vm3098, %v3064
  %3105 = vst.msk [vmem:[#allocation2 + $0x60] sm:$0xff] %vm3093, %v3037
  %3106 = vst [vmem:[#allocation2 + $0x68] sm:$0xff] %v3065
  %3107 = vst [vmem:[#allocation2 + $0x70] sm:$0xff] %v3066
  %3108 = vst [vmem:[#allocation2 + $0x78] sm:$0xff] %v3067
  %3109 = vst.msk [vmem:[#allocation2 + $0x80] sm:$0xff] %vm3098, %v3068
  %3110 = vst.msk [vmem:[#allocation2 + $0x90] sm:$0xff] %vm3093, %v3047
  %3111 = vst [vmem:[#allocation2 + $0x98] sm:$0xff] %v3069
  %3112 = vst [vmem:[#allocation2 + $0xa0] sm:$0xff] %v3070
  %3113 = vst [vmem:[#allocation2 + $0xa8] sm:$0xff] %v3071
  %3114 = vst.msk [vmem:[#allocation2 + $0xb0] sm:$0xff] %vm3098, %v3072
  %3115 = vst.msk [vmem:[#allocation2] sm:$0xff] %vm3056, 0.0
  %3116 = vst.msk [vmem:[#allocation2 + $0x30] sm:$0xff] %vm3056, 0.0
  %3117 = vst.msk [vmem:[#allocation2 + $0x60] sm:$0xff] %vm3056, 0.0
  %3118 = vst.msk [vmem:[#allocation2 + $0x90] sm:$0xff] %vm3056, 0.0
  %vm3119 = vcmask 1048488
  %3120 = vst.msk [vmem:[#allocation2 + $0x20] sm:$0xff] %vm3119, 0.0
  %3121 = vst.msk [vmem:[#allocation2 + $0x28] sm:$0xff] %vm108, 0.0
  %3122 = vst.msk [vmem:[#allocation2 + $0x50] sm:$0xff] %vm3119, 0.0
  %3123 = vst.msk [vmem:[#allocation2 + $0x58] sm:$0xff] %vm108, 0.0
  %3124 = vst.msk [vmem:[#allocation2 + $0x80] sm:$0xff] %vm3119, 0.0
  %3125 = vst.msk [vmem:[#allocation2 + $0x88] sm:$0xff] %vm108, 0.0
  %3126 = vst.msk [vmem:[#allocation2 + $0xb0] sm:$0xff] %vm3119, 0.0
  %3127 = vst.msk [vmem:[#allocation2 + $0xb8] sm:$0xff] %vm108, 0.0
  %v3128 = vld [vmem:[%s2] sm:$0xff]
  %v3129 = vld [vmem:[%s2 + $0x18] sm:$0xff]
  %v3130 = vld [vmem:[%s2 + $0x30] sm:$0xff]
  %v3131 = vld [vmem:[%s2 + $0x48] sm:$0xff]
  %v3132 = vld [vmem:[#allocation2] sm:$0xff]
  %v3133 = vld [vmem:[#allocation2 + $0x8] sm:$0xff]
  %v3134 = vld [vmem:[#allocation2 + $0x10] sm:$0xff]
  %v3135 = vld [vmem:[#allocation2 + $0x18] sm:$0xff]
  %v3136 = vld [vmem:[#allocation2 + $0x20] sm:$0xff]
  %v3137 = vld [vmem:[#allocation2 + $0x30] sm:$0xff]
  %v3138 = vld [vmem:[#allocation2 + $0x38] sm:$0xff]
  %v3139 = vld [vmem:[#allocation2 + $0x40] sm:$0xff]
  %v3140 = vld [vmem:[#allocation2 + $0x48] sm:$0xff]
  %v3141 = vld [vmem:[#allocation2 + $0x50] sm:$0xff]
  %v3142 = vld [vmem:[#allocation2 + $0x60] sm:$0xff]
  %v3143 = vld [vmem:[#allocation2 + $0x68] sm:$0xff]
  %v3144 = vld [vmem:[#allocation2 + $0x70] sm:$0xff]
  %v3145 = vld [vmem:[#allocation2 + $0x78] sm:$0xff]
  %v3146 = vld [vmem:[#allocation2 + $0x80] sm:$0xff]
  %v3147 = vld [vmem:[#allocation2 + $0x90] sm:$0xff]
  %v3148 = vld [vmem:[#allocation2 + $0x98] sm:$0xff]
  %v3149 = vld [vmem:[#allocation2 + $0xa0] sm:$0xff]
  %v3150 = vld [vmem:[#allocation2 + $0xa8] sm:$0xff]
  %v3151 = vld [vmem:[#allocation2 + $0xb0] sm:$0xff]
  %3156 = vrot.lane.b32.xlu0 %v3128, 96
  %v3157 = vpop.permute.xlu0 %3156
  %3158 = vrot.lane.b32.xlu0 %v3129, 96
  %v3159 = vpop.permute.xlu0 %3158
  %3160 = vrot.lane.b32.xlu0 %v3130, 96
  %v3161 = vpop.permute.xlu0 %3160
  %3162 = vrot.lane.b32.xlu0 %v3131, 96
  %v3163 = vpop.permute.xlu0 %3162
  %3184 = vrot.lane.b32.xlu0 %v3132, 127
  %v3185 = vpop.permute.xlu0 %3184
  %3186 = vrot.lane.b32.xlu0 %v3133, 127
  %v3187 = vpop.permute.xlu0 %3186
  %3188 = vrot.lane.b32.xlu0 %v3134, 127
  %v3189 = vpop.permute.xlu0 %3188
  %3190 = vrot.lane.b32.xlu0 %v3135, 127
  %v3191 = vpop.permute.xlu0 %3190
  %3192 = vrot.lane.b32.xlu0 %v3136, 127
  %v3193 = vpop.permute.xlu0 %3192
  %3194 = vrot.lane.b32.xlu0 %v3137, 127
  %v3195 = vpop.permute.xlu0 %3194
  %3196 = vrot.lane.b32.xlu0 %v3138, 127
  %v3197 = vpop.permute.xlu0 %3196
  %3198 = vrot.lane.b32.xlu0 %v3139, 127
  %v3199 = vpop.permute.xlu0 %3198
  %3200 = vrot.lane.b32.xlu0 %v3140, 127
  %v3201 = vpop.permute.xlu0 %3200
  %3202 = vrot.lane.b32.xlu0 %v3141, 127
  %v3203 = vpop.permute.xlu0 %3202
  %3204 = vrot.lane.b32.xlu0 %v3142, 127
  %v3205 = vpop.permute.xlu0 %3204
  %3206 = vrot.lane.b32.xlu0 %v3143, 127
  %v3207 = vpop.permute.xlu0 %3206
  %3208 = vrot.lane.b32.xlu0 %v3144, 127
  %v3209 = vpop.permute.xlu0 %3208
  %3210 = vrot.lane.b32.xlu0 %v3145, 127
  %v3211 = vpop.permute.xlu0 %3210
  %3212 = vrot.lane.b32.xlu0 %v3146, 127
  %v3213 = vpop.permute.xlu0 %3212
  %3214 = vrot.lane.b32.xlu0 %v3147, 127
  %v3215 = vpop.permute.xlu0 %3214
  %3216 = vrot.lane.b32.xlu0 %v3148, 127
  %v3217 = vpop.permute.xlu0 %3216
  %3218 = vrot.lane.b32.xlu0 %v3149, 127
  %v3219 = vpop.permute.xlu0 %3218
  %3220 = vrot.lane.b32.xlu0 %v3150, 127
  %v3221 = vpop.permute.xlu0 %3220
  %3222 = vrot.lane.b32.xlu0 %v3151, 127
  %v3223 = vpop.permute.xlu0 %3222
  %v3224 = vsel %vm98, %v3185, %v3187
  %v3225 = vsel %vm98, %v3187, %v3189
  %v3226 = vsel %vm98, %v3189, %v3191
  %v3227 = vsel %vm98, %v3191, %v3193
  %v3228 = vsel %vm98, %v3195, %v3197
  %v3229 = vsel %vm98, %v3197, %v3199
  %v3230 = vsel %vm98, %v3199, %v3201
  %v3231 = vsel %vm98, %v3201, %v3203
  %v3232 = vsel %vm98, %v3205, %v3207
  %v3233 = vsel %vm98, %v3207, %v3209
  %v3234 = vsel %vm98, %v3209, %v3211
  %v3235 = vsel %vm98, %v3211, %v3213
  %v3236 = vsel %vm98, %v3215, %v3217
  %v3237 = vsel %vm98, %v3217, %v3219
  %v3238 = vsel %vm98, %v3219, %v3221
  %v3239 = vsel %vm98, %v3221, %v3223
  %vm3260 = vcmask 261120
  %v3261 = vsel %vm3260, %v3157, 0
  %v3263 = vsel %vm3260, %v3159, 0
  %v3265 = vsel %vm3260, %v3161, 0
  %v3267 = vsel %vm3260, %v3163, 0
  %3269 = vmatprep.subr.mxu0 %v3225
  %3270 = vmatpush1.msra.mxu0 %v3224
  %3271 = vmatprep.subr.mxu0 %v3229
  %3272 = vmatpush1.msra.mxu0 %v3228
  %3273 = vmatprep.subr.mxu0 %v3233
  %3274 = vmatpush1.msra.mxu0 %v3232
  %3275 = vmatprep.subr.mxu0 %v3237
  %3276 = vmatpush1.msra.mxu0 %v3236
  %3277 = vmatprep.subr.mxu0 0.0
  %3278 = vmatpush1.msra.mxu0 0.0
  %3279 = vmatprep.subr.mxu0 0.0
  %3280 = vmatpush1.msra.mxu0 0.0
  %3281 = vmatprep.subr.mxu0 0.0
  %3282 = vmatpush1.msra.mxu0 0.0
  %3283 = vmatprep.subr.mxu0 0.0
  %3284 = vmatpush1.msra.mxu0 0.0
  %3285 = vmatprep.subr.mxu0 0.0
  %3286 = vmatpush1.msra.mxu0 0.0
  %3287 = vmatprep.subr.mxu0 0.0
  %3288 = vmatpush1.msra.mxu0 0.0
  %3289 = vmatprep.subr.mxu0 0.0
  %3290 = vmatpush1.msra.mxu0 0.0
  %3291 = vmatprep.subr.mxu0 0.0
  %3292 = vmatpush1.msra.mxu0 0.0
  %3293 = vmatprep.subr.mxu0 0.0
  %3294 = vmatpush1.msra.mxu0 0.0
  %3295 = vmatprep.subr.mxu0 0.0
  %3296 = vmatpush1.msra.mxu0 0.0
  %3297 = vmatprep.subr.mxu0 0.0
  %3298 = vmatpush1.msra.mxu0 0.0
  %3299 = vmatprep.subr.mxu0 0.0
  %3300 = vmatpush1.msra.mxu0 0.0
  %3301 = vmatprep.subr.mxu0 0.0
  %3302 = vmatpush1.msra.mxu0 0.0
  %3303 = vmatprep.subr.mxu0 0.0
  %3304 = vmatpush1.msra.mxu0 0.0
  %3305 = vmatprep.subr.mxu0 0.0
  %3306 = vmatpush1.msra.mxu0 0.0
  %3307 = vmatprep.subr.mxu0 0.0
  %3308 = vmatpush1.msra.mxu0 0.0
  %3309 = vmatprep.subr.mxu0 0.0
  %3310 = vmatpush1.msra.mxu0 0.0
  %3311 = vmatprep.subr.mxu0 0.0
  %3312 = vmatpush1.msra.mxu0 0.0
  %3313 = vmatprep.subr.mxu0 0.0
  %3314 = vmatpush1.msra.mxu0 0.0
  %3315 = vmatprep.subr.mxu0 0.0
  %3316 = vmatpush1.msra.mxu0 0.0
  %3317 = vmatprep.subr.mxu0 0.0
  %3318 = vmatpush1.msra.mxu0 0.0
  %3319 = vmatprep.subr.mxu0 0.0
  %3320 = vmatpush1.msra.mxu0 0.0
  %3321 = vmatprep.subr.mxu0 0.0
  %3322 = vmatpush1.msra.mxu0 0.0
  %3323 = vmatprep.subr.mxu0 0.0
  %3324 = vmatpush1.msra.mxu0 0.0
  %3325 = vmatprep.subr.mxu0 0.0
  %3326 = vmatpush1.msra.mxu0 0.0
  %3327 = vmatprep.subr.mxu0 0.0
  %3328 = vmatpush1.msra.mxu0 0.0
  %3329 = vmatprep.subr.mxu0 0.0
  %3330 = vmatpush1.msra.mxu0 0.0
  %3331 = vmatprep.subr.mxu0 0.0
  %3332 = vmatpush1.msra.mxu0 0.0
  %3333 = vmatprep.mubr.f32.mxu0 0.0
  %3334 = vmatmul.mubr.f32.gmra.mrb[0].mxu0 %v3261
  %v3335 = vpop.f32.mrb[0].mxu0
  %v3336 = vadd.f32 0.0, %v3335
  %v3337 = vpop.f32.mrb[0].mxu0
  %v3338 = vadd.f32 0.0, %v3337
  %3339 = vmatprep.mubr.f32.mxu0 0.0
  %3340 = vmatmul.mubr.f32.gmra.mrb[0].mxu0 %v3263
  %v3341 = vpop.f32.mrb[0].mxu0
  %v3342 = vadd.f32 0.0, %v3341
  %v3343 = vpop.f32.mrb[0].mxu0
  %v3344 = vadd.f32 0.0, %v3343
  %3345 = vmatprep.mubr.f32.mxu0 0.0
  %3346 = vmatmul.mubr.f32.gmra.mrb[0].mxu0 %v3265
  %v3347 = vpop.f32.mrb[0].mxu0
  %v3348 = vadd.f32 0.0, %v3347
  %v3349 = vpop.f32.mrb[0].mxu0
  %v3350 = vadd.f32 0.0, %v3349
  %3351 = vmatprep.mubr.f32.mxu0 0.0
  %3352 = vmatmul.mubr.f32.gmra.mrb[0].mxu0 %v3267
  %v3353 = vpop.f32.mrb[0].mxu0
  %v3354 = vadd.f32 0.0, %v3353
  %v3355 = vpop.f32.mrb[0].mxu0
  %v3356 = vadd.f32 0.0, %v3355
  %3357 = vdwg.mxu0
  %3358 = vmatprep.subr.mxu0 %v3227
  %3359 = vmatpush1.msra.mxu0 %v3226
  %3360 = vmatprep.subr.mxu0 %v3231
  %3361 = vmatpush1.msra.mxu0 %v3230
  %3362 = vmatprep.subr.mxu0 %v3235
  %3363 = vmatpush1.msra.mxu0 %v3234
  %3364 = vmatprep.subr.mxu0 %v3239
  %3365 = vmatpush1.msra.mxu0 %v3238
  %3366 = vmatprep.subr.mxu0 0.0
  %3367 = vmatpush1.msra.mxu0 0.0
  %3368 = vmatprep.subr.mxu0 0.0
  %3369 = vmatpush1.msra.mxu0 0.0
  %3370 = vmatprep.subr.mxu0 0.0
  %3371 = vmatpush1.msra.mxu0 0.0
  %3372 = vmatprep.subr.mxu0 0.0
  %3373 = vmatpush1.msra.mxu0 0.0
  %3374 = vmatprep.subr.mxu0 0.0
  %3375 = vmatpush1.msra.mxu0 0.0
  %3376 = vmatprep.subr.mxu0 0.0
  %3377 = vmatpush1.msra.mxu0 0.0
  %3378 = vmatprep.subr.mxu0 0.0
  %3379 = vmatpush1.msra.mxu0 0.0
  %3380 = vmatprep.subr.mxu0 0.0
  %3381 = vmatpush1.msra.mxu0 0.0
  %3382 = vmatprep.subr.mxu0 0.0
  %3383 = vmatpush1.msra.mxu0 0.0
  %3384 = vmatprep.subr.mxu0 0.0
  %3385 = vmatpush1.msra.mxu0 0.0
  %3386 = vmatprep.subr.mxu0 0.0
  %3387 = vmatpush1.msra.mxu0 0.0
  %3388 = vmatprep.subr.mxu0 0.0
  %3389 = vmatpush1.msra.mxu0 0.0
  %3390 = vmatprep.subr.mxu0 0.0
  %3391 = vmatpush1.msra.mxu0 0.0
  %3392 = vmatprep.subr.mxu0 0.0
  %3393 = vmatpush1.msra.mxu0 0.0
  %3394 = vmatprep.subr.mxu0 0.0
  %3395 = vmatpush1.msra.mxu0 0.0
  %3396 = vmatprep.subr.mxu0 0.0
  %3397 = vmatpush1.msra.mxu0 0.0
  %3398 = vmatprep.subr.mxu0 0.0
  %3399 = vmatpush1.msra.mxu0 0.0
  %3400 = vmatprep.subr.mxu0 0.0
  %3401 = vmatpush1.msra.mxu0 0.0
  %3402 = vmatprep.subr.mxu0 0.0
  %3403 = vmatpush1.msra.mxu0 0.0
  %3404 = vmatprep.subr.mxu0 0.0
  %3405 = vmatpush1.msra.mxu0 0.0
  %3406 = vmatprep.subr.mxu0 0.0
  %3407 = vmatpush1.msra.mxu0 0.0
  %3408 = vmatprep.subr.mxu0 0.0
  %3409 = vmatpush1.msra.mxu0 0.0
  %3410 = vmatprep.subr.mxu0 0.0
  %3411 = vmatpush1.msra.mxu0 0.0
  %3412 = vmatprep.subr.mxu0 0.0
  %3413 = vmatpush1.msra.mxu0 0.0
  %3414 = vmatprep.subr.mxu0 0.0
  %3415 = vmatpush1.msra.mxu0 0.0
  %3416 = vmatprep.subr.mxu0 0.0
  %3417 = vmatpush1.msra.mxu0 0.0
  %3418 = vmatprep.subr.mxu0 0.0
  %3419 = vmatpush1.msra.mxu0 0.0
  %3420 = vmatprep.subr.mxu0 0.0
  %3421 = vmatpush1.msra.mxu0 0.0
  %3422 = vmatprep.mubr.f32.mxu0 0.0
  %3423 = vmatmul.mubr.f32.gmra.mrb[0].mxu0 %v3261
  %v3424 = vpop.f32.mrb[0].mxu0
  %v3425 = vadd.f32 0.0, %v3424
  %v3426 = vpop.f32.mrb[0].mxu0
  %v3427 = vadd.f32 0.0, %v3426
  %3428 = vmatprep.mubr.f32.mxu0 0.0
  %3429 = vmatmul.mubr.f32.gmra.mrb[0].mxu0 %v3263
  %v3430 = vpop.f32.mrb[0].mxu0
  %v3431 = vadd.f32 0.0, %v3430
  %v3432 = vpop.f32.mrb[0].mxu0
  %v3433 = vadd.f32 0.0, %v3432
  %3434 = vmatprep.mubr.f32.mxu0 0.0
  %3435 = vmatmul.mubr.f32.gmra.mrb[0].mxu0 %v3265
  %v3436 = vpop.f32.mrb[0].mxu0
  %v3437 = vadd.f32 0.0, %v3436
  %v3438 = vpop.f32.mrb[0].mxu0
  %v3439 = vadd.f32 0.0, %v3438
  %3440 = vmatprep.mubr.f32.mxu0 0.0
  %3441 = vmatmul.mubr.f32.gmra.mrb[0].mxu0 %v3267
  %v3442 = vpop.f32.mrb[0].mxu0
  %v3443 = vadd.f32 0.0, %v3442
  %v3444 = vpop.f32.mrb[0].mxu0
  %v3445 = vadd.f32 0.0, %v3444
  %3446 = vdwg.mxu0
  %3447 = vmatprep.subr.mxu0 0.0
  %3448 = vmatpush1.msra.mxu0 %v3193
  %3449 = vmatprep.subr.mxu0 0.0
  %3450 = vmatpush1.msra.mxu0 %v3203
  %3451 = vmatprep.subr.mxu0 0.0
  %3452 = vmatpush1.msra.mxu0 %v3213
  %3453 = vmatprep.subr.mxu0 0.0
  %3454 = vmatpush1.msra.mxu0 %v3223
  %3455 = vmatprep.subr.mxu0 0.0
  %3456 = vmatpush1.msra.mxu0 0.0
  %3457 = vmatprep.subr.mxu0 0.0
  %3458 = vmatpush1.msra.mxu0 0.0
  %3459 = vmatprep.subr.mxu0 0.0
  %3460 = vmatpush1.msra.mxu0 0.0
  %3461 = vmatprep.subr.mxu0 0.0
  %3462 = vmatpush1.msra.mxu0 0.0
  %3463 = vmatprep.subr.mxu0 0.0
  %3464 = vmatpush1.msra.mxu0 0.0
  %3465 = vmatprep.subr.mxu0 0.0
  %3466 = vmatpush1.msra.mxu0 0.0
  %3467 = vmatprep.subr.mxu0 0.0
  %3468 = vmatpush1.msra.mxu0 0.0
  %3469 = vmatprep.subr.mxu0 0.0
  %3470 = vmatpush1.msra.mxu0 0.0
  %3471 = vmatprep.subr.mxu0 0.0
  %3472 = vmatpush1.msra.mxu0 0.0
  %3473 = vmatprep.subr.mxu0 0.0
  %3474 = vmatpush1.msra.mxu0 0.0
  %3475 = vmatprep.subr.mxu0 0.0
  %3476 = vmatpush1.msra.mxu0 0.0
  %3477 = vmatprep.subr.mxu0 0.0
  %3478 = vmatpush1.msra.mxu0 0.0
  %3479 = vmatprep.subr.mxu0 0.0
  %3480 = vmatpush1.msra.mxu0 0.0
  %3481 = vmatprep.subr.mxu0 0.0
  %3482 = vmatpush1.msra.mxu0 0.0
  %3483 = vmatprep.subr.mxu0 0.0
  %3484 = vmatpush1.msra.mxu0 0.0
  %3485 = vmatprep.subr.mxu0 0.0
  %3486 = vmatpush1.msra.mxu0 0.0
  %3487 = vmatprep.subr.mxu0 0.0
  %3488 = vmatpush1.msra.mxu0 0.0
  %3489 = vmatprep.subr.mxu0 0.0
  %3490 = vmatpush1.msra.mxu0 0.0
  %3491 = vmatprep.subr.mxu0 0.0
  %3492 = vmatpush1.msra.mxu0 0.0
  %3493 = vmatprep.subr.mxu0 0.0
  %3494 = vmatpush1.msra.mxu0 0.0
  %3495 = vmatprep.subr.mxu0 0.0
  %3496 = vmatpush1.msra.mxu0 0.0
  %3497 = vmatprep.subr.mxu0 0.0
  %3498 = vmatpush1.msra.mxu0 0.0
  %3499 = vmatprep.subr.mxu0 0.0
  %3500 = vmatpush1.msra.mxu0 0.0
  %3501 = vmatprep.subr.mxu0 0.0
  %3502 = vmatpush1.msra.mxu0 0.0
  %3503 = vmatprep.subr.mxu0 0.0
  %3504 = vmatpush1.msra.mxu0 0.0
  %3505 = vmatprep.subr.mxu0 0.0
  %3506 = vmatpush1.msra.mxu0 0.0
  %3507 = vmatprep.subr.mxu0 0.0
  %3508 = vmatpush1.msra.mxu0 0.0
  %3509 = vmatprep.subr.mxu0 0.0
  %3510 = vmatpush1.msra.mxu0 0.0
  %3511 = vmatprep.mubr.f32.mxu0 0.0
  %3512 = vmatmul.mubr.f32.gmra.mrb[0].mxu0 %v3261
  %v3513 = vpop.f32.mrb[0].mxu0
  %v3514 = vadd.f32 0.0, %v3513
  %v3515 = vpop.f32.mrb[0].mxu0
  %3516 = vmatprep.mubr.f32.mxu0 0.0
  %3517 = vmatmul.mubr.f32.gmra.mrb[0].mxu0 %v3263
  %v3518 = vpop.f32.mrb[0].mxu0
  %v3519 = vadd.f32 0.0, %v3518
  %v3520 = vpop.f32.mrb[0].mxu0
  %3521 = vmatprep.mubr.f32.mxu0 0.0
  %3522 = vmatmul.mubr.f32.gmra.mrb[0].mxu0 %v3265
  %v3523 = vpop.f32.mrb[0].mxu0
  %v3524 = vadd.f32 0.0, %v3523
  %v3525 = vpop.f32.mrb[0].mxu0
  %3526 = vmatprep.mubr.f32.mxu0 0.0
  %3527 = vmatmul.mubr.f32.gmra.mrb[0].mxu0 %v3267
  %v3528 = vpop.f32.mrb[0].mxu0
  %v3529 = vadd.f32 0.0, %v3528
  %v3530 = vpop.f32.mrb[0].mxu0
  %3531 = vdwg.mxu0
  %v3532 = vsel %vm3260, %v3128, 0
  %v3534 = vsel %vm3260, %v3129, 0
  %v3536 = vsel %vm3260, %v3130, 0
  %v3538 = vsel %vm3260, %v3131, 0
  %3540 = vmatprep.subr.mxu0 %v3133
  %3541 = vmatpush1.msra.mxu0 %v3132
  %3542 = vmatprep.subr.mxu0 %v3138
  %3543 = vmatpush1.msra.mxu0 %v3137
  %3544 = vmatprep.subr.mxu0 %v3143
  %3545 = vmatpush1.msra.mxu0 %v3142
  %3546 = vmatprep.subr.mxu0 %v3148
  %3547 = vmatpush1.msra.mxu0 %v3147
  %3548 = vmatprep.subr.mxu0 0.0
  %3549 = vmatpush1.msra.mxu0 0.0
  %3550 = vmatprep.subr.mxu0 0.0
  %3551 = vmatpush1.msra.mxu0 0.0
  %3552 = vmatprep.subr.mxu0 0.0
  %3553 = vmatpush1.msra.mxu0 0.0
  %3554 = vmatprep.subr.mxu0 0.0
  %3555 = vmatpush1.msra.mxu0 0.0
  %3556 = vmatprep.subr.mxu0 0.0
  %3557 = vmatpush1.msra.mxu0 0.0
  %3558 = vmatprep.subr.mxu0 0.0
  %3559 = vmatpush1.msra.mxu0 0.0
  %3560 = vmatprep.subr.mxu0 0.0
  %3561 = vmatpush1.msra.mxu0 0.0
  %3562 = vmatprep.subr.mxu0 0.0
  %3563 = vmatpush1.msra.mxu0 0.0
  %3564 = vmatprep.subr.mxu0 0.0
  %3565 = vmatpush1.msra.mxu0 0.0
  %3566 = vmatprep.subr.mxu0 0.0
  %3567 = vmatpush1.msra.mxu0 0.0
  %3568 = vmatprep.subr.mxu0 0.0
  %3569 = vmatpush1.msra.mxu0 0.0
  %3570 = vmatprep.subr.mxu0 0.0
  %3571 = vmatpush1.msra.mxu0 0.0
  %3572 = vmatprep.subr.mxu0 0.0
  %3573 = vmatpush1.msra.mxu0 0.0
  %3574 = vmatprep.subr.mxu0 0.0
  %3575 = vmatpush1.msra.mxu0 0.0
  %3576 = vmatprep.subr.mxu0 0.0
  %3577 = vmatpush1.msra.mxu0 0.0
  %3578 = vmatprep.subr.mxu0 0.0
  %3579 = vmatpush1.msra.mxu0 0.0
  %3580 = vmatprep.subr.mxu0 0.0
  %3581 = vmatpush1.msra.mxu0 0.0
  %3582 = vmatprep.subr.mxu0 0.0
  %3583 = vmatpush1.msra.mxu0 0.0
  %3584 = vmatprep.subr.mxu0 0.0
  %3585 = vmatpush1.msra.mxu0 0.0
  %3586 = vmatprep.subr.mxu0 0.0
  %3587 = vmatpush1.msra.mxu0 0.0
  %3588 = vmatprep.subr.mxu0 0.0
  %3589 = vmatpush1.msra.mxu0 0.0
  %3590 = vmatprep.subr.mxu0 0.0
  %3591 = vmatpush1.msra.mxu0 0.0
  %3592 = vmatprep.subr.mxu0 0.0
  %3593 = vmatpush1.msra.mxu0 0.0
  %3594 = vmatprep.subr.mxu0 0.0
  %3595 = vmatpush1.msra.mxu0 0.0
  %3596 = vmatprep.subr.mxu0 0.0
  %3597 = vmatpush1.msra.mxu0 0.0
  %3598 = vmatprep.subr.mxu0 0.0
  %3599 = vmatpush1.msra.mxu0 0.0
  %3600 = vmatprep.subr.mxu0 0.0
  %3601 = vmatpush1.msra.mxu0 0.0
  %3602 = vmatprep.subr.mxu0 0.0
  %3603 = vmatpush1.msra.mxu0 0.0
  %3604 = vmatprep.mubr.f32.mxu0 0.0
  %3605 = vmatmul.mubr.f32.gmra.mrb[0].mxu0 %v3532
  %v3606 = vpop.f32.mrb[0].mxu0
  %v3607 = vadd.f32 %v3336, %v3606
  %v3608 = vpop.f32.mrb[0].mxu0
  %v3609 = vadd.f32 %v3338, %v3608
  %3610 = vmatprep.mubr.f32.mxu0 0.0
  %3611 = vmatmul.mubr.f32.gmra.mrb[0].mxu0 %v3534
  %v3612 = vpop.f32.mrb[0].mxu0
  %v3613 = vadd.f32 %v3342, %v3612
  %v3614 = vpop.f32.mrb[0].mxu0
  %v3615 = vadd.f32 %v3344, %v3614
  %3616 = vmatprep.mubr.f32.mxu0 0.0
  %3617 = vmatmul.mubr.f32.gmra.mrb[0].mxu0 %v3536
  %v3618 = vpop.f32.mrb[0].mxu0
  %v3619 = vadd.f32 %v3348, %v3618
  %v3620 = vpop.f32.mrb[0].mxu0
  %v3621 = vadd.f32 %v3350, %v3620
  %3622 = vmatprep.mubr.f32.mxu0 0.0
  %3623 = vmatmul.mubr.f32.gmra.mrb[0].mxu0 %v3538
  %v3624 = vpop.f32.mrb[0].mxu0
  %v3625 = vadd.f32 %v3354, %v3624
  %v3626 = vpop.f32.mrb[0].mxu0
  %v3627 = vadd.f32 %v3356, %v3626
  %3628 = vdwg.mxu0
  %3629 = vmatprep.subr.mxu0 %v3135
  %3630 = vmatpush1.msra.mxu0 %v3134
  %3631 = vmatprep.subr.mxu0 %v3140
  %3632 = vmatpush1.msra.mxu0 %v3139
  %3633 = vmatprep.subr.mxu0 %v3145
  %3634 = vmatpush1.msra.mxu0 %v3144
  %3635 = vmatprep.subr.mxu0 %v3150
  %3636 = vmatpush1.msra.mxu0 %v3149
  %3637 = vmatprep.subr.mxu0 0.0
  %3638 = vmatpush1.msra.mxu0 0.0
  %3639 = vmatprep.subr.mxu0 0.0
  %3640 = vmatpush1.msra.mxu0 0.0
  %3641 = vmatprep.subr.mxu0 0.0
  %3642 = vmatpush1.msra.mxu0 0.0
  %3643 = vmatprep.subr.mxu0 0.0
  %3644 = vmatpush1.msra.mxu0 0.0
  %3645 = vmatprep.subr.mxu0 0.0
  %3646 = vmatpush1.msra.mxu0 0.0
  %3647 = vmatprep.subr.mxu0 0.0
  %3648 = vmatpush1.msra.mxu0 0.0
  %3649 = vmatprep.subr.mxu0 0.0
  %3650 = vmatpush1.msra.mxu0 0.0
  %3651 = vmatprep.subr.mxu0 0.0
  %3652 = vmatpush1.msra.mxu0 0.0
  %3653 = vmatprep.subr.mxu0 0.0
  %3654 = vmatpush1.msra.mxu0 0.0
  %3655 = vmatprep.subr.mxu0 0.0
  %3656 = vmatpush1.msra.mxu0 0.0
  %3657 = vmatprep.subr.mxu0 0.0
  %3658 = vmatpush1.msra.mxu0 0.0
  %3659 = vmatprep.subr.mxu0 0.0
  %3660 = vmatpush1.msra.mxu0 0.0
  %3661 = vmatprep.subr.mxu0 0.0
  %3662 = vmatpush1.msra.mxu0 0.0
  %3663 = vmatprep.subr.mxu0 0.0
  %3664 = vmatpush1.msra.mxu0 0.0
  %3665 = vmatprep.subr.mxu0 0.0
  %3666 = vmatpush1.msra.mxu0 0.0
  %3667 = vmatprep.subr.mxu0 0.0
  %3668 = vmatpush1.msra.mxu0 0.0
  %3669 = vmatprep.subr.mxu0 0.0
  %3670 = vmatpush1.msra.mxu0 0.0
  %3671 = vmatprep.subr.mxu0 0.0
  %3672 = vmatpush1.msra.mxu0 0.0
  %3673 = vmatprep.subr.mxu0 0.0
  %3674 = vmatpush1.msra.mxu0 0.0
  %3675 = vmatprep.subr.mxu0 0.0
  %3676 = vmatpush1.msra.mxu0 0.0
  %3677 = vmatprep.subr.mxu0 0.0
  %3678 = vmatpush1.msra.mxu0 0.0
  %3679 = vmatprep.subr.mxu0 0.0
  %3680 = vmatpush1.msra.mxu0 0.0
  %3681 = vmatprep.subr.mxu0 0.0
  %3682 = vmatpush1.msra.mxu0 0.0
  %3683 = vmatprep.subr.mxu0 0.0
  %3684 = vmatpush1.msra.mxu0 0.0
  %3685 = vmatprep.subr.mxu0 0.0
  %3686 = vmatpush1.msra.mxu0 0.0
  %3687 = vmatprep.subr.mxu0 0.0
  %3688 = vmatpush1.msra.mxu0 0.0
  %3689 = vmatprep.subr.mxu0 0.0
  %3690 = vmatpush1.msra.mxu0 0.0
  %3691 = vmatprep.subr.mxu0 0.0
  %3692 = vmatpush1.msra.mxu0 0.0
  %3693 = vmatprep.mubr.f32.mxu0 0.0
  %3694 = vmatmul.mubr.f32.gmra.mrb[0].mxu0 %v3532
  %v3695 = vpop.f32.mrb[0].mxu0
  %v3696 = vadd.f32 %v3425, %v3695
  %v3697 = vpop.f32.mrb[0].mxu0
  %v3698 = vadd.f32 %v3427, %v3697
  %3699 = vmatprep.mubr.f32.mxu0 0.0
  %3700 = vmatmul.mubr.f32.gmra.mrb[0].mxu0 %v3534
  %v3701 = vpop.f32.mrb[0].mxu0
  %v3702 = vadd.f32 %v3431, %v3701
  %v3703 = vpop.f32.mrb[0].mxu0
  %v3704 = vadd.f32 %v3433, %v3703
  %3705 = vmatprep.mubr.f32.mxu0 0.0
  %3706 = vmatmul.mubr.f32.gmra.mrb[0].mxu0 %v3536
  %v3707 = vpop.f32.mrb[0].mxu0
  %v3708 = vadd.f32 %v3437, %v3707
  %v3709 = vpop.f32.mrb[0].mxu0
  %v3710 = vadd.f32 %v3439, %v3709
  %3711 = vmatprep.mubr.f32.mxu0 0.0
  %3712 = vmatmul.mubr.f32.gmra.mrb[0].mxu0 %v3538
  %v3713 = vpop.f32.mrb[0].mxu0
  %v3714 = vadd.f32 %v3443, %v3713
  %v3715 = vpop.f32.mrb[0].mxu0
  %v3716 = vadd.f32 %v3445, %v3715
  %3717 = vdwg.mxu0
  %3718 = vmatprep.subr.mxu0 0.0
  %3719 = vmatpush1.msra.mxu0 %v3136
  %3720 = vmatprep.subr.mxu0 0.0
  %3721 = vmatpush1.msra.mxu0 %v3141
  %3722 = vmatprep.subr.mxu0 0.0
  %3723 = vmatpush1.msra.mxu0 %v3146
  %3724 = vmatprep.subr.mxu0 0.0
  %3725 = vmatpush1.msra.mxu0 %v3151
  %3726 = vmatprep.subr.mxu0 0.0
  %3727 = vmatpush1.msra.mxu0 0.0
  %3728 = vmatprep.subr.mxu0 0.0
  %3729 = vmatpush1.msra.mxu0 0.0
  %3730 = vmatprep.subr.mxu0 0.0
  %3731 = vmatpush1.msra.mxu0 0.0
  %3732 = vmatprep.subr.mxu0 0.0
  %3733 = vmatpush1.msra.mxu0 0.0
  %3734 = vmatprep.subr.mxu0 0.0
  %3735 = vmatpush1.msra.mxu0 0.0
  %3736 = vmatprep.subr.mxu0 0.0
  %3737 = vmatpush1.msra.mxu0 0.0
  %3738 = vmatprep.subr.mxu0 0.0
  %3739 = vmatpush1.msra.mxu0 0.0
  %3740 = vmatprep.subr.mxu0 0.0
  %3741 = vmatpush1.msra.mxu0 0.0
  %3742 = vmatprep.subr.mxu0 0.0
  %3743 = vmatpush1.msra.mxu0 0.0
  %3744 = vmatprep.subr.mxu0 0.0
  %3745 = vmatpush1.msra.mxu0 0.0
  %3746 = vmatprep.subr.mxu0 0.0
  %3747 = vmatpush1.msra.mxu0 0.0
  %3748 = vmatprep.subr.mxu0 0.0
  %3749 = vmatpush1.msra.mxu0 0.0
  %3750 = vmatprep.subr.mxu0 0.0
  %3751 = vmatpush1.msra.mxu0 0.0
  %3752 = vmatprep.subr.mxu0 0.0
  %3753 = vmatpush1.msra.mxu0 0.0
  %3754 = vmatprep.subr.mxu0 0.0
  %3755 = vmatpush1.msra.mxu0 0.0
  %3756 = vmatprep.subr.mxu0 0.0
  %3757 = vmatpush1.msra.mxu0 0.0
  %3758 = vmatprep.subr.mxu0 0.0
  %3759 = vmatpush1.msra.mxu0 0.0
  %3760 = vmatprep.subr.mxu0 0.0
  %3761 = vmatpush1.msra.mxu0 0.0
  %3762 = vmatprep.subr.mxu0 0.0
  %3763 = vmatpush1.msra.mxu0 0.0
  %3764 = vmatprep.subr.mxu0 0.0
  %3765 = vmatpush1.msra.mxu0 0.0
  %3766 = vmatprep.subr.mxu0 0.0
  %3767 = vmatpush1.msra.mxu0 0.0
  %3768 = vmatprep.subr.mxu0 0.0
  %3769 = vmatpush1.msra.mxu0 0.0
  %3770 = vmatprep.subr.mxu0 0.0
  %3771 = vmatpush1.msra.mxu0 0.0
  %3772 = vmatprep.subr.mxu0 0.0
  %3773 = vmatpush1.msra.mxu0 0.0
  %3774 = vmatprep.subr.mxu0 0.0
  %3775 = vmatpush1.msra.mxu0 0.0
  %3776 = vmatprep.subr.mxu0 0.0
  %3777 = vmatpush1.msra.mxu0 0.0
  %3778 = vmatprep.subr.mxu0 0.0
  %3779 = vmatpush1.msra.mxu0 0.0
  %3780 = vmatprep.subr.mxu0 0.0
  %3781 = vmatpush1.msra.mxu0 0.0
  %3782 = vmatprep.mubr.f32.mxu0 0.0
  %3783 = vmatmul.mubr.f32.gmra.mrb[0].mxu0 %v3532
  %v3784 = vpop.f32.mrb[0].mxu0
  %v3785 = vadd.f32 %v3514, %v3784
  %v3786 = vpop.f32.mrb[0].mxu0
  %3787 = vmatprep.mubr.f32.mxu0 0.0
  %3788 = vmatmul.mubr.f32.gmra.mrb[0].mxu0 %v3534
  %v3789 = vpop.f32.mrb[0].mxu0
  %v3790 = vadd.f32 %v3519, %v3789
  %v3791 = vpop.f32.mrb[0].mxu0
  %3792 = vmatprep.mubr.f32.mxu0 0.0
  %3793 = vmatmul.mubr.f32.gmra.mrb[0].mxu0 %v3536
  %v3794 = vpop.f32.mrb[0].mxu0
  %v3795 = vadd.f32 %v3524, %v3794
  %v3796 = vpop.f32.mrb[0].mxu0
  %3797 = vmatprep.mubr.f32.mxu0 0.0
  %3798 = vmatmul.mubr.f32.gmra.mrb[0].mxu0 %v3538
  %v3799 = vpop.f32.mrb[0].mxu0
  %v3800 = vadd.f32 %v3529, %v3799
  %v3801 = vpop.f32.mrb[0].mxu0
  %3802 = vdwg.mxu0
  %3803 = vrot.lane.b32.xlu0 %v3128, 64
  %v3804 = vpop.permute.xlu0 %3803
  %3805 = vrot.lane.b32.xlu0 %v3129, 64
  %v3806 = vpop.permute.xlu0 %3805
  %3807 = vrot.lane.b32.xlu0 %v3130, 64
  %v3808 = vpop.permute.xlu0 %3807
  %3809 = vrot.lane.b32.xlu0 %v3131, 64
  %v3810 = vpop.permute.xlu0 %3809
  %3811 = vrot.lane.b32.xlu0 %v3132, 126
  %v3812 = vpop.permute.xlu0 %3811
  %3813 = vrot.lane.b32.xlu0 %v3133, 126
  %v3814 = vpop.permute.xlu0 %3813
  %3815 = vrot.lane.b32.xlu0 %v3134, 126
  %v3816 = vpop.permute.xlu0 %3815
  %3817 = vrot.lane.b32.xlu0 %v3135, 126
  %v3818 = vpop.permute.xlu0 %3817
  %3819 = vrot.lane.b32.xlu0 %v3136, 126
  %v3820 = vpop.permute.xlu0 %3819
  %3821 = vrot.lane.b32.xlu0 %v3137, 126
  %v3822 = vpop.permute.xlu0 %3821
  %3823 = vrot.lane.b32.xlu0 %v3138, 126
  %v3824 = vpop.permute.xlu0 %3823
  %3825 = vrot.lane.b32.xlu0 %v3139, 126
  %v3826 = vpop.permute.xlu0 %3825
  %3827 = vrot.lane.b32.xlu0 %v3140, 126
  %v3828 = vpop.permute.xlu0 %3827
  %3829 = vrot.lane.b32.xlu0 %v3141, 126
  %v3830 = vpop.permute.xlu0 %3829
  %3831 = vrot.lane.b32.xlu0 %v3142, 126
  %v3832 = vpop.permute.xlu0 %3831
  %3833 = vrot.lane.b32.xlu0 %v3143, 126
  %v3834 = vpop.permute.xlu0 %3833
  %3835 = vrot.lane.b32.xlu0 %v3144, 126
  %v3836 = vpop.permute.xlu0 %3835
  %3837 = vrot.lane.b32.xlu0 %v3145, 126
  %v3838 = vpop.permute.xlu0 %3837
  %3839 = vrot.lane.b32.xlu0 %v3146, 126
  %v3840 = vpop.permute.xlu0 %3839
  %3841 = vrot.lane.b32.xlu0 %v3147, 126
  %v3842 = vpop.permute.xlu0 %3841
  %3843 = vrot.lane.b32.xlu0 %v3148, 126
  %v3844 = vpop.permute.xlu0 %3843
  %3845 = vrot.lane.b32.xlu0 %v3149, 126
  %v3846 = vpop.permute.xlu0 %3845
  %3847 = vrot.lane.b32.xlu0 %v3150, 126
  %v3848 = vpop.permute.xlu0 %3847
  %3849 = vrot.lane.b32.xlu0 %v3151, 126
  %v3850 = vpop.permute.xlu0 %3849
  %v3851 = vsel %vm669, %v3812, %v3814
  %v3852 = vsel %vm669, %v3814, %v3816
  %v3853 = vsel %vm669, %v3816, %v3818
  %v3854 = vsel %vm669, %v3818, %v3820
  %v3855 = vsel %vm669, %v3822, %v3824
  %v3856 = vsel %vm669, %v3824, %v3826
  %v3857 = vsel %vm669, %v3826, %v3828
  %v3858 = vsel %vm669, %v3828, %v3830
  %v3859 = vsel %vm669, %v3832, %v3834
  %v3860 = vsel %vm669, %v3834, %v3836
  %v3861 = vsel %vm669, %v3836, %v3838
  %v3862 = vsel %vm669, %v3838, %v3840
  %v3863 = vsel %vm669, %v3842, %v3844
  %v3864 = vsel %vm669, %v3844, %v3846
  %v3865 = vsel %vm669, %v3846, %v3848
  %v3866 = vsel %vm669, %v3848, %v3850
  %v3887 = vsel %vm3260, %v3804, 0
  %v3889 = vsel %vm3260, %v3806, 0
  %v3891 = vsel %vm3260, %v3808, 0
  %v3893 = vsel %vm3260, %v3810, 0
  %3895 = vmatprep.subr.mxu0 %v3852
  %3896 = vmatpush1.msra.mxu0 %v3851
  %3897 = vmatprep.subr.mxu0 %v3856
  %3898 = vmatpush1.msra.mxu0 %v3855
  %3899 = vmatprep.subr.mxu0 %v3860
  %3900 = vmatpush1.msra.mxu0 %v3859
  %3901 = vmatprep.subr.mxu0 %v3864
  %3902 = vmatpush1.msra.mxu0 %v3863
  %3903 = vmatprep.subr.mxu0 0.0
  %3904 = vmatpush1.msra.mxu0 0.0
  %3905 = vmatprep.subr.mxu0 0.0
  %3906 = vmatpush1.msra.mxu0 0.0
  %3907 = vmatprep.subr.mxu0 0.0
  %3908 = vmatpush1.msra.mxu0 0.0
  %3909 = vmatprep.subr.mxu0 0.0
  %3910 = vmatpush1.msra.mxu0 0.0
  %3911 = vmatprep.subr.mxu0 0.0
  %3912 = vmatpush1.msra.mxu0 0.0
  %3913 = vmatprep.subr.mxu0 0.0
  %3914 = vmatpush1.msra.mxu0 0.0
  %3915 = vmatprep.subr.mxu0 0.0
  %3916 = vmatpush1.msra.mxu0 0.0
  %3917 = vmatprep.subr.mxu0 0.0
  %3918 = vmatpush1.msra.mxu0 0.0
  %3919 = vmatprep.subr.mxu0 0.0
  %3920 = vmatpush1.msra.mxu0 0.0
  %3921 = vmatprep.subr.mxu0 0.0
  %3922 = vmatpush1.msra.mxu0 0.0
  %3923 = vmatprep.subr.mxu0 0.0
  %3924 = vmatpush1.msra.mxu0 0.0
  %3925 = vmatprep.subr.mxu0 0.0
  %3926 = vmatpush1.msra.mxu0 0.0
  %3927 = vmatprep.subr.mxu0 0.0
  %3928 = vmatpush1.msra.mxu0 0.0
  %3929 = vmatprep.subr.mxu0 0.0
  %3930 = vmatpush1.msra.mxu0 0.0
  %3931 = vmatprep.subr.mxu0 0.0
  %3932 = vmatpush1.msra.mxu0 0.0
  %3933 = vmatprep.subr.mxu0 0.0
  %3934 = vmatpush1.msra.mxu0 0.0
  %3935 = vmatprep.subr.mxu0 0.0
  %3936 = vmatpush1.msra.mxu0 0.0
  %3937 = vmatprep.subr.mxu0 0.0
  %3938 = vmatpush1.msra.mxu0 0.0
  %3939 = vmatprep.subr.mxu0 0.0
  %3940 = vmatpush1.msra.mxu0 0.0
  %3941 = vmatprep.subr.mxu0 0.0
  %3942 = vmatpush1.msra.mxu0 0.0
  %3943 = vmatprep.subr.mxu0 0.0
  %3944 = vmatpush1.msra.mxu0 0.0
  %3945 = vmatprep.subr.mxu0 0.0
  %3946 = vmatpush1.msra.mxu0 0.0
  %3947 = vmatprep.subr.mxu0 0.0
  %3948 = vmatpush1.msra.mxu0 0.0
  %3949 = vmatprep.subr.mxu0 0.0
  %3950 = vmatpush1.msra.mxu0 0.0
  %3951 = vmatprep.subr.mxu0 0.0
  %3952 = vmatpush1.msra.mxu0 0.0
  %3953 = vmatprep.subr.mxu0 0.0
  %3954 = vmatpush1.msra.mxu0 0.0
  %3955 = vmatprep.subr.mxu0 0.0
  %3956 = vmatpush1.msra.mxu0 0.0
  %3957 = vmatprep.subr.mxu0 0.0
  %3958 = vmatpush1.msra.mxu0 0.0
  %3959 = vmatprep.mubr.f32.mxu0 0.0
  %3960 = vmatmul.mubr.f32.gmra.mrb[0].mxu0 %v3887
  %v3961 = vpop.f32.mrb[0].mxu0
  %v3962 = vadd.f32 0.0, %v3961
  %v3963 = vpop.f32.mrb[0].mxu0
  %v3964 = vadd.f32 0.0, %v3963
  %3965 = vmatprep.mubr.f32.mxu0 0.0
  %3966 = vmatmul.mubr.f32.gmra.mrb[0].mxu0 %v3889
  %v3967 = vpop.f32.mrb[0].mxu0
  %v3968 = vadd.f32 0.0, %v3967
  %v3969 = vpop.f32.mrb[0].mxu0
  %v3970 = vadd.f32 0.0, %v3969
  %3971 = vmatprep.mubr.f32.mxu0 0.0
  %3972 = vmatmul.mubr.f32.gmra.mrb[0].mxu0 %v3891
  %v3973 = vpop.f32.mrb[0].mxu0
  %v3974 = vadd.f32 0.0, %v3973
  %v3975 = vpop.f32.mrb[0].mxu0
  %v3976 = vadd.f32 0.0, %v3975
  %3977 = vmatprep.mubr.f32.mxu0 0.0
  %3978 = vmatmul.mubr.f32.gmra.mrb[0].mxu0 %v3893
  %v3979 = vpop.f32.mrb[0].mxu0
  %v3980 = vadd.f32 0.0, %v3979
  %v3981 = vpop.f32.mrb[0].mxu0
  %v3982 = vadd.f32 0.0, %v3981
  %3983 = vdwg.mxu0
  %3984 = vmatprep.subr.mxu0 %v3854
  %3985 = vmatpush1.msra.mxu0 %v3853
  %3986 = vmatprep.subr.mxu0 %v3858
  %3987 = vmatpush1.msra.mxu0 %v3857
  %3988 = vmatprep.subr.mxu0 %v3862
  %3989 = vmatpush1.msra.mxu0 %v3861
  %3990 = vmatprep.subr.mxu0 %v3866
  %3991 = vmatpush1.msra.mxu0 %v3865
  %3992 = vmatprep.subr.mxu0 0.0
  %3993 = vmatpush1.msra.mxu0 0.0
  %3994 = vmatprep.subr.mxu0 0.0
  %3995 = vmatpush1.msra.mxu0 0.0
  %3996 = vmatprep.subr.mxu0 0.0
  %3997 = vmatpush1.msra.mxu0 0.0
  %3998 = vmatprep.subr.mxu0 0.0
  %3999 = vmatpush1.msra.mxu0 0.0
  %4000 = vmatprep.subr.mxu0 0.0
  %4001 = vmatpush1.msra.mxu0 0.0
  %4002 = vmatprep.subr.mxu0 0.0
  %4003 = vmatpush1.msra.mxu0 0.0
  %4004 = vmatprep.subr.mxu0 0.0
  %4005 = vmatpush1.msra.mxu0 0.0
  %4006 = vmatprep.subr.mxu0 0.0
  %4007 = vmatpush1.msra.mxu0 0.0
  %4008 = vmatprep.subr.mxu0 0.0
  %4009 = vmatpush1.msra.mxu0 0.0
  %4010 = vmatprep.subr.mxu0 0.0
  %4011 = vmatpush1.msra.mxu0 0.0
  %4012 = vmatprep.subr.mxu0 0.0
  %4013 = vmatpush1.msra.mxu0 0.0
  %4014 = vmatprep.subr.mxu0 0.0
  %4015 = vmatpush1.msra.mxu0 0.0
  %4016 = vmatprep.subr.mxu0 0.0
  %4017 = vmatpush1.msra.mxu0 0.0
  %4018 = vmatprep.subr.mxu0 0.0
  %4019 = vmatpush1.msra.mxu0 0.0
  %4020 = vmatprep.subr.mxu0 0.0
  %4021 = vmatpush1.msra.mxu0 0.0
  %4022 = vmatprep.subr.mxu0 0.0
  %4023 = vmatpush1.msra.mxu0 0.0
  %4024 = vmatprep.subr.mxu0 0.0
  %4025 = vmatpush1.msra.mxu0 0.0
  %4026 = vmatprep.subr.mxu0 0.0
  %4027 = vmatpush1.msra.mxu0 0.0
  %4028 = vmatprep.subr.mxu0 0.0
  %4029 = vmatpush1.msra.mxu0 0.0
  %4030 = vmatprep.subr.mxu0 0.0
  %4031 = vmatpush1.msra.mxu0 0.0
  %4032 = vmatprep.subr.mxu0 0.0
  %4033 = vmatpush1.msra.mxu0 0.0
  %4034 = vmatprep.subr.mxu0 0.0
  %4035 = vmatpush1.msra.mxu0 0.0
  %4036 = vmatprep.subr.mxu0 0.0
  %4037 = vmatpush1.msra.mxu0 0.0
  %4038 = vmatprep.subr.mxu0 0.0
  %4039 = vmatpush1.msra.mxu0 0.0
  %4040 = vmatprep.subr.mxu0 0.0
  %4041 = vmatpush1.msra.mxu0 0.0
  %4042 = vmatprep.subr.mxu0 0.0
  %4043 = vmatpush1.msra.mxu0 0.0
  %4044 = vmatprep.subr.mxu0 0.0
  %4045 = vmatpush1.msra.mxu0 0.0
  %4046 = vmatprep.subr.mxu0 0.0
  %4047 = vmatpush1.msra.mxu0 0.0
  %4048 = vmatprep.mubr.f32.mxu0 0.0
  %4049 = vmatmul.mubr.f32.gmra.mrb[0].mxu0 %v3887
  %v4050 = vpop.f32.mrb[0].mxu0
  %v4051 = vadd.f32 0.0, %v4050
  %v4052 = vpop.f32.mrb[0].mxu0
  %v4053 = vadd.f32 0.0, %v4052
  %4054 = vmatprep.mubr.f32.mxu0 0.0
  %4055 = vmatmul.mubr.f32.gmra.mrb[0].mxu0 %v3889
  %v4056 = vpop.f32.mrb[0].mxu0
  %v4057 = vadd.f32 0.0, %v4056
  %v4058 = vpop.f32.mrb[0].mxu0
  %v4059 = vadd.f32 0.0, %v4058
  %4060 = vmatprep.mubr.f32.mxu0 0.0
  %4061 = vmatmul.mubr.f32.gmra.mrb[0].mxu0 %v3891
  %v4062 = vpop.f32.mrb[0].mxu0
  %v4063 = vadd.f32 0.0, %v4062
  %v4064 = vpop.f32.mrb[0].mxu0
  %v4065 = vadd.f32 0.0, %v4064
  %4066 = vmatprep.mubr.f32.mxu0 0.0
  %4067 = vmatmul.mubr.f32.gmra.mrb[0].mxu0 %v3893
  %v4068 = vpop.f32.mrb[0].mxu0
  %v4069 = vadd.f32 0.0, %v4068
  %v4070 = vpop.f32.mrb[0].mxu0
  %v4071 = vadd.f32 0.0, %v4070
  %4072 = vdwg.mxu0
  %4073 = vmatprep.subr.mxu0 0.0
  %4074 = vmatpush1.msra.mxu0 %v3820
  %4075 = vmatprep.subr.mxu0 0.0
  %4076 = vmatpush1.msra.mxu0 %v3830
  %4077 = vmatprep.subr.mxu0 0.0
  %4078 = vmatpush1.msra.mxu0 %v3840
  %4079 = vmatprep.subr.mxu0 0.0
  %4080 = vmatpush1.msra.mxu0 %v3850
  %4081 = vmatprep.subr.mxu0 0.0
  %4082 = vmatpush1.msra.mxu0 0.0
  %4083 = vmatprep.subr.mxu0 0.0
  %4084 = vmatpush1.msra.mxu0 0.0
  %4085 = vmatprep.subr.mxu0 0.0
  %4086 = vmatpush1.msra.mxu0 0.0
  %4087 = vmatprep.subr.mxu0 0.0
  %4088 = vmatpush1.msra.mxu0 0.0
  %4089 = vmatprep.subr.mxu0 0.0
  %4090 = vmatpush1.msra.mxu0 0.0
  %4091 = vmatprep.subr.mxu0 0.0
  %4092 = vmatpush1.msra.mxu0 0.0
  %4093 = vmatprep.subr.mxu0 0.0
  %4094 = vmatpush1.msra.mxu0 0.0
  %4095 = vmatprep.subr.mxu0 0.0
  %4096 = vmatpush1.msra.mxu0 0.0
  %4097 = vmatprep.subr.mxu0 0.0
  %4098 = vmatpush1.msra.mxu0 0.0
  %4099 = vmatprep.subr.mxu0 0.0
  %4100 = vmatpush1.msra.mxu0 0.0
  %4101 = vmatprep.subr.mxu0 0.0
  %4102 = vmatpush1.msra.mxu0 0.0
  %4103 = vmatprep.subr.mxu0 0.0
  %4104 = vmatpush1.msra.mxu0 0.0
  %4105 = vmatprep.subr.mxu0 0.0
  %4106 = vmatpush1.msra.mxu0 0.0
  %4107 = vmatprep.subr.mxu0 0.0
  %4108 = vmatpush1.msra.mxu0 0.0
  %4109 = vmatprep.subr.mxu0 0.0
  %4110 = vmatpush1.msra.mxu0 0.0
  %4111 = vmatprep.subr.mxu0 0.0
  %4112 = vmatpush1.msra.mxu0 0.0
  %4113 = vmatprep.subr.mxu0 0.0
  %4114 = vmatpush1.msra.mxu0 0.0
  %4115 = vmatprep.subr.mxu0 0.0
  %4116 = vmatpush1.msra.mxu0 0.0
  %4117 = vmatprep.subr.mxu0 0.0
  %4118 = vmatpush1.msra.mxu0 0.0
  %4119 = vmatprep.subr.mxu0 0.0
  %4120 = vmatpush1.msra.mxu0 0.0
  %4121 = vmatprep.subr.mxu0 0.0
  %4122 = vmatpush1.msra.mxu0 0.0
  %4123 = vmatprep.subr.mxu0 0.0
  %4124 = vmatpush1.msra.mxu0 0.0
  %4125 = vmatprep.subr.mxu0 0.0
  %4126 = vmatpush1.msra.mxu0 0.0
  %4127 = vmatprep.subr.mxu0 0.0
  %4128 = vmatpush1.msra.mxu0 0.0
  %4129 = vmatprep.subr.mxu0 0.0
  %4130 = vmatpush1.msra.mxu0 0.0
  %4131 = vmatprep.subr.mxu0 0.0
  %4132 = vmatpush1.msra.mxu0 0.0
  %4133 = vmatprep.subr.mxu0 0.0
  %4134 = vmatpush1.msra.mxu0 0.0
  %4135 = vmatprep.subr.mxu0 0.0
  %4136 = vmatpush1.msra.mxu0 0.0
  %4137 = vmatprep.mubr.f32.mxu0 0.0
  %4138 = vmatmul.mubr.f32.gmra.mrb[0].mxu0 %v3887
  %v4139 = vpop.f32.mrb[0].mxu0
  %v4140 = vadd.f32 0.0, %v4139
  %v4141 = vpop.f32.mrb[0].mxu0
  %4142 = vmatprep.mubr.f32.mxu0 0.0
  %4143 = vmatmul.mubr.f32.gmra.mrb[0].mxu0 %v3889
  %v4144 = vpop.f32.mrb[0].mxu0
  %v4145 = vadd.f32 0.0, %v4144
  %v4146 = vpop.f32.mrb[0].mxu0
  %4147 = vmatprep.mubr.f32.mxu0 0.0
  %4148 = vmatmul.mubr.f32.gmra.mrb[0].mxu0 %v3891
  %v4149 = vpop.f32.mrb[0].mxu0
  %v4150 = vadd.f32 0.0, %v4149
  %v4151 = vpop.f32.mrb[0].mxu0
  %4152 = vmatprep.mubr.f32.mxu0 0.0
  %4153 = vmatmul.mubr.f32.gmra.mrb[0].mxu0 %v3893
  %v4154 = vpop.f32.mrb[0].mxu0
  %v4155 = vadd.f32 0.0, %v4154
  %v4156 = vpop.f32.mrb[0].mxu0
  %4157 = vdwg.mxu0
  %v4158 = vadd.f32 %v3607, %v3962
  %v4159 = vadd.f32 %v3609, %v3964
  %v4160 = vadd.f32 %v3696, %v4051
  %v4161 = vadd.f32 %v3698, %v4053
  %v4162 = vadd.f32 %v3785, %v4140
  %v4163 = vadd.f32 %v3613, %v3968
  %v4164 = vadd.f32 %v3615, %v3970
  %v4165 = vadd.f32 %v3702, %v4057
  %v4166 = vadd.f32 %v3704, %v4059
  %v4167 = vadd.f32 %v3790, %v4145
  %v4168 = vadd.f32 %v3619, %v3974
  %v4169 = vadd.f32 %v3621, %v3976
  %v4170 = vadd.f32 %v3708, %v4063
  %v4171 = vadd.f32 %v3710, %v4065
  %v4172 = vadd.f32 %v3795, %v4150
  %v4173 = vadd.f32 %v3625, %v3980
  %v4174 = vadd.f32 %v3627, %v3982
  %v4175 = vadd.f32 %v3714, %v4069
  %v4176 = vadd.f32 %v3716, %v4071
  %v4177 = vadd.f32 %v3800, %v4155
  %4178 = vrot.lane.b32.xlu0 %v3128, 32
  %v4179 = vpop.permute.xlu0 %4178
  %4180 = vrot.lane.b32.xlu0 %v3129, 32
  %v4181 = vpop.permute.xlu0 %4180
  %4182 = vrot.lane.b32.xlu0 %v3130, 32
  %v4183 = vpop.permute.xlu0 %4182
  %4184 = vrot.lane.b32.xlu0 %v3131, 32
  %v4185 = vpop.permute.xlu0 %4184
  %4186 = vrot.lane.b32.xlu0 %v3132, 110
  %v4187 = vpop.permute.xlu0 %4186
  %4188 = vrot.lane.b32.xlu0 %v3133, 110
  %v4189 = vpop.permute.xlu0 %4188
  %4190 = vrot.lane.b32.xlu0 %v3134, 110
  %v4191 = vpop.permute.xlu0 %4190
  %4192 = vrot.lane.b32.xlu0 %v3135, 110
  %v4193 = vpop.permute.xlu0 %4192
  %4194 = vrot.lane.b32.xlu0 %v3136, 110
  %v4195 = vpop.permute.xlu0 %4194
  %4196 = vrot.lane.b32.xlu0 %v3137, 110
  %v4197 = vpop.permute.xlu0 %4196
  %4198 = vrot.lane.b32.xlu0 %v3138, 110
  %v4199 = vpop.permute.xlu0 %4198
  %4200 = vrot.lane.b32.xlu0 %v3139, 110
  %v4201 = vpop.permute.xlu0 %4200
  %4202 = vrot.lane.b32.xlu0 %v3140, 110
  %v4203 = vpop.permute.xlu0 %4202
  %4204 = vrot.lane.b32.xlu0 %v3141, 110
  %v4205 = vpop.permute.xlu0 %4204
  %4206 = vrot.lane.b32.xlu0 %v3142, 110
  %v4207 = vpop.permute.xlu0 %4206
  %4208 = vrot.lane.b32.xlu0 %v3143, 110
  %v4209 = vpop.permute.xlu0 %4208
  %4210 = vrot.lane.b32.xlu0 %v3144, 110
  %v4211 = vpop.permute.xlu0 %4210
  %4212 = vrot.lane.b32.xlu0 %v3145, 110
  %v4213 = vpop.permute.xlu0 %4212
  %4214 = vrot.lane.b32.xlu0 %v3146, 110
  %v4215 = vpop.permute.xlu0 %4214
  %4216 = vrot.lane.b32.xlu0 %v3147, 110
  %v4217 = vpop.permute.xlu0 %4216
  %4218 = vrot.lane.b32.xlu0 %v3148, 110
  %v4219 = vpop.permute.xlu0 %4218
  %4220 = vrot.lane.b32.xlu0 %v3149, 110
  %v4221 = vpop.permute.xlu0 %4220
  %4222 = vrot.lane.b32.xlu0 %v3150, 110
  %v4223 = vpop.permute.xlu0 %4222
  %4224 = vrot.lane.b32.xlu0 %v3151, 110
  %v4225 = vpop.permute.xlu0 %4224
  %v4226 = vsel %vm988, %v4187, %v4189
  %v4227 = vsel %vm988, %v4189, %v4191
  %v4228 = vsel %vm988, %v4191, %v4193
  %v4229 = vsel %vm988, %v4193, %v4195
  %v4230 = vsel %vm988, %v4197, %v4199
  %v4231 = vsel %vm988, %v4199, %v4201
  %v4232 = vsel %vm988, %v4201, %v4203
  %v4233 = vsel %vm988, %v4203, %v4205
  %v4234 = vsel %vm988, %v4207, %v4209
  %v4235 = vsel %vm988, %v4209, %v4211
  %v4236 = vsel %vm988, %v4211, %v4213
  %v4237 = vsel %vm988, %v4213, %v4215
  %v4238 = vsel %vm988, %v4217, %v4219
  %v4239 = vsel %vm988, %v4219, %v4221
  %v4240 = vsel %vm988, %v4221, %v4223
  %v4241 = vsel %vm988, %v4223, %v4225
  %v4262 = vsel %vm3260, %v4179, 0
  %v4264 = vsel %vm3260, %v4181, 0
  %v4266 = vsel %vm3260, %v4183, 0
  %v4268 = vsel %vm3260, %v4185, 0
  %4270 = vmatprep.subr.mxu0 %v4227
  %4271 = vmatpush1.msra.mxu0 %v4226
  %4272 = vmatprep.subr.mxu0 %v4231
  %4273 = vmatpush1.msra.mxu0 %v4230
  %4274 = vmatprep.subr.mxu0 %v4235
  %4275 = vmatpush1.msra.mxu0 %v4234
  %4276 = vmatprep.subr.mxu0 %v4239
  %4277 = vmatpush1.msra.mxu0 %v4238
  %4278 = vmatprep.subr.mxu0 0.0
  %4279 = vmatpush1.msra.mxu0 0.0
  %4280 = vmatprep.subr.mxu0 0.0
  %4281 = vmatpush1.msra.mxu0 0.0
  %4282 = vmatprep.subr.mxu0 0.0
  %4283 = vmatpush1.msra.mxu0 0.0
  %4284 = vmatprep.subr.mxu0 0.0
  %4285 = vmatpush1.msra.mxu0 0.0
  %4286 = vmatprep.subr.mxu0 0.0
  %4287 = vmatpush1.msra.mxu0 0.0
  %4288 = vmatprep.subr.mxu0 0.0
  %4289 = vmatpush1.msra.mxu0 0.0
  %4290 = vmatprep.subr.mxu0 0.0
  %4291 = vmatpush1.msra.mxu0 0.0
  %4292 = vmatprep.subr.mxu0 0.0
  %4293 = vmatpush1.msra.mxu0 0.0
  %4294 = vmatprep.subr.mxu0 0.0
  %4295 = vmatpush1.msra.mxu0 0.0
  %4296 = vmatprep.subr.mxu0 0.0
  %4297 = vmatpush1.msra.mxu0 0.0
  %4298 = vmatprep.subr.mxu0 0.0
  %4299 = vmatpush1.msra.mxu0 0.0
  %4300 = vmatprep.subr.mxu0 0.0
  %4301 = vmatpush1.msra.mxu0 0.0
  %4302 = vmatprep.subr.mxu0 0.0
  %4303 = vmatpush1.msra.mxu0 0.0
  %4304 = vmatprep.subr.mxu0 0.0
  %4305 = vmatpush1.msra.mxu0 0.0
  %4306 = vmatprep.subr.mxu0 0.0
  %4307 = vmatpush1.msra.mxu0 0.0
  %4308 = vmatprep.subr.mxu0 0.0
  %4309 = vmatpush1.msra.mxu0 0.0
  %4310 = vmatprep.subr.mxu0 0.0
  %4311 = vmatpush1.msra.mxu0 0.0
  %4312 = vmatprep.subr.mxu0 0.0
  %4313 = vmatpush1.msra.mxu0 0.0
  %4314 = vmatprep.subr.mxu0 0.0
  %4315 = vmatpush1.msra.mxu0 0.0
  %4316 = vmatprep.subr.mxu0 0.0
  %4317 = vmatpush1.msra.mxu0 0.0
  %4318 = vmatprep.subr.mxu0 0.0
  %4319 = vmatpush1.msra.mxu0 0.0
  %4320 = vmatprep.subr.mxu0 0.0
  %4321 = vmatpush1.msra.mxu0 0.0
  %4322 = vmatprep.subr.mxu0 0.0
  %4323 = vmatpush1.msra.mxu0 0.0
  %4324 = vmatprep.subr.mxu0 0.0
  %4325 = vmatpush1.msra.mxu0 0.0
  %4326 = vmatprep.subr.mxu0 0.0
  %4327 = vmatpush1.msra.mxu0 0.0
  %4328 = vmatprep.subr.mxu0 0.0
  %4329 = vmatpush1.msra.mxu0 0.0
  %4330 = vmatprep.subr.mxu0 0.0
  %4331 = vmatpush1.msra.mxu0 0.0
  %4332 = vmatprep.subr.mxu0 0.0
  %4333 = vmatpush1.msra.mxu0 0.0
  %4334 = vmatprep.mubr.f32.mxu0 0.0
  %4335 = vmatmul.mubr.f32.gmra.mrb[0].mxu0 %v4262
  %v4336 = vpop.f32.mrb[0].mxu0
  %v4337 = vadd.f32 0.0, %v4336
  %v4338 = vpop.f32.mrb[0].mxu0
  %v4339 = vadd.f32 0.0, %v4338
  %4340 = vmatprep.mubr.f32.mxu0 0.0
  %4341 = vmatmul.mubr.f32.gmra.mrb[0].mxu0 %v4264
  %v4342 = vpop.f32.mrb[0].mxu0
  %v4343 = vadd.f32 0.0, %v4342
  %v4344 = vpop.f32.mrb[0].mxu0
  %v4345 = vadd.f32 0.0, %v4344
  %4346 = vmatprep.mubr.f32.mxu0 0.0
  %4347 = vmatmul.mubr.f32.gmra.mrb[0].mxu0 %v4266
  %v4348 = vpop.f32.mrb[0].mxu0
  %v4349 = vadd.f32 0.0, %v4348
  %v4350 = vpop.f32.mrb[0].mxu0
  %v4351 = vadd.f32 0.0, %v4350
  %4352 = vmatprep.mubr.f32.mxu0 0.0
  %4353 = vmatmul.mubr.f32.gmra.mrb[0].mxu0 %v4268
  %v4354 = vpop.f32.mrb[0].mxu0
  %v4355 = vadd.f32 0.0, %v4354
  %v4356 = vpop.f32.mrb[0].mxu0
  %v4357 = vadd.f32 0.0, %v4356
  %4358 = vdwg.mxu0
  %4359 = vmatprep.subr.mxu0 %v4229
  %4360 = vmatpush1.msra.mxu0 %v4228
  %4361 = vmatprep.subr.mxu0 %v4233
  %4362 = vmatpush1.msra.mxu0 %v4232
  %4363 = vmatprep.subr.mxu0 %v4237
  %4364 = vmatpush1.msra.mxu0 %v4236
  %4365 = vmatprep.subr.mxu0 %v4241
  %4366 = vmatpush1.msra.mxu0 %v4240
  %4367 = vmatprep.subr.mxu0 0.0
  %4368 = vmatpush1.msra.mxu0 0.0
  %4369 = vmatprep.subr.mxu0 0.0
  %4370 = vmatpush1.msra.mxu0 0.0
  %4371 = vmatprep.subr.mxu0 0.0
  %4372 = vmatpush1.msra.mxu0 0.0
  %4373 = vmatprep.subr.mxu0 0.0
  %4374 = vmatpush1.msra.mxu0 0.0
  %4375 = vmatprep.subr.mxu0 0.0
  %4376 = vmatpush1.msra.mxu0 0.0
  %4377 = vmatprep.subr.mxu0 0.0
  %4378 = vmatpush1.msra.mxu0 0.0
  %4379 = vmatprep.subr.mxu0 0.0
  %4380 = vmatpush1.msra.mxu0 0.0
  %4381 = vmatprep.subr.mxu0 0.0
  %4382 = vmatpush1.msra.mxu0 0.0
  %4383 = vmatprep.subr.mxu0 0.0
  %4384 = vmatpush1.msra.mxu0 0.0
  %4385 = vmatprep.subr.mxu0 0.0
  %4386 = vmatpush1.msra.mxu0 0.0
  %4387 = vmatprep.subr.mxu0 0.0
  %4388 = vmatpush1.msra.mxu0 0.0
  %4389 = vmatprep.subr.mxu0 0.0
  %4390 = vmatpush1.msra.mxu0 0.0
  %4391 = vmatprep.subr.mxu0 0.0
  %4392 = vmatpush1.msra.mxu0 0.0
  %4393 = vmatprep.subr.mxu0 0.0
  %4394 = vmatpush1.msra.mxu0 0.0
  %4395 = vmatprep.subr.mxu0 0.0
  %4396 = vmatpush1.msra.mxu0 0.0
  %4397 = vmatprep.subr.mxu0 0.0
  %4398 = vmatpush1.msra.mxu0 0.0
  %4399 = vmatprep.subr.mxu0 0.0
  %4400 = vmatpush1.msra.mxu0 0.0
  %4401 = vmatprep.subr.mxu0 0.0
  %4402 = vmatpush1.msra.mxu0 0.0
  %4403 = vmatprep.subr.mxu0 0.0
  %4404 = vmatpush1.msra.mxu0 0.0
  %4405 = vmatprep.subr.mxu0 0.0
  %4406 = vmatpush1.msra.mxu0 0.0
  %4407 = vmatprep.subr.mxu0 0.0
  %4408 = vmatpush1.msra.mxu0 0.0
  %4409 = vmatprep.subr.mxu0 0.0
  %4410 = vmatpush1.msra.mxu0 0.0
  %4411 = vmatprep.subr.mxu0 0.0
  %4412 = vmatpush1.msra.mxu0 0.0
  %4413 = vmatprep.subr.mxu0 0.0
  %4414 = vmatpush1.msra.mxu0 0.0
  %4415 = vmatprep.subr.mxu0 0.0
  %4416 = vmatpush1.msra.mxu0 0.0
  %4417 = vmatprep.subr.mxu0 0.0
  %4418 = vmatpush1.msra.mxu0 0.0
  %4419 = vmatprep.subr.mxu0 0.0
  %4420 = vmatpush1.msra.mxu0 0.0
  %4421 = vmatprep.subr.mxu0 0.0
  %4422 = vmatpush1.msra.mxu0 0.0
  %4423 = vmatprep.mubr.f32.mxu0 0.0
  %4424 = vmatmul.mubr.f32.gmra.mrb[0].mxu0 %v4262
  %v4425 = vpop.f32.mrb[0].mxu0
  %v4426 = vadd.f32 0.0, %v4425
  %v4427 = vpop.f32.mrb[0].mxu0
  %v4428 = vadd.f32 0.0, %v4427
  %4429 = vmatprep.mubr.f32.mxu0 0.0
  %4430 = vmatmul.mubr.f32.gmra.mrb[0].mxu0 %v4264
  %v4431 = vpop.f32.mrb[0].mxu0
  %v4432 = vadd.f32 0.0, %v4431
  %v4433 = vpop.f32.mrb[0].mxu0
  %v4434 = vadd.f32 0.0, %v4433
  %4435 = vmatprep.mubr.f32.mxu0 0.0
  %4436 = vmatmul.mubr.f32.gmra.mrb[0].mxu0 %v4266
  %v4437 = vpop.f32.mrb[0].mxu0
  %v4438 = vadd.f32 0.0, %v4437
  %v4439 = vpop.f32.mrb[0].mxu0
  %v4440 = vadd.f32 0.0, %v4439
  %4441 = vmatprep.mubr.f32.mxu0 0.0
  %4442 = vmatmul.mubr.f32.gmra.mrb[0].mxu0 %v4268
  %v4443 = vpop.f32.mrb[0].mxu0
  %v4444 = vadd.f32 0.0, %v4443
  %v4445 = vpop.f32.mrb[0].mxu0
  %v4446 = vadd.f32 0.0, %v4445
  %4447 = vdwg.mxu0
  %4448 = vmatprep.subr.mxu0 0.0
  %4449 = vmatpush1.msra.mxu0 %v4195
  %4450 = vmatprep.subr.mxu0 0.0
  %4451 = vmatpush1.msra.mxu0 %v4205
  %4452 = vmatprep.subr.mxu0 0.0
  %4453 = vmatpush1.msra.mxu0 %v4215
  %4454 = vmatprep.subr.mxu0 0.0
  %4455 = vmatpush1.msra.mxu0 %v4225
  %4456 = vmatprep.subr.mxu0 0.0
  %4457 = vmatpush1.msra.mxu0 0.0
  %4458 = vmatprep.subr.mxu0 0.0
  %4459 = vmatpush1.msra.mxu0 0.0
  %4460 = vmatprep.subr.mxu0 0.0
  %4461 = vmatpush1.msra.mxu0 0.0
  %4462 = vmatprep.subr.mxu0 0.0
  %4463 = vmatpush1.msra.mxu0 0.0
  %4464 = vmatprep.subr.mxu0 0.0
  %4465 = vmatpush1.msra.mxu0 0.0
  %4466 = vmatprep.subr.mxu0 0.0
  %4467 = vmatpush1.msra.mxu0 0.0
  %4468 = vmatprep.subr.mxu0 0.0
  %4469 = vmatpush1.msra.mxu0 0.0
  %4470 = vmatprep.subr.mxu0 0.0
  %4471 = vmatpush1.msra.mxu0 0.0
  %4472 = vmatprep.subr.mxu0 0.0
  %4473 = vmatpush1.msra.mxu0 0.0
  %4474 = vmatprep.subr.mxu0 0.0
  %4475 = vmatpush1.msra.mxu0 0.0
  %4476 = vmatprep.subr.mxu0 0.0
  %4477 = vmatpush1.msra.mxu0 0.0
  %4478 = vmatprep.subr.mxu0 0.0
  %4479 = vmatpush1.msra.mxu0 0.0
  %4480 = vmatprep.subr.mxu0 0.0
  %4481 = vmatpush1.msra.mxu0 0.0
  %4482 = vmatprep.subr.mxu0 0.0
  %4483 = vmatpush1.msra.mxu0 0.0
  %4484 = vmatprep.subr.mxu0 0.0
  %4485 = vmatpush1.msra.mxu0 0.0
  %4486 = vmatprep.subr.mxu0 0.0
  %4487 = vmatpush1.msra.mxu0 0.0
  %4488 = vmatprep.subr.mxu0 0.0
  %4489 = vmatpush1.msra.mxu0 0.0
  %4490 = vmatprep.subr.mxu0 0.0
  %4491 = vmatpush1.msra.mxu0 0.0
  %4492 = vmatprep.subr.mxu0 0.0
  %4493 = vmatpush1.msra.mxu0 0.0
  %4494 = vmatprep.subr.mxu0 0.0
  %4495 = vmatpush1.msra.mxu0 0.0
  %4496 = vmatprep.subr.mxu0 0.0
  %4497 = vmatpush1.msra.mxu0 0.0
  %4498 = vmatprep.subr.mxu0 0.0
  %4499 = vmatpush1.msra.mxu0 0.0
  %4500 = vmatprep.subr.mxu0 0.0
  %4501 = vmatpush1.msra.mxu0 0.0
  %4502 = vmatprep.subr.mxu0 0.0
  %4503 = vmatpush1.msra.mxu0 0.0
  %4504 = vmatprep.subr.mxu0 0.0
  %4505 = vmatpush1.msra.mxu0 0.0
  %4506 = vmatprep.subr.mxu0 0.0
  %4507 = vmatpush1.msra.mxu0 0.0
  %4508 = vmatprep.subr.mxu0 0.0
  %4509 = vmatpush1.msra.mxu0 0.0
  %4510 = vmatprep.subr.mxu0 0.0
  %4511 = vmatpush1.msra.mxu0 0.0
  %4512 = vmatprep.mubr.f32.mxu0 0.0
  %4513 = vmatmul.mubr.f32.gmra.mrb[0].mxu0 %v4262
  %v4514 = vpop.f32.mrb[0].mxu0
  %v4515 = vadd.f32 0.0, %v4514
  %v4516 = vpop.f32.mrb[0].mxu0
  %4517 = vmatprep.mubr.f32.mxu0 0.0
  %4518 = vmatmul.mubr.f32.gmra.mrb[0].mxu0 %v4264
  %v4519 = vpop.f32.mrb[0].mxu0
  %v4520 = vadd.f32 0.0, %v4519
  %v4521 = vpop.f32.mrb[0].mxu0
  %4522 = vmatprep.mubr.f32.mxu0 0.0
  %4523 = vmatmul.mubr.f32.gmra.mrb[0].mxu0 %v4266
  %v4524 = vpop.f32.mrb[0].mxu0
  %v4525 = vadd.f32 0.0, %v4524
  %v4526 = vpop.f32.mrb[0].mxu0
  %4527 = vmatprep.mubr.f32.mxu0 0.0
  %4528 = vmatmul.mubr.f32.gmra.mrb[0].mxu0 %v4268
  %v4529 = vpop.f32.mrb[0].mxu0
  %v4530 = vadd.f32 0.0, %v4529
  %v4531 = vpop.f32.mrb[0].mxu0
  %4532 = vdwg.mxu0
  %v4533 = vadd.f32 %v4158, %v4337
  %v4534 = vadd.f32 %v4159, %v4339
  %v4535 = vadd.f32 %v4160, %v4426
  %v4536 = vadd.f32 %v4161, %v4428
  %v4537 = vadd.f32 %v4162, %v4515
  %v4538 = vadd.f32 %v4163, %v4343
  %v4539 = vadd.f32 %v4164, %v4345
  %v4540 = vadd.f32 %v4165, %v4432
  %v4541 = vadd.f32 %v4166, %v4434
  %v4542 = vadd.f32 %v4167, %v4520
  %v4543 = vadd.f32 %v4168, %v4349
  %v4544 = vadd.f32 %v4169, %v4351
  %v4545 = vadd.f32 %v4170, %v4438
  %v4546 = vadd.f32 %v4171, %v4440
  %v4547 = vadd.f32 %v4172, %v4525
  %v4548 = vadd.f32 %v4173, %v4355
  %v4549 = vadd.f32 %v4174, %v4357
  %v4550 = vadd.f32 %v4175, %v4444
  %v4551 = vadd.f32 %v4176, %v4446
  %v4552 = vadd.f32 %v4177, %v4530
  %v4553 = vld [vmem:[%s2 + $0x8] sm:$0xff]
  %v4554 = vld [vmem:[%s2 + $0x20] sm:$0xff]
  %v4555 = vld [vmem:[%s2 + $0x38] sm:$0xff]
  %v4556 = vld [vmem:[%s2 + $0x50] sm:$0xff]
  %4557 = vrot.lane.b32.xlu0 %v3132, 109
  %v4558 = vpop.permute.xlu0 %4557
  %4559 = vrot.lane.b32.xlu0 %v3133, 109
  %v4560 = vpop.permute.xlu0 %4559
  %4561 = vrot.lane.b32.xlu0 %v3134, 109
  %v4562 = vpop.permute.xlu0 %4561
  %4563 = vrot.lane.b32.xlu0 %v3135, 109
  %v4564 = vpop.permute.xlu0 %4563
  %4565 = vrot.lane.b32.xlu0 %v3136, 109
  %v4566 = vpop.permute.xlu0 %4565
  %4567 = vrot.lane.b32.xlu0 %v3137, 109
  %v4568 = vpop.permute.xlu0 %4567
  %4569 = vrot.lane.b32.xlu0 %v3138, 109
  %v4570 = vpop.permute.xlu0 %4569
  %4571 = vrot.lane.b32.xlu0 %v3139, 109
  %v4572 = vpop.permute.xlu0 %4571
  %4573 = vrot.lane.b32.xlu0 %v3140, 109
  %v4574 = vpop.permute.xlu0 %4573
  %4575 = vrot.lane.b32.xlu0 %v3141, 109
  %v4576 = vpop.permute.xlu0 %4575
  %4577 = vrot.lane.b32.xlu0 %v3142, 109
  %v4578 = vpop.permute.xlu0 %4577
  %4579 = vrot.lane.b32.xlu0 %v3143, 109
  %v4580 = vpop.permute.xlu0 %4579
  %4581 = vrot.lane.b32.xlu0 %v3144, 109
  %v4582 = vpop.permute.xlu0 %4581
  %4583 = vrot.lane.b32.xlu0 %v3145, 109
  %v4584 = vpop.permute.xlu0 %4583
  %4585 = vrot.lane.b32.xlu0 %v3146, 109
  %v4586 = vpop.permute.xlu0 %4585
  %4587 = vrot.lane.b32.xlu0 %v3147, 109
  %v4588 = vpop.permute.xlu0 %4587
  %4589 = vrot.lane.b32.xlu0 %v3148, 109
  %v4590 = vpop.permute.xlu0 %4589
  %4591 = vrot.lane.b32.xlu0 %v3149, 109
  %v4592 = vpop.permute.xlu0 %4591
  %4593 = vrot.lane.b32.xlu0 %v3150, 109
  %v4594 = vpop.permute.xlu0 %4593
  %4595 = vrot.lane.b32.xlu0 %v3151, 109
  %v4596 = vpop.permute.xlu0 %4595
  %v4597 = vsel %vm1307, %v4558, %v4560
  %v4598 = vsel %vm1307, %v4560, %v4562
  %v4599 = vsel %vm1307, %v4562, %v4564
  %v4600 = vsel %vm1307, %v4564, %v4566
  %v4601 = vsel %vm1307, %v4568, %v4570
  %v4602 = vsel %vm1307, %v4570, %v4572
  %v4603 = vsel %vm1307, %v4572, %v4574
  %v4604 = vsel %vm1307, %v4574, %v4576
  %v4605 = vsel %vm1307, %v4578, %v4580
  %v4606 = vsel %vm1307, %v4580, %v4582
  %v4607 = vsel %vm1307, %v4582, %v4584
  %v4608 = vsel %vm1307, %v4584, %v4586
  %v4609 = vsel %vm1307, %v4588, %v4590
  %v4610 = vsel %vm1307, %v4590, %v4592
  %v4611 = vsel %vm1307, %v4592, %v4594
  %v4612 = vsel %vm1307, %v4594, %v4596
  %v4634 = vsel %vm3260, %v4553, 0
  %v4637 = vsel %vm3260, %v4554, 0
  %v4640 = vsel %vm3260, %v4555, 0
  %v4643 = vsel %vm3260, %v4556, 0
  %4645 = vmatprep.subr.mxu0 %v4598
  %4646 = vmatpush1.msra.mxu0 %v4597
  %4647 = vmatprep.subr.mxu0 %v4602
  %4648 = vmatpush1.msra.mxu0 %v4601
  %4649 = vmatprep.subr.mxu0 %v4606
  %4650 = vmatpush1.msra.mxu0 %v4605
  %4651 = vmatprep.subr.mxu0 %v4610
  %4652 = vmatpush1.msra.mxu0 %v4609
  %4653 = vmatprep.subr.mxu0 0.0
  %4654 = vmatpush1.msra.mxu0 0.0
  %4655 = vmatprep.subr.mxu0 0.0
  %4656 = vmatpush1.msra.mxu0 0.0
  %4657 = vmatprep.subr.mxu0 0.0
  %4658 = vmatpush1.msra.mxu0 0.0
  %4659 = vmatprep.subr.mxu0 0.0
  %4660 = vmatpush1.msra.mxu0 0.0
  %4661 = vmatprep.subr.mxu0 0.0
  %4662 = vmatpush1.msra.mxu0 0.0
  %4663 = vmatprep.subr.mxu0 0.0
  %4664 = vmatpush1.msra.mxu0 0.0
  %4665 = vmatprep.subr.mxu0 0.0
  %4666 = vmatpush1.msra.mxu0 0.0
  %4667 = vmatprep.subr.mxu0 0.0
  %4668 = vmatpush1.msra.mxu0 0.0
  %4669 = vmatprep.subr.mxu0 0.0
  %4670 = vmatpush1.msra.mxu0 0.0
  %4671 = vmatprep.subr.mxu0 0.0
  %4672 = vmatpush1.msra.mxu0 0.0
  %4673 = vmatprep.subr.mxu0 0.0
  %4674 = vmatpush1.msra.mxu0 0.0
  %4675 = vmatprep.subr.mxu0 0.0
  %4676 = vmatpush1.msra.mxu0 0.0
  %4677 = vmatprep.subr.mxu0 0.0
  %4678 = vmatpush1.msra.mxu0 0.0
  %4679 = vmatprep.subr.mxu0 0.0
  %4680 = vmatpush1.msra.mxu0 0.0
  %4681 = vmatprep.subr.mxu0 0.0
  %4682 = vmatpush1.msra.mxu0 0.0
  %4683 = vmatprep.subr.mxu0 0.0
  %4684 = vmatpush1.msra.mxu0 0.0
  %4685 = vmatprep.subr.mxu0 0.0
  %4686 = vmatpush1.msra.mxu0 0.0
  %4687 = vmatprep.subr.mxu0 0.0
  %4688 = vmatpush1.msra.mxu0 0.0
  %4689 = vmatprep.subr.mxu0 0.0
  %4690 = vmatpush1.msra.mxu0 0.0
  %4691 = vmatprep.subr.mxu0 0.0
  %4692 = vmatpush1.msra.mxu0 0.0
  %4693 = vmatprep.subr.mxu0 0.0
  %4694 = vmatpush1.msra.mxu0 0.0
  %4695 = vmatprep.subr.mxu0 0.0
  %4696 = vmatpush1.msra.mxu0 0.0
  %4697 = vmatprep.subr.mxu0 0.0
  %4698 = vmatpush1.msra.mxu0 0.0
  %4699 = vmatprep.subr.mxu0 0.0
  %4700 = vmatpush1.msra.mxu0 0.0
  %4701 = vmatprep.subr.mxu0 0.0
  %4702 = vmatpush1.msra.mxu0 0.0
  %4703 = vmatprep.subr.mxu0 0.0
  %4704 = vmatpush1.msra.mxu0 0.0
  %4705 = vmatprep.subr.mxu0 0.0
  %4706 = vmatpush1.msra.mxu0 0.0
  %4707 = vmatprep.subr.mxu0 0.0
  %4708 = vmatpush1.msra.mxu0 0.0
  %4709 = vmatprep.mubr.f32.mxu0 0.0
  %4710 = vmatmul.mubr.f32.gmra.mrb[0].mxu0 %v4634
  %v4711 = vpop.f32.mrb[0].mxu0
  %v4712 = vadd.f32 0.0, %v4711
  %v4713 = vpop.f32.mrb[0].mxu0
  %v4714 = vadd.f32 0.0, %v4713
  %4715 = vmatprep.mubr.f32.mxu0 0.0
  %4716 = vmatmul.mubr.f32.gmra.mrb[0].mxu0 %v4637
  %v4717 = vpop.f32.mrb[0].mxu0
  %v4718 = vadd.f32 0.0, %v4717
  %v4719 = vpop.f32.mrb[0].mxu0
  %v4720 = vadd.f32 0.0, %v4719
  %4721 = vmatprep.mubr.f32.mxu0 0.0
  %4722 = vmatmul.mubr.f32.gmra.mrb[0].mxu0 %v4640
  %v4723 = vpop.f32.mrb[0].mxu0
  %v4724 = vadd.f32 0.0, %v4723
  %v4725 = vpop.f32.mrb[0].mxu0
  %v4726 = vadd.f32 0.0, %v4725
  %4727 = vmatprep.mubr.f32.mxu0 0.0
  %4728 = vmatmul.mubr.f32.gmra.mrb[0].mxu0 %v4643
  %v4729 = vpop.f32.mrb[0].mxu0
  %v4730 = vadd.f32 0.0, %v4729
  %v4731 = vpop.f32.mrb[0].mxu0
  %v4732 = vadd.f32 0.0, %v4731
  %4733 = vdwg.mxu0
  %4734 = vmatprep.subr.mxu0 %v4600
  %4735 = vmatpush1.msra.mxu0 %v4599
  %4736 = vmatprep.subr.mxu0 %v4604
  %4737 = vmatpush1.msra.mxu0 %v4603
  %4738 = vmatprep.subr.mxu0 %v4608
  %4739 = vmatpush1.msra.mxu0 %v4607
  %4740 = vmatprep.subr.mxu0 %v4612
  %4741 = vmatpush1.msra.mxu0 %v4611
  %4742 = vmatprep.subr.mxu0 0.0
  %4743 = vmatpush1.msra.mxu0 0.0
  %4744 = vmatprep.subr.mxu0 0.0
  %4745 = vmatpush1.msra.mxu0 0.0
  %4746 = vmatprep.subr.mxu0 0.0
  %4747 = vmatpush1.msra.mxu0 0.0
  %4748 = vmatprep.subr.mxu0 0.0
  %4749 = vmatpush1.msra.mxu0 0.0
  %4750 = vmatprep.subr.mxu0 0.0
  %4751 = vmatpush1.msra.mxu0 0.0
  %4752 = vmatprep.subr.mxu0 0.0
  %4753 = vmatpush1.msra.mxu0 0.0
  %4754 = vmatprep.subr.mxu0 0.0
  %4755 = vmatpush1.msra.mxu0 0.0
  %4756 = vmatprep.subr.mxu0 0.0
  %4757 = vmatpush1.msra.mxu0 0.0
  %4758 = vmatprep.subr.mxu0 0.0
  %4759 = vmatpush1.msra.mxu0 0.0
  %4760 = vmatprep.subr.mxu0 0.0
  %4761 = vmatpush1.msra.mxu0 0.0
  %4762 = vmatprep.subr.mxu0 0.0
  %4763 = vmatpush1.msra.mxu0 0.0
  %4764 = vmatprep.subr.mxu0 0.0
  %4765 = vmatpush1.msra.mxu0 0.0
  %4766 = vmatprep.subr.mxu0 0.0
  %4767 = vmatpush1.msra.mxu0 0.0
  %4768 = vmatprep.subr.mxu0 0.0
  %4769 = vmatpush1.msra.mxu0 0.0
  %4770 = vmatprep.subr.mxu0 0.0
  %4771 = vmatpush1.msra.mxu0 0.0
  %4772 = vmatprep.subr.mxu0 0.0
  %4773 = vmatpush1.msra.mxu0 0.0
  %4774 = vmatprep.subr.mxu0 0.0
  %4775 = vmatpush1.msra.mxu0 0.0
  %4776 = vmatprep.subr.mxu0 0.0
  %4777 = vmatpush1.msra.mxu0 0.0
  %4778 = vmatprep.subr.mxu0 0.0
  %4779 = vmatpush1.msra.mxu0 0.0
  %4780 = vmatprep.subr.mxu0 0.0
  %4781 = vmatpush1.msra.mxu0 0.0
  %4782 = vmatprep.subr.mxu0 0.0
  %4783 = vmatpush1.msra.mxu0 0.0
  %4784 = vmatprep.subr.mxu0 0.0
  %4785 = vmatpush1.msra.mxu0 0.0
  %4786 = vmatprep.subr.mxu0 0.0
  %4787 = vmatpush1.msra.mxu0 0.0
  %4788 = vmatprep.subr.mxu0 0.0
  %4789 = vmatpush1.msra.mxu0 0.0
  %4790 = vmatprep.subr.mxu0 0.0
  %4791 = vmatpush1.msra.mxu0 0.0
  %4792 = vmatprep.subr.mxu0 0.0
  %4793 = vmatpush1.msra.mxu0 0.0
  %4794 = vmatprep.subr.mxu0 0.0
  %4795 = vmatpush1.msra.mxu0 0.0
  %4796 = vmatprep.subr.mxu0 0.0
  %4797 = vmatpush1.msra.mxu0 0.0
  %4798 = vmatprep.mubr.f32.mxu0 0.0
  %4799 = vmatmul.mubr.f32.gmra.mrb[0].mxu0 %v4634
  %v4800 = vpop.f32.mrb[0].mxu0
  %v4801 = vadd.f32 0.0, %v4800
  %v4802 = vpop.f32.mrb[0].mxu0
  %v4803 = vadd.f32 0.0, %v4802
  %4804 = vmatprep.mubr.f32.mxu0 0.0
  %4805 = vmatmul.mubr.f32.gmra.mrb[0].mxu0 %v4637
  %v4806 = vpop.f32.mrb[0].mxu0
  %v4807 = vadd.f32 0.0, %v4806
  %v4808 = vpop.f32.mrb[0].mxu0
  %v4809 = vadd.f32 0.0, %v4808
  %4810 = vmatprep.mubr.f32.mxu0 0.0
  %4811 = vmatmul.mubr.f32.gmra.mrb[0].mxu0 %v4640
  %v4812 = vpop.f32.mrb[0].mxu0
  %v4813 = vadd.f32 0.0, %v4812
  %v4814 = vpop.f32.mrb[0].mxu0
  %v4815 = vadd.f32 0.0, %v4814
  %4816 = vmatprep.mubr.f32.mxu0 0.0
  %4817 = vmatmul.mubr.f32.gmra.mrb[0].mxu0 %v4643
  %v4818 = vpop.f32.mrb[0].mxu0
  %v4819 = vadd.f32 0.0, %v4818
  %v4820 = vpop.f32.mrb[0].mxu0
  %v4821 = vadd.f32 0.0, %v4820
  %4822 = vdwg.mxu0
  %4823 = vmatprep.subr.mxu0 0.0
  %4824 = vmatpush1.msra.mxu0 %v4566
  %4825 = vmatprep.subr.mxu0 0.0
  %4826 = vmatpush1.msra.mxu0 %v4576
  %4827 = vmatprep.subr.mxu0 0.0
  %4828 = vmatpush1.msra.mxu0 %v4586
  %4829 = vmatprep.subr.mxu0 0.0
  %4830 = vmatpush1.msra.mxu0 %v4596
  %4831 = vmatprep.subr.mxu0 0.0
  %4832 = vmatpush1.msra.mxu0 0.0
  %4833 = vmatprep.subr.mxu0 0.0
  %4834 = vmatpush1.msra.mxu0 0.0
  %4835 = vmatprep.subr.mxu0 0.0
  %4836 = vmatpush1.msra.mxu0 0.0
  %4837 = vmatprep.subr.mxu0 0.0
  %4838 = vmatpush1.msra.mxu0 0.0
  %4839 = vmatprep.subr.mxu0 0.0
  %4840 = vmatpush1.msra.mxu0 0.0
  %4841 = vmatprep.subr.mxu0 0.0
  %4842 = vmatpush1.msra.mxu0 0.0
  %4843 = vmatprep.subr.mxu0 0.0
  %4844 = vmatpush1.msra.mxu0 0.0
  %4845 = vmatprep.subr.mxu0 0.0
  %4846 = vmatpush1.msra.mxu0 0.0
  %4847 = vmatprep.subr.mxu0 0.0
  %4848 = vmatpush1.msra.mxu0 0.0
  %4849 = vmatprep.subr.mxu0 0.0
  %4850 = vmatpush1.msra.mxu0 0.0
  %4851 = vmatprep.subr.mxu0 0.0
  %4852 = vmatpush1.msra.mxu0 0.0
  %4853 = vmatprep.subr.mxu0 0.0
  %4854 = vmatpush1.msra.mxu0 0.0
  %4855 = vmatprep.subr.mxu0 0.0
  %4856 = vmatpush1.msra.mxu0 0.0
  %4857 = vmatprep.subr.mxu0 0.0
  %4858 = vmatpush1.msra.mxu0 0.0
  %4859 = vmatprep.subr.mxu0 0.0
  %4860 = vmatpush1.msra.mxu0 0.0
  %4861 = vmatprep.subr.mxu0 0.0
  %4862 = vmatpush1.msra.mxu0 0.0
  %4863 = vmatprep.subr.mxu0 0.0
  %4864 = vmatpush1.msra.mxu0 0.0
  %4865 = vmatprep.subr.mxu0 0.0
  %4866 = vmatpush1.msra.mxu0 0.0
  %4867 = vmatprep.subr.mxu0 0.0
  %4868 = vmatpush1.msra.mxu0 0.0
  %4869 = vmatprep.subr.mxu0 0.0
  %4870 = vmatpush1.msra.mxu0 0.0
  %4871 = vmatprep.subr.mxu0 0.0
  %4872 = vmatpush1.msra.mxu0 0.0
  %4873 = vmatprep.subr.mxu0 0.0
  %4874 = vmatpush1.msra.mxu0 0.0
  %4875 = vmatprep.subr.mxu0 0.0
  %4876 = vmatpush1.msra.mxu0 0.0
  %4877 = vmatprep.subr.mxu0 0.0
  %4878 = vmatpush1.msra.mxu0 0.0
  %4879 = vmatprep.subr.mxu0 0.0
  %4880 = vmatpush1.msra.mxu0 0.0
  %4881 = vmatprep.subr.mxu0 0.0
  %4882 = vmatpush1.msra.mxu0 0.0
  %4883 = vmatprep.subr.mxu0 0.0
  %4884 = vmatpush1.msra.mxu0 0.0
  %4885 = vmatprep.subr.mxu0 0.0
  %4886 = vmatpush1.msra.mxu0 0.0
  %4887 = vmatprep.mubr.f32.mxu0 0.0
  %4888 = vmatmul.mubr.f32.gmra.mrb[0].mxu0 %v4634
  %v4889 = vpop.f32.mrb[0].mxu0
  %v4890 = vadd.f32 0.0, %v4889
  %v4891 = vpop.f32.mrb[0].mxu0
  %4892 = vmatprep.mubr.f32.mxu0 0.0
  %4893 = vmatmul.mubr.f32.gmra.mrb[0].mxu0 %v4637
  %v4894 = vpop.f32.mrb[0].mxu0
  %v4895 = vadd.f32 0.0, %v4894
  %v4896 = vpop.f32.mrb[0].mxu0
  %4897 = vmatprep.mubr.f32.mxu0 0.0
  %4898 = vmatmul.mubr.f32.gmra.mrb[0].mxu0 %v4640
  %v4899 = vpop.f32.mrb[0].mxu0
  %v4900 = vadd.f32 0.0, %v4899
  %v4901 = vpop.f32.mrb[0].mxu0
  %4902 = vmatprep.mubr.f32.mxu0 0.0
  %4903 = vmatmul.mubr.f32.gmra.mrb[0].mxu0 %v4643
  %v4904 = vpop.f32.mrb[0].mxu0
  %v4905 = vadd.f32 0.0, %v4904
  %v4906 = vpop.f32.mrb[0].mxu0
  %4907 = vdwg.mxu0
  %v4908 = vadd.f32 %v4533, %v4712
  %v4909 = vadd.f32 %v4534, %v4714
  %v4910 = vadd.f32 %v4535, %v4801
  %v4911 = vadd.f32 %v4536, %v4803
  %v4912 = vadd.f32 %v4537, %v4890
  %v4913 = vadd.f32 %v4538, %v4718
  %v4914 = vadd.f32 %v4539, %v4720
  %v4915 = vadd.f32 %v4540, %v4807
  %v4916 = vadd.f32 %v4541, %v4809
  %v4917 = vadd.f32 %v4542, %v4895
  %v4918 = vadd.f32 %v4543, %v4724
  %v4919 = vadd.f32 %v4544, %v4726
  %v4920 = vadd.f32 %v4545, %v4813
  %v4921 = vadd.f32 %v4546, %v4815
  %v4922 = vadd.f32 %v4547, %v4900
  %v4923 = vadd.f32 %v4548, %v4730
  %v4924 = vadd.f32 %v4549, %v4732
  %v4925 = vadd.f32 %v4550, %v4819
  %v4926 = vadd.f32 %v4551, %v4821
  %v4927 = vadd.f32 %v4552, %v4905
  %4928 = vrot.lane.b32.xlu0 %v4553, 96
  %v4929 = vpop.permute.xlu0 %4928
  %4930 = vrot.lane.b32.xlu0 %v4554, 96
  %v4931 = vpop.permute.xlu0 %4930
  %4932 = vrot.lane.b32.xlu0 %v4555, 96
  %v4933 = vpop.permute.xlu0 %4932
  %4934 = vrot.lane.b32.xlu0 %v4556, 96
  %v4935 = vpop.permute.xlu0 %4934
  %4936 = vrot.lane.b32.xlu0 %v3132, 108
  %v4937 = vpop.permute.xlu0 %4936
  %4938 = vrot.lane.b32.xlu0 %v3133, 108
  %v4939 = vpop.permute.xlu0 %4938
  %4940 = vrot.lane.b32.xlu0 %v3134, 108
  %v4941 = vpop.permute.xlu0 %4940
  %4942 = vrot.lane.b32.xlu0 %v3135, 108
  %v4943 = vpop.permute.xlu0 %4942
  %4944 = vrot.lane.b32.xlu0 %v3136, 108
  %v4945 = vpop.permute.xlu0 %4944
  %4946 = vrot.lane.b32.xlu0 %v3137, 108
  %v4947 = vpop.permute.xlu0 %4946
  %4948 = vrot.lane.b32.xlu0 %v3138, 108
  %v4949 = vpop.permute.xlu0 %4948
  %4950 = vrot.lane.b32.xlu0 %v3139, 108
  %v4951 = vpop.permute.xlu0 %4950
  %4952 = vrot.lane.b32.xlu0 %v3140, 108
  %v4953 = vpop.permute.xlu0 %4952
  %4954 = vrot.lane.b32.xlu0 %v3141, 108
  %v4955 = vpop.permute.xlu0 %4954
  %4956 = vrot.lane.b32.xlu0 %v3142, 108
  %v4957 = vpop.permute.xlu0 %4956
  %4958 = vrot.lane.b32.xlu0 %v3143, 108
  %v4959 = vpop.permute.xlu0 %4958
  %4960 = vrot.lane.b32.xlu0 %v3144, 108
  %v4961 = vpop.permute.xlu0 %4960
  %4962 = vrot.lane.b32.xlu0 %v3145, 108
  %v4963 = vpop.permute.xlu0 %4962
  %4964 = vrot.lane.b32.xlu0 %v3146, 108
  %v4965 = vpop.permute.xlu0 %4964
  %4966 = vrot.lane.b32.xlu0 %v3147, 108
  %v4967 = vpop.permute.xlu0 %4966
  %4968 = vrot.lane.b32.xlu0 %v3148, 108
  %v4969 = vpop.permute.xlu0 %4968
  %4970 = vrot.lane.b32.xlu0 %v3149, 108
  %v4971 = vpop.permute.xlu0 %4970
  %4972 = vrot.lane.b32.xlu0 %v3150, 108
  %v4973 = vpop.permute.xlu0 %4972
  %4974 = vrot.lane.b32.xlu0 %v3151, 108
  %v4975 = vpop.permute.xlu0 %4974
  %v4976 = vsel %vm1626, %v4937, %v4939
  %v4977 = vsel %vm1626, %v4939, %v4941
  %v4978 = vsel %vm1626, %v4941, %v4943
  %v4979 = vsel %vm1626, %v4943, %v4945
  %v4980 = vsel %vm1626, %v4947, %v4949
  %v4981 = vsel %vm1626, %v4949, %v4951
  %v4982 = vsel %vm1626, %v4951, %v4953
  %v4983 = vsel %vm1626, %v4953, %v4955
  %v4984 = vsel %vm1626, %v4957, %v4959
  %v4985 = vsel %vm1626, %v4959, %v4961
  %v4986 = vsel %vm1626, %v4961, %v4963
  %v4987 = vsel %vm1626, %v4963, %v4965
  %v4988 = vsel %vm1626, %v4967, %v4969
  %v4989 = vsel %vm1626, %v4969, %v4971
  %v4990 = vsel %vm1626, %v4971, %v4973
  %v4991 = vsel %vm1626, %v4973, %v4975
  %v5012 = vsel %vm3260, %v4929, 0
  %v5014 = vsel %vm3260, %v4931, 0
  %v5016 = vsel %vm3260, %v4933, 0
  %v5018 = vsel %vm3260, %v4935, 0
  %5020 = vmatprep.subr.mxu0 %v4977
  %5021 = vmatpush1.msra.mxu0 %v4976
  %5022 = vmatprep.subr.mxu0 %v4981
  %5023 = vmatpush1.msra.mxu0 %v4980
  %5024 = vmatprep.subr.mxu0 %v4985
  %5025 = vmatpush1.msra.mxu0 %v4984
  %5026 = vmatprep.subr.mxu0 %v4989
  %5027 = vmatpush1.msra.mxu0 %v4988
  %5028 = vmatprep.subr.mxu0 0.0
  %5029 = vmatpush1.msra.mxu0 0.0
  %5030 = vmatprep.subr.mxu0 0.0
  %5031 = vmatpush1.msra.mxu0 0.0
  %5032 = vmatprep.subr.mxu0 0.0
  %5033 = vmatpush1.msra.mxu0 0.0
  %5034 = vmatprep.subr.mxu0 0.0
  %5035 = vmatpush1.msra.mxu0 0.0
  %5036 = vmatprep.subr.mxu0 0.0
  %5037 = vmatpush1.msra.mxu0 0.0
  %5038 = vmatprep.subr.mxu0 0.0
  %5039 = vmatpush1.msra.mxu0 0.0
  %5040 = vmatprep.subr.mxu0 0.0
  %5041 = vmatpush1.msra.mxu0 0.0
  %5042 = vmatprep.subr.mxu0 0.0
  %5043 = vmatpush1.msra.mxu0 0.0
  %5044 = vmatprep.subr.mxu0 0.0
  %5045 = vmatpush1.msra.mxu0 0.0
  %5046 = vmatprep.subr.mxu0 0.0
  %5047 = vmatpush1.msra.mxu0 0.0
  %5048 = vmatprep.subr.mxu0 0.0
  %5049 = vmatpush1.msra.mxu0 0.0
  %5050 = vmatprep.subr.mxu0 0.0
  %5051 = vmatpush1.msra.mxu0 0.0
  %5052 = vmatprep.subr.mxu0 0.0
  %5053 = vmatpush1.msra.mxu0 0.0
  %5054 = vmatprep.subr.mxu0 0.0
  %5055 = vmatpush1.msra.mxu0 0.0
  %5056 = vmatprep.subr.mxu0 0.0
  %5057 = vmatpush1.msra.mxu0 0.0
  %5058 = vmatprep.subr.mxu0 0.0
  %5059 = vmatpush1.msra.mxu0 0.0
  %5060 = vmatprep.subr.mxu0 0.0
  %5061 = vmatpush1.msra.mxu0 0.0
  %5062 = vmatprep.subr.mxu0 0.0
  %5063 = vmatpush1.msra.mxu0 0.0
  %5064 = vmatprep.subr.mxu0 0.0
  %5065 = vmatpush1.msra.mxu0 0.0
  %5066 = vmatprep.subr.mxu0 0.0
  %5067 = vmatpush1.msra.mxu0 0.0
  %5068 = vmatprep.subr.mxu0 0.0
  %5069 = vmatpush1.msra.mxu0 0.0
  %5070 = vmatprep.subr.mxu0 0.0
  %5071 = vmatpush1.msra.mxu0 0.0
  %5072 = vmatprep.subr.mxu0 0.0
  %5073 = vmatpush1.msra.mxu0 0.0
  %5074 = vmatprep.subr.mxu0 0.0
  %5075 = vmatpush1.msra.mxu0 0.0
  %5076 = vmatprep.subr.mxu0 0.0
  %5077 = vmatpush1.msra.mxu0 0.0
  %5078 = vmatprep.subr.mxu0 0.0
  %5079 = vmatpush1.msra.mxu0 0.0
  %5080 = vmatprep.subr.mxu0 0.0
  %5081 = vmatpush1.msra.mxu0 0.0
  %5082 = vmatprep.subr.mxu0 0.0
  %5083 = vmatpush1.msra.mxu0 0.0
  %5084 = vmatprep.mubr.f32.mxu0 0.0
  %5085 = vmatmul.mubr.f32.gmra.mrb[0].mxu0 %v5012
  %v5086 = vpop.f32.mrb[0].mxu0
  %v5087 = vadd.f32 0.0, %v5086
  %v5088 = vpop.f32.mrb[0].mxu0
  %v5089 = vadd.f32 0.0, %v5088
  %5090 = vmatprep.mubr.f32.mxu0 0.0
  %5091 = vmatmul.mubr.f32.gmra.mrb[0].mxu0 %v5014
  %v5092 = vpop.f32.mrb[0].mxu0
  %v5093 = vadd.f32 0.0, %v5092
  %v5094 = vpop.f32.mrb[0].mxu0
  %v5095 = vadd.f32 0.0, %v5094
  %5096 = vmatprep.mubr.f32.mxu0 0.0
  %5097 = vmatmul.mubr.f32.gmra.mrb[0].mxu0 %v5016
  %v5098 = vpop.f32.mrb[0].mxu0
  %v5099 = vadd.f32 0.0, %v5098
  %v5100 = vpop.f32.mrb[0].mxu0
  %v5101 = vadd.f32 0.0, %v5100
  %5102 = vmatprep.mubr.f32.mxu0 0.0
  %5103 = vmatmul.mubr.f32.gmra.mrb[0].mxu0 %v5018
  %v5104 = vpop.f32.mrb[0].mxu0
  %v5105 = vadd.f32 0.0, %v5104
  %v5106 = vpop.f32.mrb[0].mxu0
  %v5107 = vadd.f32 0.0, %v5106
  %5108 = vdwg.mxu0
  %5109 = vmatprep.subr.mxu0 %v4979
  %5110 = vmatpush1.msra.mxu0 %v4978
  %5111 = vmatprep.subr.mxu0 %v4983
  %5112 = vmatpush1.msra.mxu0 %v4982
  %5113 = vmatprep.subr.mxu0 %v4987
  %5114 = vmatpush1.msra.mxu0 %v4986
  %5115 = vmatprep.subr.mxu0 %v4991
  %5116 = vmatpush1.msra.mxu0 %v4990
  %5117 = vmatprep.subr.mxu0 0.0
  %5118 = vmatpush1.msra.mxu0 0.0
  %5119 = vmatprep.subr.mxu0 0.0
  %5120 = vmatpush1.msra.mxu0 0.0
  %5121 = vmatprep.subr.mxu0 0.0
  %5122 = vmatpush1.msra.mxu0 0.0
  %5123 = vmatprep.subr.mxu0 0.0
  %5124 = vmatpush1.msra.mxu0 0.0
  %5125 = vmatprep.subr.mxu0 0.0
  %5126 = vmatpush1.msra.mxu0 0.0
  %5127 = vmatprep.subr.mxu0 0.0
  %5128 = vmatpush1.msra.mxu0 0.0
  %5129 = vmatprep.subr.mxu0 0.0
  %5130 = vmatpush1.msra.mxu0 0.0
  %5131 = vmatprep.subr.mxu0 0.0
  %5132 = vmatpush1.msra.mxu0 0.0
  %5133 = vmatprep.subr.mxu0 0.0
  %5134 = vmatpush1.msra.mxu0 0.0
  %5135 = vmatprep.subr.mxu0 0.0
  %5136 = vmatpush1.msra.mxu0 0.0
  %5137 = vmatprep.subr.mxu0 0.0
  %5138 = vmatpush1.msra.mxu0 0.0
  %5139 = vmatprep.subr.mxu0 0.0
  %5140 = vmatpush1.msra.mxu0 0.0
  %5141 = vmatprep.subr.mxu0 0.0
  %5142 = vmatpush1.msra.mxu0 0.0
  %5143 = vmatprep.subr.mxu0 0.0
  %5144 = vmatpush1.msra.mxu0 0.0
  %5145 = vmatprep.subr.mxu0 0.0
  %5146 = vmatpush1.msra.mxu0 0.0
  %5147 = vmatprep.subr.mxu0 0.0
  %5148 = vmatpush1.msra.mxu0 0.0
  %5149 = vmatprep.subr.mxu0 0.0
  %5150 = vmatpush1.msra.mxu0 0.0
  %5151 = vmatprep.subr.mxu0 0.0
  %5152 = vmatpush1.msra.mxu0 0.0
  %5153 = vmatprep.subr.mxu0 0.0
  %5154 = vmatpush1.msra.mxu0 0.0
  %5155 = vmatprep.subr.mxu0 0.0
  %5156 = vmatpush1.msra.mxu0 0.0
  %5157 = vmatprep.subr.mxu0 0.0
  %5158 = vmatpush1.msra.mxu0 0.0
  %5159 = vmatprep.subr.mxu0 0.0
  %5160 = vmatpush1.msra.mxu0 0.0
  %5161 = vmatprep.subr.mxu0 0.0
  %5162 = vmatpush1.msra.mxu0 0.0
  %5163 = vmatprep.subr.mxu0 0.0
  %5164 = vmatpush1.msra.mxu0 0.0
  %5165 = vmatprep.subr.mxu0 0.0
  %5166 = vmatpush1.msra.mxu0 0.0
  %5167 = vmatprep.subr.mxu0 0.0
  %5168 = vmatpush1.msra.mxu0 0.0
  %5169 = vmatprep.subr.mxu0 0.0
  %5170 = vmatpush1.msra.mxu0 0.0
  %5171 = vmatprep.subr.mxu0 0.0
  %5172 = vmatpush1.msra.mxu0 0.0
  %5173 = vmatprep.mubr.f32.mxu0 0.0
  %5174 = vmatmul.mubr.f32.gmra.mrb[0].mxu0 %v5012
  %v5175 = vpop.f32.mrb[0].mxu0
  %v5176 = vadd.f32 0.0, %v5175
  %v5177 = vpop.f32.mrb[0].mxu0
  %v5178 = vadd.f32 0.0, %v5177
  %5179 = vmatprep.mubr.f32.mxu0 0.0
  %5180 = vmatmul.mubr.f32.gmra.mrb[0].mxu0 %v5014
  %v5181 = vpop.f32.mrb[0].mxu0
  %v5182 = vadd.f32 0.0, %v5181
  %v5183 = vpop.f32.mrb[0].mxu0
  %v5184 = vadd.f32 0.0, %v5183
  %5185 = vmatprep.mubr.f32.mxu0 0.0
  %5186 = vmatmul.mubr.f32.gmra.mrb[0].mxu0 %v5016
  %v5187 = vpop.f32.mrb[0].mxu0
  %v5188 = vadd.f32 0.0, %v5187
  %v5189 = vpop.f32.mrb[0].mxu0
  %v5190 = vadd.f32 0.0, %v5189
  %5191 = vmatprep.mubr.f32.mxu0 0.0
  %5192 = vmatmul.mubr.f32.gmra.mrb[0].mxu0 %v5018
  %v5193 = vpop.f32.mrb[0].mxu0
  %v5194 = vadd.f32 0.0, %v5193
  %v5195 = vpop.f32.mrb[0].mxu0
  %v5196 = vadd.f32 0.0, %v5195
  %5197 = vdwg.mxu0
  %5198 = vmatprep.subr.mxu0 0.0
  %5199 = vmatpush1.msra.mxu0 %v4945
  %5200 = vmatprep.subr.mxu0 0.0
  %5201 = vmatpush1.msra.mxu0 %v4955
  %5202 = vmatprep.subr.mxu0 0.0
  %5203 = vmatpush1.msra.mxu0 %v4965
  %5204 = vmatprep.subr.mxu0 0.0
  %5205 = vmatpush1.msra.mxu0 %v4975
  %5206 = vmatprep.subr.mxu0 0.0
  %5207 = vmatpush1.msra.mxu0 0.0
  %5208 = vmatprep.subr.mxu0 0.0
  %5209 = vmatpush1.msra.mxu0 0.0
  %5210 = vmatprep.subr.mxu0 0.0
  %5211 = vmatpush1.msra.mxu0 0.0
  %5212 = vmatprep.subr.mxu0 0.0
  %5213 = vmatpush1.msra.mxu0 0.0
  %5214 = vmatprep.subr.mxu0 0.0
  %5215 = vmatpush1.msra.mxu0 0.0
  %5216 = vmatprep.subr.mxu0 0.0
  %5217 = vmatpush1.msra.mxu0 0.0
  %5218 = vmatprep.subr.mxu0 0.0
  %5219 = vmatpush1.msra.mxu0 0.0
  %5220 = vmatprep.subr.mxu0 0.0
  %5221 = vmatpush1.msra.mxu0 0.0
  %5222 = vmatprep.subr.mxu0 0.0
  %5223 = vmatpush1.msra.mxu0 0.0
  %5224 = vmatprep.subr.mxu0 0.0
  %5225 = vmatpush1.msra.mxu0 0.0
  %5226 = vmatprep.subr.mxu0 0.0
  %5227 = vmatpush1.msra.mxu0 0.0
  %5228 = vmatprep.subr.mxu0 0.0
  %5229 = vmatpush1.msra.mxu0 0.0
  %5230 = vmatprep.subr.mxu0 0.0
  %5231 = vmatpush1.msra.mxu0 0.0
  %5232 = vmatprep.subr.mxu0 0.0
  %5233 = vmatpush1.msra.mxu0 0.0
  %5234 = vmatprep.subr.mxu0 0.0
  %5235 = vmatpush1.msra.mxu0 0.0
  %5236 = vmatprep.subr.mxu0 0.0
  %5237 = vmatpush1.msra.mxu0 0.0
  %5238 = vmatprep.subr.mxu0 0.0
  %5239 = vmatpush1.msra.mxu0 0.0
  %5240 = vmatprep.subr.mxu0 0.0
  %5241 = vmatpush1.msra.mxu0 0.0
  %5242 = vmatprep.subr.mxu0 0.0
  %5243 = vmatpush1.msra.mxu0 0.0
  %5244 = vmatprep.subr.mxu0 0.0
  %5245 = vmatpush1.msra.mxu0 0.0
  %5246 = vmatprep.subr.mxu0 0.0
  %5247 = vmatpush1.msra.mxu0 0.0
  %5248 = vmatprep.subr.mxu0 0.0
  %5249 = vmatpush1.msra.mxu0 0.0
  %5250 = vmatprep.subr.mxu0 0.0
  %5251 = vmatpush1.msra.mxu0 0.0
  %5252 = vmatprep.subr.mxu0 0.0
  %5253 = vmatpush1.msra.mxu0 0.0
  %5254 = vmatprep.subr.mxu0 0.0
  %5255 = vmatpush1.msra.mxu0 0.0
  %5256 = vmatprep.subr.mxu0 0.0
  %5257 = vmatpush1.msra.mxu0 0.0
  %5258 = vmatprep.subr.mxu0 0.0
  %5259 = vmatpush1.msra.mxu0 0.0
  %5260 = vmatprep.subr.mxu0 0.0
  %5261 = vmatpush1.msra.mxu0 0.0
  %5262 = vmatprep.mubr.f32.mxu0 0.0
  %5263 = vmatmul.mubr.f32.gmra.mrb[0].mxu0 %v5012
  %v5264 = vpop.f32.mrb[0].mxu0
  %v5265 = vadd.f32 0.0, %v5264
  %v5266 = vpop.f32.mrb[0].mxu0
  %5267 = vmatprep.mubr.f32.mxu0 0.0
  %5268 = vmatmul.mubr.f32.gmra.mrb[0].mxu0 %v5014
  %v5269 = vpop.f32.mrb[0].mxu0
  %v5270 = vadd.f32 0.0, %v5269
  %v5271 = vpop.f32.mrb[0].mxu0
  %5272 = vmatprep.mubr.f32.mxu0 0.0
  %5273 = vmatmul.mubr.f32.gmra.mrb[0].mxu0 %v5016
  %v5274 = vpop.f32.mrb[0].mxu0
  %v5275 = vadd.f32 0.0, %v5274
  %v5276 = vpop.f32.mrb[0].mxu0
  %5277 = vmatprep.mubr.f32.mxu0 0.0
  %5278 = vmatmul.mubr.f32.gmra.mrb[0].mxu0 %v5018
  %v5279 = vpop.f32.mrb[0].mxu0
  %v5280 = vadd.f32 0.0, %v5279
  %v5281 = vpop.f32.mrb[0].mxu0
  %5282 = vdwg.mxu0
  %v5283 = vadd.f32 %v4908, %v5087
  %v5284 = vadd.f32 %v4909, %v5089
  %v5285 = vadd.f32 %v4910, %v5176
  %v5286 = vadd.f32 %v4911, %v5178
  %v5287 = vadd.f32 %v4912, %v5265
  %v5288 = vadd.f32 %v4913, %v5093
  %v5289 = vadd.f32 %v4914, %v5095
  %v5290 = vadd.f32 %v4915, %v5182
  %v5291 = vadd.f32 %v4916, %v5184
  %v5292 = vadd.f32 %v4917, %v5270
  %v5293 = vadd.f32 %v4918, %v5099
  %v5294 = vadd.f32 %v4919, %v5101
  %v5295 = vadd.f32 %v4920, %v5188
  %v5296 = vadd.f32 %v4921, %v5190
  %v5297 = vadd.f32 %v4922, %v5275
  %v5298 = vadd.f32 %v4923, %v5105
  %v5299 = vadd.f32 %v4924, %v5107
  %v5300 = vadd.f32 %v4925, %v5194
  %v5301 = vadd.f32 %v4926, %v5196
  %v5302 = vadd.f32 %v4927, %v5280
  %v5303 = vld [vmem:[#allocation2] sm:$0xff]
  %v5304 = vld [vmem:[#allocation2 + $0x8] sm:$0xff]
  %v5305 = vld [vmem:[#allocation2 + $0x10] sm:$0xff]
  %v5306 = vld [vmem:[#allocation2 + $0x18] sm:$0xff]
  %v5307 = vld [vmem:[#allocation2 + $0x20] sm:$0xff]
  %v5308 = vld [vmem:[#allocation2 + $0x28] sm:$0xff]
  %v5309 = vld [vmem:[#allocation2 + $0x30] sm:$0xff]
  %v5310 = vld [vmem:[#allocation2 + $0x38] sm:$0xff]
  %v5311 = vld [vmem:[#allocation2 + $0x40] sm:$0xff]
  %v5312 = vld [vmem:[#allocation2 + $0x48] sm:$0xff]
  %v5313 = vld [vmem:[#allocation2 + $0x50] sm:$0xff]
  %v5314 = vld [vmem:[#allocation2 + $0x58] sm:$0xff]
  %v5315 = vld [vmem:[#allocation2 + $0x60] sm:$0xff]
  %v5316 = vld [vmem:[#allocation2 + $0x68] sm:$0xff]
  %v5317 = vld [vmem:[#allocation2 + $0x70] sm:$0xff]
  %v5318 = vld [vmem:[#allocation2 + $0x78] sm:$0xff]
  %v5319 = vld [vmem:[#allocation2 + $0x80] sm:$0xff]
  %v5320 = vld [vmem:[#allocation2 + $0x88] sm:$0xff]
  %v5321 = vld [vmem:[#allocation2 + $0x90] sm:$0xff]
  %v5322 = vld [vmem:[#allocation2 + $0x98] sm:$0xff]
  %v5323 = vld [vmem:[#allocation2 + $0xa0] sm:$0xff]
  %v5324 = vld [vmem:[#allocation2 + $0xa8] sm:$0xff]
  %v5325 = vld [vmem:[#allocation2 + $0xb0] sm:$0xff]
  %v5326 = vld [vmem:[#allocation2 + $0xb8] sm:$0xff]
  %5327 = vrot.lane.b32.xlu0 %v4553, 64
  %v5328 = vpop.permute.xlu0 %5327
  %5329 = vrot.lane.b32.xlu0 %v4554, 64
  %v5330 = vpop.permute.xlu0 %5329
  %5331 = vrot.lane.b32.xlu0 %v4555, 64
  %v5332 = vpop.permute.xlu0 %5331
  %5333 = vrot.lane.b32.xlu0 %v4556, 64
  %v5334 = vpop.permute.xlu0 %5333
  %5359 = vrot.lane.b32.xlu0 %v5303, 92
  %v5360 = vpop.permute.xlu0 %5359
  %5361 = vrot.lane.b32.xlu0 %v5304, 92
  %v5362 = vpop.permute.xlu0 %5361
  %5363 = vrot.lane.b32.xlu0 %v5305, 92
  %v5364 = vpop.permute.xlu0 %5363
  %5365 = vrot.lane.b32.xlu0 %v5306, 92
  %v5366 = vpop.permute.xlu0 %5365
  %5367 = vrot.lane.b32.xlu0 %v5307, 92
  %v5368 = vpop.permute.xlu0 %5367
  %5369 = vrot.lane.b32.xlu0 %v5308, 92
  %v5370 = vpop.permute.xlu0 %5369
  %5371 = vrot.lane.b32.xlu0 %v5309, 92
  %v5372 = vpop.permute.xlu0 %5371
  %5373 = vrot.lane.b32.xlu0 %v5310, 92
  %v5374 = vpop.permute.xlu0 %5373
  %5375 = vrot.lane.b32.xlu0 %v5311, 92
  %v5376 = vpop.permute.xlu0 %5375
  %5377 = vrot.lane.b32.xlu0 %v5312, 92
  %v5378 = vpop.permute.xlu0 %5377
  %5379 = vrot.lane.b32.xlu0 %v5313, 92
  %v5380 = vpop.permute.xlu0 %5379
  %5381 = vrot.lane.b32.xlu0 %v5314, 92
  %v5382 = vpop.permute.xlu0 %5381
  %5383 = vrot.lane.b32.xlu0 %v5315, 92
  %v5384 = vpop.permute.xlu0 %5383
  %5385 = vrot.lane.b32.xlu0 %v5316, 92
  %v5386 = vpop.permute.xlu0 %5385
  %5387 = vrot.lane.b32.xlu0 %v5317, 92
  %v5388 = vpop.permute.xlu0 %5387
  %5389 = vrot.lane.b32.xlu0 %v5318, 92
  %v5390 = vpop.permute.xlu0 %5389
  %5391 = vrot.lane.b32.xlu0 %v5319, 92
  %v5392 = vpop.permute.xlu0 %5391
  %5393 = vrot.lane.b32.xlu0 %v5320, 92
  %v5394 = vpop.permute.xlu0 %5393
  %5395 = vrot.lane.b32.xlu0 %v5321, 92
  %v5396 = vpop.permute.xlu0 %5395
  %5397 = vrot.lane.b32.xlu0 %v5322, 92
  %v5398 = vpop.permute.xlu0 %5397
  %5399 = vrot.lane.b32.xlu0 %v5323, 92
  %v5400 = vpop.permute.xlu0 %5399
  %5401 = vrot.lane.b32.xlu0 %v5324, 92
  %v5402 = vpop.permute.xlu0 %5401
  %5403 = vrot.lane.b32.xlu0 %v5325, 92
  %v5404 = vpop.permute.xlu0 %5403
  %5405 = vrot.lane.b32.xlu0 %v5326, 92
  %v5406 = vpop.permute.xlu0 %5405
  %v5407 = vsel %vm1959, %v5360, %v5362
  %v5408 = vsel %vm1959, %v5362, %v5364
  %v5409 = vsel %vm1959, %v5364, %v5366
  %v5410 = vsel %vm1959, %v5366, %v5368
  %v5411 = vsel %vm1959, %v5368, %v5370
  %v5412 = vsel %vm1959, %v5372, %v5374
  %v5413 = vsel %vm1959, %v5374, %v5376
  %v5414 = vsel %vm1959, %v5376, %v5378
  %v5415 = vsel %vm1959, %v5378, %v5380
  %v5416 = vsel %vm1959, %v5380, %v5382
  %v5417 = vsel %vm1959, %v5384, %v5386
  %v5418 = vsel %vm1959, %v5386, %v5388
  %v5419 = vsel %vm1959, %v5388, %v5390
  %v5420 = vsel %vm1959, %v5390, %v5392
  %v5421 = vsel %vm1959, %v5392, %v5394
  %v5422 = vsel %vm1959, %v5396, %v5398
  %v5423 = vsel %vm1959, %v5398, %v5400
  %v5424 = vsel %vm1959, %v5400, %v5402
  %v5425 = vsel %vm1959, %v5402, %v5404
  %v5426 = vsel %vm1959, %v5404, %v5406
  %v5447 = vsel %vm3260, %v5328, 0
  %v5449 = vsel %vm3260, %v5330, 0
  %v5451 = vsel %vm3260, %v5332, 0
  %v5453 = vsel %vm3260, %v5334, 0
  %5455 = vmatprep.subr.mxu0 %v5408
  %5456 = vmatpush1.msra.mxu0 %v5407
  %5457 = vmatprep.subr.mxu0 %v5413
  %5458 = vmatpush1.msra.mxu0 %v5412
  %5459 = vmatprep.subr.mxu0 %v5418
  %5460 = vmatpush1.msra.mxu0 %v5417
  %5461 = vmatprep.subr.mxu0 %v5423
  %5462 = vmatpush1.msra.mxu0 %v5422
  %5463 = vmatprep.subr.mxu0 0.0
  %5464 = vmatpush1.msra.mxu0 0.0
  %5465 = vmatprep.subr.mxu0 0.0
  %5466 = vmatpush1.msra.mxu0 0.0
  %5467 = vmatprep.subr.mxu0 0.0
  %5468 = vmatpush1.msra.mxu0 0.0
  %5469 = vmatprep.subr.mxu0 0.0
  %5470 = vmatpush1.msra.mxu0 0.0
  %5471 = vmatprep.subr.mxu0 0.0
  %5472 = vmatpush1.msra.mxu0 0.0
  %5473 = vmatprep.subr.mxu0 0.0
  %5474 = vmatpush1.msra.mxu0 0.0
  %5475 = vmatprep.subr.mxu0 0.0
  %5476 = vmatpush1.msra.mxu0 0.0
  %5477 = vmatprep.subr.mxu0 0.0
  %5478 = vmatpush1.msra.mxu0 0.0
  %5479 = vmatprep.subr.mxu0 0.0
  %5480 = vmatpush1.msra.mxu0 0.0
  %5481 = vmatprep.subr.mxu0 0.0
  %5482 = vmatpush1.msra.mxu0 0.0
  %5483 = vmatprep.subr.mxu0 0.0
  %5484 = vmatpush1.msra.mxu0 0.0
  %5485 = vmatprep.subr.mxu0 0.0
  %5486 = vmatpush1.msra.mxu0 0.0
  %5487 = vmatprep.subr.mxu0 0.0
  %5488 = vmatpush1.msra.mxu0 0.0
  %5489 = vmatprep.subr.mxu0 0.0
  %5490 = vmatpush1.msra.mxu0 0.0
  %5491 = vmatprep.subr.mxu0 0.0
  %5492 = vmatpush1.msra.mxu0 0.0
  %5493 = vmatprep.subr.mxu0 0.0
  %5494 = vmatpush1.msra.mxu0 0.0
  %5495 = vmatprep.subr.mxu0 0.0
  %5496 = vmatpush1.msra.mxu0 0.0
  %5497 = vmatprep.subr.mxu0 0.0
  %5498 = vmatpush1.msra.mxu0 0.0
  %5499 = vmatprep.subr.mxu0 0.0
  %5500 = vmatpush1.msra.mxu0 0.0
  %5501 = vmatprep.subr.mxu0 0.0
  %5502 = vmatpush1.msra.mxu0 0.0
  %5503 = vmatprep.subr.mxu0 0.0
  %5504 = vmatpush1.msra.mxu0 0.0
  %5505 = vmatprep.subr.mxu0 0.0
  %5506 = vmatpush1.msra.mxu0 0.0
  %5507 = vmatprep.subr.mxu0 0.0
  %5508 = vmatpush1.msra.mxu0 0.0
  %5509 = vmatprep.subr.mxu0 0.0
  %5510 = vmatpush1.msra.mxu0 0.0
  %5511 = vmatprep.subr.mxu0 0.0
  %5512 = vmatpush1.msra.mxu0 0.0
  %5513 = vmatprep.subr.mxu0 0.0
  %5514 = vmatpush1.msra.mxu0 0.0
  %5515 = vmatprep.subr.mxu0 0.0
  %5516 = vmatpush1.msra.mxu0 0.0
  %5517 = vmatprep.subr.mxu0 0.0
  %5518 = vmatpush1.msra.mxu0 0.0
  %5519 = vmatprep.mubr.f32.mxu0 0.0
  %5520 = vmatmul.mubr.f32.gmra.mrb[0].mxu0 %v5447
  %v5521 = vpop.f32.mrb[0].mxu0
  %v5522 = vadd.f32 0.0, %v5521
  %v5523 = vpop.f32.mrb[0].mxu0
  %v5524 = vadd.f32 0.0, %v5523
  %5525 = vmatprep.mubr.f32.mxu0 0.0
  %5526 = vmatmul.mubr.f32.gmra.mrb[0].mxu0 %v5449
  %v5527 = vpop.f32.mrb[0].mxu0
  %v5528 = vadd.f32 0.0, %v5527
  %v5529 = vpop.f32.mrb[0].mxu0
  %v5530 = vadd.f32 0.0, %v5529
  %5531 = vmatprep.mubr.f32.mxu0 0.0
  %5532 = vmatmul.mubr.f32.gmra.mrb[0].mxu0 %v5451
  %v5533 = vpop.f32.mrb[0].mxu0
  %v5534 = vadd.f32 0.0, %v5533
  %v5535 = vpop.f32.mrb[0].mxu0
  %v5536 = vadd.f32 0.0, %v5535
  %5537 = vmatprep.mubr.f32.mxu0 0.0
  %5538 = vmatmul.mubr.f32.gmra.mrb[0].mxu0 %v5453
  %v5539 = vpop.f32.mrb[0].mxu0
  %v5540 = vadd.f32 0.0, %v5539
  %v5541 = vpop.f32.mrb[0].mxu0
  %v5542 = vadd.f32 0.0, %v5541
  %5543 = vdwg.mxu0
  %5544 = vmatprep.subr.mxu0 %v5410
  %5545 = vmatpush1.msra.mxu0 %v5409
  %5546 = vmatprep.subr.mxu0 %v5415
  %5547 = vmatpush1.msra.mxu0 %v5414
  %5548 = vmatprep.subr.mxu0 %v5420
  %5549 = vmatpush1.msra.mxu0 %v5419
  %5550 = vmatprep.subr.mxu0 %v5425
  %5551 = vmatpush1.msra.mxu0 %v5424
  %5552 = vmatprep.subr.mxu0 0.0
  %5553 = vmatpush1.msra.mxu0 0.0
  %5554 = vmatprep.subr.mxu0 0.0
  %5555 = vmatpush1.msra.mxu0 0.0
  %5556 = vmatprep.subr.mxu0 0.0
  %5557 = vmatpush1.msra.mxu0 0.0
  %5558 = vmatprep.subr.mxu0 0.0
  %5559 = vmatpush1.msra.mxu0 0.0
  %5560 = vmatprep.subr.mxu0 0.0
  %5561 = vmatpush1.msra.mxu0 0.0
  %5562 = vmatprep.subr.mxu0 0.0
  %5563 = vmatpush1.msra.mxu0 0.0
  %5564 = vmatprep.subr.mxu0 0.0
  %5565 = vmatpush1.msra.mxu0 0.0
  %5566 = vmatprep.subr.mxu0 0.0
  %5567 = vmatpush1.msra.mxu0 0.0
  %5568 = vmatprep.subr.mxu0 0.0
  %5569 = vmatpush1.msra.mxu0 0.0
  %5570 = vmatprep.subr.mxu0 0.0
  %5571 = vmatpush1.msra.mxu0 0.0
  %5572 = vmatprep.subr.mxu0 0.0
  %5573 = vmatpush1.msra.mxu0 0.0
  %5574 = vmatprep.subr.mxu0 0.0
  %5575 = vmatpush1.msra.mxu0 0.0
  %5576 = vmatprep.subr.mxu0 0.0
  %5577 = vmatpush1.msra.mxu0 0.0
  %5578 = vmatprep.subr.mxu0 0.0
  %5579 = vmatpush1.msra.mxu0 0.0
  %5580 = vmatprep.subr.mxu0 0.0
  %5581 = vmatpush1.msra.mxu0 0.0
  %5582 = vmatprep.subr.mxu0 0.0
  %5583 = vmatpush1.msra.mxu0 0.0
  %5584 = vmatprep.subr.mxu0 0.0
  %5585 = vmatpush1.msra.mxu0 0.0
  %5586 = vmatprep.subr.mxu0 0.0
  %5587 = vmatpush1.msra.mxu0 0.0
  %5588 = vmatprep.subr.mxu0 0.0
  %5589 = vmatpush1.msra.mxu0 0.0
  %5590 = vmatprep.subr.mxu0 0.0
  %5591 = vmatpush1.msra.mxu0 0.0
  %5592 = vmatprep.subr.mxu0 0.0
  %5593 = vmatpush1.msra.mxu0 0.0
  %5594 = vmatprep.subr.mxu0 0.0
  %5595 = vmatpush1.msra.mxu0 0.0
  %5596 = vmatprep.subr.mxu0 0.0
  %5597 = vmatpush1.msra.mxu0 0.0
  %5598 = vmatprep.subr.mxu0 0.0
  %5599 = vmatpush1.msra.mxu0 0.0
  %5600 = vmatprep.subr.mxu0 0.0
  %5601 = vmatpush1.msra.mxu0 0.0
  %5602 = vmatprep.subr.mxu0 0.0
  %5603 = vmatpush1.msra.mxu0 0.0
  %5604 = vmatprep.subr.mxu0 0.0
  %5605 = vmatpush1.msra.mxu0 0.0
  %5606 = vmatprep.subr.mxu0 0.0
  %5607 = vmatpush1.msra.mxu0 0.0
  %5608 = vmatprep.mubr.f32.mxu0 0.0
  %5609 = vmatmul.mubr.f32.gmra.mrb[0].mxu0 %v5447
  %v5610 = vpop.f32.mrb[0].mxu0
  %v5611 = vadd.f32 0.0, %v5610
  %v5612 = vpop.f32.mrb[0].mxu0
  %v5613 = vadd.f32 0.0, %v5612
  %5614 = vmatprep.mubr.f32.mxu0 0.0
  %5615 = vmatmul.mubr.f32.gmra.mrb[0].mxu0 %v5449
  %v5616 = vpop.f32.mrb[0].mxu0
  %v5617 = vadd.f32 0.0, %v5616
  %v5618 = vpop.f32.mrb[0].mxu0
  %v5619 = vadd.f32 0.0, %v5618
  %5620 = vmatprep.mubr.f32.mxu0 0.0
  %5621 = vmatmul.mubr.f32.gmra.mrb[0].mxu0 %v5451
  %v5622 = vpop.f32.mrb[0].mxu0
  %v5623 = vadd.f32 0.0, %v5622
  %v5624 = vpop.f32.mrb[0].mxu0
  %v5625 = vadd.f32 0.0, %v5624
  %5626 = vmatprep.mubr.f32.mxu0 0.0
  %5627 = vmatmul.mubr.f32.gmra.mrb[0].mxu0 %v5453
  %v5628 = vpop.f32.mrb[0].mxu0
  %v5629 = vadd.f32 0.0, %v5628
  %v5630 = vpop.f32.mrb[0].mxu0
  %v5631 = vadd.f32 0.0, %v5630
  %5632 = vdwg.mxu0
  %5633 = vmatprep.subr.mxu0 0.0
  %5634 = vmatpush1.msra.mxu0 %v5411
  %5635 = vmatprep.subr.mxu0 0.0
  %5636 = vmatpush1.msra.mxu0 %v5416
  %5637 = vmatprep.subr.mxu0 0.0
  %5638 = vmatpush1.msra.mxu0 %v5421
  %5639 = vmatprep.subr.mxu0 0.0
  %5640 = vmatpush1.msra.mxu0 %v5426
  %5641 = vmatprep.subr.mxu0 0.0
  %5642 = vmatpush1.msra.mxu0 0.0
  %5643 = vmatprep.subr.mxu0 0.0
  %5644 = vmatpush1.msra.mxu0 0.0
  %5645 = vmatprep.subr.mxu0 0.0
  %5646 = vmatpush1.msra.mxu0 0.0
  %5647 = vmatprep.subr.mxu0 0.0
  %5648 = vmatpush1.msra.mxu0 0.0
  %5649 = vmatprep.subr.mxu0 0.0
  %5650 = vmatpush1.msra.mxu0 0.0
  %5651 = vmatprep.subr.mxu0 0.0
  %5652 = vmatpush1.msra.mxu0 0.0
  %5653 = vmatprep.subr.mxu0 0.0
  %5654 = vmatpush1.msra.mxu0 0.0
  %5655 = vmatprep.subr.mxu0 0.0
  %5656 = vmatpush1.msra.mxu0 0.0
  %5657 = vmatprep.subr.mxu0 0.0
  %5658 = vmatpush1.msra.mxu0 0.0
  %5659 = vmatprep.subr.mxu0 0.0
  %5660 = vmatpush1.msra.mxu0 0.0
  %5661 = vmatprep.subr.mxu0 0.0
  %5662 = vmatpush1.msra.mxu0 0.0
  %5663 = vmatprep.subr.mxu0 0.0
  %5664 = vmatpush1.msra.mxu0 0.0
  %5665 = vmatprep.subr.mxu0 0.0
  %5666 = vmatpush1.msra.mxu0 0.0
  %5667 = vmatprep.subr.mxu0 0.0
  %5668 = vmatpush1.msra.mxu0 0.0
  %5669 = vmatprep.subr.mxu0 0.0
  %5670 = vmatpush1.msra.mxu0 0.0
  %5671 = vmatprep.subr.mxu0 0.0
  %5672 = vmatpush1.msra.mxu0 0.0
  %5673 = vmatprep.subr.mxu0 0.0
  %5674 = vmatpush1.msra.mxu0 0.0
  %5675 = vmatprep.subr.mxu0 0.0
  %5676 = vmatpush1.msra.mxu0 0.0
  %5677 = vmatprep.subr.mxu0 0.0
  %5678 = vmatpush1.msra.mxu0 0.0
  %5679 = vmatprep.subr.mxu0 0.0
  %5680 = vmatpush1.msra.mxu0 0.0
  %5681 = vmatprep.subr.mxu0 0.0
  %5682 = vmatpush1.msra.mxu0 0.0
  %5683 = vmatprep.subr.mxu0 0.0
  %5684 = vmatpush1.msra.mxu0 0.0
  %5685 = vmatprep.subr.mxu0 0.0
  %5686 = vmatpush1.msra.mxu0 0.0
  %5687 = vmatprep.subr.mxu0 0.0
  %5688 = vmatpush1.msra.mxu0 0.0
  %5689 = vmatprep.subr.mxu0 0.0
  %5690 = vmatpush1.msra.mxu0 0.0
  %5691 = vmatprep.subr.mxu0 0.0
  %5692 = vmatpush1.msra.mxu0 0.0
  %5693 = vmatprep.subr.mxu0 0.0
  %5694 = vmatpush1.msra.mxu0 0.0
  %5695 = vmatprep.subr.mxu0 0.0
  %5696 = vmatpush1.msra.mxu0 0.0
  %5697 = vmatprep.mubr.f32.mxu0 0.0
  %5698 = vmatmul.mubr.f32.gmra.mrb[0].mxu0 %v5447
  %v5699 = vpop.f32.mrb[0].mxu0
  %v5700 = vadd.f32 0.0, %v5699
  %v5701 = vpop.f32.mrb[0].mxu0
  %5702 = vmatprep.mubr.f32.mxu0 0.0
  %5703 = vmatmul.mubr.f32.gmra.mrb[0].mxu0 %v5449
  %v5704 = vpop.f32.mrb[0].mxu0
  %v5705 = vadd.f32 0.0, %v5704
  %v5706 = vpop.f32.mrb[0].mxu0
  %5707 = vmatprep.mubr.f32.mxu0 0.0
  %5708 = vmatmul.mubr.f32.gmra.mrb[0].mxu0 %v5451
  %v5709 = vpop.f32.mrb[0].mxu0
  %v5710 = vadd.f32 0.0, %v5709
  %v5711 = vpop.f32.mrb[0].mxu0
  %5712 = vmatprep.mubr.f32.mxu0 0.0
  %5713 = vmatmul.mubr.f32.gmra.mrb[0].mxu0 %v5453
  %v5714 = vpop.f32.mrb[0].mxu0
  %v5715 = vadd.f32 0.0, %v5714
  %v5716 = vpop.f32.mrb[0].mxu0
  %5717 = vdwg.mxu0
  %v5718 = vadd.f32 %v5283, %v5522
  %v5719 = vadd.f32 %v5284, %v5524
  %v5720 = vadd.f32 %v5285, %v5611
  %v5721 = vadd.f32 %v5286, %v5613
  %v5722 = vadd.f32 %v5287, %v5700
  %v5723 = vadd.f32 %v5288, %v5528
  %v5724 = vadd.f32 %v5289, %v5530
  %v5725 = vadd.f32 %v5290, %v5617
  %v5726 = vadd.f32 %v5291, %v5619
  %v5727 = vadd.f32 %v5292, %v5705
  %v5728 = vadd.f32 %v5293, %v5534
  %v5729 = vadd.f32 %v5294, %v5536
  %v5730 = vadd.f32 %v5295, %v5623
  %v5731 = vadd.f32 %v5296, %v5625
  %v5732 = vadd.f32 %v5297, %v5710
  %v5733 = vadd.f32 %v5298, %v5540
  %v5734 = vadd.f32 %v5299, %v5542
  %v5735 = vadd.f32 %v5300, %v5629
  %v5736 = vadd.f32 %v5301, %v5631
  %v5737 = vadd.f32 %v5302, %v5715
  %5738 = vrot.lane.b32.xlu0 %v4553, 32
  %v5739 = vpop.permute.xlu0 %5738
  %5740 = vrot.lane.b32.xlu0 %v4554, 32
  %v5741 = vpop.permute.xlu0 %5740
  %5742 = vrot.lane.b32.xlu0 %v4555, 32
  %v5743 = vpop.permute.xlu0 %5742
  %5744 = vrot.lane.b32.xlu0 %v4556, 32
  %v5745 = vpop.permute.xlu0 %5744
  %5746 = vrot.lane.b32.xlu0 %v5303, 91
  %v5747 = vpop.permute.xlu0 %5746
  %5748 = vrot.lane.b32.xlu0 %v5304, 91
  %v5749 = vpop.permute.xlu0 %5748
  %5750 = vrot.lane.b32.xlu0 %v5305, 91
  %v5751 = vpop.permute.xlu0 %5750
  %5752 = vrot.lane.b32.xlu0 %v5306, 91
  %v5753 = vpop.permute.xlu0 %5752
  %5754 = vrot.lane.b32.xlu0 %v5307, 91
  %v5755 = vpop.permute.xlu0 %5754
  %5756 = vrot.lane.b32.xlu0 %v5308, 91
  %v5757 = vpop.permute.xlu0 %5756
  %5758 = vrot.lane.b32.xlu0 %v5309, 91
  %v5759 = vpop.permute.xlu0 %5758
  %5760 = vrot.lane.b32.xlu0 %v5310, 91
  %v5761 = vpop.permute.xlu0 %5760
  %5762 = vrot.lane.b32.xlu0 %v5311, 91
  %v5763 = vpop.permute.xlu0 %5762
  %5764 = vrot.lane.b32.xlu0 %v5312, 91
  %v5765 = vpop.permute.xlu0 %5764
  %5766 = vrot.lane.b32.xlu0 %v5313, 91
  %v5767 = vpop.permute.xlu0 %5766
  %5768 = vrot.lane.b32.xlu0 %v5314, 91
  %v5769 = vpop.permute.xlu0 %5768
  %5770 = vrot.lane.b32.xlu0 %v5315, 91
  %v5771 = vpop.permute.xlu0 %5770
  %5772 = vrot.lane.b32.xlu0 %v5316, 91
  %v5773 = vpop.permute.xlu0 %5772
  %5774 = vrot.lane.b32.xlu0 %v5317, 91
  %v5775 = vpop.permute.xlu0 %5774
  %5776 = vrot.lane.b32.xlu0 %v5318, 91
  %v5777 = vpop.permute.xlu0 %5776
  %5778 = vrot.lane.b32.xlu0 %v5319, 91
  %v5779 = vpop.permute.xlu0 %5778
  %5780 = vrot.lane.b32.xlu0 %v5320, 91
  %v5781 = vpop.permute.xlu0 %5780
  %5782 = vrot.lane.b32.xlu0 %v5321, 91
  %v5783 = vpop.permute.xlu0 %5782
  %5784 = vrot.lane.b32.xlu0 %v5322, 91
  %v5785 = vpop.permute.xlu0 %5784
  %5786 = vrot.lane.b32.xlu0 %v5323, 91
  %v5787 = vpop.permute.xlu0 %5786
  %5788 = vrot.lane.b32.xlu0 %v5324, 91
  %v5789 = vpop.permute.xlu0 %5788
  %5790 = vrot.lane.b32.xlu0 %v5325, 91
  %v5791 = vpop.permute.xlu0 %5790
  %5792 = vrot.lane.b32.xlu0 %v5326, 91
  %v5793 = vpop.permute.xlu0 %5792
  %v5794 = vsel %vm2281, %v5747, %v5749
  %v5795 = vsel %vm2281, %v5749, %v5751
  %v5796 = vsel %vm2281, %v5751, %v5753
  %v5797 = vsel %vm2281, %v5753, %v5755
  %v5798 = vsel %vm2281, %v5755, %v5757
  %v5799 = vsel %vm2281, %v5759, %v5761
  %v5800 = vsel %vm2281, %v5761, %v5763
  %v5801 = vsel %vm2281, %v5763, %v5765
  %v5802 = vsel %vm2281, %v5765, %v5767
  %v5803 = vsel %vm2281, %v5767, %v5769
  %v5804 = vsel %vm2281, %v5771, %v5773
  %v5805 = vsel %vm2281, %v5773, %v5775
  %v5806 = vsel %vm2281, %v5775, %v5777
  %v5807 = vsel %vm2281, %v5777, %v5779
  %v5808 = vsel %vm2281, %v5779, %v5781
  %v5809 = vsel %vm2281, %v5783, %v5785
  %v5810 = vsel %vm2281, %v5785, %v5787
  %v5811 = vsel %vm2281, %v5787, %v5789
  %v5812 = vsel %vm2281, %v5789, %v5791
  %v5813 = vsel %vm2281, %v5791, %v5793
  %v5834 = vsel %vm3260, %v5739, 0
  %v5836 = vsel %vm3260, %v5741, 0
  %v5838 = vsel %vm3260, %v5743, 0
  %v5840 = vsel %vm3260, %v5745, 0
  %5842 = vmatprep.subr.mxu0 %v5795
  %5843 = vmatpush1.msra.mxu0 %v5794
  %5844 = vmatprep.subr.mxu0 %v5800
  %5845 = vmatpush1.msra.mxu0 %v5799
  %5846 = vmatprep.subr.mxu0 %v5805
  %5847 = vmatpush1.msra.mxu0 %v5804
  %5848 = vmatprep.subr.mxu0 %v5810
  %5849 = vmatpush1.msra.mxu0 %v5809
  %5850 = vmatprep.subr.mxu0 0.0
  %5851 = vmatpush1.msra.mxu0 0.0
  %5852 = vmatprep.subr.mxu0 0.0
  %5853 = vmatpush1.msra.mxu0 0.0
  %5854 = vmatprep.subr.mxu0 0.0
  %5855 = vmatpush1.msra.mxu0 0.0
  %5856 = vmatprep.subr.mxu0 0.0
  %5857 = vmatpush1.msra.mxu0 0.0
  %5858 = vmatprep.subr.mxu0 0.0
  %5859 = vmatpush1.msra.mxu0 0.0
  %5860 = vmatprep.subr.mxu0 0.0
  %5861 = vmatpush1.msra.mxu0 0.0
  %5862 = vmatprep.subr.mxu0 0.0
  %5863 = vmatpush1.msra.mxu0 0.0
  %5864 = vmatprep.subr.mxu0 0.0
  %5865 = vmatpush1.msra.mxu0 0.0
  %5866 = vmatprep.subr.mxu0 0.0
  %5867 = vmatpush1.msra.mxu0 0.0
  %5868 = vmatprep.subr.mxu0 0.0
  %5869 = vmatpush1.msra.mxu0 0.0
  %5870 = vmatprep.subr.mxu0 0.0
  %5871 = vmatpush1.msra.mxu0 0.0
  %5872 = vmatprep.subr.mxu0 0.0
  %5873 = vmatpush1.msra.mxu0 0.0
  %5874 = vmatprep.subr.mxu0 0.0
  %5875 = vmatpush1.msra.mxu0 0.0
  %5876 = vmatprep.subr.mxu0 0.0
  %5877 = vmatpush1.msra.mxu0 0.0
  %5878 = vmatprep.subr.mxu0 0.0
  %5879 = vmatpush1.msra.mxu0 0.0
  %5880 = vmatprep.subr.mxu0 0.0
  %5881 = vmatpush1.msra.mxu0 0.0
  %5882 = vmatprep.subr.mxu0 0.0
  %5883 = vmatpush1.msra.mxu0 0.0
  %5884 = vmatprep.subr.mxu0 0.0
  %5885 = vmatpush1.msra.mxu0 0.0
  %5886 = vmatprep.subr.mxu0 0.0
  %5887 = vmatpush1.msra.mxu0 0.0
  %5888 = vmatprep.subr.mxu0 0.0
  %5889 = vmatpush1.msra.mxu0 0.0
  %5890 = vmatprep.subr.mxu0 0.0
  %5891 = vmatpush1.msra.mxu0 0.0
  %5892 = vmatprep.subr.mxu0 0.0
  %5893 = vmatpush1.msra.mxu0 0.0
  %5894 = vmatprep.subr.mxu0 0.0
  %5895 = vmatpush1.msra.mxu0 0.0
  %5896 = vmatprep.subr.mxu0 0.0
  %5897 = vmatpush1.msra.mxu0 0.0
  %5898 = vmatprep.subr.mxu0 0.0
  %5899 = vmatpush1.msra.mxu0 0.0
  %5900 = vmatprep.subr.mxu0 0.0
  %5901 = vmatpush1.msra.mxu0 0.0
  %5902 = vmatprep.subr.mxu0 0.0
  %5903 = vmatpush1.msra.mxu0 0.0
  %5904 = vmatprep.subr.mxu0 0.0
  %5905 = vmatpush1.msra.mxu0 0.0
  %5906 = vmatprep.mubr.f32.mxu0 0.0
  %5907 = vmatmul.mubr.f32.gmra.mrb[0].mxu0 %v5834
  %v5908 = vpop.f32.mrb[0].mxu0
  %v5909 = vadd.f32 0.0, %v5908
  %v5910 = vpop.f32.mrb[0].mxu0
  %v5911 = vadd.f32 0.0, %v5910
  %5912 = vmatprep.mubr.f32.mxu0 0.0
  %5913 = vmatmul.mubr.f32.gmra.mrb[0].mxu0 %v5836
  %v5914 = vpop.f32.mrb[0].mxu0
  %v5915 = vadd.f32 0.0, %v5914
  %v5916 = vpop.f32.mrb[0].mxu0
  %v5917 = vadd.f32 0.0, %v5916
  %5918 = vmatprep.mubr.f32.mxu0 0.0
  %5919 = vmatmul.mubr.f32.gmra.mrb[0].mxu0 %v5838
  %v5920 = vpop.f32.mrb[0].mxu0
  %v5921 = vadd.f32 0.0, %v5920
  %v5922 = vpop.f32.mrb[0].mxu0
  %v5923 = vadd.f32 0.0, %v5922
  %5924 = vmatprep.mubr.f32.mxu0 0.0
  %5925 = vmatmul.mubr.f32.gmra.mrb[0].mxu0 %v5840
  %v5926 = vpop.f32.mrb[0].mxu0
  %v5927 = vadd.f32 0.0, %v5926
  %v5928 = vpop.f32.mrb[0].mxu0
  %v5929 = vadd.f32 0.0, %v5928
  %5930 = vdwg.mxu0
  %5931 = vmatprep.subr.mxu0 %v5797
  %5932 = vmatpush1.msra.mxu0 %v5796
  %5933 = vmatprep.subr.mxu0 %v5802
  %5934 = vmatpush1.msra.mxu0 %v5801
  %5935 = vmatprep.subr.mxu0 %v5807
  %5936 = vmatpush1.msra.mxu0 %v5806
  %5937 = vmatprep.subr.mxu0 %v5812
  %5938 = vmatpush1.msra.mxu0 %v5811
  %5939 = vmatprep.subr.mxu0 0.0
  %5940 = vmatpush1.msra.mxu0 0.0
  %5941 = vmatprep.subr.mxu0 0.0
  %5942 = vmatpush1.msra.mxu0 0.0
  %5943 = vmatprep.subr.mxu0 0.0
  %5944 = vmatpush1.msra.mxu0 0.0
  %5945 = vmatprep.subr.mxu0 0.0
  %5946 = vmatpush1.msra.mxu0 0.0
  %5947 = vmatprep.subr.mxu0 0.0
  %5948 = vmatpush1.msra.mxu0 0.0
  %5949 = vmatprep.subr.mxu0 0.0
  %5950 = vmatpush1.msra.mxu0 0.0
  %5951 = vmatprep.subr.mxu0 0.0
  %5952 = vmatpush1.msra.mxu0 0.0
  %5953 = vmatprep.subr.mxu0 0.0
  %5954 = vmatpush1.msra.mxu0 0.0
  %5955 = vmatprep.subr.mxu0 0.0
  %5956 = vmatpush1.msra.mxu0 0.0
  %5957 = vmatprep.subr.mxu0 0.0
  %5958 = vmatpush1.msra.mxu0 0.0
  %5959 = vmatprep.subr.mxu0 0.0
  %5960 = vmatpush1.msra.mxu0 0.0
  %5961 = vmatprep.subr.mxu0 0.0
  %5962 = vmatpush1.msra.mxu0 0.0
  %5963 = vmatprep.subr.mxu0 0.0
  %5964 = vmatpush1.msra.mxu0 0.0
  %5965 = vmatprep.subr.mxu0 0.0
  %5966 = vmatpush1.msra.mxu0 0.0
  %5967 = vmatprep.subr.mxu0 0.0
  %5968 = vmatpush1.msra.mxu0 0.0
  %5969 = vmatprep.subr.mxu0 0.0
  %5970 = vmatpush1.msra.mxu0 0.0
  %5971 = vmatprep.subr.mxu0 0.0
  %5972 = vmatpush1.msra.mxu0 0.0
  %5973 = vmatprep.subr.mxu0 0.0
  %5974 = vmatpush1.msra.mxu0 0.0
  %5975 = vmatprep.subr.mxu0 0.0
  %5976 = vmatpush1.msra.mxu0 0.0
  %5977 = vmatprep.subr.mxu0 0.0
  %5978 = vmatpush1.msra.mxu0 0.0
  %5979 = vmatprep.subr.mxu0 0.0
  %5980 = vmatpush1.msra.mxu0 0.0
  %5981 = vmatprep.subr.mxu0 0.0
  %5982 = vmatpush1.msra.mxu0 0.0
  %5983 = vmatprep.subr.mxu0 0.0
  %5984 = vmatpush1.msra.mxu0 0.0
  %5985 = vmatprep.subr.mxu0 0.0
  %5986 = vmatpush1.msra.mxu0 0.0
  %5987 = vmatprep.subr.mxu0 0.0
  %5988 = vmatpush1.msra.mxu0 0.0
  %5989 = vmatprep.subr.mxu0 0.0
  %5990 = vmatpush1.msra.mxu0 0.0
  %5991 = vmatprep.subr.mxu0 0.0
  %5992 = vmatpush1.msra.mxu0 0.0
  %5993 = vmatprep.subr.mxu0 0.0
  %5994 = vmatpush1.msra.mxu0 0.0
  %5995 = vmatprep.mubr.f32.mxu0 0.0
  %5996 = vmatmul.mubr.f32.gmra.mrb[0].mxu0 %v5834
  %v5997 = vpop.f32.mrb[0].mxu0
  %v5998 = vadd.f32 0.0, %v5997
  %v5999 = vpop.f32.mrb[0].mxu0
  %v6000 = vadd.f32 0.0, %v5999
  %6001 = vmatprep.mubr.f32.mxu0 0.0
  %6002 = vmatmul.mubr.f32.gmra.mrb[0].mxu0 %v5836
  %v6003 = vpop.f32.mrb[0].mxu0
  %v6004 = vadd.f32 0.0, %v6003
  %v6005 = vpop.f32.mrb[0].mxu0
  %v6006 = vadd.f32 0.0, %v6005
  %6007 = vmatprep.mubr.f32.mxu0 0.0
  %6008 = vmatmul.mubr.f32.gmra.mrb[0].mxu0 %v5838
  %v6009 = vpop.f32.mrb[0].mxu0
  %v6010 = vadd.f32 0.0, %v6009
  %v6011 = vpop.f32.mrb[0].mxu0
  %v6012 = vadd.f32 0.0, %v6011
  %6013 = vmatprep.mubr.f32.mxu0 0.0
  %6014 = vmatmul.mubr.f32.gmra.mrb[0].mxu0 %v5840
  %v6015 = vpop.f32.mrb[0].mxu0
  %v6016 = vadd.f32 0.0, %v6015
  %v6017 = vpop.f32.mrb[0].mxu0
  %v6018 = vadd.f32 0.0, %v6017
  %6019 = vdwg.mxu0
  %6020 = vmatprep.subr.mxu0 0.0
  %6021 = vmatpush1.msra.mxu0 %v5798
  %6022 = vmatprep.subr.mxu0 0.0
  %6023 = vmatpush1.msra.mxu0 %v5803
  %6024 = vmatprep.subr.mxu0 0.0
  %6025 = vmatpush1.msra.mxu0 %v5808
  %6026 = vmatprep.subr.mxu0 0.0
  %6027 = vmatpush1.msra.mxu0 %v5813
  %6028 = vmatprep.subr.mxu0 0.0
  %6029 = vmatpush1.msra.mxu0 0.0
  %6030 = vmatprep.subr.mxu0 0.0
  %6031 = vmatpush1.msra.mxu0 0.0
  %6032 = vmatprep.subr.mxu0 0.0
  %6033 = vmatpush1.msra.mxu0 0.0
  %6034 = vmatprep.subr.mxu0 0.0
  %6035 = vmatpush1.msra.mxu0 0.0
  %6036 = vmatprep.subr.mxu0 0.0
  %6037 = vmatpush1.msra.mxu0 0.0
  %6038 = vmatprep.subr.mxu0 0.0
  %6039 = vmatpush1.msra.mxu0 0.0
  %6040 = vmatprep.subr.mxu0 0.0
  %6041 = vmatpush1.msra.mxu0 0.0
  %6042 = vmatprep.subr.mxu0 0.0
  %6043 = vmatpush1.msra.mxu0 0.0
  %6044 = vmatprep.subr.mxu0 0.0
  %6045 = vmatpush1.msra.mxu0 0.0
  %6046 = vmatprep.subr.mxu0 0.0
  %6047 = vmatpush1.msra.mxu0 0.0
  %6048 = vmatprep.subr.mxu0 0.0
  %6049 = vmatpush1.msra.mxu0 0.0
  %6050 = vmatprep.subr.mxu0 0.0
  %6051 = vmatpush1.msra.mxu0 0.0
  %6052 = vmatprep.subr.mxu0 0.0
  %6053 = vmatpush1.msra.mxu0 0.0
  %6054 = vmatprep.subr.mxu0 0.0
  %6055 = vmatpush1.msra.mxu0 0.0
  %6056 = vmatprep.subr.mxu0 0.0
  %6057 = vmatpush1.msra.mxu0 0.0
  %6058 = vmatprep.subr.mxu0 0.0
  %6059 = vmatpush1.msra.mxu0 0.0
  %6060 = vmatprep.subr.mxu0 0.0
  %6061 = vmatpush1.msra.mxu0 0.0
  %6062 = vmatprep.subr.mxu0 0.0
  %6063 = vmatpush1.msra.mxu0 0.0
  %6064 = vmatprep.subr.mxu0 0.0
  %6065 = vmatpush1.msra.mxu0 0.0
  %6066 = vmatprep.subr.mxu0 0.0
  %6067 = vmatpush1.msra.mxu0 0.0
  %6068 = vmatprep.subr.mxu0 0.0
  %6069 = vmatpush1.msra.mxu0 0.0
  %6070 = vmatprep.subr.mxu0 0.0
  %6071 = vmatpush1.msra.mxu0 0.0
  %6072 = vmatprep.subr.mxu0 0.0
  %6073 = vmatpush1.msra.mxu0 0.0
  %6074 = vmatprep.subr.mxu0 0.0
  %6075 = vmatpush1.msra.mxu0 0.0
  %6076 = vmatprep.subr.mxu0 0.0
  %6077 = vmatpush1.msra.mxu0 0.0
  %6078 = vmatprep.subr.mxu0 0.0
  %6079 = vmatpush1.msra.mxu0 0.0
  %6080 = vmatprep.subr.mxu0 0.0
  %6081 = vmatpush1.msra.mxu0 0.0
  %6082 = vmatprep.subr.mxu0 0.0
  %6083 = vmatpush1.msra.mxu0 0.0
  %6084 = vmatprep.mubr.f32.mxu0 0.0
  %6085 = vmatmul.mubr.f32.gmra.mrb[0].mxu0 %v5834
  %v6086 = vpop.f32.mrb[0].mxu0
  %v6087 = vadd.f32 0.0, %v6086
  %v6088 = vpop.f32.mrb[0].mxu0
  %6089 = vmatprep.mubr.f32.mxu0 0.0
  %6090 = vmatmul.mubr.f32.gmra.mrb[0].mxu0 %v5836
  %v6091 = vpop.f32.mrb[0].mxu0
  %v6092 = vadd.f32 0.0, %v6091
  %v6093 = vpop.f32.mrb[0].mxu0
  %6094 = vmatprep.mubr.f32.mxu0 0.0
  %6095 = vmatmul.mubr.f32.gmra.mrb[0].mxu0 %v5838
  %v6096 = vpop.f32.mrb[0].mxu0
  %v6097 = vadd.f32 0.0, %v6096
  %v6098 = vpop.f32.mrb[0].mxu0
  %6099 = vmatprep.mubr.f32.mxu0 0.0
  %6100 = vmatmul.mubr.f32.gmra.mrb[0].mxu0 %v5840
  %v6101 = vpop.f32.mrb[0].mxu0
  %v6102 = vadd.f32 0.0, %v6101
  %v6103 = vpop.f32.mrb[0].mxu0
  %6104 = vdwg.mxu0
  %v6105 = vadd.f32 %v5718, %v5909
  %v6106 = vadd.f32 %v5719, %v5911
  %v6107 = vadd.f32 %v5720, %v5998
  %v6108 = vadd.f32 %v5721, %v6000
  %v6109 = vadd.f32 %v5722, %v6087
  %v6110 = vadd.f32 %v5723, %v5915
  %v6111 = vadd.f32 %v5724, %v5917
  %v6112 = vadd.f32 %v5725, %v6004
  %v6113 = vadd.f32 %v5726, %v6006
  %v6114 = vadd.f32 %v5727, %v6092
  %v6115 = vadd.f32 %v5728, %v5921
  %v6116 = vadd.f32 %v5729, %v5923
  %v6117 = vadd.f32 %v5730, %v6010
  %v6118 = vadd.f32 %v5731, %v6012
  %v6119 = vadd.f32 %v5732, %v6097
  %v6120 = vadd.f32 %v5733, %v5927
  %v6121 = vadd.f32 %v5734, %v5929
  %v6122 = vadd.f32 %v5735, %v6016
  %v6123 = vadd.f32 %v5736, %v6018
  %v6124 = vadd.f32 %v5737, %v6102
  %v6125 = vld [vmem:[%s2 + $0x10] sm:$0xff]
  %v6126 = vld [vmem:[%s2 + $0x28] sm:$0xff]
  %v6127 = vld [vmem:[%s2 + $0x40] sm:$0xff]
  %v6128 = vld [vmem:[%s2 + $0x58] sm:$0xff]
  %6129 = vrot.lane.b32.xlu0 %v5303, 90
  %v6130 = vpop.permute.xlu0 %6129
  %6131 = vrot.lane.b32.xlu0 %v5304, 90
  %v6132 = vpop.permute.xlu0 %6131
  %6133 = vrot.lane.b32.xlu0 %v5305, 90
  %v6134 = vpop.permute.xlu0 %6133
  %6135 = vrot.lane.b32.xlu0 %v5306, 90
  %v6136 = vpop.permute.xlu0 %6135
  %6137 = vrot.lane.b32.xlu0 %v5307, 90
  %v6138 = vpop.permute.xlu0 %6137
  %6139 = vrot.lane.b32.xlu0 %v5308, 90
  %v6140 = vpop.permute.xlu0 %6139
  %6141 = vrot.lane.b32.xlu0 %v5309, 90
  %v6142 = vpop.permute.xlu0 %6141
  %6143 = vrot.lane.b32.xlu0 %v5310, 90
  %v6144 = vpop.permute.xlu0 %6143
  %6145 = vrot.lane.b32.xlu0 %v5311, 90
  %v6146 = vpop.permute.xlu0 %6145
  %6147 = vrot.lane.b32.xlu0 %v5312, 90
  %v6148 = vpop.permute.xlu0 %6147
  %6149 = vrot.lane.b32.xlu0 %v5313, 90
  %v6150 = vpop.permute.xlu0 %6149
  %6151 = vrot.lane.b32.xlu0 %v5314, 90
  %v6152 = vpop.permute.xlu0 %6151
  %6153 = vrot.lane.b32.xlu0 %v5315, 90
  %v6154 = vpop.permute.xlu0 %6153
  %6155 = vrot.lane.b32.xlu0 %v5316, 90
  %v6156 = vpop.permute.xlu0 %6155
  %6157 = vrot.lane.b32.xlu0 %v5317, 90
  %v6158 = vpop.permute.xlu0 %6157
  %6159 = vrot.lane.b32.xlu0 %v5318, 90
  %v6160 = vpop.permute.xlu0 %6159
  %6161 = vrot.lane.b32.xlu0 %v5319, 90
  %v6162 = vpop.permute.xlu0 %6161
  %6163 = vrot.lane.b32.xlu0 %v5320, 90
  %v6164 = vpop.permute.xlu0 %6163
  %6165 = vrot.lane.b32.xlu0 %v5321, 90
  %v6166 = vpop.permute.xlu0 %6165
  %6167 = vrot.lane.b32.xlu0 %v5322, 90
  %v6168 = vpop.permute.xlu0 %6167
  %6169 = vrot.lane.b32.xlu0 %v5323, 90
  %v6170 = vpop.permute.xlu0 %6169
  %6171 = vrot.lane.b32.xlu0 %v5324, 90
  %v6172 = vpop.permute.xlu0 %6171
  %6173 = vrot.lane.b32.xlu0 %v5325, 90
  %v6174 = vpop.permute.xlu0 %6173
  %6175 = vrot.lane.b32.xlu0 %v5326, 90
  %v6176 = vpop.permute.xlu0 %6175
  %v6177 = vsel %vm2603, %v6130, %v6132
  %v6178 = vsel %vm2603, %v6132, %v6134
  %v6179 = vsel %vm2603, %v6134, %v6136
  %v6180 = vsel %vm2603, %v6136, %v6138
  %v6181 = vsel %vm2603, %v6138, %v6140
  %v6182 = vsel %vm2603, %v6142, %v6144
  %v6183 = vsel %vm2603, %v6144, %v6146
  %v6184 = vsel %vm2603, %v6146, %v6148
  %v6185 = vsel %vm2603, %v6148, %v6150
  %v6186 = vsel %vm2603, %v6150, %v6152
  %v6187 = vsel %vm2603, %v6154, %v6156
  %v6188 = vsel %vm2603, %v6156, %v6158
  %v6189 = vsel %vm2603, %v6158, %v6160
  %v6190 = vsel %vm2603, %v6160, %v6162
  %v6191 = vsel %vm2603, %v6162, %v6164
  %v6192 = vsel %vm2603, %v6166, %v6168
  %v6193 = vsel %vm2603, %v6168, %v6170
  %v6194 = vsel %vm2603, %v6170, %v6172
  %v6195 = vsel %vm2603, %v6172, %v6174
  %v6196 = vsel %vm2603, %v6174, %v6176
  %v6218 = vsel %vm3260, %v6125, 0
  %v6221 = vsel %vm3260, %v6126, 0
  %v6224 = vsel %vm3260, %v6127, 0
  %v6227 = vsel %vm3260, %v6128, 0
  %6229 = vmatprep.subr.mxu0 %v6178
  %6230 = vmatpush1.msra.mxu0 %v6177
  %6231 = vmatprep.subr.mxu0 %v6183
  %6232 = vmatpush1.msra.mxu0 %v6182
  %6233 = vmatprep.subr.mxu0 %v6188
  %6234 = vmatpush1.msra.mxu0 %v6187
  %6235 = vmatprep.subr.mxu0 %v6193
  %6236 = vmatpush1.msra.mxu0 %v6192
  %6237 = vmatprep.subr.mxu0 0.0
  %6238 = vmatpush1.msra.mxu0 0.0
  %6239 = vmatprep.subr.mxu0 0.0
  %6240 = vmatpush1.msra.mxu0 0.0
  %6241 = vmatprep.subr.mxu0 0.0
  %6242 = vmatpush1.msra.mxu0 0.0
  %6243 = vmatprep.subr.mxu0 0.0
  %6244 = vmatpush1.msra.mxu0 0.0
  %6245 = vmatprep.subr.mxu0 0.0
  %6246 = vmatpush1.msra.mxu0 0.0
  %6247 = vmatprep.subr.mxu0 0.0
  %6248 = vmatpush1.msra.mxu0 0.0
  %6249 = vmatprep.subr.mxu0 0.0
  %6250 = vmatpush1.msra.mxu0 0.0
  %6251 = vmatprep.subr.mxu0 0.0
  %6252 = vmatpush1.msra.mxu0 0.0
  %6253 = vmatprep.subr.mxu0 0.0
  %6254 = vmatpush1.msra.mxu0 0.0
  %6255 = vmatprep.subr.mxu0 0.0
  %6256 = vmatpush1.msra.mxu0 0.0
  %6257 = vmatprep.subr.mxu0 0.0
  %6258 = vmatpush1.msra.mxu0 0.0
  %6259 = vmatprep.subr.mxu0 0.0
  %6260 = vmatpush1.msra.mxu0 0.0
  %6261 = vmatprep.subr.mxu0 0.0
  %6262 = vmatpush1.msra.mxu0 0.0
  %6263 = vmatprep.subr.mxu0 0.0
  %6264 = vmatpush1.msra.mxu0 0.0
  %6265 = vmatprep.subr.mxu0 0.0
  %6266 = vmatpush1.msra.mxu0 0.0
  %6267 = vmatprep.subr.mxu0 0.0
  %6268 = vmatpush1.msra.mxu0 0.0
  %6269 = vmatprep.subr.mxu0 0.0
  %6270 = vmatpush1.msra.mxu0 0.0
  %6271 = vmatprep.subr.mxu0 0.0
  %6272 = vmatpush1.msra.mxu0 0.0
  %6273 = vmatprep.subr.mxu0 0.0
  %6274 = vmatpush1.msra.mxu0 0.0
  %6275 = vmatprep.subr.mxu0 0.0
  %6276 = vmatpush1.msra.mxu0 0.0
  %6277 = vmatprep.subr.mxu0 0.0
  %6278 = vmatpush1.msra.mxu0 0.0
  %6279 = vmatprep.subr.mxu0 0.0
  %6280 = vmatpush1.msra.mxu0 0.0
  %6281 = vmatprep.subr.mxu0 0.0
  %6282 = vmatpush1.msra.mxu0 0.0
  %6283 = vmatprep.subr.mxu0 0.0
  %6284 = vmatpush1.msra.mxu0 0.0
  %6285 = vmatprep.subr.mxu0 0.0
  %6286 = vmatpush1.msra.mxu0 0.0
  %6287 = vmatprep.subr.mxu0 0.0
  %6288 = vmatpush1.msra.mxu0 0.0
  %6289 = vmatprep.subr.mxu0 0.0
  %6290 = vmatpush1.msra.mxu0 0.0
  %6291 = vmatprep.subr.mxu0 0.0
  %6292 = vmatpush1.msra.mxu0 0.0
  %6293 = vmatprep.mubr.f32.mxu0 0.0
  %6294 = vmatmul.mubr.f32.gmra.mrb[0].mxu0 %v6218
  %v6295 = vpop.f32.mrb[0].mxu0
  %v6296 = vadd.f32 0.0, %v6295
  %v6297 = vpop.f32.mrb[0].mxu0
  %v6298 = vadd.f32 0.0, %v6297
  %6299 = vmatprep.mubr.f32.mxu0 0.0
  %6300 = vmatmul.mubr.f32.gmra.mrb[0].mxu0 %v6221
  %v6301 = vpop.f32.mrb[0].mxu0
  %v6302 = vadd.f32 0.0, %v6301
  %v6303 = vpop.f32.mrb[0].mxu0
  %v6304 = vadd.f32 0.0, %v6303
  %6305 = vmatprep.mubr.f32.mxu0 0.0
  %6306 = vmatmul.mubr.f32.gmra.mrb[0].mxu0 %v6224
  %v6307 = vpop.f32.mrb[0].mxu0
  %v6308 = vadd.f32 0.0, %v6307
  %v6309 = vpop.f32.mrb[0].mxu0
  %v6310 = vadd.f32 0.0, %v6309
  %6311 = vmatprep.mubr.f32.mxu0 0.0
  %6312 = vmatmul.mubr.f32.gmra.mrb[0].mxu0 %v6227
  %v6313 = vpop.f32.mrb[0].mxu0
  %v6314 = vadd.f32 0.0, %v6313
  %v6315 = vpop.f32.mrb[0].mxu0
  %v6316 = vadd.f32 0.0, %v6315
  %6317 = vdwg.mxu0
  %6318 = vmatprep.subr.mxu0 %v6180
  %6319 = vmatpush1.msra.mxu0 %v6179
  %6320 = vmatprep.subr.mxu0 %v6185
  %6321 = vmatpush1.msra.mxu0 %v6184
  %6322 = vmatprep.subr.mxu0 %v6190
  %6323 = vmatpush1.msra.mxu0 %v6189
  %6324 = vmatprep.subr.mxu0 %v6195
  %6325 = vmatpush1.msra.mxu0 %v6194
  %6326 = vmatprep.subr.mxu0 0.0
  %6327 = vmatpush1.msra.mxu0 0.0
  %6328 = vmatprep.subr.mxu0 0.0
  %6329 = vmatpush1.msra.mxu0 0.0
  %6330 = vmatprep.subr.mxu0 0.0
  %6331 = vmatpush1.msra.mxu0 0.0
  %6332 = vmatprep.subr.mxu0 0.0
  %6333 = vmatpush1.msra.mxu0 0.0
  %6334 = vmatprep.subr.mxu0 0.0
  %6335 = vmatpush1.msra.mxu0 0.0
  %6336 = vmatprep.subr.mxu0 0.0
  %6337 = vmatpush1.msra.mxu0 0.0
  %6338 = vmatprep.subr.mxu0 0.0
  %6339 = vmatpush1.msra.mxu0 0.0
  %6340 = vmatprep.subr.mxu0 0.0
  %6341 = vmatpush1.msra.mxu0 0.0
  %6342 = vmatprep.subr.mxu0 0.0
  %6343 = vmatpush1.msra.mxu0 0.0
  %6344 = vmatprep.subr.mxu0 0.0
  %6345 = vmatpush1.msra.mxu0 0.0
  %6346 = vmatprep.subr.mxu0 0.0
  %6347 = vmatpush1.msra.mxu0 0.0
  %6348 = vmatprep.subr.mxu0 0.0
  %6349 = vmatpush1.msra.mxu0 0.0
  %6350 = vmatprep.subr.mxu0 0.0
  %6351 = vmatpush1.msra.mxu0 0.0
  %6352 = vmatprep.subr.mxu0 0.0
  %6353 = vmatpush1.msra.mxu0 0.0
  %6354 = vmatprep.subr.mxu0 0.0
  %6355 = vmatpush1.msra.mxu0 0.0
  %6356 = vmatprep.subr.mxu0 0.0
  %6357 = vmatpush1.msra.mxu0 0.0
  %6358 = vmatprep.subr.mxu0 0.0
  %6359 = vmatpush1.msra.mxu0 0.0
  %6360 = vmatprep.subr.mxu0 0.0
  %6361 = vmatpush1.msra.mxu0 0.0
  %6362 = vmatprep.subr.mxu0 0.0
  %6363 = vmatpush1.msra.mxu0 0.0
  %6364 = vmatprep.subr.mxu0 0.0
  %6365 = vmatpush1.msra.mxu0 0.0
  %6366 = vmatprep.subr.mxu0 0.0
  %6367 = vmatpush1.msra.mxu0 0.0
  %6368 = vmatprep.subr.mxu0 0.0
  %6369 = vmatpush1.msra.mxu0 0.0
  %6370 = vmatprep.subr.mxu0 0.0
  %6371 = vmatpush1.msra.mxu0 0.0
  %6372 = vmatprep.subr.mxu0 0.0
  %6373 = vmatpush1.msra.mxu0 0.0
  %6374 = vmatprep.subr.mxu0 0.0
  %6375 = vmatpush1.msra.mxu0 0.0
  %6376 = vmatprep.subr.mxu0 0.0
  %6377 = vmatpush1.msra.mxu0 0.0
  %6378 = vmatprep.subr.mxu0 0.0
  %6379 = vmatpush1.msra.mxu0 0.0
  %6380 = vmatprep.subr.mxu0 0.0
  %6381 = vmatpush1.msra.mxu0 0.0
  %6382 = vmatprep.mubr.f32.mxu0 0.0
  %6383 = vmatmul.mubr.f32.gmra.mrb[0].mxu0 %v6218
  %v6384 = vpop.f32.mrb[0].mxu0
  %v6385 = vadd.f32 0.0, %v6384
  %v6386 = vpop.f32.mrb[0].mxu0
  %v6387 = vadd.f32 0.0, %v6386
  %6388 = vmatprep.mubr.f32.mxu0 0.0
  %6389 = vmatmul.mubr.f32.gmra.mrb[0].mxu0 %v6221
  %v6390 = vpop.f32.mrb[0].mxu0
  %v6391 = vadd.f32 0.0, %v6390
  %v6392 = vpop.f32.mrb[0].mxu0
  %v6393 = vadd.f32 0.0, %v6392
  %6394 = vmatprep.mubr.f32.mxu0 0.0
  %6395 = vmatmul.mubr.f32.gmra.mrb[0].mxu0 %v6224
  %v6396 = vpop.f32.mrb[0].mxu0
  %v6397 = vadd.f32 0.0, %v6396
  %v6398 = vpop.f32.mrb[0].mxu0
  %v6399 = vadd.f32 0.0, %v6398
  %6400 = vmatprep.mubr.f32.mxu0 0.0
  %6401 = vmatmul.mubr.f32.gmra.mrb[0].mxu0 %v6227
  %v6402 = vpop.f32.mrb[0].mxu0
  %v6403 = vadd.f32 0.0, %v6402
  %v6404 = vpop.f32.mrb[0].mxu0
  %v6405 = vadd.f32 0.0, %v6404
  %6406 = vdwg.mxu0
  %6407 = vmatprep.subr.mxu0 0.0
  %6408 = vmatpush1.msra.mxu0 %v6181
  %6409 = vmatprep.subr.mxu0 0.0
  %6410 = vmatpush1.msra.mxu0 %v6186
  %6411 = vmatprep.subr.mxu0 0.0
  %6412 = vmatpush1.msra.mxu0 %v6191
  %6413 = vmatprep.subr.mxu0 0.0
  %6414 = vmatpush1.msra.mxu0 %v6196
  %6415 = vmatprep.subr.mxu0 0.0
  %6416 = vmatpush1.msra.mxu0 0.0
  %6417 = vmatprep.subr.mxu0 0.0
  %6418 = vmatpush1.msra.mxu0 0.0
  %6419 = vmatprep.subr.mxu0 0.0
  %6420 = vmatpush1.msra.mxu0 0.0
  %6421 = vmatprep.subr.mxu0 0.0
  %6422 = vmatpush1.msra.mxu0 0.0
  %6423 = vmatprep.subr.mxu0 0.0
  %6424 = vmatpush1.msra.mxu0 0.0
  %6425 = vmatprep.subr.mxu0 0.0
  %6426 = vmatpush1.msra.mxu0 0.0
  %6427 = vmatprep.subr.mxu0 0.0
  %6428 = vmatpush1.msra.mxu0 0.0
  %6429 = vmatprep.subr.mxu0 0.0
  %6430 = vmatpush1.msra.mxu0 0.0
  %6431 = vmatprep.subr.mxu0 0.0
  %6432 = vmatpush1.msra.mxu0 0.0
  %6433 = vmatprep.subr.mxu0 0.0
  %6434 = vmatpush1.msra.mxu0 0.0
  %6435 = vmatprep.subr.mxu0 0.0
  %6436 = vmatpush1.msra.mxu0 0.0
  %6437 = vmatprep.subr.mxu0 0.0
  %6438 = vmatpush1.msra.mxu0 0.0
  %6439 = vmatprep.subr.mxu0 0.0
  %6440 = vmatpush1.msra.mxu0 0.0
  %6441 = vmatprep.subr.mxu0 0.0
  %6442 = vmatpush1.msra.mxu0 0.0
  %6443 = vmatprep.subr.mxu0 0.0
  %6444 = vmatpush1.msra.mxu0 0.0
  %6445 = vmatprep.subr.mxu0 0.0
  %6446 = vmatpush1.msra.mxu0 0.0
  %6447 = vmatprep.subr.mxu0 0.0
  %6448 = vmatpush1.msra.mxu0 0.0
  %6449 = vmatprep.subr.mxu0 0.0
  %6450 = vmatpush1.msra.mxu0 0.0
  %6451 = vmatprep.subr.mxu0 0.0
  %6452 = vmatpush1.msra.mxu0 0.0
  %6453 = vmatprep.subr.mxu0 0.0
  %6454 = vmatpush1.msra.mxu0 0.0
  %6455 = vmatprep.subr.mxu0 0.0
  %6456 = vmatpush1.msra.mxu0 0.0
  %6457 = vmatprep.subr.mxu0 0.0
  %6458 = vmatpush1.msra.mxu0 0.0
  %6459 = vmatprep.subr.mxu0 0.0
  %6460 = vmatpush1.msra.mxu0 0.0
  %6461 = vmatprep.subr.mxu0 0.0
  %6462 = vmatpush1.msra.mxu0 0.0
  %6463 = vmatprep.subr.mxu0 0.0
  %6464 = vmatpush1.msra.mxu0 0.0
  %6465 = vmatprep.subr.mxu0 0.0
  %6466 = vmatpush1.msra.mxu0 0.0
  %6467 = vmatprep.subr.mxu0 0.0
  %6468 = vmatpush1.msra.mxu0 0.0
  %6469 = vmatprep.subr.mxu0 0.0
  %6470 = vmatpush1.msra.mxu0 0.0
  %6471 = vmatprep.mubr.f32.mxu0 0.0
  %6472 = vmatmul.mubr.f32.gmra.mrb[0].mxu0 %v6218
  %v6473 = vpop.f32.mrb[0].mxu0
  %v6474 = vadd.f32 0.0, %v6473
  %v6475 = vpop.f32.mrb[0].mxu0
  %6476 = vmatprep.mubr.f32.mxu0 0.0
  %6477 = vmatmul.mubr.f32.gmra.mrb[0].mxu0 %v6221
  %v6478 = vpop.f32.mrb[0].mxu0
  %v6479 = vadd.f32 0.0, %v6478
  %v6480 = vpop.f32.mrb[0].mxu0
  %6481 = vmatprep.mubr.f32.mxu0 0.0
  %6482 = vmatmul.mubr.f32.gmra.mrb[0].mxu0 %v6224
  %v6483 = vpop.f32.mrb[0].mxu0
  %v6484 = vadd.f32 0.0, %v6483
  %v6485 = vpop.f32.mrb[0].mxu0
  %6486 = vmatprep.mubr.f32.mxu0 0.0
  %6487 = vmatmul.mubr.f32.gmra.mrb[0].mxu0 %v6227
  %v6488 = vpop.f32.mrb[0].mxu0
  %v6489 = vadd.f32 0.0, %v6488
  %v6490 = vpop.f32.mrb[0].mxu0
  %6491 = vdwg.mxu0
  %v6492 = vadd.f32 %v6105, %v6296
  %v6493 = vadd.f32 %v6106, %v6298
  %v6494 = vadd.f32 %v6107, %v6385
  %v6495 = vadd.f32 %v6108, %v6387
  %v6496 = vadd.f32 %v6109, %v6474
  %v6497 = vadd.f32 %v6110, %v6302
  %v6498 = vadd.f32 %v6111, %v6304
  %v6499 = vadd.f32 %v6112, %v6391
  %v6500 = vadd.f32 %v6113, %v6393
  %v6501 = vadd.f32 %v6114, %v6479
  %v6502 = vadd.f32 %v6115, %v6308
  %v6503 = vadd.f32 %v6116, %v6310
  %v6504 = vadd.f32 %v6117, %v6397
  %v6505 = vadd.f32 %v6118, %v6399
  %v6506 = vadd.f32 %v6119, %v6484
  %v6507 = vadd.f32 %v6120, %v6314
  %v6508 = vadd.f32 %v6121, %v6316
  %v6509 = vadd.f32 %v6122, %v6403
  %v6510 = vadd.f32 %v6123, %v6405
  %v6511 = vadd.f32 %v6124, %v6489
  %v6512 = vld [vmem:[%s8] sm:$0xff]
  %v6513 = vld [vmem:[%s8 + $0x8] sm:$0xff]
  %v6514 = vld [vmem:[%s8 + $0x10] sm:$0xff]
  %v6515 = vld [vmem:[%s8 + $0x18] sm:$0xff]
  %6517 = vset.pattern.permute.xlu0 0
  %6518 = vperm.xlu0 %6517, %v6512
  %v6519 = vpop.permute.xlu0 %6518
  %6522 = vset.pattern.permute.xlu0 0
  %6523 = vperm.xlu0 %6522, %v6513
  %v6524 = vpop.permute.xlu0 %6523
  %6527 = vset.pattern.permute.xlu0 0
  %6528 = vperm.xlu0 %6527, %v6514
  %v6529 = vpop.permute.xlu0 %6528
  %6532 = vset.pattern.permute.xlu0 0
  %6533 = vperm.xlu0 %6532, %v6515
  %v6534 = vpop.permute.xlu0 %6533
  %v6536 = vadd.f32 %v6492, %v6519
  %v6537 = vadd.f32 %v6493, %v6519
  %v6538 = vadd.f32 %v6494, %v6519
  %v6539 = vadd.f32 %v6495, %v6519
  %v6540 = vadd.f32 %v6496, %v6519
  %v6541 = vadd.f32 %v6497, %v6524
  %v6542 = vadd.f32 %v6498, %v6524
  %v6543 = vadd.f32 %v6499, %v6524
  %v6544 = vadd.f32 %v6500, %v6524
  %v6545 = vadd.f32 %v6501, %v6524
  %v6546 = vadd.f32 %v6502, %v6529
  %v6547 = vadd.f32 %v6503, %v6529
  %v6548 = vadd.f32 %v6504, %v6529
  %v6549 = vadd.f32 %v6505, %v6529
  %v6550 = vadd.f32 %v6506, %v6529
  %v6551 = vadd.f32 %v6507, %v6534
  %v6552 = vadd.f32 %v6508, %v6534
  %v6553 = vadd.f32 %v6509, %v6534
  %v6554 = vadd.f32 %v6510, %v6534
  %v6555 = vadd.f32 %v6511, %v6534
  %6576 = vrot.lane.b32.xlu0 %v6536, 127
  %v6577 = vpop.permute.xlu0 %6576
  %6578 = vrot.lane.b32.xlu0 %v6537, 127
  %v6579 = vpop.permute.xlu0 %6578
  %6580 = vrot.lane.b32.xlu0 %v6538, 127
  %v6581 = vpop.permute.xlu0 %6580
  %6582 = vrot.lane.b32.xlu0 %v6539, 127
  %v6583 = vpop.permute.xlu0 %6582
  %6584 = vrot.lane.b32.xlu0 %v6540, 127
  %v6585 = vpop.permute.xlu0 %6584
  %6586 = vrot.lane.b32.xlu0 %v6541, 127
  %v6587 = vpop.permute.xlu0 %6586
  %6588 = vrot.lane.b32.xlu0 %v6542, 127
  %v6589 = vpop.permute.xlu0 %6588
  %6590 = vrot.lane.b32.xlu0 %v6543, 127
  %v6591 = vpop.permute.xlu0 %6590
  %6592 = vrot.lane.b32.xlu0 %v6544, 127
  %v6593 = vpop.permute.xlu0 %6592
  %6594 = vrot.lane.b32.xlu0 %v6545, 127
  %v6595 = vpop.permute.xlu0 %6594
  %6596 = vrot.lane.b32.xlu0 %v6546, 127
  %v6597 = vpop.permute.xlu0 %6596
  %6598 = vrot.lane.b32.xlu0 %v6547, 127
  %v6599 = vpop.permute.xlu0 %6598
  %6600 = vrot.lane.b32.xlu0 %v6548, 127
  %v6601 = vpop.permute.xlu0 %6600
  %6602 = vrot.lane.b32.xlu0 %v6549, 127
  %v6603 = vpop.permute.xlu0 %6602
  %6604 = vrot.lane.b32.xlu0 %v6550, 127
  %v6605 = vpop.permute.xlu0 %6604
  %6606 = vrot.lane.b32.xlu0 %v6551, 127
  %v6607 = vpop.permute.xlu0 %6606
  %6608 = vrot.lane.b32.xlu0 %v6552, 127
  %v6609 = vpop.permute.xlu0 %6608
  %6610 = vrot.lane.b32.xlu0 %v6553, 127
  %v6611 = vpop.permute.xlu0 %6610
  %6612 = vrot.lane.b32.xlu0 %v6554, 127
  %v6613 = vpop.permute.xlu0 %6612
  %6614 = vrot.lane.b32.xlu0 %v6555, 127
  %v6615 = vpop.permute.xlu0 %6614
  %v6616 = vsel %vm98, %v6577, %v6579
  %v6617 = vsel %vm98, %v6579, %v6581
  %v6618 = vsel %vm98, %v6581, %v6583
  %v6619 = vsel %vm98, %v6583, %v6585
  %v6620 = vsel %vm98, %v6587, %v6589
  %v6621 = vsel %vm98, %v6589, %v6591
  %v6622 = vsel %vm98, %v6591, %v6593
  %v6623 = vsel %vm98, %v6593, %v6595
  %v6624 = vsel %vm98, %v6597, %v6599
  %v6625 = vsel %vm98, %v6599, %v6601
  %v6626 = vsel %vm98, %v6601, %v6603
  %v6627 = vsel %vm98, %v6603, %v6605
  %v6628 = vsel %vm98, %v6607, %v6609
  %v6629 = vsel %vm98, %v6609, %v6611
  %v6630 = vsel %vm98, %v6611, %v6613
  %v6631 = vsel %vm98, %v6613, %v6615
  %v6652 = vmax.f32 %v6536, %v6616
  %v6653 = vmax.f32 %v6537, %v6617
  %v6654 = vmax.f32 %v6538, %v6618
  %v6655 = vmax.f32 %v6539, %v6619
  %v6656 = vmax.f32 %v6540, %v6585
  %v6657 = vmax.f32 %v6541, %v6620
  %v6658 = vmax.f32 %v6542, %v6621
  %v6659 = vmax.f32 %v6543, %v6622
  %v6660 = vmax.f32 %v6544, %v6623
  %v6661 = vmax.f32 %v6545, %v6595
  %v6662 = vmax.f32 %v6546, %v6624
  %v6663 = vmax.f32 %v6547, %v6625
  %v6664 = vmax.f32 %v6548, %v6626
  %v6665 = vmax.f32 %v6549, %v6627
  %v6666 = vmax.f32 %v6550, %v6605
  %v6667 = vmax.f32 %v6551, %v6628
  %v6668 = vmax.f32 %v6552, %v6629
  %v6669 = vmax.f32 %v6553, %v6630
  %v6670 = vmax.f32 %v6554, %v6631
  %v6671 = vmax.f32 %v6555, %v6615
  %6692 = vrot.lane.b32.xlu0 %v6652, 110
  %v6693 = vpop.permute.xlu0 %6692
  %6694 = vrot.lane.b32.xlu0 %v6653, 110
  %v6695 = vpop.permute.xlu0 %6694
  %6696 = vrot.lane.b32.xlu0 %v6654, 110
  %v6697 = vpop.permute.xlu0 %6696
  %6698 = vrot.lane.b32.xlu0 %v6655, 110
  %v6699 = vpop.permute.xlu0 %6698
  %6700 = vrot.lane.b32.xlu0 %v6656, 110
  %v6701 = vpop.permute.xlu0 %6700
  %6702 = vrot.lane.b32.xlu0 %v6657, 110
  %v6703 = vpop.permute.xlu0 %6702
  %6704 = vrot.lane.b32.xlu0 %v6658, 110
  %v6705 = vpop.permute.xlu0 %6704
  %6706 = vrot.lane.b32.xlu0 %v6659, 110
  %v6707 = vpop.permute.xlu0 %6706
  %6708 = vrot.lane.b32.xlu0 %v6660, 110
  %v6709 = vpop.permute.xlu0 %6708
  %6710 = vrot.lane.b32.xlu0 %v6661, 110
  %v6711 = vpop.permute.xlu0 %6710
  %6712 = vrot.lane.b32.xlu0 %v6662, 110
  %v6713 = vpop.permute.xlu0 %6712
  %6714 = vrot.lane.b32.xlu0 %v6663, 110
  %v6715 = vpop.permute.xlu0 %6714
  %6716 = vrot.lane.b32.xlu0 %v6664, 110
  %v6717 = vpop.permute.xlu0 %6716
  %6718 = vrot.lane.b32.xlu0 %v6665, 110
  %v6719 = vpop.permute.xlu0 %6718
  %6720 = vrot.lane.b32.xlu0 %v6666, 110
  %v6721 = vpop.permute.xlu0 %6720
  %6722 = vrot.lane.b32.xlu0 %v6667, 110
  %v6723 = vpop.permute.xlu0 %6722
  %6724 = vrot.lane.b32.xlu0 %v6668, 110
  %v6725 = vpop.permute.xlu0 %6724
  %6726 = vrot.lane.b32.xlu0 %v6669, 110
  %v6727 = vpop.permute.xlu0 %6726
  %6728 = vrot.lane.b32.xlu0 %v6670, 110
  %v6729 = vpop.permute.xlu0 %6728
  %6730 = vrot.lane.b32.xlu0 %v6671, 110
  %v6731 = vpop.permute.xlu0 %6730
  %v6732 = vsel %vm988, %v6693, %v6695
  %v6733 = vsel %vm988, %v6695, %v6697
  %v6734 = vsel %vm988, %v6697, %v6699
  %v6735 = vsel %vm988, %v6699, %v6701
  %v6736 = vsel %vm988, %v6703, %v6705
  %v6737 = vsel %vm988, %v6705, %v6707
  %v6738 = vsel %vm988, %v6707, %v6709
  %v6739 = vsel %vm988, %v6709, %v6711
  %v6740 = vsel %vm988, %v6713, %v6715
  %v6741 = vsel %vm988, %v6715, %v6717
  %v6742 = vsel %vm988, %v6717, %v6719
  %v6743 = vsel %vm988, %v6719, %v6721
  %v6744 = vsel %vm988, %v6723, %v6725
  %v6745 = vsel %vm988, %v6725, %v6727
  %v6746 = vsel %vm988, %v6727, %v6729
  %v6747 = vsel %vm988, %v6729, %v6731
  %v6768 = vmax.f32 %v6652, %v6732
  %v6769 = vmax.f32 %v6653, %v6733
  %v6770 = vmax.f32 %v6654, %v6734
  %v6771 = vmax.f32 %v6655, %v6735
  %v6772 = vmax.f32 %v6656, %v6701
  %v6773 = vmax.f32 %v6657, %v6736
  %v6774 = vmax.f32 %v6658, %v6737
  %v6775 = vmax.f32 %v6659, %v6738
  %v6776 = vmax.f32 %v6660, %v6739
  %v6777 = vmax.f32 %v6661, %v6711
  %v6778 = vmax.f32 %v6662, %v6740
  %v6779 = vmax.f32 %v6663, %v6741
  %v6780 = vmax.f32 %v6664, %v6742
  %v6781 = vmax.f32 %v6665, %v6743
  %v6782 = vmax.f32 %v6666, %v6721
  %v6783 = vmax.f32 %v6667, %v6744
  %v6784 = vmax.f32 %v6668, %v6745
  %v6785 = vmax.f32 %v6669, %v6746
  %v6786 = vmax.f32 %v6670, %v6747
  %v6787 = vmax.f32 %v6671, %v6731
  %v6788 = vmax.f32 %v6768, 0.0
  %v6789 = vmax.f32 %v6769, 0.0
  %v6790 = vmax.f32 %v6770, 0.0
  %v6791 = vmax.f32 %v6771, 0.0
  %v6792 = vmax.f32 %v6772, 0.0
  %v6793 = vmax.f32 %v6773, 0.0
  %v6794 = vmax.f32 %v6774, 0.0
  %v6795 = vmax.f32 %v6775, 0.0
  %v6796 = vmax.f32 %v6776, 0.0
  %v6797 = vmax.f32 %v6777, 0.0
  %v6798 = vmax.f32 %v6778, 0.0
  %v6799 = vmax.f32 %v6779, 0.0
  %v6800 = vmax.f32 %v6780, 0.0
  %v6801 = vmax.f32 %v6781, 0.0
  %v6802 = vmax.f32 %v6782, 0.0
  %v6803 = vmax.f32 %v6783, 0.0
  %v6804 = vmax.f32 %v6784, 0.0
  %v6805 = vmax.f32 %v6785, 0.0
  %v6806 = vmax.f32 %v6786, 0.0
  %v6807 = vmax.f32 %v6787, 0.0
  %v6808 = vld [vmem:[%s14] sm:$0xff]
  %v6809 = vld [vmem:[%s14 + $0x8] sm:$0xff]
  %v6810 = vld [vmem:[%s14 + $0x10] sm:$0xff]
  %v6811 = vld [vmem:[%s14 + $0x18] sm:$0xff]
  %v6812 = vld [vmem:[%s14 + $0x20] sm:$0xff]
  %v6813 = vld [vmem:[%s14 + $0x28] sm:$0xff]
  %v6814 = vld [vmem:[%s14 + $0x30] sm:$0xff]
  %v6815 = vld [vmem:[%s14 + $0x38] sm:$0xff]
  %v6816 = vld [vmem:[%s14 + $0x40] sm:$0xff]
  %v6817 = vld [vmem:[%s14 + $0x48] sm:$0xff]
  %v6818 = vld [vmem:[%s14 + $0x50] sm:$0xff]
  %v6819 = vld [vmem:[%s14 + $0x58] sm:$0xff]
  %v6820 = vld [vmem:[%s14 + $0x60] sm:$0xff]
  %v6821 = vld [vmem:[%s14 + $0x68] sm:$0xff]
  %v6822 = vld [vmem:[%s14 + $0x70] sm:$0xff]
  %v6823 = vld [vmem:[%s14 + $0x78] sm:$0xff]
  %v6824 = vld [vmem:[%s14 + $0x80] sm:$0xff]
  %v6825 = vld [vmem:[%s14 + $0x88] sm:$0xff]
  %v6826 = vld [vmem:[%s14 + $0x90] sm:$0xff]
  %v6827 = vld [vmem:[%s14 + $0x98] sm:$0xff]
  %v6828 = vld [vmem:[%s14 + $0xa0] sm:$0xff]
  %v6829 = vld [vmem:[%s14 + $0xa8] sm:$0xff]
  %v6830 = vld [vmem:[%s14 + $0xb0] sm:$0xff]
  %v6831 = vld [vmem:[%s14 + $0xb8] sm:$0xff]
  %v6832 = vld [vmem:[%s14 + $0xc0] sm:$0xff]
  %v6833 = vld [vmem:[%s14 + $0xc8] sm:$0xff]
  %v6834 = vld [vmem:[%s14 + $0xd0] sm:$0xff]
  %v6835 = vld [vmem:[%s14 + $0xd8] sm:$0xff]
  %v6836 = vld [vmem:[%s14 + $0xe0] sm:$0xff]
  %v6837 = vld [vmem:[%s14 + $0xe8] sm:$0xff]
  %v6838 = vld [vmem:[%s14 + $0xf0] sm:$0xff]
  %v6839 = vld [vmem:[%s14 + $0xf8] sm:$0xff]
  %v6840 = vld [vmem:[%s14 + $0x100] sm:$0xff]
  %v6841 = vld [vmem:[%s14 + $0x108] sm:$0xff]
  %v6842 = vld [vmem:[%s14 + $0x110] sm:$0xff]
  %v6843 = vld [vmem:[%s14 + $0x118] sm:$0xff]
  %v6844 = vld [vmem:[%s14 + $0x120] sm:$0xff]
  %v6845 = vld [vmem:[%s14 + $0x128] sm:$0xff]
  %v6846 = vld [vmem:[%s14 + $0x130] sm:$0xff]
  %v6847 = vld [vmem:[%s14 + $0x138] sm:$0xff]
  %v6848 = vld [vmem:[%s14 + $0x140] sm:$0xff]
  %v6849 = vld [vmem:[%s14 + $0x148] sm:$0xff]
  %v6850 = vld [vmem:[%s14 + $0x150] sm:$0xff]
  %v6851 = vld [vmem:[%s14 + $0x158] sm:$0xff]
  %v6852 = vld [vmem:[%s14 + $0x160] sm:$0xff]
  %v6853 = vld [vmem:[%s14 + $0x168] sm:$0xff]
  %v6854 = vld [vmem:[%s14 + $0x170] sm:$0xff]
  %v6855 = vld [vmem:[%s14 + $0x178] sm:$0xff]
  %v6856 = vld [vmem:[%s14 + $0x180] sm:$0xff]
  %v6857 = vld [vmem:[%s14 + $0x188] sm:$0xff]
  %v6858 = vld [vmem:[%s14 + $0x190] sm:$0xff]
  %v6859 = vld [vmem:[%s14 + $0x198] sm:$0xff]
  %v6860 = vld [vmem:[%s14 + $0x1a0] sm:$0xff]
  %v6861 = vld [vmem:[%s14 + $0x1a8] sm:$0xff]
  %v6862 = vld [vmem:[%s14 + $0x1b0] sm:$0xff]
  %v6863 = vld [vmem:[%s14 + $0x1b8] sm:$0xff]
  %v6864 = vld [vmem:[%s14 + $0x1c0] sm:$0xff]
  %v6865 = vld [vmem:[%s14 + $0x1c8] sm:$0xff]
  %v6866 = vld [vmem:[%s14 + $0x1d0] sm:$0xff]
  %v6867 = vld [vmem:[%s14 + $0x1d8] sm:$0xff]
  %v6868 = vld [vmem:[%s14 + $0x1e0] sm:$0xff]
  %v6869 = vld [vmem:[%s14 + $0x1e8] sm:$0xff]
  %v6870 = vld [vmem:[%s14 + $0x1f0] sm:$0xff]
  %v6871 = vld [vmem:[%s14 + $0x1f8] sm:$0xff]
  %v6872 = vld [vmem:[%s14 + $0x200] sm:$0xff]
  %v6873 = vld [vmem:[%s14 + $0x208] sm:$0xff]
  %v6874 = vld [vmem:[%s14 + $0x210] sm:$0xff]
  %v6875 = vld [vmem:[%s14 + $0x218] sm:$0xff]
  %v6876 = vld [vmem:[%s14 + $0x220] sm:$0xff]
  %v6877 = vld [vmem:[%s14 + $0x228] sm:$0xff]
  %v6878 = vld [vmem:[%s14 + $0x230] sm:$0xff]
  %v6879 = vld [vmem:[%s14 + $0x238] sm:$0xff]
  %v6880 = vld [vmem:[%s14 + $0x240] sm:$0xff]
  %v6881 = vld [vmem:[%s14 + $0x248] sm:$0xff]
  %v6882 = vld [vmem:[%s14 + $0x250] sm:$0xff]
  %v6883 = vld [vmem:[%s14 + $0x258] sm:$0xff]
  %v6884 = vld [vmem:[%s14 + $0x260] sm:$0xff]
  %v6885 = vld [vmem:[%s14 + $0x268] sm:$0xff]
  %v6886 = vld [vmem:[%s14 + $0x270] sm:$0xff]
  %v6887 = vld [vmem:[%s14 + $0x278] sm:$0xff]
  %v6888 = vld [vmem:[%s14 + $0x280] sm:$0xff]
  %v6889 = vld [vmem:[%s14 + $0x288] sm:$0xff]
  %v6890 = vld [vmem:[%s14 + $0x290] sm:$0xff]
  %v6891 = vld [vmem:[%s14 + $0x298] sm:$0xff]
  %v6892 = vld [vmem:[%s14 + $0x2a0] sm:$0xff]
  %v6893 = vld [vmem:[%s14 + $0x2a8] sm:$0xff]
  %v6894 = vld [vmem:[%s14 + $0x2b0] sm:$0xff]
  %v6895 = vld [vmem:[%s14 + $0x2b8] sm:$0xff]
  %v6896 = vld [vmem:[%s14 + $0x2c0] sm:$0xff]
  %v6897 = vld [vmem:[%s14 + $0x2c8] sm:$0xff]
  %v6898 = vld [vmem:[%s14 + $0x2d0] sm:$0xff]
  %v6899 = vld [vmem:[%s14 + $0x2d8] sm:$0xff]
  %v6900 = vld [vmem:[%s14 + $0x2e0] sm:$0xff]
  %v6901 = vld [vmem:[%s14 + $0x2e8] sm:$0xff]
  %v6902 = vld [vmem:[%s14 + $0x2f0] sm:$0xff]
  %v6903 = vld [vmem:[%s14 + $0x2f8] sm:$0xff]
  %v6904 = vld [vmem:[%s14 + $0x300] sm:$0xff]
  %v6905 = vld [vmem:[%s14 + $0x308] sm:$0xff]
  %v6906 = vld [vmem:[%s14 + $0x310] sm:$0xff]
  %v6907 = vld [vmem:[%s14 + $0x318] sm:$0xff]
  %v6908 = vld [vmem:[%s14 + $0x320] sm:$0xff]
  %v6909 = vld [vmem:[%s14 + $0x328] sm:$0xff]
  %v6910 = vld [vmem:[%s14 + $0x330] sm:$0xff]
  %v6911 = vld [vmem:[%s14 + $0x338] sm:$0xff]
  %v6912 = vld [vmem:[%s14 + $0x340] sm:$0xff]
  %v6913 = vld [vmem:[%s14 + $0x348] sm:$0xff]
  %v6914 = vld [vmem:[%s14 + $0x350] sm:$0xff]
  %v6915 = vld [vmem:[%s14 + $0x358] sm:$0xff]
  %v6916 = vld [vmem:[%s14 + $0x360] sm:$0xff]
  %v6917 = vld [vmem:[%s14 + $0x368] sm:$0xff]
  %v6918 = vld [vmem:[%s14 + $0x370] sm:$0xff]
  %v6919 = vld [vmem:[%s14 + $0x378] sm:$0xff]
  %v6920 = vld [vmem:[%s14 + $0x380] sm:$0xff]
  %v6921 = vld [vmem:[%s14 + $0x388] sm:$0xff]
  %v6922 = vld [vmem:[%s14 + $0x390] sm:$0xff]
  %v6923 = vld [vmem:[%s14 + $0x398] sm:$0xff]
  %v6924 = vld [vmem:[%s14 + $0x3a0] sm:$0xff]
  %v6925 = vld [vmem:[%s14 + $0x3a8] sm:$0xff]
  %v6926 = vld [vmem:[%s14 + $0x3b0] sm:$0xff]
  %v6927 = vld [vmem:[%s14 + $0x3b8] sm:$0xff]
  %v6928 = vld [vmem:[%s14 + $0x3c0] sm:$0xff]
  %v6929 = vld [vmem:[%s14 + $0x3c8] sm:$0xff]
  %v6930 = vld [vmem:[%s14 + $0x3d0] sm:$0xff]
  %v6931 = vld [vmem:[%s14 + $0x3d8] sm:$0xff]
  %v6932 = vld [vmem:[%s14 + $0x3e0] sm:$0xff]
  %v6933 = vld [vmem:[%s14 + $0x3e8] sm:$0xff]
  %v6934 = vld [vmem:[%s14 + $0x3f0] sm:$0xff]
  %v6935 = vld [vmem:[%s14 + $0x3f8] sm:$0xff]
  %v6936 = vld [vmem:[%s14 + $0x400] sm:$0xff]
  %v6937 = vld [vmem:[%s14 + $0x408] sm:$0xff]
  %v6938 = vld [vmem:[%s14 + $0x410] sm:$0xff]
  %v6939 = vld [vmem:[%s14 + $0x418] sm:$0xff]
  %v6940 = vld [vmem:[%s14 + $0x420] sm:$0xff]
  %v6941 = vld [vmem:[%s14 + $0x428] sm:$0xff]
  %v6942 = vld [vmem:[%s14 + $0x430] sm:$0xff]
  %v6943 = vld [vmem:[%s14 + $0x438] sm:$0xff]
  %v6944 = vld [vmem:[%s14 + $0x440] sm:$0xff]
  %v6945 = vld [vmem:[%s14 + $0x448] sm:$0xff]
  %v6946 = vld [vmem:[%s14 + $0x450] sm:$0xff]
  %v6947 = vld [vmem:[%s14 + $0x458] sm:$0xff]
  %v6948 = vld [vmem:[%s14 + $0x460] sm:$0xff]
  %v6949 = vld [vmem:[%s14 + $0x468] sm:$0xff]
  %v6950 = vld [vmem:[%s14 + $0x470] sm:$0xff]
  %v6951 = vld [vmem:[%s14 + $0x478] sm:$0xff]
  %v6952 = vld [vmem:[%s14 + $0x480] sm:$0xff]
  %v6953 = vld [vmem:[%s14 + $0x488] sm:$0xff]
  %v6954 = vld [vmem:[%s14 + $0x490] sm:$0x7f]
  %v6955 = vld [vmem:[%s14 + $0x498] sm:$0x7f]
  %vm6956 = vcmask 646144
  %v6958 = vsel %vm6956, %v6792, 0
  %v6961 = vsel %vm6956, %v6797, 0
  %v6964 = vsel %vm6956, %v6802, 0
  %v6967 = vsel %vm6956, %v6807, 0
  %vm6969 = vcmask 1046528
  %v6971 = vsel %vm6969, %v6954, 0
  %v6974 = vsel %vm6969, %v6955, 0
  %6976 = vmatprep.subr.mxu0 %v6809
  %6977 = vmatpush1.msra.mxu0 %v6808
  %6978 = vmatprep.subr.mxu0 %v6811
  %6979 = vmatpush1.msra.mxu0 %v6810
  %6980 = vmatprep.subr.mxu0 %v6813
  %6981 = vmatpush1.msra.mxu0 %v6812
  %6982 = vmatprep.subr.mxu0 %v6815
  %6983 = vmatpush1.msra.mxu0 %v6814
  %6984 = vmatprep.subr.mxu0 %v6817
  %6985 = vmatpush1.msra.mxu0 %v6816
  %6986 = vmatprep.subr.mxu0 %v6819
  %6987 = vmatpush1.msra.mxu0 %v6818
  %6988 = vmatprep.subr.mxu0 %v6821
  %6989 = vmatpush1.msra.mxu0 %v6820
  %6990 = vmatprep.subr.mxu0 %v6823
  %6991 = vmatpush1.msra.mxu0 %v6822
  %6992 = vmatprep.subr.mxu0 %v6825
  %6993 = vmatpush1.msra.mxu0 %v6824
  %6994 = vmatprep.subr.mxu0 %v6827
  %6995 = vmatpush1.msra.mxu0 %v6826
  %6996 = vmatprep.subr.mxu0 %v6829
  %6997 = vmatpush1.msra.mxu0 %v6828
  %6998 = vmatprep.subr.mxu0 %v6831
  %6999 = vmatpush1.msra.mxu0 %v6830
  %7000 = vmatprep.subr.mxu0 %v6833
  %7001 = vmatpush1.msra.mxu0 %v6832
  %7002 = vmatprep.subr.mxu0 %v6835
  %7003 = vmatpush1.msra.mxu0 %v6834
  %7004 = vmatprep.subr.mxu0 %v6837
  %7005 = vmatpush1.msra.mxu0 %v6836
  %7006 = vmatprep.subr.mxu0 %v6839
  %7007 = vmatpush1.msra.mxu0 %v6838
  %7008 = vmatprep.subr.mxu0 %v6841
  %7009 = vmatpush1.msra.mxu0 %v6840
  %7010 = vmatprep.subr.mxu0 %v6843
  %7011 = vmatpush1.msra.mxu0 %v6842
  %7012 = vmatprep.subr.mxu0 %v6845
  %7013 = vmatpush1.msra.mxu0 %v6844
  %7014 = vmatprep.subr.mxu0 %v6847
  %7015 = vmatpush1.msra.mxu0 %v6846
  %7016 = vmatprep.subr.mxu0 %v6849
  %7017 = vmatpush1.msra.mxu0 %v6848
  %7018 = vmatprep.subr.mxu0 %v6851
  %7019 = vmatpush1.msra.mxu0 %v6850
  %7020 = vmatprep.subr.mxu0 %v6853
  %7021 = vmatpush1.msra.mxu0 %v6852
  %7022 = vmatprep.subr.mxu0 %v6855
  %7023 = vmatpush1.msra.mxu0 %v6854
  %7024 = vmatprep.subr.mxu0 %v6857
  %7025 = vmatpush1.msra.mxu0 %v6856
  %7026 = vmatprep.subr.mxu0 %v6859
  %7027 = vmatpush1.msra.mxu0 %v6858
  %7028 = vmatprep.subr.mxu0 %v6861
  %7029 = vmatpush1.msra.mxu0 %v6860
  %7030 = vmatprep.subr.mxu0 %v6863
  %7031 = vmatpush1.msra.mxu0 %v6862
  %7032 = vmatprep.subr.mxu0 %v6865
  %7033 = vmatpush1.msra.mxu0 %v6864
  %7034 = vmatprep.subr.mxu0 %v6867
  %7035 = vmatpush1.msra.mxu0 %v6866
  %7036 = vmatprep.subr.mxu0 %v6869
  %7037 = vmatpush1.msra.mxu0 %v6868
  %7038 = vmatprep.subr.mxu0 %v6871
  %7039 = vmatpush1.msra.mxu0 %v6870
  %7040 = vmatprep.mubr.f32.mxu0 %v6789
  %7041 = vmatmul.mubr.f32.gmra.mrb[0].mxu0 %v6788
  %v7042 = vpop.f32.mrb[0].mxu0
  %v7043 = vadd.f32 0.0, %v7042
  %v7044 = vpop.f32.mrb[0].mxu0
  %v7045 = vadd.f32 0.0, %v7044
  %7046 = vmatprep.mubr.f32.mxu0 %v6794
  %7047 = vmatmul.mubr.f32.gmra.mrb[0].mxu0 %v6793
  %v7048 = vpop.f32.mrb[0].mxu0
  %v7049 = vadd.f32 0.0, %v7048
  %v7050 = vpop.f32.mrb[0].mxu0
  %v7051 = vadd.f32 0.0, %v7050
  %7052 = vmatprep.mubr.f32.mxu0 %v6799
  %7053 = vmatmul.mubr.f32.gmra.mrb[0].mxu0 %v6798
  %v7054 = vpop.f32.mrb[0].mxu0
  %v7055 = vadd.f32 0.0, %v7054
  %v7056 = vpop.f32.mrb[0].mxu0
  %v7057 = vadd.f32 0.0, %v7056
  %7058 = vmatprep.mubr.f32.mxu0 %v6804
  %7059 = vmatmul.mubr.f32.gmra.mrb[0].mxu0 %v6803
  %v7060 = vpop.f32.mrb[0].mxu0
  %v7061 = vadd.f32 0.0, %v7060
  %v7062 = vpop.f32.mrb[0].mxu0
  %v7063 = vadd.f32 0.0, %v7062
  %7064 = vdwg.mxu0
  %7065 = vmatprep.subr.mxu0 %v6873
  %7066 = vmatpush1.msra.mxu0 %v6872
  %7067 = vmatprep.subr.mxu0 %v6875
  %7068 = vmatpush1.msra.mxu0 %v6874
  %7069 = vmatprep.subr.mxu0 %v6877
  %7070 = vmatpush1.msra.mxu0 %v6876
  %7071 = vmatprep.subr.mxu0 %v6879
  %7072 = vmatpush1.msra.mxu0 %v6878
  %7073 = vmatprep.subr.mxu0 %v6881
  %7074 = vmatpush1.msra.mxu0 %v6880
  %7075 = vmatprep.subr.mxu0 %v6883
  %7076 = vmatpush1.msra.mxu0 %v6882
  %7077 = vmatprep.subr.mxu0 %v6885
  %7078 = vmatpush1.msra.mxu0 %v6884
  %7079 = vmatprep.subr.mxu0 %v6887
  %7080 = vmatpush1.msra.mxu0 %v6886
  %7081 = vmatprep.subr.mxu0 %v6889
  %7082 = vmatpush1.msra.mxu0 %v6888
  %7083 = vmatprep.subr.mxu0 %v6891
  %7084 = vmatpush1.msra.mxu0 %v6890
  %7085 = vmatprep.subr.mxu0 %v6893
  %7086 = vmatpush1.msra.mxu0 %v6892
  %7087 = vmatprep.subr.mxu0 %v6895
  %7088 = vmatpush1.msra.mxu0 %v6894
  %7089 = vmatprep.subr.mxu0 %v6897
  %7090 = vmatpush1.msra.mxu0 %v6896
  %7091 = vmatprep.subr.mxu0 %v6899
  %7092 = vmatpush1.msra.mxu0 %v6898
  %7093 = vmatprep.subr.mxu0 %v6901
  %7094 = vmatpush1.msra.mxu0 %v6900
  %7095 = vmatprep.subr.mxu0 %v6903
  %7096 = vmatpush1.msra.mxu0 %v6902
  %7097 = vmatprep.subr.mxu0 %v6905
  %7098 = vmatpush1.msra.mxu0 %v6904
  %7099 = vmatprep.subr.mxu0 %v6907
  %7100 = vmatpush1.msra.mxu0 %v6906
  %7101 = vmatprep.subr.mxu0 %v6909
  %7102 = vmatpush1.msra.mxu0 %v6908
  %7103 = vmatprep.subr.mxu0 %v6911
  %7104 = vmatpush1.msra.mxu0 %v6910
  %7105 = vmatprep.subr.mxu0 %v6913
  %7106 = vmatpush1.msra.mxu0 %v6912
  %7107 = vmatprep.subr.mxu0 %v6915
  %7108 = vmatpush1.msra.mxu0 %v6914
  %7109 = vmatprep.subr.mxu0 %v6917
  %7110 = vmatpush1.msra.mxu0 %v6916
  %7111 = vmatprep.subr.mxu0 %v6919
  %7112 = vmatpush1.msra.mxu0 %v6918
  %7113 = vmatprep.subr.mxu0 %v6921
  %7114 = vmatpush1.msra.mxu0 %v6920
  %7115 = vmatprep.subr.mxu0 %v6923
  %7116 = vmatpush1.msra.mxu0 %v6922
  %7117 = vmatprep.subr.mxu0 %v6925
  %7118 = vmatpush1.msra.mxu0 %v6924
  %7119 = vmatprep.subr.mxu0 %v6927
  %7120 = vmatpush1.msra.mxu0 %v6926
  %7121 = vmatprep.subr.mxu0 %v6929
  %7122 = vmatpush1.msra.mxu0 %v6928
  %7123 = vmatprep.subr.mxu0 %v6931
  %7124 = vmatpush1.msra.mxu0 %v6930
  %7125 = vmatprep.subr.mxu0 %v6933
  %7126 = vmatpush1.msra.mxu0 %v6932
  %7127 = vmatprep.subr.mxu0 %v6935
  %7128 = vmatpush1.msra.mxu0 %v6934
  %7129 = vmatprep.mubr.f32.mxu0 %v6791
  %7130 = vmatmul.mubr.f32.gmra.mrb[0].mxu0 %v6790
  %v7131 = vpop.f32.mrb[0].mxu0
  %v7132 = vadd.f32 %v7043, %v7131
  %v7133 = vpop.f32.mrb[0].mxu0
  %v7134 = vadd.f32 %v7045, %v7133
  %7135 = vmatprep.mubr.f32.mxu0 %v6796
  %7136 = vmatmul.mubr.f32.gmra.mrb[0].mxu0 %v6795
  %v7137 = vpop.f32.mrb[0].mxu0
  %v7138 = vadd.f32 %v7049, %v7137
  %v7139 = vpop.f32.mrb[0].mxu0
  %v7140 = vadd.f32 %v7051, %v7139
  %7141 = vmatprep.mubr.f32.mxu0 %v6801
  %7142 = vmatmul.mubr.f32.gmra.mrb[0].mxu0 %v6800
  %v7143 = vpop.f32.mrb[0].mxu0
  %v7144 = vadd.f32 %v7055, %v7143
  %v7145 = vpop.f32.mrb[0].mxu0
  %v7146 = vadd.f32 %v7057, %v7145
  %7147 = vmatprep.mubr.f32.mxu0 %v6806
  %7148 = vmatmul.mubr.f32.gmra.mrb[0].mxu0 %v6805
  %v7149 = vpop.f32.mrb[0].mxu0
  %v7150 = vadd.f32 %v7061, %v7149
  %v7151 = vpop.f32.mrb[0].mxu0
  %v7152 = vadd.f32 %v7063, %v7151
  %7153 = vdwg.mxu0
  %7154 = vmatprep.subr.mxu0 %v6937
  %7155 = vmatpush1.msra.mxu0 %v6936
  %7156 = vmatprep.subr.mxu0 %v6939
  %7157 = vmatpush1.msra.mxu0 %v6938
  %7158 = vmatprep.subr.mxu0 %v6941
  %7159 = vmatpush1.msra.mxu0 %v6940
  %7160 = vmatprep.subr.mxu0 %v6943
  %7161 = vmatpush1.msra.mxu0 %v6942
  %7162 = vmatprep.subr.mxu0 %v6945
  %7163 = vmatpush1.msra.mxu0 %v6944
  %7164 = vmatprep.subr.mxu0 %v6947
  %7165 = vmatpush1.msra.mxu0 %v6946
  %7166 = vmatprep.subr.mxu0 %v6949
  %7167 = vmatpush1.msra.mxu0 %v6948
  %7168 = vmatprep.subr.mxu0 %v6951
  %7169 = vmatpush1.msra.mxu0 %v6950
  %7170 = vmatprep.subr.mxu0 %v6953
  %7171 = vmatpush1.msra.mxu0 %v6952
  %7172 = vmatprep.subr.mxu0 %v6974
  %7173 = vmatpush1.msra.mxu0 %v6971
  %7174 = vmatprep.subr.mxu0 0.0
  %7175 = vmatpush1.msra.mxu0 0.0
  %7176 = vmatprep.subr.mxu0 0.0
  %7177 = vmatpush1.msra.mxu0 0.0
  %7178 = vmatprep.subr.mxu0 0.0
  %7179 = vmatpush1.msra.mxu0 0.0
  %7180 = vmatprep.subr.mxu0 0.0
  %7181 = vmatpush1.msra.mxu0 0.0
  %7182 = vmatprep.subr.mxu0 0.0
  %7183 = vmatpush1.msra.mxu0 0.0
  %7184 = vmatprep.subr.mxu0 0.0
  %7185 = vmatpush1.msra.mxu0 0.0
  %7186 = vmatprep.subr.mxu0 0.0
  %7187 = vmatpush1.msra.mxu0 0.0
  %7188 = vmatprep.subr.mxu0 0.0
  %7189 = vmatpush1.msra.mxu0 0.0
  %7190 = vmatprep.subr.mxu0 0.0
  %7191 = vmatpush1.msra.mxu0 0.0
  %7192 = vmatprep.subr.mxu0 0.0
  %7193 = vmatpush1.msra.mxu0 0.0
  %7194 = vmatprep.subr.mxu0 0.0
  %7195 = vmatpush1.msra.mxu0 0.0
  %7196 = vmatprep.subr.mxu0 0.0
  %7197 = vmatpush1.msra.mxu0 0.0
  %7198 = vmatprep.subr.mxu0 0.0
  %7199 = vmatpush1.msra.mxu0 0.0
  %7200 = vmatprep.subr.mxu0 0.0
  %7201 = vmatpush1.msra.mxu0 0.0
  %7202 = vmatprep.subr.mxu0 0.0
  %7203 = vmatpush1.msra.mxu0 0.0
  %7204 = vmatprep.subr.mxu0 0.0
  %7205 = vmatpush1.msra.mxu0 0.0
  %7206 = vmatprep.subr.mxu0 0.0
  %7207 = vmatpush1.msra.mxu0 0.0
  %7208 = vmatprep.subr.mxu0 0.0
  %7209 = vmatpush1.msra.mxu0 0.0
  %7210 = vmatprep.subr.mxu0 0.0
  %7211 = vmatpush1.msra.mxu0 0.0
  %7212 = vmatprep.subr.mxu0 0.0
  %7213 = vmatpush1.msra.mxu0 0.0
  %7214 = vmatprep.subr.mxu0 0.0
  %7215 = vmatpush1.msra.mxu0 0.0
  %7216 = vmatprep.subr.mxu0 0.0
  %7217 = vmatpush1.msra.mxu0 0.0
  %7218 = vmatprep.mubr.f32.mxu0 0.0
  %7219 = vmatmul.mubr.f32.gmra.mrb[0].mxu0 %v6958
  %v7220 = vpop.f32.mrb[0].mxu0
  %v7221 = vadd.f32 %v7132, %v7220
  %v7222 = vpop.f32.mrb[0].mxu0
  %v7223 = vadd.f32 %v7134, %v7222
  %7224 = vmatprep.mubr.f32.mxu0 0.0
  %7225 = vmatmul.mubr.f32.gmra.mrb[0].mxu0 %v6961
  %v7226 = vpop.f32.mrb[0].mxu0
  %v7227 = vadd.f32 %v7138, %v7226
  %v7228 = vpop.f32.mrb[0].mxu0
  %v7229 = vadd.f32 %v7140, %v7228
  %7230 = vmatprep.mubr.f32.mxu0 0.0
  %7231 = vmatmul.mubr.f32.gmra.mrb[0].mxu0 %v6964
  %v7232 = vpop.f32.mrb[0].mxu0
  %v7233 = vadd.f32 %v7144, %v7232
  %v7234 = vpop.f32.mrb[0].mxu0
  %v7235 = vadd.f32 %v7146, %v7234
  %7236 = vmatprep.mubr.f32.mxu0 0.0
  %7237 = vmatmul.mubr.f32.gmra.mrb[0].mxu0 %v6967
  %v7238 = vpop.f32.mrb[0].mxu0
  %v7239 = vadd.f32 %v7150, %v7238
  %v7240 = vpop.f32.mrb[0].mxu0
  %v7241 = vadd.f32 %v7152, %v7240
  %7242 = vdwg.mxu0
  %7243 = vst [vmem:[#allocation3] sm:$0xff] %v7221
  %vm7244 = vcmask 588800
  %7245 = vst.msk [vmem:[#allocation3 + $0x8] sm:$0xff] %vm7244, %v7223
  %7246 = vst [vmem:[#allocation3 + $0x10] sm:$0xff] %v7227
  %7247 = vst.msk [vmem:[#allocation3 + $0x18] sm:$0xff] %vm7244, %v7229
  %7248 = vst [vmem:[#allocation3 + $0x20] sm:$0xff] %v7233
  %7249 = vst.msk [vmem:[#allocation3 + $0x28] sm:$0xff] %vm7244, %v7235
  %7250 = vst [vmem:[#allocation3 + $0x30] sm:$0xff] %v7239
  %7251 = vst.msk [vmem:[#allocation3 + $0x38] sm:$0xff] %vm7244, %v7241
  %v7252 = vld [vmem:[%s3] sm:$0xff]
  %v7253 = vld [vmem:[%s3 + $0x18] sm:$0xff]
  %v7254 = vld [vmem:[%s3 + $0x30] sm:$0xff]
  %v7255 = vld [vmem:[%s3 + $0x48] sm:$0xff]
  %v7256 = vld [vmem:[#allocation3] sm:$0xff]
  %v7257 = vld [vmem:[#allocation3 + $0x8] sm:$0xff]
  %v7258 = vld [vmem:[#allocation3 + $0x10] sm:$0xff]
  %v7259 = vld [vmem:[#allocation3 + $0x18] sm:$0xff]
  %v7260 = vld [vmem:[#allocation3 + $0x20] sm:$0xff]
  %v7261 = vld [vmem:[#allocation3 + $0x28] sm:$0xff]
  %v7262 = vld [vmem:[#allocation3 + $0x30] sm:$0xff]
  %v7263 = vld [vmem:[#allocation3 + $0x38] sm:$0xff]
  %7268 = vrot.lane.b32.xlu0 %v7252, 96
  %v7269 = vpop.permute.xlu0 %7268
  %7270 = vrot.lane.b32.xlu0 %v7253, 96
  %v7271 = vpop.permute.xlu0 %7270
  %7272 = vrot.lane.b32.xlu0 %v7254, 96
  %v7273 = vpop.permute.xlu0 %7272
  %7274 = vrot.lane.b32.xlu0 %v7255, 96
  %v7275 = vpop.permute.xlu0 %7274
  %7284 = vrot.lane.b32.xlu0 %v7256, 127
  %v7285 = vpop.permute.xlu0 %7284
  %7286 = vrot.lane.b32.xlu0 %v7257, 127
  %v7287 = vpop.permute.xlu0 %7286
  %7288 = vrot.lane.b32.xlu0 %v7258, 127
  %v7289 = vpop.permute.xlu0 %7288
  %7290 = vrot.lane.b32.xlu0 %v7259, 127
  %v7291 = vpop.permute.xlu0 %7290
  %7292 = vrot.lane.b32.xlu0 %v7260, 127
  %v7293 = vpop.permute.xlu0 %7292
  %7294 = vrot.lane.b32.xlu0 %v7261, 127
  %v7295 = vpop.permute.xlu0 %7294
  %7296 = vrot.lane.b32.xlu0 %v7262, 127
  %v7297 = vpop.permute.xlu0 %7296
  %7298 = vrot.lane.b32.xlu0 %v7263, 127
  %v7299 = vpop.permute.xlu0 %7298
  %v7300 = vsel %vm98, %v7285, %v7287
  %v7301 = vsel %vm98, %v7289, %v7291
  %v7302 = vsel %vm98, %v7293, %v7295
  %v7303 = vsel %vm98, %v7297, %v7299
  %v7312 = vsel %vm3260, %v7269, 0
  %v7314 = vsel %vm3260, %v7271, 0
  %v7316 = vsel %vm3260, %v7273, 0
  %v7318 = vsel %vm3260, %v7275, 0
  %7320 = vmatprep.subr.mxu0 %v7287
  %7321 = vmatpush1.msra.mxu0 %v7300
  %7322 = vmatprep.subr.mxu0 %v7291
  %7323 = vmatpush1.msra.mxu0 %v7301
  %7324 = vmatprep.subr.mxu0 %v7295
  %7325 = vmatpush1.msra.mxu0 %v7302
  %7326 = vmatprep.subr.mxu0 %v7299
  %7327 = vmatpush1.msra.mxu0 %v7303
  %7328 = vmatprep.subr.mxu0 0.0
  %7329 = vmatpush1.msra.mxu0 0.0
  %7330 = vmatprep.subr.mxu0 0.0
  %7331 = vmatpush1.msra.mxu0 0.0
  %7332 = vmatprep.subr.mxu0 0.0
  %7333 = vmatpush1.msra.mxu0 0.0
  %7334 = vmatprep.subr.mxu0 0.0
  %7335 = vmatpush1.msra.mxu0 0.0
  %7336 = vmatprep.subr.mxu0 0.0
  %7337 = vmatpush1.msra.mxu0 0.0
  %7338 = vmatprep.subr.mxu0 0.0
  %7339 = vmatpush1.msra.mxu0 0.0
  %7340 = vmatprep.subr.mxu0 0.0
  %7341 = vmatpush1.msra.mxu0 0.0
  %7342 = vmatprep.subr.mxu0 0.0
  %7343 = vmatpush1.msra.mxu0 0.0
  %7344 = vmatprep.subr.mxu0 0.0
  %7345 = vmatpush1.msra.mxu0 0.0
  %7346 = vmatprep.subr.mxu0 0.0
  %7347 = vmatpush1.msra.mxu0 0.0
  %7348 = vmatprep.subr.mxu0 0.0
  %7349 = vmatpush1.msra.mxu0 0.0
  %7350 = vmatprep.subr.mxu0 0.0
  %7351 = vmatpush1.msra.mxu0 0.0
  %7352 = vmatprep.subr.mxu0 0.0
  %7353 = vmatpush1.msra.mxu0 0.0
  %7354 = vmatprep.subr.mxu0 0.0
  %7355 = vmatpush1.msra.mxu0 0.0
  %7356 = vmatprep.subr.mxu0 0.0
  %7357 = vmatpush1.msra.mxu0 0.0
  %7358 = vmatprep.subr.mxu0 0.0
  %7359 = vmatpush1.msra.mxu0 0.0
  %7360 = vmatprep.subr.mxu0 0.0
  %7361 = vmatpush1.msra.mxu0 0.0
  %7362 = vmatprep.subr.mxu0 0.0
  %7363 = vmatpush1.msra.mxu0 0.0
  %7364 = vmatprep.subr.mxu0 0.0
  %7365 = vmatpush1.msra.mxu0 0.0
  %7366 = vmatprep.subr.mxu0 0.0
  %7367 = vmatpush1.msra.mxu0 0.0
  %7368 = vmatprep.subr.mxu0 0.0
  %7369 = vmatpush1.msra.mxu0 0.0
  %7370 = vmatprep.subr.mxu0 0.0
  %7371 = vmatpush1.msra.mxu0 0.0
  %7372 = vmatprep.subr.mxu0 0.0
  %7373 = vmatpush1.msra.mxu0 0.0
  %7374 = vmatprep.subr.mxu0 0.0
  %7375 = vmatpush1.msra.mxu0 0.0
  %7376 = vmatprep.subr.mxu0 0.0
  %7377 = vmatpush1.msra.mxu0 0.0
  %7378 = vmatprep.subr.mxu0 0.0
  %7379 = vmatpush1.msra.mxu0 0.0
  %7380 = vmatprep.subr.mxu0 0.0
  %7381 = vmatpush1.msra.mxu0 0.0
  %7382 = vmatprep.subr.mxu0 0.0
  %7383 = vmatpush1.msra.mxu0 0.0
  %7384 = vmatprep.mubr.f32.mxu0 0.0
  %7385 = vmatmul.mubr.f32.gmra.mrb[0].mxu0 %v7312
  %v7386 = vpop.f32.mrb[0].mxu0
  %v7387 = vadd.f32 0.0, %v7386
  %v7388 = vpop.f32.mrb[0].mxu0
  %v7389 = vadd.f32 0.0, %v7388
  %7390 = vmatprep.mubr.f32.mxu0 0.0
  %7391 = vmatmul.mubr.f32.gmra.mrb[0].mxu0 %v7314
  %v7392 = vpop.f32.mrb[0].mxu0
  %v7393 = vadd.f32 0.0, %v7392
  %v7394 = vpop.f32.mrb[0].mxu0
  %v7395 = vadd.f32 0.0, %v7394
  %7396 = vmatprep.mubr.f32.mxu0 0.0
  %7397 = vmatmul.mubr.f32.gmra.mrb[0].mxu0 %v7316
  %v7398 = vpop.f32.mrb[0].mxu0
  %v7399 = vadd.f32 0.0, %v7398
  %v7400 = vpop.f32.mrb[0].mxu0
  %v7401 = vadd.f32 0.0, %v7400
  %7402 = vmatprep.mubr.f32.mxu0 0.0
  %7403 = vmatmul.mubr.f32.gmra.mrb[0].mxu0 %v7318
  %v7404 = vpop.f32.mrb[0].mxu0
  %v7405 = vadd.f32 0.0, %v7404
  %v7406 = vpop.f32.mrb[0].mxu0
  %v7407 = vadd.f32 0.0, %v7406
  %7408 = vdwg.mxu0
  %v7409 = vsel %vm3260, %v7252, 0
  %v7411 = vsel %vm3260, %v7253, 0
  %v7413 = vsel %vm3260, %v7254, 0
  %v7415 = vsel %vm3260, %v7255, 0
  %7417 = vmatprep.subr.mxu0 %v7257
  %7418 = vmatpush1.msra.mxu0 %v7256
  %7419 = vmatprep.subr.mxu0 %v7259
  %7420 = vmatpush1.msra.mxu0 %v7258
  %7421 = vmatprep.subr.mxu0 %v7261
  %7422 = vmatpush1.msra.mxu0 %v7260
  %7423 = vmatprep.subr.mxu0 %v7263
  %7424 = vmatpush1.msra.mxu0 %v7262
  %7425 = vmatprep.subr.mxu0 0.0
  %7426 = vmatpush1.msra.mxu0 0.0
  %7427 = vmatprep.subr.mxu0 0.0
  %7428 = vmatpush1.msra.mxu0 0.0
  %7429 = vmatprep.subr.mxu0 0.0
  %7430 = vmatpush1.msra.mxu0 0.0
  %7431 = vmatprep.subr.mxu0 0.0
  %7432 = vmatpush1.msra.mxu0 0.0
  %7433 = vmatprep.subr.mxu0 0.0
  %7434 = vmatpush1.msra.mxu0 0.0
  %7435 = vmatprep.subr.mxu0 0.0
  %7436 = vmatpush1.msra.mxu0 0.0
  %7437 = vmatprep.subr.mxu0 0.0
  %7438 = vmatpush1.msra.mxu0 0.0
  %7439 = vmatprep.subr.mxu0 0.0
  %7440 = vmatpush1.msra.mxu0 0.0
  %7441 = vmatprep.subr.mxu0 0.0
  %7442 = vmatpush1.msra.mxu0 0.0
  %7443 = vmatprep.subr.mxu0 0.0
  %7444 = vmatpush1.msra.mxu0 0.0
  %7445 = vmatprep.subr.mxu0 0.0
  %7446 = vmatpush1.msra.mxu0 0.0
  %7447 = vmatprep.subr.mxu0 0.0
  %7448 = vmatpush1.msra.mxu0 0.0
  %7449 = vmatprep.subr.mxu0 0.0
  %7450 = vmatpush1.msra.mxu0 0.0
  %7451 = vmatprep.subr.mxu0 0.0
  %7452 = vmatpush1.msra.mxu0 0.0
  %7453 = vmatprep.subr.mxu0 0.0
  %7454 = vmatpush1.msra.mxu0 0.0
  %7455 = vmatprep.subr.mxu0 0.0
  %7456 = vmatpush1.msra.mxu0 0.0
  %7457 = vmatprep.subr.mxu0 0.0
  %7458 = vmatpush1.msra.mxu0 0.0
  %7459 = vmatprep.subr.mxu0 0.0
  %7460 = vmatpush1.msra.mxu0 0.0
  %7461 = vmatprep.subr.mxu0 0.0
  %7462 = vmatpush1.msra.mxu0 0.0
  %7463 = vmatprep.subr.mxu0 0.0
  %7464 = vmatpush1.msra.mxu0 0.0
  %7465 = vmatprep.subr.mxu0 0.0
  %7466 = vmatpush1.msra.mxu0 0.0
  %7467 = vmatprep.subr.mxu0 0.0
  %7468 = vmatpush1.msra.mxu0 0.0
  %7469 = vmatprep.subr.mxu0 0.0
  %7470 = vmatpush1.msra.mxu0 0.0
  %7471 = vmatprep.subr.mxu0 0.0
  %7472 = vmatpush1.msra.mxu0 0.0
  %7473 = vmatprep.subr.mxu0 0.0
  %7474 = vmatpush1.msra.mxu0 0.0
  %7475 = vmatprep.subr.mxu0 0.0
  %7476 = vmatpush1.msra.mxu0 0.0
  %7477 = vmatprep.subr.mxu0 0.0
  %7478 = vmatpush1.msra.mxu0 0.0
  %7479 = vmatprep.subr.mxu0 0.0
  %7480 = vmatpush1.msra.mxu0 0.0
  %7481 = vmatprep.mubr.f32.mxu0 0.0
  %7482 = vmatmul.mubr.f32.gmra.mrb[0].mxu0 %v7409
  %v7483 = vpop.f32.mrb[0].mxu0
  %v7484 = vadd.f32 %v7387, %v7483
  %v7485 = vpop.f32.mrb[0].mxu0
  %v7486 = vadd.f32 %v7389, %v7485
  %7487 = vmatprep.mubr.f32.mxu0 0.0
  %7488 = vmatmul.mubr.f32.gmra.mrb[0].mxu0 %v7411
  %v7489 = vpop.f32.mrb[0].mxu0
  %v7490 = vadd.f32 %v7393, %v7489
  %v7491 = vpop.f32.mrb[0].mxu0
  %v7492 = vadd.f32 %v7395, %v7491
  %7493 = vmatprep.mubr.f32.mxu0 0.0
  %7494 = vmatmul.mubr.f32.gmra.mrb[0].mxu0 %v7413
  %v7495 = vpop.f32.mrb[0].mxu0
  %v7496 = vadd.f32 %v7399, %v7495
  %v7497 = vpop.f32.mrb[0].mxu0
  %v7498 = vadd.f32 %v7401, %v7497
  %7499 = vmatprep.mubr.f32.mxu0 0.0
  %7500 = vmatmul.mubr.f32.gmra.mrb[0].mxu0 %v7415
  %v7501 = vpop.f32.mrb[0].mxu0
  %v7502 = vadd.f32 %v7405, %v7501
  %v7503 = vpop.f32.mrb[0].mxu0
  %v7504 = vadd.f32 %v7407, %v7503
  %7505 = vdwg.mxu0
  %7506 = vrot.lane.b32.xlu0 %v7252, 64
  %v7507 = vpop.permute.xlu0 %7506
  %7508 = vrot.lane.b32.xlu0 %v7253, 64
  %v7509 = vpop.permute.xlu0 %7508
  %7510 = vrot.lane.b32.xlu0 %v7254, 64
  %v7511 = vpop.permute.xlu0 %7510
  %7512 = vrot.lane.b32.xlu0 %v7255, 64
  %v7513 = vpop.permute.xlu0 %7512
  %7514 = vrot.lane.b32.xlu0 %v7256, 126
  %v7515 = vpop.permute.xlu0 %7514
  %7516 = vrot.lane.b32.xlu0 %v7257, 126
  %v7517 = vpop.permute.xlu0 %7516
  %7518 = vrot.lane.b32.xlu0 %v7258, 126
  %v7519 = vpop.permute.xlu0 %7518
  %7520 = vrot.lane.b32.xlu0 %v7259, 126
  %v7521 = vpop.permute.xlu0 %7520
  %7522 = vrot.lane.b32.xlu0 %v7260, 126
  %v7523 = vpop.permute.xlu0 %7522
  %7524 = vrot.lane.b32.xlu0 %v7261, 126
  %v7525 = vpop.permute.xlu0 %7524
  %7526 = vrot.lane.b32.xlu0 %v7262, 126
  %v7527 = vpop.permute.xlu0 %7526
  %7528 = vrot.lane.b32.xlu0 %v7263, 126
  %v7529 = vpop.permute.xlu0 %7528
  %v7530 = vsel %vm669, %v7515, %v7517
  %v7531 = vsel %vm669, %v7519, %v7521
  %v7532 = vsel %vm669, %v7523, %v7525
  %v7533 = vsel %vm669, %v7527, %v7529
  %v7542 = vsel %vm3260, %v7507, 0
  %v7544 = vsel %vm3260, %v7509, 0
  %v7546 = vsel %vm3260, %v7511, 0
  %v7548 = vsel %vm3260, %v7513, 0
  %7550 = vmatprep.subr.mxu0 %v7517
  %7551 = vmatpush1.msra.mxu0 %v7530
  %7552 = vmatprep.subr.mxu0 %v7521
  %7553 = vmatpush1.msra.mxu0 %v7531
  %7554 = vmatprep.subr.mxu0 %v7525
  %7555 = vmatpush1.msra.mxu0 %v7532
  %7556 = vmatprep.subr.mxu0 %v7529
  %7557 = vmatpush1.msra.mxu0 %v7533
  %7558 = vmatprep.subr.mxu0 0.0
  %7559 = vmatpush1.msra.mxu0 0.0
  %7560 = vmatprep.subr.mxu0 0.0
  %7561 = vmatpush1.msra.mxu0 0.0
  %7562 = vmatprep.subr.mxu0 0.0
  %7563 = vmatpush1.msra.mxu0 0.0
  %7564 = vmatprep.subr.mxu0 0.0
  %7565 = vmatpush1.msra.mxu0 0.0
  %7566 = vmatprep.subr.mxu0 0.0
  %7567 = vmatpush1.msra.mxu0 0.0
  %7568 = vmatprep.subr.mxu0 0.0
  %7569 = vmatpush1.msra.mxu0 0.0
  %7570 = vmatprep.subr.mxu0 0.0
  %7571 = vmatpush1.msra.mxu0 0.0
  %7572 = vmatprep.subr.mxu0 0.0
  %7573 = vmatpush1.msra.mxu0 0.0
  %7574 = vmatprep.subr.mxu0 0.0
  %7575 = vmatpush1.msra.mxu0 0.0
  %7576 = vmatprep.subr.mxu0 0.0
  %7577 = vmatpush1.msra.mxu0 0.0
  %7578 = vmatprep.subr.mxu0 0.0
  %7579 = vmatpush1.msra.mxu0 0.0
  %7580 = vmatprep.subr.mxu0 0.0
  %7581 = vmatpush1.msra.mxu0 0.0
  %7582 = vmatprep.subr.mxu0 0.0
  %7583 = vmatpush1.msra.mxu0 0.0
  %7584 = vmatprep.subr.mxu0 0.0
  %7585 = vmatpush1.msra.mxu0 0.0
  %7586 = vmatprep.subr.mxu0 0.0
  %7587 = vmatpush1.msra.mxu0 0.0
  %7588 = vmatprep.subr.mxu0 0.0
  %7589 = vmatpush1.msra.mxu0 0.0
  %7590 = vmatprep.subr.mxu0 0.0
  %7591 = vmatpush1.msra.mxu0 0.0
  %7592 = vmatprep.subr.mxu0 0.0
  %7593 = vmatpush1.msra.mxu0 0.0
  %7594 = vmatprep.subr.mxu0 0.0
  %7595 = vmatpush1.msra.mxu0 0.0
  %7596 = vmatprep.subr.mxu0 0.0
  %7597 = vmatpush1.msra.mxu0 0.0
  %7598 = vmatprep.subr.mxu0 0.0
  %7599 = vmatpush1.msra.mxu0 0.0
  %7600 = vmatprep.subr.mxu0 0.0
  %7601 = vmatpush1.msra.mxu0 0.0
  %7602 = vmatprep.subr.mxu0 0.0
  %7603 = vmatpush1.msra.mxu0 0.0
  %7604 = vmatprep.subr.mxu0 0.0
  %7605 = vmatpush1.msra.mxu0 0.0
  %7606 = vmatprep.subr.mxu0 0.0
  %7607 = vmatpush1.msra.mxu0 0.0
  %7608 = vmatprep.subr.mxu0 0.0
  %7609 = vmatpush1.msra.mxu0 0.0
  %7610 = vmatprep.subr.mxu0 0.0
  %7611 = vmatpush1.msra.mxu0 0.0
  %7612 = vmatprep.subr.mxu0 0.0
  %7613 = vmatpush1.msra.mxu0 0.0
  %7614 = vmatprep.mubr.f32.mxu0 0.0
  %7615 = vmatmul.mubr.f32.gmra.mrb[0].mxu0 %v7542
  %v7616 = vpop.f32.mrb[0].mxu0
  %v7617 = vadd.f32 0.0, %v7616
  %v7618 = vpop.f32.mrb[0].mxu0
  %v7619 = vadd.f32 0.0, %v7618
  %7620 = vmatprep.mubr.f32.mxu0 0.0
  %7621 = vmatmul.mubr.f32.gmra.mrb[0].mxu0 %v7544
  %v7622 = vpop.f32.mrb[0].mxu0
  %v7623 = vadd.f32 0.0, %v7622
  %v7624 = vpop.f32.mrb[0].mxu0
  %v7625 = vadd.f32 0.0, %v7624
  %7626 = vmatprep.mubr.f32.mxu0 0.0
  %7627 = vmatmul.mubr.f32.gmra.mrb[0].mxu0 %v7546
  %v7628 = vpop.f32.mrb[0].mxu0
  %v7629 = vadd.f32 0.0, %v7628
  %v7630 = vpop.f32.mrb[0].mxu0
  %v7631 = vadd.f32 0.0, %v7630
  %7632 = vmatprep.mubr.f32.mxu0 0.0
  %7633 = vmatmul.mubr.f32.gmra.mrb[0].mxu0 %v7548
  %v7634 = vpop.f32.mrb[0].mxu0
  %v7635 = vadd.f32 0.0, %v7634
  %v7636 = vpop.f32.mrb[0].mxu0
  %v7637 = vadd.f32 0.0, %v7636
  %7638 = vdwg.mxu0
  %v7639 = vadd.f32 %v7484, %v7617
  %v7640 = vadd.f32 %v7486, %v7619
  %v7641 = vadd.f32 %v7490, %v7623
  %v7642 = vadd.f32 %v7492, %v7625
  %v7643 = vadd.f32 %v7496, %v7629
  %v7644 = vadd.f32 %v7498, %v7631
  %v7645 = vadd.f32 %v7502, %v7635
  %v7646 = vadd.f32 %v7504, %v7637
  %7647 = vrot.lane.b32.xlu0 %v7252, 32
  %v7648 = vpop.permute.xlu0 %7647
  %7649 = vrot.lane.b32.xlu0 %v7253, 32
  %v7650 = vpop.permute.xlu0 %7649
  %7651 = vrot.lane.b32.xlu0 %v7254, 32
  %v7652 = vpop.permute.xlu0 %7651
  %7653 = vrot.lane.b32.xlu0 %v7255, 32
  %v7654 = vpop.permute.xlu0 %7653
  %7655 = vrot.lane.b32.xlu0 %v7256, 118
  %v7656 = vpop.permute.xlu0 %7655
  %7657 = vrot.lane.b32.xlu0 %v7257, 118
  %v7658 = vpop.permute.xlu0 %7657
  %7659 = vrot.lane.b32.xlu0 %v7258, 118
  %v7660 = vpop.permute.xlu0 %7659
  %7661 = vrot.lane.b32.xlu0 %v7259, 118
  %v7662 = vpop.permute.xlu0 %7661
  %7663 = vrot.lane.b32.xlu0 %v7260, 118
  %v7664 = vpop.permute.xlu0 %7663
  %7665 = vrot.lane.b32.xlu0 %v7261, 118
  %v7666 = vpop.permute.xlu0 %7665
  %7667 = vrot.lane.b32.xlu0 %v7262, 118
  %v7668 = vpop.permute.xlu0 %7667
  %7669 = vrot.lane.b32.xlu0 %v7263, 118
  %v7670 = vpop.permute.xlu0 %7669
  %vm7671 = vcmask 965632
  %v7672 = vsel %vm7671, %v7656, %v7658
  %v7673 = vsel %vm7671, %v7660, %v7662
  %v7674 = vsel %vm7671, %v7664, %v7666
  %v7675 = vsel %vm7671, %v7668, %v7670
  %v7684 = vsel %vm3260, %v7648, 0
  %v7686 = vsel %vm3260, %v7650, 0
  %v7688 = vsel %vm3260, %v7652, 0
  %v7690 = vsel %vm3260, %v7654, 0
  %7692 = vmatprep.subr.mxu0 %v7658
  %7693 = vmatpush1.msra.mxu0 %v7672
  %7694 = vmatprep.subr.mxu0 %v7662
  %7695 = vmatpush1.msra.mxu0 %v7673
  %7696 = vmatprep.subr.mxu0 %v7666
  %7697 = vmatpush1.msra.mxu0 %v7674
  %7698 = vmatprep.subr.mxu0 %v7670
  %7699 = vmatpush1.msra.mxu0 %v7675
  %7700 = vmatprep.subr.mxu0 0.0
  %7701 = vmatpush1.msra.mxu0 0.0
  %7702 = vmatprep.subr.mxu0 0.0
  %7703 = vmatpush1.msra.mxu0 0.0
  %7704 = vmatprep.subr.mxu0 0.0
  %7705 = vmatpush1.msra.mxu0 0.0
  %7706 = vmatprep.subr.mxu0 0.0
  %7707 = vmatpush1.msra.mxu0 0.0
  %7708 = vmatprep.subr.mxu0 0.0
  %7709 = vmatpush1.msra.mxu0 0.0
  %7710 = vmatprep.subr.mxu0 0.0
  %7711 = vmatpush1.msra.mxu0 0.0
  %7712 = vmatprep.subr.mxu0 0.0
  %7713 = vmatpush1.msra.mxu0 0.0
  %7714 = vmatprep.subr.mxu0 0.0
  %7715 = vmatpush1.msra.mxu0 0.0
  %7716 = vmatprep.subr.mxu0 0.0
  %7717 = vmatpush1.msra.mxu0 0.0
  %7718 = vmatprep.subr.mxu0 0.0
  %7719 = vmatpush1.msra.mxu0 0.0
  %7720 = vmatprep.subr.mxu0 0.0
  %7721 = vmatpush1.msra.mxu0 0.0
  %7722 = vmatprep.subr.mxu0 0.0
  %7723 = vmatpush1.msra.mxu0 0.0
  %7724 = vmatprep.subr.mxu0 0.0
  %7725 = vmatpush1.msra.mxu0 0.0
  %7726 = vmatprep.subr.mxu0 0.0
  %7727 = vmatpush1.msra.mxu0 0.0
  %7728 = vmatprep.subr.mxu0 0.0
  %7729 = vmatpush1.msra.mxu0 0.0
  %7730 = vmatprep.subr.mxu0 0.0
  %7731 = vmatpush1.msra.mxu0 0.0
  %7732 = vmatprep.subr.mxu0 0.0
  %7733 = vmatpush1.msra.mxu0 0.0
  %7734 = vmatprep.subr.mxu0 0.0
  %7735 = vmatpush1.msra.mxu0 0.0
  %7736 = vmatprep.subr.mxu0 0.0
  %7737 = vmatpush1.msra.mxu0 0.0
  %7738 = vmatprep.subr.mxu0 0.0
  %7739 = vmatpush1.msra.mxu0 0.0
  %7740 = vmatprep.subr.mxu0 0.0
  %7741 = vmatpush1.msra.mxu0 0.0
  %7742 = vmatprep.subr.mxu0 0.0
  %7743 = vmatpush1.msra.mxu0 0.0
  %7744 = vmatprep.subr.mxu0 0.0
  %7745 = vmatpush1.msra.mxu0 0.0
  %7746 = vmatprep.subr.mxu0 0.0
  %7747 = vmatpush1.msra.mxu0 0.0
  %7748 = vmatprep.subr.mxu0 0.0
  %7749 = vmatpush1.msra.mxu0 0.0
  %7750 = vmatprep.subr.mxu0 0.0
  %7751 = vmatpush1.msra.mxu0 0.0
  %7752 = vmatprep.subr.mxu0 0.0
  %7753 = vmatpush1.msra.mxu0 0.0
  %7754 = vmatprep.subr.mxu0 0.0
  %7755 = vmatpush1.msra.mxu0 0.0
  %7756 = vmatprep.mubr.f32.mxu0 0.0
  %7757 = vmatmul.mubr.f32.gmra.mrb[0].mxu0 %v7684
  %v7758 = vpop.f32.mrb[0].mxu0
  %v7759 = vadd.f32 0.0, %v7758
  %v7760 = vpop.f32.mrb[0].mxu0
  %v7761 = vadd.f32 0.0, %v7760
  %7762 = vmatprep.mubr.f32.mxu0 0.0
  %7763 = vmatmul.mubr.f32.gmra.mrb[0].mxu0 %v7686
  %v7764 = vpop.f32.mrb[0].mxu0
  %v7765 = vadd.f32 0.0, %v7764
  %v7766 = vpop.f32.mrb[0].mxu0
  %v7767 = vadd.f32 0.0, %v7766
  %7768 = vmatprep.mubr.f32.mxu0 0.0
  %7769 = vmatmul.mubr.f32.gmra.mrb[0].mxu0 %v7688
  %v7770 = vpop.f32.mrb[0].mxu0
  %v7771 = vadd.f32 0.0, %v7770
  %v7772 = vpop.f32.mrb[0].mxu0
  %v7773 = vadd.f32 0.0, %v7772
  %7774 = vmatprep.mubr.f32.mxu0 0.0
  %7775 = vmatmul.mubr.f32.gmra.mrb[0].mxu0 %v7690
  %v7776 = vpop.f32.mrb[0].mxu0
  %v7777 = vadd.f32 0.0, %v7776
  %v7778 = vpop.f32.mrb[0].mxu0
  %v7779 = vadd.f32 0.0, %v7778
  %7780 = vdwg.mxu0
  %v7781 = vadd.f32 %v7639, %v7759
  %v7782 = vadd.f32 %v7640, %v7761
  %v7783 = vadd.f32 %v7641, %v7765
  %v7784 = vadd.f32 %v7642, %v7767
  %v7785 = vadd.f32 %v7643, %v7771
  %v7786 = vadd.f32 %v7644, %v7773
  %v7787 = vadd.f32 %v7645, %v7777
  %v7788 = vadd.f32 %v7646, %v7779
  %v7789 = vld [vmem:[%s3 + $0x8] sm:$0xff]
  %v7790 = vld [vmem:[%s3 + $0x20] sm:$0xff]
  %v7791 = vld [vmem:[%s3 + $0x38] sm:$0xff]
  %v7792 = vld [vmem:[%s3 + $0x50] sm:$0xff]
  %7793 = vrot.lane.b32.xlu0 %v7256, 117
  %v7794 = vpop.permute.xlu0 %7793
  %7795 = vrot.lane.b32.xlu0 %v7257, 117
  %v7796 = vpop.permute.xlu0 %7795
  %7797 = vrot.lane.b32.xlu0 %v7258, 117
  %v7798 = vpop.permute.xlu0 %7797
  %7799 = vrot.lane.b32.xlu0 %v7259, 117
  %v7800 = vpop.permute.xlu0 %7799
  %7801 = vrot.lane.b32.xlu0 %v7260, 117
  %v7802 = vpop.permute.xlu0 %7801
  %7803 = vrot.lane.b32.xlu0 %v7261, 117
  %v7804 = vpop.permute.xlu0 %7803
  %7805 = vrot.lane.b32.xlu0 %v7262, 117
  %v7806 = vpop.permute.xlu0 %7805
  %7807 = vrot.lane.b32.xlu0 %v7263, 117
  %v7808 = vpop.permute.xlu0 %7807
  %v7809 = vsel %vm3098, %v7794, %v7796
  %v7810 = vsel %vm3098, %v7798, %v7800
  %v7811 = vsel %vm3098, %v7802, %v7804
  %v7812 = vsel %vm3098, %v7806, %v7808
  %v7822 = vsel %vm3260, %v7789, 0
  %v7825 = vsel %vm3260, %v7790, 0
  %v7828 = vsel %vm3260, %v7791, 0
  %v7831 = vsel %vm3260, %v7792, 0
  %7833 = vmatprep.subr.mxu0 %v7796
  %7834 = vmatpush1.msra.mxu0 %v7809
  %7835 = vmatprep.subr.mxu0 %v7800
  %7836 = vmatpush1.msra.mxu0 %v7810
  %7837 = vmatprep.subr.mxu0 %v7804
  %7838 = vmatpush1.msra.mxu0 %v7811
  %7839 = vmatprep.subr.mxu0 %v7808
  %7840 = vmatpush1.msra.mxu0 %v7812
  %7841 = vmatprep.subr.mxu0 0.0
  %7842 = vmatpush1.msra.mxu0 0.0
  %7843 = vmatprep.subr.mxu0 0.0
  %7844 = vmatpush1.msra.mxu0 0.0
  %7845 = vmatprep.subr.mxu0 0.0
  %7846 = vmatpush1.msra.mxu0 0.0
  %7847 = vmatprep.subr.mxu0 0.0
  %7848 = vmatpush1.msra.mxu0 0.0
  %7849 = vmatprep.subr.mxu0 0.0
  %7850 = vmatpush1.msra.mxu0 0.0
  %7851 = vmatprep.subr.mxu0 0.0
  %7852 = vmatpush1.msra.mxu0 0.0
  %7853 = vmatprep.subr.mxu0 0.0
  %7854 = vmatpush1.msra.mxu0 0.0
  %7855 = vmatprep.subr.mxu0 0.0
  %7856 = vmatpush1.msra.mxu0 0.0
  %7857 = vmatprep.subr.mxu0 0.0
  %7858 = vmatpush1.msra.mxu0 0.0
  %7859 = vmatprep.subr.mxu0 0.0
  %7860 = vmatpush1.msra.mxu0 0.0
  %7861 = vmatprep.subr.mxu0 0.0
  %7862 = vmatpush1.msra.mxu0 0.0
  %7863 = vmatprep.subr.mxu0 0.0
  %7864 = vmatpush1.msra.mxu0 0.0
  %7865 = vmatprep.subr.mxu0 0.0
  %7866 = vmatpush1.msra.mxu0 0.0
  %7867 = vmatprep.subr.mxu0 0.0
  %7868 = vmatpush1.msra.mxu0 0.0
  %7869 = vmatprep.subr.mxu0 0.0
  %7870 = vmatpush1.msra.mxu0 0.0
  %7871 = vmatprep.subr.mxu0 0.0
  %7872 = vmatpush1.msra.mxu0 0.0
  %7873 = vmatprep.subr.mxu0 0.0
  %7874 = vmatpush1.msra.mxu0 0.0
  %7875 = vmatprep.subr.mxu0 0.0
  %7876 = vmatpush1.msra.mxu0 0.0
  %7877 = vmatprep.subr.mxu0 0.0
  %7878 = vmatpush1.msra.mxu0 0.0
  %7879 = vmatprep.subr.mxu0 0.0
  %7880 = vmatpush1.msra.mxu0 0.0
  %7881 = vmatprep.subr.mxu0 0.0
  %7882 = vmatpush1.msra.mxu0 0.0
  %7883 = vmatprep.subr.mxu0 0.0
  %7884 = vmatpush1.msra.mxu0 0.0
  %7885 = vmatprep.subr.mxu0 0.0
  %7886 = vmatpush1.msra.mxu0 0.0
  %7887 = vmatprep.subr.mxu0 0.0
  %7888 = vmatpush1.msra.mxu0 0.0
  %7889 = vmatprep.subr.mxu0 0.0
  %7890 = vmatpush1.msra.mxu0 0.0
  %7891 = vmatprep.subr.mxu0 0.0
  %7892 = vmatpush1.msra.mxu0 0.0
  %7893 = vmatprep.subr.mxu0 0.0
  %7894 = vmatpush1.msra.mxu0 0.0
  %7895 = vmatprep.subr.mxu0 0.0
  %7896 = vmatpush1.msra.mxu0 0.0
  %7897 = vmatprep.mubr.f32.mxu0 0.0
  %7898 = vmatmul.mubr.f32.gmra.mrb[0].mxu0 %v7822
  %v7899 = vpop.f32.mrb[0].mxu0
  %v7900 = vadd.f32 0.0, %v7899
  %v7901 = vpop.f32.mrb[0].mxu0
  %v7902 = vadd.f32 0.0, %v7901
  %7903 = vmatprep.mubr.f32.mxu0 0.0
  %7904 = vmatmul.mubr.f32.gmra.mrb[0].mxu0 %v7825
  %v7905 = vpop.f32.mrb[0].mxu0
  %v7906 = vadd.f32 0.0, %v7905
  %v7907 = vpop.f32.mrb[0].mxu0
  %v7908 = vadd.f32 0.0, %v7907
  %7909 = vmatprep.mubr.f32.mxu0 0.0
  %7910 = vmatmul.mubr.f32.gmra.mrb[0].mxu0 %v7828
  %v7911 = vpop.f32.mrb[0].mxu0
  %v7912 = vadd.f32 0.0, %v7911
  %v7913 = vpop.f32.mrb[0].mxu0
  %v7914 = vadd.f32 0.0, %v7913
  %7915 = vmatprep.mubr.f32.mxu0 0.0
  %7916 = vmatmul.mubr.f32.gmra.mrb[0].mxu0 %v7831
  %v7917 = vpop.f32.mrb[0].mxu0
  %v7918 = vadd.f32 0.0, %v7917
  %v7919 = vpop.f32.mrb[0].mxu0
  %v7920 = vadd.f32 0.0, %v7919
  %7921 = vdwg.mxu0
  %v7922 = vadd.f32 %v7781, %v7900
  %v7923 = vadd.f32 %v7782, %v7902
  %v7924 = vadd.f32 %v7783, %v7906
  %v7925 = vadd.f32 %v7784, %v7908
  %v7926 = vadd.f32 %v7785, %v7912
  %v7927 = vadd.f32 %v7786, %v7914
  %v7928 = vadd.f32 %v7787, %v7918
  %v7929 = vadd.f32 %v7788, %v7920
  %7930 = vrot.lane.b32.xlu0 %v7789, 96
  %v7931 = vpop.permute.xlu0 %7930
  %7932 = vrot.lane.b32.xlu0 %v7790, 96
  %v7933 = vpop.permute.xlu0 %7932
  %7934 = vrot.lane.b32.xlu0 %v7791, 96
  %v7935 = vpop.permute.xlu0 %7934
  %7936 = vrot.lane.b32.xlu0 %v7792, 96
  %v7937 = vpop.permute.xlu0 %7936
  %7938 = vrot.lane.b32.xlu0 %v7256, 116
  %v7939 = vpop.permute.xlu0 %7938
  %7940 = vrot.lane.b32.xlu0 %v7257, 116
  %v7941 = vpop.permute.xlu0 %7940
  %7942 = vrot.lane.b32.xlu0 %v7258, 116
  %v7943 = vpop.permute.xlu0 %7942
  %7944 = vrot.lane.b32.xlu0 %v7259, 116
  %v7945 = vpop.permute.xlu0 %7944
  %7946 = vrot.lane.b32.xlu0 %v7260, 116
  %v7947 = vpop.permute.xlu0 %7946
  %7948 = vrot.lane.b32.xlu0 %v7261, 116
  %v7949 = vpop.permute.xlu0 %7948
  %7950 = vrot.lane.b32.xlu0 %v7262, 116
  %v7951 = vpop.permute.xlu0 %7950
  %7952 = vrot.lane.b32.xlu0 %v7263, 116
  %v7953 = vpop.permute.xlu0 %7952
  %vm7954 = vcmask 949248
  %v7955 = vsel %vm7954, %v7939, %v7941
  %v7956 = vsel %vm7954, %v7943, %v7945
  %v7957 = vsel %vm7954, %v7947, %v7949
  %v7958 = vsel %vm7954, %v7951, %v7953
  %v7967 = vsel %vm3260, %v7931, 0
  %v7969 = vsel %vm3260, %v7933, 0
  %v7971 = vsel %vm3260, %v7935, 0
  %v7973 = vsel %vm3260, %v7937, 0
  %7975 = vmatprep.subr.mxu0 %v7941
  %7976 = vmatpush1.msra.mxu0 %v7955
  %7977 = vmatprep.subr.mxu0 %v7945
  %7978 = vmatpush1.msra.mxu0 %v7956
  %7979 = vmatprep.subr.mxu0 %v7949
  %7980 = vmatpush1.msra.mxu0 %v7957
  %7981 = vmatprep.subr.mxu0 %v7953
  %7982 = vmatpush1.msra.mxu0 %v7958
  %7983 = vmatprep.subr.mxu0 0.0
  %7984 = vmatpush1.msra.mxu0 0.0
  %7985 = vmatprep.subr.mxu0 0.0
  %7986 = vmatpush1.msra.mxu0 0.0
  %7987 = vmatprep.subr.mxu0 0.0
  %7988 = vmatpush1.msra.mxu0 0.0
  %7989 = vmatprep.subr.mxu0 0.0
  %7990 = vmatpush1.msra.mxu0 0.0
  %7991 = vmatprep.subr.mxu0 0.0
  %7992 = vmatpush1.msra.mxu0 0.0
  %7993 = vmatprep.subr.mxu0 0.0
  %7994 = vmatpush1.msra.mxu0 0.0
  %7995 = vmatprep.subr.mxu0 0.0
  %7996 = vmatpush1.msra.mxu0 0.0
  %7997 = vmatprep.subr.mxu0 0.0
  %7998 = vmatpush1.msra.mxu0 0.0
  %7999 = vmatprep.subr.mxu0 0.0
  %8000 = vmatpush1.msra.mxu0 0.0
  %8001 = vmatprep.subr.mxu0 0.0
  %8002 = vmatpush1.msra.mxu0 0.0
  %8003 = vmatprep.subr.mxu0 0.0
  %8004 = vmatpush1.msra.mxu0 0.0
  %8005 = vmatprep.subr.mxu0 0.0
  %8006 = vmatpush1.msra.mxu0 0.0
  %8007 = vmatprep.subr.mxu0 0.0
  %8008 = vmatpush1.msra.mxu0 0.0
  %8009 = vmatprep.subr.mxu0 0.0
  %8010 = vmatpush1.msra.mxu0 0.0
  %8011 = vmatprep.subr.mxu0 0.0
  %8012 = vmatpush1.msra.mxu0 0.0
  %8013 = vmatprep.subr.mxu0 0.0
  %8014 = vmatpush1.msra.mxu0 0.0
  %8015 = vmatprep.subr.mxu0 0.0
  %8016 = vmatpush1.msra.mxu0 0.0
  %8017 = vmatprep.subr.mxu0 0.0
  %8018 = vmatpush1.msra.mxu0 0.0
  %8019 = vmatprep.subr.mxu0 0.0
  %8020 = vmatpush1.msra.mxu0 0.0
  %8021 = vmatprep.subr.mxu0 0.0
  %8022 = vmatpush1.msra.mxu0 0.0
  %8023 = vmatprep.subr.mxu0 0.0
  %8024 = vmatpush1.msra.mxu0 0.0
  %8025 = vmatprep.subr.mxu0 0.0
  %8026 = vmatpush1.msra.mxu0 0.0
  %8027 = vmatprep.subr.mxu0 0.0
  %8028 = vmatpush1.msra.mxu0 0.0
  %8029 = vmatprep.subr.mxu0 0.0
  %8030 = vmatpush1.msra.mxu0 0.0
  %8031 = vmatprep.subr.mxu0 0.0
  %8032 = vmatpush1.msra.mxu0 0.0
  %8033 = vmatprep.subr.mxu0 0.0
  %8034 = vmatpush1.msra.mxu0 0.0
  %8035 = vmatprep.subr.mxu0 0.0
  %8036 = vmatpush1.msra.mxu0 0.0
  %8037 = vmatprep.subr.mxu0 0.0
  %8038 = vmatpush1.msra.mxu0 0.0
  %8039 = vmatprep.mubr.f32.mxu0 0.0
  %8040 = vmatmul.mubr.f32.gmra.mrb[0].mxu0 %v7967
  %v8041 = vpop.f32.mrb[0].mxu0
  %v8042 = vadd.f32 0.0, %v8041
  %v8043 = vpop.f32.mrb[0].mxu0
  %v8044 = vadd.f32 0.0, %v8043
  %8045 = vmatprep.mubr.f32.mxu0 0.0
  %8046 = vmatmul.mubr.f32.gmra.mrb[0].mxu0 %v7969
  %v8047 = vpop.f32.mrb[0].mxu0
  %v8048 = vadd.f32 0.0, %v8047
  %v8049 = vpop.f32.mrb[0].mxu0
  %v8050 = vadd.f32 0.0, %v8049
  %8051 = vmatprep.mubr.f32.mxu0 0.0
  %8052 = vmatmul.mubr.f32.gmra.mrb[0].mxu0 %v7971
  %v8053 = vpop.f32.mrb[0].mxu0
  %v8054 = vadd.f32 0.0, %v8053
  %v8055 = vpop.f32.mrb[0].mxu0
  %v8056 = vadd.f32 0.0, %v8055
  %8057 = vmatprep.mubr.f32.mxu0 0.0
  %8058 = vmatmul.mubr.f32.gmra.mrb[0].mxu0 %v7973
  %v8059 = vpop.f32.mrb[0].mxu0
  %v8060 = vadd.f32 0.0, %v8059
  %v8061 = vpop.f32.mrb[0].mxu0
  %v8062 = vadd.f32 0.0, %v8061
  %8063 = vdwg.mxu0
  %v8064 = vadd.f32 %v7922, %v8042
  %v8065 = vadd.f32 %v7923, %v8044
  %v8066 = vadd.f32 %v7924, %v8048
  %v8067 = vadd.f32 %v7925, %v8050
  %v8068 = vadd.f32 %v7926, %v8054
  %v8069 = vadd.f32 %v7927, %v8056
  %v8070 = vadd.f32 %v7928, %v8060
  %v8071 = vadd.f32 %v7929, %v8062
  %8072 = vrot.lane.b32.xlu0 %v7789, 64
  %v8073 = vpop.permute.xlu0 %8072
  %8074 = vrot.lane.b32.xlu0 %v7790, 64
  %v8075 = vpop.permute.xlu0 %8074
  %8076 = vrot.lane.b32.xlu0 %v7791, 64
  %v8077 = vpop.permute.xlu0 %8076
  %8078 = vrot.lane.b32.xlu0 %v7792, 64
  %v8079 = vpop.permute.xlu0 %8078
  %8080 = vrot.lane.b32.xlu0 %v7256, 108
  %v8081 = vpop.permute.xlu0 %8080
  %8082 = vrot.lane.b32.xlu0 %v7257, 108
  %v8083 = vpop.permute.xlu0 %8082
  %8084 = vrot.lane.b32.xlu0 %v7258, 108
  %v8085 = vpop.permute.xlu0 %8084
  %8086 = vrot.lane.b32.xlu0 %v7259, 108
  %v8087 = vpop.permute.xlu0 %8086
  %8088 = vrot.lane.b32.xlu0 %v7260, 108
  %v8089 = vpop.permute.xlu0 %8088
  %8090 = vrot.lane.b32.xlu0 %v7261, 108
  %v8091 = vpop.permute.xlu0 %8090
  %8092 = vrot.lane.b32.xlu0 %v7262, 108
  %v8093 = vpop.permute.xlu0 %8092
  %8094 = vrot.lane.b32.xlu0 %v7263, 108
  %v8095 = vpop.permute.xlu0 %8094
  %v8096 = vsel %vm1626, %v8081, %v8083
  %v8097 = vsel %vm1626, %v8085, %v8087
  %v8098 = vsel %vm1626, %v8089, %v8091
  %v8099 = vsel %vm1626, %v8093, %v8095
  %v8108 = vsel %vm3260, %v8073, 0
  %v8110 = vsel %vm3260, %v8075, 0
  %v8112 = vsel %vm3260, %v8077, 0
  %v8114 = vsel %vm3260, %v8079, 0
  %8116 = vmatprep.subr.mxu0 %v8083
  %8117 = vmatpush1.msra.mxu0 %v8096
  %8118 = vmatprep.subr.mxu0 %v8087
  %8119 = vmatpush1.msra.mxu0 %v8097
  %8120 = vmatprep.subr.mxu0 %v8091
  %8121 = vmatpush1.msra.mxu0 %v8098
  %8122 = vmatprep.subr.mxu0 %v8095
  %8123 = vmatpush1.msra.mxu0 %v8099
  %8124 = vmatprep.subr.mxu0 0.0
  %8125 = vmatpush1.msra.mxu0 0.0
  %8126 = vmatprep.subr.mxu0 0.0
  %8127 = vmatpush1.msra.mxu0 0.0
  %8128 = vmatprep.subr.mxu0 0.0
  %8129 = vmatpush1.msra.mxu0 0.0
  %8130 = vmatprep.subr.mxu0 0.0
  %8131 = vmatpush1.msra.mxu0 0.0
  %8132 = vmatprep.subr.mxu0 0.0
  %8133 = vmatpush1.msra.mxu0 0.0
  %8134 = vmatprep.subr.mxu0 0.0
  %8135 = vmatpush1.msra.mxu0 0.0
  %8136 = vmatprep.subr.mxu0 0.0
  %8137 = vmatpush1.msra.mxu0 0.0
  %8138 = vmatprep.subr.mxu0 0.0
  %8139 = vmatpush1.msra.mxu0 0.0
  %8140 = vmatprep.subr.mxu0 0.0
  %8141 = vmatpush1.msra.mxu0 0.0
  %8142 = vmatprep.subr.mxu0 0.0
  %8143 = vmatpush1.msra.mxu0 0.0
  %8144 = vmatprep.subr.mxu0 0.0
  %8145 = vmatpush1.msra.mxu0 0.0
  %8146 = vmatprep.subr.mxu0 0.0
  %8147 = vmatpush1.msra.mxu0 0.0
  %8148 = vmatprep.subr.mxu0 0.0
  %8149 = vmatpush1.msra.mxu0 0.0
  %8150 = vmatprep.subr.mxu0 0.0
  %8151 = vmatpush1.msra.mxu0 0.0
  %8152 = vmatprep.subr.mxu0 0.0
  %8153 = vmatpush1.msra.mxu0 0.0
  %8154 = vmatprep.subr.mxu0 0.0
  %8155 = vmatpush1.msra.mxu0 0.0
  %8156 = vmatprep.subr.mxu0 0.0
  %8157 = vmatpush1.msra.mxu0 0.0
  %8158 = vmatprep.subr.mxu0 0.0
  %8159 = vmatpush1.msra.mxu0 0.0
  %8160 = vmatprep.subr.mxu0 0.0
  %8161 = vmatpush1.msra.mxu0 0.0
  %8162 = vmatprep.subr.mxu0 0.0
  %8163 = vmatpush1.msra.mxu0 0.0
  %8164 = vmatprep.subr.mxu0 0.0
  %8165 = vmatpush1.msra.mxu0 0.0
  %8166 = vmatprep.subr.mxu0 0.0
  %8167 = vmatpush1.msra.mxu0 0.0
  %8168 = vmatprep.subr.mxu0 0.0
  %8169 = vmatpush1.msra.mxu0 0.0
  %8170 = vmatprep.subr.mxu0 0.0
  %8171 = vmatpush1.msra.mxu0 0.0
  %8172 = vmatprep.subr.mxu0 0.0
  %8173 = vmatpush1.msra.mxu0 0.0
  %8174 = vmatprep.subr.mxu0 0.0
  %8175 = vmatpush1.msra.mxu0 0.0
  %8176 = vmatprep.subr.mxu0 0.0
  %8177 = vmatpush1.msra.mxu0 0.0
  %8178 = vmatprep.subr.mxu0 0.0
  %8179 = vmatpush1.msra.mxu0 0.0
  %8180 = vmatprep.mubr.f32.mxu0 0.0
  %8181 = vmatmul.mubr.f32.gmra.mrb[0].mxu0 %v8108
  %v8182 = vpop.f32.mrb[0].mxu0
  %v8183 = vadd.f32 0.0, %v8182
  %v8184 = vpop.f32.mrb[0].mxu0
  %v8185 = vadd.f32 0.0, %v8184
  %8186 = vmatprep.mubr.f32.mxu0 0.0
  %8187 = vmatmul.mubr.f32.gmra.mrb[0].mxu0 %v8110
  %v8188 = vpop.f32.mrb[0].mxu0
  %v8189 = vadd.f32 0.0, %v8188
  %v8190 = vpop.f32.mrb[0].mxu0
  %v8191 = vadd.f32 0.0, %v8190
  %8192 = vmatprep.mubr.f32.mxu0 0.0
  %8193 = vmatmul.mubr.f32.gmra.mrb[0].mxu0 %v8112
  %v8194 = vpop.f32.mrb[0].mxu0
  %v8195 = vadd.f32 0.0, %v8194
  %v8196 = vpop.f32.mrb[0].mxu0
  %v8197 = vadd.f32 0.0, %v8196
  %8198 = vmatprep.mubr.f32.mxu0 0.0
  %8199 = vmatmul.mubr.f32.gmra.mrb[0].mxu0 %v8114
  %v8200 = vpop.f32.mrb[0].mxu0
  %v8201 = vadd.f32 0.0, %v8200
  %v8202 = vpop.f32.mrb[0].mxu0
  %v8203 = vadd.f32 0.0, %v8202
  %8204 = vdwg.mxu0
  %v8205 = vadd.f32 %v8064, %v8183
  %v8206 = vadd.f32 %v8065, %v8185
  %v8207 = vadd.f32 %v8066, %v8189
  %v8208 = vadd.f32 %v8067, %v8191
  %v8209 = vadd.f32 %v8068, %v8195
  %v8210 = vadd.f32 %v8069, %v8197
  %v8211 = vadd.f32 %v8070, %v8201
  %v8212 = vadd.f32 %v8071, %v8203
  %8213 = vrot.lane.b32.xlu0 %v7789, 32
  %v8214 = vpop.permute.xlu0 %8213
  %8215 = vrot.lane.b32.xlu0 %v7790, 32
  %v8216 = vpop.permute.xlu0 %8215
  %8217 = vrot.lane.b32.xlu0 %v7791, 32
  %v8218 = vpop.permute.xlu0 %8217
  %8219 = vrot.lane.b32.xlu0 %v7792, 32
  %v8220 = vpop.permute.xlu0 %8219
  %8221 = vrot.lane.b32.xlu0 %v7256, 107
  %v8222 = vpop.permute.xlu0 %8221
  %8223 = vrot.lane.b32.xlu0 %v7257, 107
  %v8224 = vpop.permute.xlu0 %8223
  %8225 = vrot.lane.b32.xlu0 %v7258, 107
  %v8226 = vpop.permute.xlu0 %8225
  %8227 = vrot.lane.b32.xlu0 %v7259, 107
  %v8228 = vpop.permute.xlu0 %8227
  %8229 = vrot.lane.b32.xlu0 %v7260, 107
  %v8230 = vpop.permute.xlu0 %8229
  %8231 = vrot.lane.b32.xlu0 %v7261, 107
  %v8232 = vpop.permute.xlu0 %8231
  %8233 = vrot.lane.b32.xlu0 %v7262, 107
  %v8234 = vpop.permute.xlu0 %8233
  %8235 = vrot.lane.b32.xlu0 %v7263, 107
  %v8236 = vpop.permute.xlu0 %8235
  %vm8237 = vcmask 875520
  %v8238 = vsel %vm8237, %v8222, %v8224
  %v8239 = vsel %vm8237, %v8226, %v8228
  %v8240 = vsel %vm8237, %v8230, %v8232
  %v8241 = vsel %vm8237, %v8234, %v8236
  %v8250 = vsel %vm3260, %v8214, 0
  %v8252 = vsel %vm3260, %v8216, 0
  %v8254 = vsel %vm3260, %v8218, 0
  %v8256 = vsel %vm3260, %v8220, 0
  %8258 = vmatprep.subr.mxu0 %v8224
  %8259 = vmatpush1.msra.mxu0 %v8238
  %8260 = vmatprep.subr.mxu0 %v8228
  %8261 = vmatpush1.msra.mxu0 %v8239
  %8262 = vmatprep.subr.mxu0 %v8232
  %8263 = vmatpush1.msra.mxu0 %v8240
  %8264 = vmatprep.subr.mxu0 %v8236
  %8265 = vmatpush1.msra.mxu0 %v8241
  %8266 = vmatprep.subr.mxu0 0.0
  %8267 = vmatpush1.msra.mxu0 0.0
  %8268 = vmatprep.subr.mxu0 0.0
  %8269 = vmatpush1.msra.mxu0 0.0
  %8270 = vmatprep.subr.mxu0 0.0
  %8271 = vmatpush1.msra.mxu0 0.0
  %8272 = vmatprep.subr.mxu0 0.0
  %8273 = vmatpush1.msra.mxu0 0.0
  %8274 = vmatprep.subr.mxu0 0.0
  %8275 = vmatpush1.msra.mxu0 0.0
  %8276 = vmatprep.subr.mxu0 0.0
  %8277 = vmatpush1.msra.mxu0 0.0
  %8278 = vmatprep.subr.mxu0 0.0
  %8279 = vmatpush1.msra.mxu0 0.0
  %8280 = vmatprep.subr.mxu0 0.0
  %8281 = vmatpush1.msra.mxu0 0.0
  %8282 = vmatprep.subr.mxu0 0.0
  %8283 = vmatpush1.msra.mxu0 0.0
  %8284 = vmatprep.subr.mxu0 0.0
  %8285 = vmatpush1.msra.mxu0 0.0
  %8286 = vmatprep.subr.mxu0 0.0
  %8287 = vmatpush1.msra.mxu0 0.0
  %8288 = vmatprep.subr.mxu0 0.0
  %8289 = vmatpush1.msra.mxu0 0.0
  %8290 = vmatprep.subr.mxu0 0.0
  %8291 = vmatpush1.msra.mxu0 0.0
  %8292 = vmatprep.subr.mxu0 0.0
  %8293 = vmatpush1.msra.mxu0 0.0
  %8294 = vmatprep.subr.mxu0 0.0
  %8295 = vmatpush1.msra.mxu0 0.0
  %8296 = vmatprep.subr.mxu0 0.0
  %8297 = vmatpush1.msra.mxu0 0.0
  %8298 = vmatprep.subr.mxu0 0.0
  %8299 = vmatpush1.msra.mxu0 0.0
  %8300 = vmatprep.subr.mxu0 0.0
  %8301 = vmatpush1.msra.mxu0 0.0
  %8302 = vmatprep.subr.mxu0 0.0
  %8303 = vmatpush1.msra.mxu0 0.0
  %8304 = vmatprep.subr.mxu0 0.0
  %8305 = vmatpush1.msra.mxu0 0.0
  %8306 = vmatprep.subr.mxu0 0.0
  %8307 = vmatpush1.msra.mxu0 0.0
  %8308 = vmatprep.subr.mxu0 0.0
  %8309 = vmatpush1.msra.mxu0 0.0
  %8310 = vmatprep.subr.mxu0 0.0
  %8311 = vmatpush1.msra.mxu0 0.0
  %8312 = vmatprep.subr.mxu0 0.0
  %8313 = vmatpush1.msra.mxu0 0.0
  %8314 = vmatprep.subr.mxu0 0.0
  %8315 = vmatpush1.msra.mxu0 0.0
  %8316 = vmatprep.subr.mxu0 0.0
  %8317 = vmatpush1.msra.mxu0 0.0
  %8318 = vmatprep.subr.mxu0 0.0
  %8319 = vmatpush1.msra.mxu0 0.0
  %8320 = vmatprep.subr.mxu0 0.0
  %8321 = vmatpush1.msra.mxu0 0.0
  %8322 = vmatprep.mubr.f32.mxu0 0.0
  %8323 = vmatmul.mubr.f32.gmra.mrb[0].mxu0 %v8250
  %v8324 = vpop.f32.mrb[0].mxu0
  %v8325 = vadd.f32 0.0, %v8324
  %v8326 = vpop.f32.mrb[0].mxu0
  %v8327 = vadd.f32 0.0, %v8326
  %8328 = vmatprep.mubr.f32.mxu0 0.0
  %8329 = vmatmul.mubr.f32.gmra.mrb[0].mxu0 %v8252
  %v8330 = vpop.f32.mrb[0].mxu0
  %v8331 = vadd.f32 0.0, %v8330
  %v8332 = vpop.f32.mrb[0].mxu0
  %v8333 = vadd.f32 0.0, %v8332
  %8334 = vmatprep.mubr.f32.mxu0 0.0
  %8335 = vmatmul.mubr.f32.gmra.mrb[0].mxu0 %v8254
  %v8336 = vpop.f32.mrb[0].mxu0
  %v8337 = vadd.f32 0.0, %v8336
  %v8338 = vpop.f32.mrb[0].mxu0
  %v8339 = vadd.f32 0.0, %v8338
  %8340 = vmatprep.mubr.f32.mxu0 0.0
  %8341 = vmatmul.mubr.f32.gmra.mrb[0].mxu0 %v8256
  %v8342 = vpop.f32.mrb[0].mxu0
  %v8343 = vadd.f32 0.0, %v8342
  %v8344 = vpop.f32.mrb[0].mxu0
  %v8345 = vadd.f32 0.0, %v8344
  %8346 = vdwg.mxu0
  %v8347 = vadd.f32 %v8205, %v8325
  %v8348 = vadd.f32 %v8206, %v8327
  %v8349 = vadd.f32 %v8207, %v8331
  %v8350 = vadd.f32 %v8208, %v8333
  %v8351 = vadd.f32 %v8209, %v8337
  %v8352 = vadd.f32 %v8210, %v8339
  %v8353 = vadd.f32 %v8211, %v8343
  %v8354 = vadd.f32 %v8212, %v8345
  %v8355 = vld [vmem:[%s3 + $0x10] sm:$0xff]
  %v8356 = vld [vmem:[%s3 + $0x28] sm:$0xff]
  %v8357 = vld [vmem:[%s3 + $0x40] sm:$0xff]
  %v8358 = vld [vmem:[%s3 + $0x58] sm:$0xff]
  %8359 = vrot.lane.b32.xlu0 %v7256, 106
  %v8360 = vpop.permute.xlu0 %8359
  %8361 = vrot.lane.b32.xlu0 %v7257, 106
  %v8362 = vpop.permute.xlu0 %8361
  %8363 = vrot.lane.b32.xlu0 %v7258, 106
  %v8364 = vpop.permute.xlu0 %8363
  %8365 = vrot.lane.b32.xlu0 %v7259, 106
  %v8366 = vpop.permute.xlu0 %8365
  %8367 = vrot.lane.b32.xlu0 %v7260, 106
  %v8368 = vpop.permute.xlu0 %8367
  %8369 = vrot.lane.b32.xlu0 %v7261, 106
  %v8370 = vpop.permute.xlu0 %8369
  %8371 = vrot.lane.b32.xlu0 %v7262, 106
  %v8372 = vpop.permute.xlu0 %8371
  %8373 = vrot.lane.b32.xlu0 %v7263, 106
  %v8374 = vpop.permute.xlu0 %8373
  %vm8375 = vcmask 867328
  %v8376 = vsel %vm8375, %v8360, %v8362
  %v8377 = vsel %vm8375, %v8364, %v8366
  %v8378 = vsel %vm8375, %v8368, %v8370
  %v8379 = vsel %vm8375, %v8372, %v8374
  %v8389 = vsel %vm3260, %v8355, 0
  %v8392 = vsel %vm3260, %v8356, 0
  %v8395 = vsel %vm3260, %v8357, 0
  %v8398 = vsel %vm3260, %v8358, 0
  %8400 = vmatprep.subr.mxu0 %v8362
  %8401 = vmatpush1.msra.mxu0 %v8376
  %8402 = vmatprep.subr.mxu0 %v8366
  %8403 = vmatpush1.msra.mxu0 %v8377
  %8404 = vmatprep.subr.mxu0 %v8370
  %8405 = vmatpush1.msra.mxu0 %v8378
  %8406 = vmatprep.subr.mxu0 %v8374
  %8407 = vmatpush1.msra.mxu0 %v8379
  %8408 = vmatprep.subr.mxu0 0.0
  %8409 = vmatpush1.msra.mxu0 0.0
  %8410 = vmatprep.subr.mxu0 0.0
  %8411 = vmatpush1.msra.mxu0 0.0
  %8412 = vmatprep.subr.mxu0 0.0
  %8413 = vmatpush1.msra.mxu0 0.0
  %8414 = vmatprep.subr.mxu0 0.0
  %8415 = vmatpush1.msra.mxu0 0.0
  %8416 = vmatprep.subr.mxu0 0.0
  %8417 = vmatpush1.msra.mxu0 0.0
  %8418 = vmatprep.subr.mxu0 0.0
  %8419 = vmatpush1.msra.mxu0 0.0
  %8420 = vmatprep.subr.mxu0 0.0
  %8421 = vmatpush1.msra.mxu0 0.0
  %8422 = vmatprep.subr.mxu0 0.0
  %8423 = vmatpush1.msra.mxu0 0.0
  %8424 = vmatprep.subr.mxu0 0.0
  %8425 = vmatpush1.msra.mxu0 0.0
  %8426 = vmatprep.subr.mxu0 0.0
  %8427 = vmatpush1.msra.mxu0 0.0
  %8428 = vmatprep.subr.mxu0 0.0
  %8429 = vmatpush1.msra.mxu0 0.0
  %8430 = vmatprep.subr.mxu0 0.0
  %8431 = vmatpush1.msra.mxu0 0.0
  %8432 = vmatprep.subr.mxu0 0.0
  %8433 = vmatpush1.msra.mxu0 0.0
  %8434 = vmatprep.subr.mxu0 0.0
  %8435 = vmatpush1.msra.mxu0 0.0
  %8436 = vmatprep.subr.mxu0 0.0
  %8437 = vmatpush1.msra.mxu0 0.0
  %8438 = vmatprep.subr.mxu0 0.0
  %8439 = vmatpush1.msra.mxu0 0.0
  %8440 = vmatprep.subr.mxu0 0.0
  %8441 = vmatpush1.msra.mxu0 0.0
  %8442 = vmatprep.subr.mxu0 0.0
  %8443 = vmatpush1.msra.mxu0 0.0
  %8444 = vmatprep.subr.mxu0 0.0
  %8445 = vmatpush1.msra.mxu0 0.0
  %8446 = vmatprep.subr.mxu0 0.0
  %8447 = vmatpush1.msra.mxu0 0.0
  %8448 = vmatprep.subr.mxu0 0.0
  %8449 = vmatpush1.msra.mxu0 0.0
  %8450 = vmatprep.subr.mxu0 0.0
  %8451 = vmatpush1.msra.mxu0 0.0
  %8452 = vmatprep.subr.mxu0 0.0
  %8453 = vmatpush1.msra.mxu0 0.0
  %8454 = vmatprep.subr.mxu0 0.0
  %8455 = vmatpush1.msra.mxu0 0.0
  %8456 = vmatprep.subr.mxu0 0.0
  %8457 = vmatpush1.msra.mxu0 0.0
  %8458 = vmatprep.subr.mxu0 0.0
  %8459 = vmatpush1.msra.mxu0 0.0
  %8460 = vmatprep.subr.mxu0 0.0
  %8461 = vmatpush1.msra.mxu0 0.0
  %8462 = vmatprep.subr.mxu0 0.0
  %8463 = vmatpush1.msra.mxu0 0.0
  %8464 = vmatprep.mubr.f32.mxu0 0.0
  %8465 = vmatmul.mubr.f32.gmra.mrb[0].mxu0 %v8389
  %v8466 = vpop.f32.mrb[0].mxu0
  %v8467 = vadd.f32 0.0, %v8466
  %v8468 = vpop.f32.mrb[0].mxu0
  %v8469 = vadd.f32 0.0, %v8468
  %8470 = vmatprep.mubr.f32.mxu0 0.0
  %8471 = vmatmul.mubr.f32.gmra.mrb[0].mxu0 %v8392
  %v8472 = vpop.f32.mrb[0].mxu0
  %v8473 = vadd.f32 0.0, %v8472
  %v8474 = vpop.f32.mrb[0].mxu0
  %v8475 = vadd.f32 0.0, %v8474
  %8476 = vmatprep.mubr.f32.mxu0 0.0
  %8477 = vmatmul.mubr.f32.gmra.mrb[0].mxu0 %v8395
  %v8478 = vpop.f32.mrb[0].mxu0
  %v8479 = vadd.f32 0.0, %v8478
  %v8480 = vpop.f32.mrb[0].mxu0
  %v8481 = vadd.f32 0.0, %v8480
  %8482 = vmatprep.mubr.f32.mxu0 0.0
  %8483 = vmatmul.mubr.f32.gmra.mrb[0].mxu0 %v8398
  %v8484 = vpop.f32.mrb[0].mxu0
  %v8485 = vadd.f32 0.0, %v8484
  %v8486 = vpop.f32.mrb[0].mxu0
  %v8487 = vadd.f32 0.0, %v8486
  %8488 = vdwg.mxu0
  %v8489 = vadd.f32 %v8347, %v8467
  %v8490 = vadd.f32 %v8348, %v8469
  %v8491 = vadd.f32 %v8349, %v8473
  %v8492 = vadd.f32 %v8350, %v8475
  %v8493 = vadd.f32 %v8351, %v8479
  %v8494 = vadd.f32 %v8352, %v8481
  %v8495 = vadd.f32 %v8353, %v8485
  %v8496 = vadd.f32 %v8354, %v8487
  %v8497 = vld [vmem:[%s9] sm:$0xff]
  %v8498 = vld [vmem:[%s9 + $0x8] sm:$0xff]
  %v8499 = vld [vmem:[%s9 + $0x10] sm:$0xff]
  %v8500 = vld [vmem:[%s9 + $0x18] sm:$0xff]
  %8502 = vset.pattern.permute.xlu0 0
  %8503 = vperm.xlu0 %8502, %v8497
  %v8504 = vpop.permute.xlu0 %8503
  %8507 = vset.pattern.permute.xlu0 0
  %8508 = vperm.xlu0 %8507, %v8498
  %v8509 = vpop.permute.xlu0 %8508
  %8512 = vset.pattern.permute.xlu0 0
  %8513 = vperm.xlu0 %8512, %v8499
  %v8514 = vpop.permute.xlu0 %8513
  %8517 = vset.pattern.permute.xlu0 0
  %8518 = vperm.xlu0 %8517, %v8500
  %v8519 = vpop.permute.xlu0 %8518
  %v8521 = vadd.f32 %v8489, %v8504
  %v8522 = vadd.f32 %v8490, %v8504
  %v8523 = vadd.f32 %v8491, %v8509
  %v8524 = vadd.f32 %v8492, %v8509
  %v8525 = vadd.f32 %v8493, %v8514
  %v8526 = vadd.f32 %v8494, %v8514
  %v8527 = vadd.f32 %v8495, %v8519
  %v8528 = vadd.f32 %v8496, %v8519
  %8537 = vrot.lane.b32.xlu0 %v8521, 127
  %v8538 = vpop.permute.xlu0 %8537
  %8539 = vrot.lane.b32.xlu0 %v8522, 127
  %v8540 = vpop.permute.xlu0 %8539
  %8541 = vrot.lane.b32.xlu0 %v8523, 127
  %v8542 = vpop.permute.xlu0 %8541
  %8543 = vrot.lane.b32.xlu0 %v8524, 127
  %v8544 = vpop.permute.xlu0 %8543
  %8545 = vrot.lane.b32.xlu0 %v8525, 127
  %v8546 = vpop.permute.xlu0 %8545
  %8547 = vrot.lane.b32.xlu0 %v8526, 127
  %v8548 = vpop.permute.xlu0 %8547
  %8549 = vrot.lane.b32.xlu0 %v8527, 127
  %v8550 = vpop.permute.xlu0 %8549
  %8551 = vrot.lane.b32.xlu0 %v8528, 127
  %v8552 = vpop.permute.xlu0 %8551
  %v8553 = vsel %vm98, %v8538, %v8540
  %v8554 = vsel %vm98, %v8542, %v8544
  %v8555 = vsel %vm98, %v8546, %v8548
  %v8556 = vsel %vm98, %v8550, %v8552
  %v8565 = vmax.f32 %v8521, %v8553
  %v8566 = vmax.f32 %v8522, %v8540
  %v8567 = vmax.f32 %v8523, %v8554
  %v8568 = vmax.f32 %v8524, %v8544
  %v8569 = vmax.f32 %v8525, %v8555
  %v8570 = vmax.f32 %v8526, %v8548
  %v8571 = vmax.f32 %v8527, %v8556
  %v8572 = vmax.f32 %v8528, %v8552
  %8581 = vrot.lane.b32.xlu0 %v8565, 118
  %v8582 = vpop.permute.xlu0 %8581
  %8583 = vrot.lane.b32.xlu0 %v8566, 118
  %v8584 = vpop.permute.xlu0 %8583
  %8585 = vrot.lane.b32.xlu0 %v8567, 118
  %v8586 = vpop.permute.xlu0 %8585
  %8587 = vrot.lane.b32.xlu0 %v8568, 118
  %v8588 = vpop.permute.xlu0 %8587
  %8589 = vrot.lane.b32.xlu0 %v8569, 118
  %v8590 = vpop.permute.xlu0 %8589
  %8591 = vrot.lane.b32.xlu0 %v8570, 118
  %v8592 = vpop.permute.xlu0 %8591
  %8593 = vrot.lane.b32.xlu0 %v8571, 118
  %v8594 = vpop.permute.xlu0 %8593
  %8595 = vrot.lane.b32.xlu0 %v8572, 118
  %v8596 = vpop.permute.xlu0 %8595
  %v8597 = vsel %vm7671, %v8582, %v8584
  %v8598 = vsel %vm7671, %v8586, %v8588
  %v8599 = vsel %vm7671, %v8590, %v8592
  %v8600 = vsel %vm7671, %v8594, %v8596
  %v8609 = vmax.f32 %v8565, %v8597
  %v8610 = vmax.f32 %v8566, %v8584
  %v8611 = vmax.f32 %v8567, %v8598
  %v8612 = vmax.f32 %v8568, %v8588
  %v8613 = vmax.f32 %v8569, %v8599
  %v8614 = vmax.f32 %v8570, %v8592
  %v8615 = vmax.f32 %v8571, %v8600
  %v8616 = vmax.f32 %v8572, %v8596
  %v8617 = vmax.f32 %v8609, 0.0
  %v8618 = vmax.f32 %v8610, 0.0
  %v8619 = vmax.f32 %v8611, 0.0
  %v8620 = vmax.f32 %v8612, 0.0
  %v8621 = vmax.f32 %v8613, 0.0
  %v8622 = vmax.f32 %v8614, 0.0
  %v8623 = vmax.f32 %v8615, 0.0
  %v8624 = vmax.f32 %v8616, 0.0
  %v8625 = vld [vmem:[%s15] sm:$0xff]
  %v8626 = vld [vmem:[%s15 + $0x8] sm:$0xff]
  %v8627 = vld [vmem:[%s15 + $0x10] sm:$0xff]
  %v8628 = vld [vmem:[%s15 + $0x18] sm:$0xff]
  %v8629 = vld [vmem:[%s15 + $0x20] sm:$0xff]
  %v8630 = vld [vmem:[%s15 + $0x28] sm:$0xff]
  %v8631 = vld [vmem:[%s15 + $0x30] sm:$0xff]
  %v8632 = vld [vmem:[%s15 + $0x38] sm:$0xff]
  %v8633 = vld [vmem:[%s15 + $0x40] sm:$0xff]
  %v8634 = vld [vmem:[%s15 + $0x48] sm:$0xff]
  %v8635 = vld [vmem:[%s15 + $0x50] sm:$0xff]
  %v8636 = vld [vmem:[%s15 + $0x58] sm:$0xff]
  %v8637 = vld [vmem:[%s15 + $0x60] sm:$0xff]
  %v8638 = vld [vmem:[%s15 + $0x68] sm:$0xff]
  %v8639 = vld [vmem:[%s15 + $0x70] sm:$0xff]
  %v8640 = vld [vmem:[%s15 + $0x78] sm:$0xff]
  %v8641 = vld [vmem:[%s15 + $0x80] sm:$0xff]
  %v8642 = vld [vmem:[%s15 + $0x88] sm:$0xff]
  %v8643 = vld [vmem:[%s15 + $0x90] sm:$0xff]
  %v8644 = vld [vmem:[%s15 + $0x98] sm:$0xff]
  %v8645 = vld [vmem:[%s15 + $0xa0] sm:$0x7f]
  %vm8646 = vcmask 318464
  %v8648 = vsel %vm8646, %v8618, 0
  %v8651 = vsel %vm8646, %v8620, 0
  %v8654 = vsel %vm8646, %v8622, 0
  %v8657 = vsel %vm8646, %v8624, 0
  %v8660 = vsel %vm6969, %v8645, 0
  %8662 = vmatprep.subr.mxu0 0.0
  %8663 = vmatpush1.msra.mxu0 %v8625
  %8664 = vmatprep.subr.mxu0 0.0
  %8665 = vmatpush1.msra.mxu0 %v8626
  %8666 = vmatprep.subr.mxu0 0.0
  %8667 = vmatpush1.msra.mxu0 %v8627
  %8668 = vmatprep.subr.mxu0 0.0
  %8669 = vmatpush1.msra.mxu0 %v8628
  %8670 = vmatprep.subr.mxu0 0.0
  %8671 = vmatpush1.msra.mxu0 %v8629
  %8672 = vmatprep.subr.mxu0 0.0
  %8673 = vmatpush1.msra.mxu0 %v8630
  %8674 = vmatprep.subr.mxu0 0.0
  %8675 = vmatpush1.msra.mxu0 %v8631
  %8676 = vmatprep.subr.mxu0 0.0
  %8677 = vmatpush1.msra.mxu0 %v8632
  %8678 = vmatprep.subr.mxu0 0.0
  %8679 = vmatpush1.msra.mxu0 %v8633
  %8680 = vmatprep.subr.mxu0 0.0
  %8681 = vmatpush1.msra.mxu0 %v8634
  %8682 = vmatprep.subr.mxu0 0.0
  %8683 = vmatpush1.msra.mxu0 %v8635
  %8684 = vmatprep.subr.mxu0 0.0
  %8685 = vmatpush1.msra.mxu0 %v8636
  %8686 = vmatprep.subr.mxu0 0.0
  %8687 = vmatpush1.msra.mxu0 %v8637
  %8688 = vmatprep.subr.mxu0 0.0
  %8689 = vmatpush1.msra.mxu0 %v8638
  %8690 = vmatprep.subr.mxu0 0.0
  %8691 = vmatpush1.msra.mxu0 %v8639
  %8692 = vmatprep.subr.mxu0 0.0
  %8693 = vmatpush1.msra.mxu0 %v8640
  %8694 = vmatprep.subr.mxu0 0.0
  %8695 = vmatpush1.msra.mxu0 %v8641
  %8696 = vmatprep.subr.mxu0 0.0
  %8697 = vmatpush1.msra.mxu0 %v8642
  %8698 = vmatprep.subr.mxu0 0.0
  %8699 = vmatpush1.msra.mxu0 %v8643
  %8700 = vmatprep.subr.mxu0 0.0
  %8701 = vmatpush1.msra.mxu0 %v8644
  %8702 = vmatprep.subr.mxu0 0.0
  %8703 = vmatpush1.msra.mxu0 %v8660
  %8704 = vmatprep.subr.mxu0 0.0
  %8705 = vmatpush1.msra.mxu0 0.0
  %8706 = vmatprep.subr.mxu0 0.0
  %8707 = vmatpush1.msra.mxu0 0.0
  %8708 = vmatprep.subr.mxu0 0.0
  %8709 = vmatpush1.msra.mxu0 0.0
  %8710 = vmatprep.subr.mxu0 0.0
  %8711 = vmatpush1.msra.mxu0 0.0
  %8712 = vmatprep.subr.mxu0 0.0
  %8713 = vmatpush1.msra.mxu0 0.0
  %8714 = vmatprep.subr.mxu0 0.0
  %8715 = vmatpush1.msra.mxu0 0.0
  %8716 = vmatprep.subr.mxu0 0.0
  %8717 = vmatpush1.msra.mxu0 0.0
  %8718 = vmatprep.subr.mxu0 0.0
  %8719 = vmatpush1.msra.mxu0 0.0
  %8720 = vmatprep.subr.mxu0 0.0
  %8721 = vmatpush1.msra.mxu0 0.0
  %8722 = vmatprep.subr.mxu0 0.0
  %8723 = vmatpush1.msra.mxu0 0.0
  %8724 = vmatprep.subr.mxu0 0.0
  %8725 = vmatpush1.msra.mxu0 0.0
  %8726 = vmatprep.mubr.f32.mxu0 %v8648
  %8727 = vmatmul.mubr.f32.gmra.mrb[0].mxu0 %v8617
  %v8728 = vpop.f32.mrb[0].mxu0
  %v8729 = vadd.f32 0.0, %v8728
  %v8730 = vpop.f32.mrb[0].mxu0
  %8731 = vmatprep.mubr.f32.mxu0 %v8651
  %8732 = vmatmul.mubr.f32.gmra.mrb[0].mxu0 %v8619
  %v8733 = vpop.f32.mrb[0].mxu0
  %v8734 = vadd.f32 0.0, %v8733
  %v8735 = vpop.f32.mrb[0].mxu0
  %8736 = vmatprep.mubr.f32.mxu0 %v8654
  %8737 = vmatmul.mubr.f32.gmra.mrb[0].mxu0 %v8621
  %v8738 = vpop.f32.mrb[0].mxu0
  %v8739 = vadd.f32 0.0, %v8738
  %v8740 = vpop.f32.mrb[0].mxu0
  %8741 = vmatprep.mubr.f32.mxu0 %v8657
  %8742 = vmatmul.mubr.f32.gmra.mrb[0].mxu0 %v8623
  %v8743 = vpop.f32.mrb[0].mxu0
  %v8744 = vadd.f32 0.0, %v8743
  %v8745 = vpop.f32.mrb[0].mxu0
  %8746 = vdwg.mxu0
  %8747 = vst.msk [vmem:[#allocation4] sm:$0xff] %vm7244, %v8729
  %8748 = vst.msk [vmem:[#allocation4 + $0x8] sm:$0xff] %vm7244, %v8734
  %8749 = vst.msk [vmem:[#allocation4 + $0x10] sm:$0xff] %vm7244, %v8739
  %8750 = vst.msk [vmem:[#allocation4 + $0x18] sm:$0xff] %vm7244, %v8744
  %v8751 = vld [vmem:[%s4] sm:$0xff]
  %v8752 = vld [vmem:[%s4 + $0x18] sm:$0xff]
  %v8753 = vld [vmem:[%s4 + $0x30] sm:$0xff]
  %v8754 = vld [vmem:[%s4 + $0x48] sm:$0xff]
  %v8755 = vld [vmem:[#allocation4] sm:$0xff]
  %v8756 = vld [vmem:[#allocation4 + $0x8] sm:$0xff]
  %v8757 = vld [vmem:[#allocation4 + $0x10] sm:$0xff]
  %v8758 = vld [vmem:[#allocation4 + $0x18] sm:$0xff]
  %8763 = vrot.lane.b32.xlu0 %v8751, 96
  %v8764 = vpop.permute.xlu0 %8763
  %8765 = vrot.lane.b32.xlu0 %v8752, 96
  %v8766 = vpop.permute.xlu0 %8765
  %8767 = vrot.lane.b32.xlu0 %v8753, 96
  %v8768 = vpop.permute.xlu0 %8767
  %8769 = vrot.lane.b32.xlu0 %v8754, 96
  %v8770 = vpop.permute.xlu0 %8769
  %8775 = vrot.lane.b32.xlu0 %v8755, 127
  %v8776 = vpop.permute.xlu0 %8775
  %8777 = vrot.lane.b32.xlu0 %v8756, 127
  %v8778 = vpop.permute.xlu0 %8777
  %8779 = vrot.lane.b32.xlu0 %v8757, 127
  %v8780 = vpop.permute.xlu0 %8779
  %8781 = vrot.lane.b32.xlu0 %v8758, 127
  %v8782 = vpop.permute.xlu0 %8781
  %v8787 = vsel %vm3260, %v8764, 0
  %v8789 = vsel %vm3260, %v8766, 0
  %v8791 = vsel %vm3260, %v8768, 0
  %v8793 = vsel %vm3260, %v8770, 0
  %8795 = vmatprep.subr.mxu0 0.0
  %8796 = vmatpush1.msra.mxu0 %v8776
  %8797 = vmatprep.subr.mxu0 0.0
  %8798 = vmatpush1.msra.mxu0 %v8778
  %8799 = vmatprep.subr.mxu0 0.0
  %8800 = vmatpush1.msra.mxu0 %v8780
  %8801 = vmatprep.subr.mxu0 0.0
  %8802 = vmatpush1.msra.mxu0 %v8782
  %8803 = vmatprep.subr.mxu0 0.0
  %8804 = vmatpush1.msra.mxu0 0.0
  %8805 = vmatprep.subr.mxu0 0.0
  %8806 = vmatpush1.msra.mxu0 0.0
  %8807 = vmatprep.subr.mxu0 0.0
  %8808 = vmatpush1.msra.mxu0 0.0
  %8809 = vmatprep.subr.mxu0 0.0
  %8810 = vmatpush1.msra.mxu0 0.0
  %8811 = vmatprep.subr.mxu0 0.0
  %8812 = vmatpush1.msra.mxu0 0.0
  %8813 = vmatprep.subr.mxu0 0.0
  %8814 = vmatpush1.msra.mxu0 0.0
  %8815 = vmatprep.subr.mxu0 0.0
  %8816 = vmatpush1.msra.mxu0 0.0
  %8817 = vmatprep.subr.mxu0 0.0
  %8818 = vmatpush1.msra.mxu0 0.0
  %8819 = vmatprep.subr.mxu0 0.0
  %8820 = vmatpush1.msra.mxu0 0.0
  %8821 = vmatprep.subr.mxu0 0.0
  %8822 = vmatpush1.msra.mxu0 0.0
  %8823 = vmatprep.subr.mxu0 0.0
  %8824 = vmatpush1.msra.mxu0 0.0
  %8825 = vmatprep.subr.mxu0 0.0
  %8826 = vmatpush1.msra.mxu0 0.0
  %8827 = vmatprep.subr.mxu0 0.0
  %8828 = vmatpush1.msra.mxu0 0.0
  %8829 = vmatprep.subr.mxu0 0.0
  %8830 = vmatpush1.msra.mxu0 0.0
  %8831 = vmatprep.subr.mxu0 0.0
  %8832 = vmatpush1.msra.mxu0 0.0
  %8833 = vmatprep.subr.mxu0 0.0
  %8834 = vmatpush1.msra.mxu0 0.0
  %8835 = vmatprep.subr.mxu0 0.0
  %8836 = vmatpush1.msra.mxu0 0.0
  %8837 = vmatprep.subr.mxu0 0.0
  %8838 = vmatpush1.msra.mxu0 0.0
  %8839 = vmatprep.subr.mxu0 0.0
  %8840 = vmatpush1.msra.mxu0 0.0
  %8841 = vmatprep.subr.mxu0 0.0
  %8842 = vmatpush1.msra.mxu0 0.0
  %8843 = vmatprep.subr.mxu0 0.0
  %8844 = vmatpush1.msra.mxu0 0.0
  %8845 = vmatprep.subr.mxu0 0.0
  %8846 = vmatpush1.msra.mxu0 0.0
  %8847 = vmatprep.subr.mxu0 0.0
  %8848 = vmatpush1.msra.mxu0 0.0
  %8849 = vmatprep.subr.mxu0 0.0
  %8850 = vmatpush1.msra.mxu0 0.0
  %8851 = vmatprep.subr.mxu0 0.0
  %8852 = vmatpush1.msra.mxu0 0.0
  %8853 = vmatprep.subr.mxu0 0.0
  %8854 = vmatpush1.msra.mxu0 0.0
  %8855 = vmatprep.subr.mxu0 0.0
  %8856 = vmatpush1.msra.mxu0 0.0
  %8857 = vmatprep.subr.mxu0 0.0
  %8858 = vmatpush1.msra.mxu0 0.0
  %8859 = vmatprep.mubr.f32.mxu0 0.0
  %8860 = vmatmul.mubr.f32.gmra.mrb[0].mxu0 %v8787
  %v8861 = vpop.f32.mrb[0].mxu0
  %v8862 = vadd.f32 0.0, %v8861
  %v8863 = vpop.f32.mrb[0].mxu0
  %8864 = vmatprep.mubr.f32.mxu0 0.0
  %8865 = vmatmul.mubr.f32.gmra.mrb[0].mxu0 %v8789
  %v8866 = vpop.f32.mrb[0].mxu0
  %v8867 = vadd.f32 0.0, %v8866
  %v8868 = vpop.f32.mrb[0].mxu0
  %8869 = vmatprep.mubr.f32.mxu0 0.0
  %8870 = vmatmul.mubr.f32.gmra.mrb[0].mxu0 %v8791
  %v8871 = vpop.f32.mrb[0].mxu0
  %v8872 = vadd.f32 0.0, %v8871
  %v8873 = vpop.f32.mrb[0].mxu0
  %8874 = vmatprep.mubr.f32.mxu0 0.0
  %8875 = vmatmul.mubr.f32.gmra.mrb[0].mxu0 %v8793
  %v8876 = vpop.f32.mrb[0].mxu0
  %v8877 = vadd.f32 0.0, %v8876
  %v8878 = vpop.f32.mrb[0].mxu0
  %8879 = vdwg.mxu0
  %v8880 = vsel %vm3260, %v8751, 0
  %v8882 = vsel %vm3260, %v8752, 0
  %v8884 = vsel %vm3260, %v8753, 0
  %v8886 = vsel %vm3260, %v8754, 0
  %8888 = vmatprep.subr.mxu0 0.0
  %8889 = vmatpush1.msra.mxu0 %v8755
  %8890 = vmatprep.subr.mxu0 0.0
  %8891 = vmatpush1.msra.mxu0 %v8756
  %8892 = vmatprep.subr.mxu0 0.0
  %8893 = vmatpush1.msra.mxu0 %v8757
  %8894 = vmatprep.subr.mxu0 0.0
  %8895 = vmatpush1.msra.mxu0 %v8758
  %8896 = vmatprep.subr.mxu0 0.0
  %8897 = vmatpush1.msra.mxu0 0.0
  %8898 = vmatprep.subr.mxu0 0.0
  %8899 = vmatpush1.msra.mxu0 0.0
  %8900 = vmatprep.subr.mxu0 0.0
  %8901 = vmatpush1.msra.mxu0 0.0
  %8902 = vmatprep.subr.mxu0 0.0
  %8903 = vmatpush1.msra.mxu0 0.0
  %8904 = vmatprep.subr.mxu0 0.0
  %8905 = vmatpush1.msra.mxu0 0.0
  %8906 = vmatprep.subr.mxu0 0.0
  %8907 = vmatpush1.msra.mxu0 0.0
  %8908 = vmatprep.subr.mxu0 0.0
  %8909 = vmatpush1.msra.mxu0 0.0
  %8910 = vmatprep.subr.mxu0 0.0
  %8911 = vmatpush1.msra.mxu0 0.0
  %8912 = vmatprep.subr.mxu0 0.0
  %8913 = vmatpush1.msra.mxu0 0.0
  %8914 = vmatprep.subr.mxu0 0.0
  %8915 = vmatpush1.msra.mxu0 0.0
  %8916 = vmatprep.subr.mxu0 0.0
  %8917 = vmatpush1.msra.mxu0 0.0
  %8918 = vmatprep.subr.mxu0 0.0
  %8919 = vmatpush1.msra.mxu0 0.0
  %8920 = vmatprep.subr.mxu0 0.0
  %8921 = vmatpush1.msra.mxu0 0.0
  %8922 = vmatprep.subr.mxu0 0.0
  %8923 = vmatpush1.msra.mxu0 0.0
  %8924 = vmatprep.subr.mxu0 0.0
  %8925 = vmatpush1.msra.mxu0 0.0
  %8926 = vmatprep.subr.mxu0 0.0
  %8927 = vmatpush1.msra.mxu0 0.0
  %8928 = vmatprep.subr.mxu0 0.0
  %8929 = vmatpush1.msra.mxu0 0.0
  %8930 = vmatprep.subr.mxu0 0.0
  %8931 = vmatpush1.msra.mxu0 0.0
  %8932 = vmatprep.subr.mxu0 0.0
  %8933 = vmatpush1.msra.mxu0 0.0
  %8934 = vmatprep.subr.mxu0 0.0
  %8935 = vmatpush1.msra.mxu0 0.0
  %8936 = vmatprep.subr.mxu0 0.0
  %8937 = vmatpush1.msra.mxu0 0.0
  %8938 = vmatprep.subr.mxu0 0.0
  %8939 = vmatpush1.msra.mxu0 0.0
  %8940 = vmatprep.subr.mxu0 0.0
  %8941 = vmatpush1.msra.mxu0 0.0
  %8942 = vmatprep.subr.mxu0 0.0
  %8943 = vmatpush1.msra.mxu0 0.0
  %8944 = vmatprep.subr.mxu0 0.0
  %8945 = vmatpush1.msra.mxu0 0.0
  %8946 = vmatprep.subr.mxu0 0.0
  %8947 = vmatpush1.msra.mxu0 0.0
  %8948 = vmatprep.subr.mxu0 0.0
  %8949 = vmatpush1.msra.mxu0 0.0
  %8950 = vmatprep.subr.mxu0 0.0
  %8951 = vmatpush1.msra.mxu0 0.0
  %8952 = vmatprep.mubr.f32.mxu0 0.0
  %8953 = vmatmul.mubr.f32.gmra.mrb[0].mxu0 %v8880
  %v8954 = vpop.f32.mrb[0].mxu0
  %v8955 = vadd.f32 %v8862, %v8954
  %v8956 = vpop.f32.mrb[0].mxu0
  %8957 = vmatprep.mubr.f32.mxu0 0.0
  %8958 = vmatmul.mubr.f32.gmra.mrb[0].mxu0 %v8882
  %v8959 = vpop.f32.mrb[0].mxu0
  %v8960 = vadd.f32 %v8867, %v8959
  %v8961 = vpop.f32.mrb[0].mxu0
  %8962 = vmatprep.mubr.f32.mxu0 0.0
  %8963 = vmatmul.mubr.f32.gmra.mrb[0].mxu0 %v8884
  %v8964 = vpop.f32.mrb[0].mxu0
  %v8965 = vadd.f32 %v8872, %v8964
  %v8966 = vpop.f32.mrb[0].mxu0
  %8967 = vmatprep.mubr.f32.mxu0 0.0
  %8968 = vmatmul.mubr.f32.gmra.mrb[0].mxu0 %v8886
  %v8969 = vpop.f32.mrb[0].mxu0
  %v8970 = vadd.f32 %v8877, %v8969
  %v8971 = vpop.f32.mrb[0].mxu0
  %8972 = vdwg.mxu0
  %8973 = vrot.lane.b32.xlu0 %v8751, 64
  %v8974 = vpop.permute.xlu0 %8973
  %8975 = vrot.lane.b32.xlu0 %v8752, 64
  %v8976 = vpop.permute.xlu0 %8975
  %8977 = vrot.lane.b32.xlu0 %v8753, 64
  %v8978 = vpop.permute.xlu0 %8977
  %8979 = vrot.lane.b32.xlu0 %v8754, 64
  %v8980 = vpop.permute.xlu0 %8979
  %8981 = vrot.lane.b32.xlu0 %v8755, 126
  %v8982 = vpop.permute.xlu0 %8981
  %8983 = vrot.lane.b32.xlu0 %v8756, 126
  %v8984 = vpop.permute.xlu0 %8983
  %8985 = vrot.lane.b32.xlu0 %v8757, 126
  %v8986 = vpop.permute.xlu0 %8985
  %8987 = vrot.lane.b32.xlu0 %v8758, 126
  %v8988 = vpop.permute.xlu0 %8987
  %v8993 = vsel %vm3260, %v8974, 0
  %v8995 = vsel %vm3260, %v8976, 0
  %v8997 = vsel %vm3260, %v8978, 0
  %v8999 = vsel %vm3260, %v8980, 0
  %9001 = vmatprep.subr.mxu0 0.0
  %9002 = vmatpush1.msra.mxu0 %v8982
  %9003 = vmatprep.subr.mxu0 0.0
  %9004 = vmatpush1.msra.mxu0 %v8984
  %9005 = vmatprep.subr.mxu0 0.0
  %9006 = vmatpush1.msra.mxu0 %v8986
  %9007 = vmatprep.subr.mxu0 0.0
  %9008 = vmatpush1.msra.mxu0 %v8988
  %9009 = vmatprep.subr.mxu0 0.0
  %9010 = vmatpush1.msra.mxu0 0.0
  %9011 = vmatprep.subr.mxu0 0.0
  %9012 = vmatpush1.msra.mxu0 0.0
  %9013 = vmatprep.subr.mxu0 0.0
  %9014 = vmatpush1.msra.mxu0 0.0
  %9015 = vmatprep.subr.mxu0 0.0
  %9016 = vmatpush1.msra.mxu0 0.0
  %9017 = vmatprep.subr.mxu0 0.0
  %9018 = vmatpush1.msra.mxu0 0.0
  %9019 = vmatprep.subr.mxu0 0.0
  %9020 = vmatpush1.msra.mxu0 0.0
  %9021 = vmatprep.subr.mxu0 0.0
  %9022 = vmatpush1.msra.mxu0 0.0
  %9023 = vmatprep.subr.mxu0 0.0
  %9024 = vmatpush1.msra.mxu0 0.0
  %9025 = vmatprep.subr.mxu0 0.0
  %9026 = vmatpush1.msra.mxu0 0.0
  %9027 = vmatprep.subr.mxu0 0.0
  %9028 = vmatpush1.msra.mxu0 0.0
  %9029 = vmatprep.subr.mxu0 0.0
  %9030 = vmatpush1.msra.mxu0 0.0
  %9031 = vmatprep.subr.mxu0 0.0
  %9032 = vmatpush1.msra.mxu0 0.0
  %9033 = vmatprep.subr.mxu0 0.0
  %9034 = vmatpush1.msra.mxu0 0.0
  %9035 = vmatprep.subr.mxu0 0.0
  %9036 = vmatpush1.msra.mxu0 0.0
  %9037 = vmatprep.subr.mxu0 0.0
  %9038 = vmatpush1.msra.mxu0 0.0
  %9039 = vmatprep.subr.mxu0 0.0
  %9040 = vmatpush1.msra.mxu0 0.0
  %9041 = vmatprep.subr.mxu0 0.0
  %9042 = vmatpush1.msra.mxu0 0.0
  %9043 = vmatprep.subr.mxu0 0.0
  %9044 = vmatpush1.msra.mxu0 0.0
  %9045 = vmatprep.subr.mxu0 0.0
  %9046 = vmatpush1.msra.mxu0 0.0
  %9047 = vmatprep.subr.mxu0 0.0
  %9048 = vmatpush1.msra.mxu0 0.0
  %9049 = vmatprep.subr.mxu0 0.0
  %9050 = vmatpush1.msra.mxu0 0.0
  %9051 = vmatprep.subr.mxu0 0.0
  %9052 = vmatpush1.msra.mxu0 0.0
  %9053 = vmatprep.subr.mxu0 0.0
  %9054 = vmatpush1.msra.mxu0 0.0
  %9055 = vmatprep.subr.mxu0 0.0
  %9056 = vmatpush1.msra.mxu0 0.0
  %9057 = vmatprep.subr.mxu0 0.0
  %9058 = vmatpush1.msra.mxu0 0.0
  %9059 = vmatprep.subr.mxu0 0.0
  %9060 = vmatpush1.msra.mxu0 0.0
  %9061 = vmatprep.subr.mxu0 0.0
  %9062 = vmatpush1.msra.mxu0 0.0
  %9063 = vmatprep.subr.mxu0 0.0
  %9064 = vmatpush1.msra.mxu0 0.0
  %9065 = vmatprep.mubr.f32.mxu0 0.0
  %9066 = vmatmul.mubr.f32.gmra.mrb[0].mxu0 %v8993
  %v9067 = vpop.f32.mrb[0].mxu0
  %v9068 = vadd.f32 0.0, %v9067
  %v9069 = vpop.f32.mrb[0].mxu0
  %9070 = vmatprep.mubr.f32.mxu0 0.0
  %9071 = vmatmul.mubr.f32.gmra.mrb[0].mxu0 %v8995
  %v9072 = vpop.f32.mrb[0].mxu0
  %v9073 = vadd.f32 0.0, %v9072
  %v9074 = vpop.f32.mrb[0].mxu0
  %9075 = vmatprep.mubr.f32.mxu0 0.0
  %9076 = vmatmul.mubr.f32.gmra.mrb[0].mxu0 %v8997
  %v9077 = vpop.f32.mrb[0].mxu0
  %v9078 = vadd.f32 0.0, %v9077
  %v9079 = vpop.f32.mrb[0].mxu0
  %9080 = vmatprep.mubr.f32.mxu0 0.0
  %9081 = vmatmul.mubr.f32.gmra.mrb[0].mxu0 %v8999
  %v9082 = vpop.f32.mrb[0].mxu0
  %v9083 = vadd.f32 0.0, %v9082
  %v9084 = vpop.f32.mrb[0].mxu0
  %9085 = vdwg.mxu0
  %v9086 = vadd.f32 %v8955, %v9068
  %v9087 = vadd.f32 %v8960, %v9073
  %v9088 = vadd.f32 %v8965, %v9078
  %v9089 = vadd.f32 %v8970, %v9083
  %9090 = vrot.lane.b32.xlu0 %v8751, 32
  %v9091 = vpop.permute.xlu0 %9090
  %9092 = vrot.lane.b32.xlu0 %v8752, 32
  %v9093 = vpop.permute.xlu0 %9092
  %9094 = vrot.lane.b32.xlu0 %v8753, 32
  %v9095 = vpop.permute.xlu0 %9094
  %9096 = vrot.lane.b32.xlu0 %v8754, 32
  %v9097 = vpop.permute.xlu0 %9096
  %9098 = vrot.lane.b32.xlu0 %v8755, 122
  %v9099 = vpop.permute.xlu0 %9098
  %9100 = vrot.lane.b32.xlu0 %v8756, 122
  %v9101 = vpop.permute.xlu0 %9100
  %9102 = vrot.lane.b32.xlu0 %v8757, 122
  %v9103 = vpop.permute.xlu0 %9102
  %9104 = vrot.lane.b32.xlu0 %v8758, 122
  %v9105 = vpop.permute.xlu0 %9104
  %v9110 = vsel %vm3260, %v9091, 0
  %v9112 = vsel %vm3260, %v9093, 0
  %v9114 = vsel %vm3260, %v9095, 0
  %v9116 = vsel %vm3260, %v9097, 0
  %9118 = vmatprep.subr.mxu0 0.0
  %9119 = vmatpush1.msra.mxu0 %v9099
  %9120 = vmatprep.subr.mxu0 0.0
  %9121 = vmatpush1.msra.mxu0 %v9101
  %9122 = vmatprep.subr.mxu0 0.0
  %9123 = vmatpush1.msra.mxu0 %v9103
  %9124 = vmatprep.subr.mxu0 0.0
  %9125 = vmatpush1.msra.mxu0 %v9105
  %9126 = vmatprep.subr.mxu0 0.0
  %9127 = vmatpush1.msra.mxu0 0.0
  %9128 = vmatprep.subr.mxu0 0.0
  %9129 = vmatpush1.msra.mxu0 0.0
  %9130 = vmatprep.subr.mxu0 0.0
  %9131 = vmatpush1.msra.mxu0 0.0
  %9132 = vmatprep.subr.mxu0 0.0
  %9133 = vmatpush1.msra.mxu0 0.0
  %9134 = vmatprep.subr.mxu0 0.0
  %9135 = vmatpush1.msra.mxu0 0.0
  %9136 = vmatprep.subr.mxu0 0.0
  %9137 = vmatpush1.msra.mxu0 0.0
  %9138 = vmatprep.subr.mxu0 0.0
  %9139 = vmatpush1.msra.mxu0 0.0
  %9140 = vmatprep.subr.mxu0 0.0
  %9141 = vmatpush1.msra.mxu0 0.0
  %9142 = vmatprep.subr.mxu0 0.0
  %9143 = vmatpush1.msra.mxu0 0.0
  %9144 = vmatprep.subr.mxu0 0.0
  %9145 = vmatpush1.msra.mxu0 0.0
  %9146 = vmatprep.subr.mxu0 0.0
  %9147 = vmatpush1.msra.mxu0 0.0
  %9148 = vmatprep.subr.mxu0 0.0
  %9149 = vmatpush1.msra.mxu0 0.0
  %9150 = vmatprep.subr.mxu0 0.0
  %9151 = vmatpush1.msra.mxu0 0.0
  %9152 = vmatprep.subr.mxu0 0.0
  %9153 = vmatpush1.msra.mxu0 0.0
  %9154 = vmatprep.subr.mxu0 0.0
  %9155 = vmatpush1.msra.mxu0 0.0
  %9156 = vmatprep.subr.mxu0 0.0
  %9157 = vmatpush1.msra.mxu0 0.0
  %9158 = vmatprep.subr.mxu0 0.0
  %9159 = vmatpush1.msra.mxu0 0.0
  %9160 = vmatprep.subr.mxu0 0.0
  %9161 = vmatpush1.msra.mxu0 0.0
  %9162 = vmatprep.subr.mxu0 0.0
  %9163 = vmatpush1.msra.mxu0 0.0
  %9164 = vmatprep.subr.mxu0 0.0
  %9165 = vmatpush1.msra.mxu0 0.0
  %9166 = vmatprep.subr.mxu0 0.0
  %9167 = vmatpush1.msra.mxu0 0.0
  %9168 = vmatprep.subr.mxu0 0.0
  %9169 = vmatpush1.msra.mxu0 0.0
  %9170 = vmatprep.subr.mxu0 0.0
  %9171 = vmatpush1.msra.mxu0 0.0
  %9172 = vmatprep.subr.mxu0 0.0
  %9173 = vmatpush1.msra.mxu0 0.0
  %9174 = vmatprep.subr.mxu0 0.0
  %9175 = vmatpush1.msra.mxu0 0.0
  %9176 = vmatprep.subr.mxu0 0.0
  %9177 = vmatpush1.msra.mxu0 0.0
  %9178 = vmatprep.subr.mxu0 0.0
  %9179 = vmatpush1.msra.mxu0 0.0
  %9180 = vmatprep.subr.mxu0 0.0
  %9181 = vmatpush1.msra.mxu0 0.0
  %9182 = vmatprep.mubr.f32.mxu0 0.0
  %9183 = vmatmul.mubr.f32.gmra.mrb[0].mxu0 %v9110
  %v9184 = vpop.f32.mrb[0].mxu0
  %v9185 = vadd.f32 0.0, %v9184
  %v9186 = vpop.f32.mrb[0].mxu0
  %9187 = vmatprep.mubr.f32.mxu0 0.0
  %9188 = vmatmul.mubr.f32.gmra.mrb[0].mxu0 %v9112
  %v9189 = vpop.f32.mrb[0].mxu0
  %v9190 = vadd.f32 0.0, %v9189
  %v9191 = vpop.f32.mrb[0].mxu0
  %9192 = vmatprep.mubr.f32.mxu0 0.0
  %9193 = vmatmul.mubr.f32.gmra.mrb[0].mxu0 %v9114
  %v9194 = vpop.f32.mrb[0].mxu0
  %v9195 = vadd.f32 0.0, %v9194
  %v9196 = vpop.f32.mrb[0].mxu0
  %9197 = vmatprep.mubr.f32.mxu0 0.0
  %9198 = vmatmul.mubr.f32.gmra.mrb[0].mxu0 %v9116
  %v9199 = vpop.f32.mrb[0].mxu0
  %v9200 = vadd.f32 0.0, %v9199
  %v9201 = vpop.f32.mrb[0].mxu0
  %9202 = vdwg.mxu0
  %v9203 = vadd.f32 %v9086, %v9185
  %v9204 = vadd.f32 %v9087, %v9190
  %v9205 = vadd.f32 %v9088, %v9195
  %v9206 = vadd.f32 %v9089, %v9200
  %v9207 = vld [vmem:[%s4 + $0x8] sm:$0xff]
  %v9208 = vld [vmem:[%s4 + $0x20] sm:$0xff]
  %v9209 = vld [vmem:[%s4 + $0x38] sm:$0xff]
  %v9210 = vld [vmem:[%s4 + $0x50] sm:$0xff]
  %9211 = vrot.lane.b32.xlu0 %v8755, 121
  %v9212 = vpop.permute.xlu0 %9211
  %9213 = vrot.lane.b32.xlu0 %v8756, 121
  %v9214 = vpop.permute.xlu0 %9213
  %9215 = vrot.lane.b32.xlu0 %v8757, 121
  %v9216 = vpop.permute.xlu0 %9215
  %9217 = vrot.lane.b32.xlu0 %v8758, 121
  %v9218 = vpop.permute.xlu0 %9217
  %v9224 = vsel %vm3260, %v9207, 0
  %v9227 = vsel %vm3260, %v9208, 0
  %v9230 = vsel %vm3260, %v9209, 0
  %v9233 = vsel %vm3260, %v9210, 0
  %9235 = vmatprep.subr.mxu0 0.0
  %9236 = vmatpush1.msra.mxu0 %v9212
  %9237 = vmatprep.subr.mxu0 0.0
  %9238 = vmatpush1.msra.mxu0 %v9214
  %9239 = vmatprep.subr.mxu0 0.0
  %9240 = vmatpush1.msra.mxu0 %v9216
  %9241 = vmatprep.subr.mxu0 0.0
  %9242 = vmatpush1.msra.mxu0 %v9218
  %9243 = vmatprep.subr.mxu0 0.0
  %9244 = vmatpush1.msra.mxu0 0.0
  %9245 = vmatprep.subr.mxu0 0.0
  %9246 = vmatpush1.msra.mxu0 0.0
  %9247 = vmatprep.subr.mxu0 0.0
  %9248 = vmatpush1.msra.mxu0 0.0
  %9249 = vmatprep.subr.mxu0 0.0
  %9250 = vmatpush1.msra.mxu0 0.0
  %9251 = vmatprep.subr.mxu0 0.0
  %9252 = vmatpush1.msra.mxu0 0.0
  %9253 = vmatprep.subr.mxu0 0.0
  %9254 = vmatpush1.msra.mxu0 0.0
  %9255 = vmatprep.subr.mxu0 0.0
  %9256 = vmatpush1.msra.mxu0 0.0
  %9257 = vmatprep.subr.mxu0 0.0
  %9258 = vmatpush1.msra.mxu0 0.0
  %9259 = vmatprep.subr.mxu0 0.0
  %9260 = vmatpush1.msra.mxu0 0.0
  %9261 = vmatprep.subr.mxu0 0.0
  %9262 = vmatpush1.msra.mxu0 0.0
  %9263 = vmatprep.subr.mxu0 0.0
  %9264 = vmatpush1.msra.mxu0 0.0
  %9265 = vmatprep.subr.mxu0 0.0
  %9266 = vmatpush1.msra.mxu0 0.0
  %9267 = vmatprep.subr.mxu0 0.0
  %9268 = vmatpush1.msra.mxu0 0.0
  %9269 = vmatprep.subr.mxu0 0.0
  %9270 = vmatpush1.msra.mxu0 0.0
  %9271 = vmatprep.subr.mxu0 0.0
  %9272 = vmatpush1.msra.mxu0 0.0
  %9273 = vmatprep.subr.mxu0 0.0
  %9274 = vmatpush1.msra.mxu0 0.0
  %9275 = vmatprep.subr.mxu0 0.0
  %9276 = vmatpush1.msra.mxu0 0.0
  %9277 = vmatprep.subr.mxu0 0.0
  %9278 = vmatpush1.msra.mxu0 0.0
  %9279 = vmatprep.subr.mxu0 0.0
  %9280 = vmatpush1.msra.mxu0 0.0
  %9281 = vmatprep.subr.mxu0 0.0
  %9282 = vmatpush1.msra.mxu0 0.0
  %9283 = vmatprep.subr.mxu0 0.0
  %9284 = vmatpush1.msra.mxu0 0.0
  %9285 = vmatprep.subr.mxu0 0.0
  %9286 = vmatpush1.msra.mxu0 0.0
  %9287 = vmatprep.subr.mxu0 0.0
  %9288 = vmatpush1.msra.mxu0 0.0
  %9289 = vmatprep.subr.mxu0 0.0
  %9290 = vmatpush1.msra.mxu0 0.0
  %9291 = vmatprep.subr.mxu0 0.0
  %9292 = vmatpush1.msra.mxu0 0.0
  %9293 = vmatprep.subr.mxu0 0.0
  %9294 = vmatpush1.msra.mxu0 0.0
  %9295 = vmatprep.subr.mxu0 0.0
  %9296 = vmatpush1.msra.mxu0 0.0
  %9297 = vmatprep.subr.mxu0 0.0
  %9298 = vmatpush1.msra.mxu0 0.0
  %9299 = vmatprep.mubr.f32.mxu0 0.0
  %9300 = vmatmul.mubr.f32.gmra.mrb[0].mxu0 %v9224
  %v9301 = vpop.f32.mrb[0].mxu0
  %v9302 = vadd.f32 0.0, %v9301
  %v9303 = vpop.f32.mrb[0].mxu0
  %9304 = vmatprep.mubr.f32.mxu0 0.0
  %9305 = vmatmul.mubr.f32.gmra.mrb[0].mxu0 %v9227
  %v9306 = vpop.f32.mrb[0].mxu0
  %v9307 = vadd.f32 0.0, %v9306
  %v9308 = vpop.f32.mrb[0].mxu0
  %9309 = vmatprep.mubr.f32.mxu0 0.0
  %9310 = vmatmul.mubr.f32.gmra.mrb[0].mxu0 %v9230
  %v9311 = vpop.f32.mrb[0].mxu0
  %v9312 = vadd.f32 0.0, %v9311
  %v9313 = vpop.f32.mrb[0].mxu0
  %9314 = vmatprep.mubr.f32.mxu0 0.0
  %9315 = vmatmul.mubr.f32.gmra.mrb[0].mxu0 %v9233
  %v9316 = vpop.f32.mrb[0].mxu0
  %v9317 = vadd.f32 0.0, %v9316
  %v9318 = vpop.f32.mrb[0].mxu0
  %9319 = vdwg.mxu0
  %v9320 = vadd.f32 %v9203, %v9302
  %v9321 = vadd.f32 %v9204, %v9307
  %v9322 = vadd.f32 %v9205, %v9312
  %v9323 = vadd.f32 %v9206, %v9317
  %9324 = vrot.lane.b32.xlu0 %v9207, 96
  %v9325 = vpop.permute.xlu0 %9324
  %9326 = vrot.lane.b32.xlu0 %v9208, 96
  %v9327 = vpop.permute.xlu0 %9326
  %9328 = vrot.lane.b32.xlu0 %v9209, 96
  %v9329 = vpop.permute.xlu0 %9328
  %9330 = vrot.lane.b32.xlu0 %v9210, 96
  %v9331 = vpop.permute.xlu0 %9330
  %9332 = vrot.lane.b32.xlu0 %v8755, 120
  %v9333 = vpop.permute.xlu0 %9332
  %9334 = vrot.lane.b32.xlu0 %v8756, 120
  %v9335 = vpop.permute.xlu0 %9334
  %9336 = vrot.lane.b32.xlu0 %v8757, 120
  %v9337 = vpop.permute.xlu0 %9336
  %9338 = vrot.lane.b32.xlu0 %v8758, 120
  %v9339 = vpop.permute.xlu0 %9338
  %v9344 = vsel %vm3260, %v9325, 0
  %v9346 = vsel %vm3260, %v9327, 0
  %v9348 = vsel %vm3260, %v9329, 0
  %v9350 = vsel %vm3260, %v9331, 0
  %9352 = vmatprep.subr.mxu0 0.0
  %9353 = vmatpush1.msra.mxu0 %v9333
  %9354 = vmatprep.subr.mxu0 0.0
  %9355 = vmatpush1.msra.mxu0 %v9335
  %9356 = vmatprep.subr.mxu0 0.0
  %9357 = vmatpush1.msra.mxu0 %v9337
  %9358 = vmatprep.subr.mxu0 0.0
  %9359 = vmatpush1.msra.mxu0 %v9339
  %9360 = vmatprep.subr.mxu0 0.0
  %9361 = vmatpush1.msra.mxu0 0.0
  %9362 = vmatprep.subr.mxu0 0.0
  %9363 = vmatpush1.msra.mxu0 0.0
  %9364 = vmatprep.subr.mxu0 0.0
  %9365 = vmatpush1.msra.mxu0 0.0
  %9366 = vmatprep.subr.mxu0 0.0
  %9367 = vmatpush1.msra.mxu0 0.0
  %9368 = vmatprep.subr.mxu0 0.0
  %9369 = vmatpush1.msra.mxu0 0.0
  %9370 = vmatprep.subr.mxu0 0.0
  %9371 = vmatpush1.msra.mxu0 0.0
  %9372 = vmatprep.subr.mxu0 0.0
  %9373 = vmatpush1.msra.mxu0 0.0
  %9374 = vmatprep.subr.mxu0 0.0
  %9375 = vmatpush1.msra.mxu0 0.0
  %9376 = vmatprep.subr.mxu0 0.0
  %9377 = vmatpush1.msra.mxu0 0.0
  %9378 = vmatprep.subr.mxu0 0.0
  %9379 = vmatpush1.msra.mxu0 0.0
  %9380 = vmatprep.subr.mxu0 0.0
  %9381 = vmatpush1.msra.mxu0 0.0
  %9382 = vmatprep.subr.mxu0 0.0
  %9383 = vmatpush1.msra.mxu0 0.0
  %9384 = vmatprep.subr.mxu0 0.0
  %9385 = vmatpush1.msra.mxu0 0.0
  %9386 = vmatprep.subr.mxu0 0.0
  %9387 = vmatpush1.msra.mxu0 0.0
  %9388 = vmatprep.subr.mxu0 0.0
  %9389 = vmatpush1.msra.mxu0 0.0
  %9390 = vmatprep.subr.mxu0 0.0
  %9391 = vmatpush1.msra.mxu0 0.0
  %9392 = vmatprep.subr.mxu0 0.0
  %9393 = vmatpush1.msra.mxu0 0.0
  %9394 = vmatprep.subr.mxu0 0.0
  %9395 = vmatpush1.msra.mxu0 0.0
  %9396 = vmatprep.subr.mxu0 0.0
  %9397 = vmatpush1.msra.mxu0 0.0
  %9398 = vmatprep.subr.mxu0 0.0
  %9399 = vmatpush1.msra.mxu0 0.0
  %9400 = vmatprep.subr.mxu0 0.0
  %9401 = vmatpush1.msra.mxu0 0.0
  %9402 = vmatprep.subr.mxu0 0.0
  %9403 = vmatpush1.msra.mxu0 0.0
  %9404 = vmatprep.subr.mxu0 0.0
  %9405 = vmatpush1.msra.mxu0 0.0
  %9406 = vmatprep.subr.mxu0 0.0
  %9407 = vmatpush1.msra.mxu0 0.0
  %9408 = vmatprep.subr.mxu0 0.0
  %9409 = vmatpush1.msra.mxu0 0.0
  %9410 = vmatprep.subr.mxu0 0.0
  %9411 = vmatpush1.msra.mxu0 0.0
  %9412 = vmatprep.subr.mxu0 0.0
  %9413 = vmatpush1.msra.mxu0 0.0
  %9414 = vmatprep.subr.mxu0 0.0
  %9415 = vmatpush1.msra.mxu0 0.0
  %9416 = vmatprep.mubr.f32.mxu0 0.0
  %9417 = vmatmul.mubr.f32.gmra.mrb[0].mxu0 %v9344
  %v9418 = vpop.f32.mrb[0].mxu0
  %v9419 = vadd.f32 0.0, %v9418
  %v9420 = vpop.f32.mrb[0].mxu0
  %9421 = vmatprep.mubr.f32.mxu0 0.0
  %9422 = vmatmul.mubr.f32.gmra.mrb[0].mxu0 %v9346
  %v9423 = vpop.f32.mrb[0].mxu0
  %v9424 = vadd.f32 0.0, %v9423
  %v9425 = vpop.f32.mrb[0].mxu0
  %9426 = vmatprep.mubr.f32.mxu0 0.0
  %9427 = vmatmul.mubr.f32.gmra.mrb[0].mxu0 %v9348
  %v9428 = vpop.f32.mrb[0].mxu0
  %v9429 = vadd.f32 0.0, %v9428
  %v9430 = vpop.f32.mrb[0].mxu0
  %9431 = vmatprep.mubr.f32.mxu0 0.0
  %9432 = vmatmul.mubr.f32.gmra.mrb[0].mxu0 %v9350
  %v9433 = vpop.f32.mrb[0].mxu0
  %v9434 = vadd.f32 0.0, %v9433
  %v9435 = vpop.f32.mrb[0].mxu0
  %9436 = vdwg.mxu0
  %v9437 = vadd.f32 %v9320, %v9419
  %v9438 = vadd.f32 %v9321, %v9424
  %v9439 = vadd.f32 %v9322, %v9429
  %v9440 = vadd.f32 %v9323, %v9434
  %9441 = vrot.lane.b32.xlu0 %v9207, 64
  %v9442 = vpop.permute.xlu0 %9441
  %9443 = vrot.lane.b32.xlu0 %v9208, 64
  %v9444 = vpop.permute.xlu0 %9443
  %9445 = vrot.lane.b32.xlu0 %v9209, 64
  %v9446 = vpop.permute.xlu0 %9445
  %9447 = vrot.lane.b32.xlu0 %v9210, 64
  %v9448 = vpop.permute.xlu0 %9447
  %9449 = vrot.lane.b32.xlu0 %v8755, 116
  %v9450 = vpop.permute.xlu0 %9449
  %9451 = vrot.lane.b32.xlu0 %v8756, 116
  %v9452 = vpop.permute.xlu0 %9451
  %9453 = vrot.lane.b32.xlu0 %v8757, 116
  %v9454 = vpop.permute.xlu0 %9453
  %9455 = vrot.lane.b32.xlu0 %v8758, 116
  %v9456 = vpop.permute.xlu0 %9455
  %v9461 = vsel %vm3260, %v9442, 0
  %v9463 = vsel %vm3260, %v9444, 0
  %v9465 = vsel %vm3260, %v9446, 0
  %v9467 = vsel %vm3260, %v9448, 0
  %9469 = vmatprep.subr.mxu0 0.0
  %9470 = vmatpush1.msra.mxu0 %v9450
  %9471 = vmatprep.subr.mxu0 0.0
  %9472 = vmatpush1.msra.mxu0 %v9452
  %9473 = vmatprep.subr.mxu0 0.0
  %9474 = vmatpush1.msra.mxu0 %v9454
  %9475 = vmatprep.subr.mxu0 0.0
  %9476 = vmatpush1.msra.mxu0 %v9456
  %9477 = vmatprep.subr.mxu0 0.0
  %9478 = vmatpush1.msra.mxu0 0.0
  %9479 = vmatprep.subr.mxu0 0.0
  %9480 = vmatpush1.msra.mxu0 0.0
  %9481 = vmatprep.subr.mxu0 0.0
  %9482 = vmatpush1.msra.mxu0 0.0
  %9483 = vmatprep.subr.mxu0 0.0
  %9484 = vmatpush1.msra.mxu0 0.0
  %9485 = vmatprep.subr.mxu0 0.0
  %9486 = vmatpush1.msra.mxu0 0.0
  %9487 = vmatprep.subr.mxu0 0.0
  %9488 = vmatpush1.msra.mxu0 0.0
  %9489 = vmatprep.subr.mxu0 0.0
  %9490 = vmatpush1.msra.mxu0 0.0
  %9491 = vmatprep.subr.mxu0 0.0
  %9492 = vmatpush1.msra.mxu0 0.0
  %9493 = vmatprep.subr.mxu0 0.0
  %9494 = vmatpush1.msra.mxu0 0.0
  %9495 = vmatprep.subr.mxu0 0.0
  %9496 = vmatpush1.msra.mxu0 0.0
  %9497 = vmatprep.subr.mxu0 0.0
  %9498 = vmatpush1.msra.mxu0 0.0
  %9499 = vmatprep.subr.mxu0 0.0
  %9500 = vmatpush1.msra.mxu0 0.0
  %9501 = vmatprep.subr.mxu0 0.0
  %9502 = vmatpush1.msra.mxu0 0.0
  %9503 = vmatprep.subr.mxu0 0.0
  %9504 = vmatpush1.msra.mxu0 0.0
  %9505 = vmatprep.subr.mxu0 0.0
  %9506 = vmatpush1.msra.mxu0 0.0
  %9507 = vmatprep.subr.mxu0 0.0
  %9508 = vmatpush1.msra.mxu0 0.0
  %9509 = vmatprep.subr.mxu0 0.0
  %9510 = vmatpush1.msra.mxu0 0.0
  %9511 = vmatprep.subr.mxu0 0.0
  %9512 = vmatpush1.msra.mxu0 0.0
  %9513 = vmatprep.subr.mxu0 0.0
  %9514 = vmatpush1.msra.mxu0 0.0
  %9515 = vmatprep.subr.mxu0 0.0
  %9516 = vmatpush1.msra.mxu0 0.0
  %9517 = vmatprep.subr.mxu0 0.0
  %9518 = vmatpush1.msra.mxu0 0.0
  %9519 = vmatprep.subr.mxu0 0.0
  %9520 = vmatpush1.msra.mxu0 0.0
  %9521 = vmatprep.subr.mxu0 0.0
  %9522 = vmatpush1.msra.mxu0 0.0
  %9523 = vmatprep.subr.mxu0 0.0
  %9524 = vmatpush1.msra.mxu0 0.0
  %9525 = vmatprep.subr.mxu0 0.0
  %9526 = vmatpush1.msra.mxu0 0.0
  %9527 = vmatprep.subr.mxu0 0.0
  %9528 = vmatpush1.msra.mxu0 0.0
  %9529 = vmatprep.subr.mxu0 0.0
  %9530 = vmatpush1.msra.mxu0 0.0
  %9531 = vmatprep.subr.mxu0 0.0
  %9532 = vmatpush1.msra.mxu0 0.0
  %9533 = vmatprep.mubr.f32.mxu0 0.0
  %9534 = vmatmul.mubr.f32.gmra.mrb[0].mxu0 %v9461
  %v9535 = vpop.f32.mrb[0].mxu0
  %v9536 = vadd.f32 0.0, %v9535
  %v9537 = vpop.f32.mrb[0].mxu0
  %9538 = vmatprep.mubr.f32.mxu0 0.0
  %9539 = vmatmul.mubr.f32.gmra.mrb[0].mxu0 %v9463
  %v9540 = vpop.f32.mrb[0].mxu0
  %v9541 = vadd.f32 0.0, %v9540
  %v9542 = vpop.f32.mrb[0].mxu0
  %9543 = vmatprep.mubr.f32.mxu0 0.0
  %9544 = vmatmul.mubr.f32.gmra.mrb[0].mxu0 %v9465
  %v9545 = vpop.f32.mrb[0].mxu0
  %v9546 = vadd.f32 0.0, %v9545
  %v9547 = vpop.f32.mrb[0].mxu0
  %9548 = vmatprep.mubr.f32.mxu0 0.0
  %9549 = vmatmul.mubr.f32.gmra.mrb[0].mxu0 %v9467
  %v9550 = vpop.f32.mrb[0].mxu0
  %v9551 = vadd.f32 0.0, %v9550
  %v9552 = vpop.f32.mrb[0].mxu0
  %9553 = vdwg.mxu0
  %v9554 = vadd.f32 %v9437, %v9536
  %v9555 = vadd.f32 %v9438, %v9541
  %v9556 = vadd.f32 %v9439, %v9546
  %v9557 = vadd.f32 %v9440, %v9551
  %9558 = vrot.lane.b32.xlu0 %v9207, 32
  %v9559 = vpop.permute.xlu0 %9558
  %9560 = vrot.lane.b32.xlu0 %v9208, 32
  %v9561 = vpop.permute.xlu0 %9560
  %9562 = vrot.lane.b32.xlu0 %v9209, 32
  %v9563 = vpop.permute.xlu0 %9562
  %9564 = vrot.lane.b32.xlu0 %v9210, 32
  %v9565 = vpop.permute.xlu0 %9564
  %9566 = vrot.lane.b32.xlu0 %v8755, 115
  %v9567 = vpop.permute.xlu0 %9566
  %9568 = vrot.lane.b32.xlu0 %v8756, 115
  %v9569 = vpop.permute.xlu0 %9568
  %9570 = vrot.lane.b32.xlu0 %v8757, 115
  %v9571 = vpop.permute.xlu0 %9570
  %9572 = vrot.lane.b32.xlu0 %v8758, 115
  %v9573 = vpop.permute.xlu0 %9572
  %v9578 = vsel %vm3260, %v9559, 0
  %v9580 = vsel %vm3260, %v9561, 0
  %v9582 = vsel %vm3260, %v9563, 0
  %v9584 = vsel %vm3260, %v9565, 0
  %9586 = vmatprep.subr.mxu0 0.0
  %9587 = vmatpush1.msra.mxu0 %v9567
  %9588 = vmatprep.subr.mxu0 0.0
  %9589 = vmatpush1.msra.mxu0 %v9569
  %9590 = vmatprep.subr.mxu0 0.0
  %9591 = vmatpush1.msra.mxu0 %v9571
  %9592 = vmatprep.subr.mxu0 0.0
  %9593 = vmatpush1.msra.mxu0 %v9573
  %9594 = vmatprep.subr.mxu0 0.0
  %9595 = vmatpush1.msra.mxu0 0.0
  %9596 = vmatprep.subr.mxu0 0.0
  %9597 = vmatpush1.msra.mxu0 0.0
  %9598 = vmatprep.subr.mxu0 0.0
  %9599 = vmatpush1.msra.mxu0 0.0
  %9600 = vmatprep.subr.mxu0 0.0
  %9601 = vmatpush1.msra.mxu0 0.0
  %9602 = vmatprep.subr.mxu0 0.0
  %9603 = vmatpush1.msra.mxu0 0.0
  %9604 = vmatprep.subr.mxu0 0.0
  %9605 = vmatpush1.msra.mxu0 0.0
  %9606 = vmatprep.subr.mxu0 0.0
  %9607 = vmatpush1.msra.mxu0 0.0
  %9608 = vmatprep.subr.mxu0 0.0
  %9609 = vmatpush1.msra.mxu0 0.0
  %9610 = vmatprep.subr.mxu0 0.0
  %9611 = vmatpush1.msra.mxu0 0.0
  %9612 = vmatprep.subr.mxu0 0.0
  %9613 = vmatpush1.msra.mxu0 0.0
  %9614 = vmatprep.subr.mxu0 0.0
  %9615 = vmatpush1.msra.mxu0 0.0
  %9616 = vmatprep.subr.mxu0 0.0
  %9617 = vmatpush1.msra.mxu0 0.0
  %9618 = vmatprep.subr.mxu0 0.0
  %9619 = vmatpush1.msra.mxu0 0.0
  %9620 = vmatprep.subr.mxu0 0.0
  %9621 = vmatpush1.msra.mxu0 0.0
  %9622 = vmatprep.subr.mxu0 0.0
  %9623 = vmatpush1.msra.mxu0 0.0
  %9624 = vmatprep.subr.mxu0 0.0
  %9625 = vmatpush1.msra.mxu0 0.0
  %9626 = vmatprep.subr.mxu0 0.0
  %9627 = vmatpush1.msra.mxu0 0.0
  %9628 = vmatprep.subr.mxu0 0.0
  %9629 = vmatpush1.msra.mxu0 0.0
  %9630 = vmatprep.subr.mxu0 0.0
  %9631 = vmatpush1.msra.mxu0 0.0
  %9632 = vmatprep.subr.mxu0 0.0
  %9633 = vmatpush1.msra.mxu0 0.0
  %9634 = vmatprep.subr.mxu0 0.0
  %9635 = vmatpush1.msra.mxu0 0.0
  %9636 = vmatprep.subr.mxu0 0.0
  %9637 = vmatpush1.msra.mxu0 0.0
  %9638 = vmatprep.subr.mxu0 0.0
  %9639 = vmatpush1.msra.mxu0 0.0
  %9640 = vmatprep.subr.mxu0 0.0
  %9641 = vmatpush1.msra.mxu0 0.0
  %9642 = vmatprep.subr.mxu0 0.0
  %9643 = vmatpush1.msra.mxu0 0.0
  %9644 = vmatprep.subr.mxu0 0.0
  %9645 = vmatpush1.msra.mxu0 0.0
  %9646 = vmatprep.subr.mxu0 0.0
  %9647 = vmatpush1.msra.mxu0 0.0
  %9648 = vmatprep.subr.mxu0 0.0
  %9649 = vmatpush1.msra.mxu0 0.0
  %9650 = vmatprep.mubr.f32.mxu0 0.0
  %9651 = vmatmul.mubr.f32.gmra.mrb[0].mxu0 %v9578
  %v9652 = vpop.f32.mrb[0].mxu0
  %v9653 = vadd.f32 0.0, %v9652
  %v9654 = vpop.f32.mrb[0].mxu0
  %9655 = vmatprep.mubr.f32.mxu0 0.0
  %9656 = vmatmul.mubr.f32.gmra.mrb[0].mxu0 %v9580
  %v9657 = vpop.f32.mrb[0].mxu0
  %v9658 = vadd.f32 0.0, %v9657
  %v9659 = vpop.f32.mrb[0].mxu0
  %9660 = vmatprep.mubr.f32.mxu0 0.0
  %9661 = vmatmul.mubr.f32.gmra.mrb[0].mxu0 %v9582
  %v9662 = vpop.f32.mrb[0].mxu0
  %v9663 = vadd.f32 0.0, %v9662
  %v9664 = vpop.f32.mrb[0].mxu0
  %9665 = vmatprep.mubr.f32.mxu0 0.0
  %9666 = vmatmul.mubr.f32.gmra.mrb[0].mxu0 %v9584
  %v9667 = vpop.f32.mrb[0].mxu0
  %v9668 = vadd.f32 0.0, %v9667
  %v9669 = vpop.f32.mrb[0].mxu0
  %9670 = vdwg.mxu0
  %v9671 = vadd.f32 %v9554, %v9653
  %v9672 = vadd.f32 %v9555, %v9658
  %v9673 = vadd.f32 %v9556, %v9663
  %v9674 = vadd.f32 %v9557, %v9668
  %v9675 = vld [vmem:[%s4 + $0x10] sm:$0xff]
  %v9676 = vld [vmem:[%s4 + $0x28] sm:$0xff]
  %v9677 = vld [vmem:[%s4 + $0x40] sm:$0xff]
  %v9678 = vld [vmem:[%s4 + $0x58] sm:$0xff]
  %9679 = vrot.lane.b32.xlu0 %v8755, 114
  %v9680 = vpop.permute.xlu0 %9679
  %9681 = vrot.lane.b32.xlu0 %v8756, 114
  %v9682 = vpop.permute.xlu0 %9681
  %9683 = vrot.lane.b32.xlu0 %v8757, 114
  %v9684 = vpop.permute.xlu0 %9683
  %9685 = vrot.lane.b32.xlu0 %v8758, 114
  %v9686 = vpop.permute.xlu0 %9685
  %v9692 = vsel %vm3260, %v9675, 0
  %v9695 = vsel %vm3260, %v9676, 0
  %v9698 = vsel %vm3260, %v9677, 0
  %v9701 = vsel %vm3260, %v9678, 0
  %9703 = vmatprep.subr.mxu0 0.0
  %9704 = vmatpush1.msra.mxu0 %v9680
  %9705 = vmatprep.subr.mxu0 0.0
  %9706 = vmatpush1.msra.mxu0 %v9682
  %9707 = vmatprep.subr.mxu0 0.0
  %9708 = vmatpush1.msra.mxu0 %v9684
  %9709 = vmatprep.subr.mxu0 0.0
  %9710 = vmatpush1.msra.mxu0 %v9686
  %9711 = vmatprep.subr.mxu0 0.0
  %9712 = vmatpush1.msra.mxu0 0.0
  %9713 = vmatprep.subr.mxu0 0.0
  %9714 = vmatpush1.msra.mxu0 0.0
  %9715 = vmatprep.subr.mxu0 0.0
  %9716 = vmatpush1.msra.mxu0 0.0
  %9717 = vmatprep.subr.mxu0 0.0
  %9718 = vmatpush1.msra.mxu0 0.0
  %9719 = vmatprep.subr.mxu0 0.0
  %9720 = vmatpush1.msra.mxu0 0.0
  %9721 = vmatprep.subr.mxu0 0.0
  %9722 = vmatpush1.msra.mxu0 0.0
  %9723 = vmatprep.subr.mxu0 0.0
  %9724 = vmatpush1.msra.mxu0 0.0
  %9725 = vmatprep.subr.mxu0 0.0
  %9726 = vmatpush1.msra.mxu0 0.0
  %9727 = vmatprep.subr.mxu0 0.0
  %9728 = vmatpush1.msra.mxu0 0.0
  %9729 = vmatprep.subr.mxu0 0.0
  %9730 = vmatpush1.msra.mxu0 0.0
  %9731 = vmatprep.subr.mxu0 0.0
  %9732 = vmatpush1.msra.mxu0 0.0
  %9733 = vmatprep.subr.mxu0 0.0
  %9734 = vmatpush1.msra.mxu0 0.0
  %9735 = vmatprep.subr.mxu0 0.0
  %9736 = vmatpush1.msra.mxu0 0.0
  %9737 = vmatprep.subr.mxu0 0.0
  %9738 = vmatpush1.msra.mxu0 0.0
  %9739 = vmatprep.subr.mxu0 0.0
  %9740 = vmatpush1.msra.mxu0 0.0
  %9741 = vmatprep.subr.mxu0 0.0
  %9742 = vmatpush1.msra.mxu0 0.0
  %9743 = vmatprep.subr.mxu0 0.0
  %9744 = vmatpush1.msra.mxu0 0.0
  %9745 = vmatprep.subr.mxu0 0.0
  %9746 = vmatpush1.msra.mxu0 0.0
  %9747 = vmatprep.subr.mxu0 0.0
  %9748 = vmatpush1.msra.mxu0 0.0
  %9749 = vmatprep.subr.mxu0 0.0
  %9750 = vmatpush1.msra.mxu0 0.0
  %9751 = vmatprep.subr.mxu0 0.0
  %9752 = vmatpush1.msra.mxu0 0.0
  %9753 = vmatprep.subr.mxu0 0.0
  %9754 = vmatpush1.msra.mxu0 0.0
  %9755 = vmatprep.subr.mxu0 0.0
  %9756 = vmatpush1.msra.mxu0 0.0
  %9757 = vmatprep.subr.mxu0 0.0
  %9758 = vmatpush1.msra.mxu0 0.0
  %9759 = vmatprep.subr.mxu0 0.0
  %9760 = vmatpush1.msra.mxu0 0.0
  %9761 = vmatprep.subr.mxu0 0.0
  %9762 = vmatpush1.msra.mxu0 0.0
  %9763 = vmatprep.subr.mxu0 0.0
  %9764 = vmatpush1.msra.mxu0 0.0
  %9765 = vmatprep.subr.mxu0 0.0
  %9766 = vmatpush1.msra.mxu0 0.0
  %9767 = vmatprep.mubr.f32.mxu0 0.0
  %9768 = vmatmul.mubr.f32.gmra.mrb[0].mxu0 %v9692
  %v9769 = vpop.f32.mrb[0].mxu0
  %v9770 = vadd.f32 0.0, %v9769
  %v9771 = vpop.f32.mrb[0].mxu0
  %9772 = vmatprep.mubr.f32.mxu0 0.0
  %9773 = vmatmul.mubr.f32.gmra.mrb[0].mxu0 %v9695
  %v9774 = vpop.f32.mrb[0].mxu0
  %v9775 = vadd.f32 0.0, %v9774
  %v9776 = vpop.f32.mrb[0].mxu0
  %9777 = vmatprep.mubr.f32.mxu0 0.0
  %9778 = vmatmul.mubr.f32.gmra.mrb[0].mxu0 %v9698
  %v9779 = vpop.f32.mrb[0].mxu0
  %v9780 = vadd.f32 0.0, %v9779
  %v9781 = vpop.f32.mrb[0].mxu0
  %9782 = vmatprep.mubr.f32.mxu0 0.0
  %9783 = vmatmul.mubr.f32.gmra.mrb[0].mxu0 %v9701
  %v9784 = vpop.f32.mrb[0].mxu0
  %v9785 = vadd.f32 0.0, %v9784
  %v9786 = vpop.f32.mrb[0].mxu0
  %9787 = vdwg.mxu0
  %v9788 = vadd.f32 %v9671, %v9770
  %v9789 = vadd.f32 %v9672, %v9775
  %v9790 = vadd.f32 %v9673, %v9780
  %v9791 = vadd.f32 %v9674, %v9785
  %v9792 = vld [vmem:[%s10] sm:$0xff]
  %v9793 = vld [vmem:[%s10 + $0x8] sm:$0xff]
  %v9794 = vld [vmem:[%s10 + $0x10] sm:$0xff]
  %v9795 = vld [vmem:[%s10 + $0x18] sm:$0xff]
  %9797 = vset.pattern.permute.xlu0 0
  %9798 = vperm.xlu0 %9797, %v9792
  %v9799 = vpop.permute.xlu0 %9798
  %9802 = vset.pattern.permute.xlu0 0
  %9803 = vperm.xlu0 %9802, %v9793
  %v9804 = vpop.permute.xlu0 %9803
  %9807 = vset.pattern.permute.xlu0 0
  %9808 = vperm.xlu0 %9807, %v9794
  %v9809 = vpop.permute.xlu0 %9808
  %9812 = vset.pattern.permute.xlu0 0
  %9813 = vperm.xlu0 %9812, %v9795
  %v9814 = vpop.permute.xlu0 %9813
  %v9816 = vadd.f32 %v9788, %v9799
  %v9817 = vadd.f32 %v9789, %v9804
  %v9818 = vadd.f32 %v9790, %v9809
  %v9819 = vadd.f32 %v9791, %v9814
  %9824 = vrot.lane.b32.xlu0 %v9816, 127
  %v9825 = vpop.permute.xlu0 %9824
  %9826 = vrot.lane.b32.xlu0 %v9817, 127
  %v9827 = vpop.permute.xlu0 %9826
  %9828 = vrot.lane.b32.xlu0 %v9818, 127
  %v9829 = vpop.permute.xlu0 %9828
  %9830 = vrot.lane.b32.xlu0 %v9819, 127
  %v9831 = vpop.permute.xlu0 %9830
  %v9836 = vmax.f32 %v9816, %v9825
  %v9837 = vmax.f32 %v9817, %v9827
  %v9838 = vmax.f32 %v9818, %v9829
  %v9839 = vmax.f32 %v9819, %v9831
  %9844 = vrot.lane.b32.xlu0 %v9836, 122
  %v9845 = vpop.permute.xlu0 %9844
  %9846 = vrot.lane.b32.xlu0 %v9837, 122
  %v9847 = vpop.permute.xlu0 %9846
  %9848 = vrot.lane.b32.xlu0 %v9838, 122
  %v9849 = vpop.permute.xlu0 %9848
  %9850 = vrot.lane.b32.xlu0 %v9839, 122
  %v9851 = vpop.permute.xlu0 %9850
  %v9856 = vmax.f32 %v9836, %v9845
  %v9857 = vmax.f32 %v9837, %v9847
  %v9858 = vmax.f32 %v9838, %v9849
  %v9859 = vmax.f32 %v9839, %v9851
  %v9860 = vmax.f32 %v9856, 0.0
  %v9861 = vmax.f32 %v9857, 0.0
  %v9862 = vmax.f32 %v9858, 0.0
  %v9863 = vmax.f32 %v9859, 0.0
  %v9864 = vld [vmem:[%s16] sm:$0xff]
  %v9865 = vld [vmem:[%s16 + $0x8] sm:$0xff]
  %v9866 = vld [vmem:[%s16 + $0x10] sm:$0xff]
  %v9867 = vld [vmem:[%s16 + $0x18] sm:$0xff]
  %v9868 = vld [vmem:[%s16 + $0x20] sm:$0xff]
  %v9869 = vld [vmem:[%s16 + $0x28] sm:$0xff]
  %v9870 = vld [vmem:[%s16 + $0x30] sm:$0x7]
  %vm9871 = vcmask 416768
  %v9873 = vsel %vm9871, %v9860, 0
  %v9876 = vsel %vm9871, %v9861, 0
  %v9879 = vsel %vm9871, %v9862, 0
  %v9882 = vsel %vm9871, %v9863, 0
  %vm9884 = vcmask 1042432
  %v9886 = vsel %vm9884, %v9870, 0
  %9888 = vmatprep.subr.mxu0 0.0
  %9889 = vmatpush1.msra.mxu0 %v9864
  %9890 = vmatprep.subr.mxu0 0.0
  %9891 = vmatpush1.msra.mxu0 %v9865
  %9892 = vmatprep.subr.mxu0 0.0
  %9893 = vmatpush1.msra.mxu0 %v9866
  %9894 = vmatprep.subr.mxu0 0.0
  %9895 = vmatpush1.msra.mxu0 %v9867
  %9896 = vmatprep.subr.mxu0 0.0
  %9897 = vmatpush1.msra.mxu0 %v9868
  %9898 = vmatprep.subr.mxu0 0.0
  %9899 = vmatpush1.msra.mxu0 %v9869
  %9900 = vmatprep.subr.mxu0 0.0
  %9901 = vmatpush1.msra.mxu0 %v9886
  %9902 = vmatprep.subr.mxu0 0.0
  %9903 = vmatpush1.msra.mxu0 0.0
  %9904 = vmatprep.subr.mxu0 0.0
  %9905 = vmatpush1.msra.mxu0 0.0
  %9906 = vmatprep.subr.mxu0 0.0
  %9907 = vmatpush1.msra.mxu0 0.0
  %9908 = vmatprep.subr.mxu0 0.0
  %9909 = vmatpush1.msra.mxu0 0.0
  %9910 = vmatprep.subr.mxu0 0.0
  %9911 = vmatpush1.msra.mxu0 0.0
  %9912 = vmatprep.subr.mxu0 0.0
  %9913 = vmatpush1.msra.mxu0 0.0
  %9914 = vmatprep.subr.mxu0 0.0
  %9915 = vmatpush1.msra.mxu0 0.0
  %9916 = vmatprep.subr.mxu0 0.0
  %9917 = vmatpush1.msra.mxu0 0.0
  %9918 = vmatprep.subr.mxu0 0.0
  %9919 = vmatpush1.msra.mxu0 0.0
  %9920 = vmatprep.subr.mxu0 0.0
  %9921 = vmatpush1.msra.mxu0 0.0
  %9922 = vmatprep.subr.mxu0 0.0
  %9923 = vmatpush1.msra.mxu0 0.0
  %9924 = vmatprep.subr.mxu0 0.0
  %9925 = vmatpush1.msra.mxu0 0.0
  %9926 = vmatprep.subr.mxu0 0.0
  %9927 = vmatpush1.msra.mxu0 0.0
  %9928 = vmatprep.subr.mxu0 0.0
  %9929 = vmatpush1.msra.mxu0 0.0
  %9930 = vmatprep.subr.mxu0 0.0
  %9931 = vmatpush1.msra.mxu0 0.0
  %9932 = vmatprep.subr.mxu0 0.0
  %9933 = vmatpush1.msra.mxu0 0.0
  %9934 = vmatprep.subr.mxu0 0.0
  %9935 = vmatpush1.msra.mxu0 0.0
  %9936 = vmatprep.subr.mxu0 0.0
  %9937 = vmatpush1.msra.mxu0 0.0
  %9938 = vmatprep.subr.mxu0 0.0
  %9939 = vmatpush1.msra.mxu0 0.0
  %9940 = vmatprep.subr.mxu0 0.0
  %9941 = vmatpush1.msra.mxu0 0.0
  %9942 = vmatprep.subr.mxu0 0.0
  %9943 = vmatpush1.msra.mxu0 0.0
  %9944 = vmatprep.subr.mxu0 0.0
  %9945 = vmatpush1.msra.mxu0 0.0
  %9946 = vmatprep.subr.mxu0 0.0
  %9947 = vmatpush1.msra.mxu0 0.0
  %9948 = vmatprep.subr.mxu0 0.0
  %9949 = vmatpush1.msra.mxu0 0.0
  %9950 = vmatprep.subr.mxu0 0.0
  %9951 = vmatpush1.msra.mxu0 0.0
  %9952 = vmatprep.mubr.f32.mxu0 0.0
  %9953 = vmatmul.mubr.f32.gmra.mrb[0].mxu0 %v9873
  %v9954 = vpop.f32.mrb[0].mxu0
  %v9955 = vadd.f32 0.0, %v9954
  %v9956 = vpop.f32.mrb[0].mxu0
  %9957 = vmatprep.mubr.f32.mxu0 0.0
  %9958 = vmatmul.mubr.f32.gmra.mrb[0].mxu0 %v9876
  %v9959 = vpop.f32.mrb[0].mxu0
  %v9960 = vadd.f32 0.0, %v9959
  %v9961 = vpop.f32.mrb[0].mxu0
  %9962 = vmatprep.mubr.f32.mxu0 0.0
  %9963 = vmatmul.mubr.f32.gmra.mrb[0].mxu0 %v9879
  %v9964 = vpop.f32.mrb[0].mxu0
  %v9965 = vadd.f32 0.0, %v9964
  %v9966 = vpop.f32.mrb[0].mxu0
  %9967 = vmatprep.mubr.f32.mxu0 0.0
  %9968 = vmatmul.mubr.f32.gmra.mrb[0].mxu0 %v9882
  %v9969 = vpop.f32.mrb[0].mxu0
  %v9970 = vadd.f32 0.0, %v9969
  %v9971 = vpop.f32.mrb[0].mxu0
  %9972 = vdwg.mxu0
  %9973 = vst.msk [vmem:[#allocation5] sm:$0xff] %vm3260, %v9955
  %9974 = vst.msk [vmem:[#allocation5 + $0x8] sm:$0xff] %vm3260, %v9960
  %9975 = vst.msk [vmem:[#allocation5 + $0x10] sm:$0xff] %vm3260, %v9965
  %9976 = vst.msk [vmem:[#allocation5 + $0x18] sm:$0xff] %vm3260, %v9970
  %v9977 = vld [vmem:[%s5] sm:$0xff]
  %v9978 = vld [vmem:[%s5 + $0x18] sm:$0xff]
  %v9979 = vld [vmem:[%s5 + $0x30] sm:$0xff]
  %v9980 = vld [vmem:[%s5 + $0x48] sm:$0xff]
  %v9981 = vld [vmem:[#allocation5] sm:$0xff]
  %v9982 = vld [vmem:[#allocation5 + $0x8] sm:$0xff]
  %v9983 = vld [vmem:[#allocation5 + $0x10] sm:$0xff]
  %v9984 = vld [vmem:[#allocation5 + $0x18] sm:$0xff]
  %9989 = vrot.lane.b32.xlu0 %v9977, 96
  %v9990 = vpop.permute.xlu0 %9989
  %9991 = vrot.lane.b32.xlu0 %v9978, 96
  %v9992 = vpop.permute.xlu0 %9991
  %9993 = vrot.lane.b32.xlu0 %v9979, 96
  %v9994 = vpop.permute.xlu0 %9993
  %9995 = vrot.lane.b32.xlu0 %v9980, 96
  %v9996 = vpop.permute.xlu0 %9995
  %10001 = vrot.lane.b32.xlu0 %v9981, 127
  %v10002 = vpop.permute.xlu0 %10001
  %10003 = vrot.lane.b32.xlu0 %v9982, 127
  %v10004 = vpop.permute.xlu0 %10003
  %10005 = vrot.lane.b32.xlu0 %v9983, 127
  %v10006 = vpop.permute.xlu0 %10005
  %10007 = vrot.lane.b32.xlu0 %v9984, 127
  %v10008 = vpop.permute.xlu0 %10007
  %v10013 = vsel %vm3260, %v9990, 0
  %v10015 = vsel %vm3260, %v9992, 0
  %v10017 = vsel %vm3260, %v9994, 0
  %v10019 = vsel %vm3260, %v9996, 0
  %10021 = vmatprep.subr.mxu0 0.0
  %10022 = vmatpush1.msra.mxu0 %v10002
  %10023 = vmatprep.subr.mxu0 0.0
  %10024 = vmatpush1.msra.mxu0 %v10004
  %10025 = vmatprep.subr.mxu0 0.0
  %10026 = vmatpush1.msra.mxu0 %v10006
  %10027 = vmatprep.subr.mxu0 0.0
  %10028 = vmatpush1.msra.mxu0 %v10008
  %10029 = vmatprep.subr.mxu0 0.0
  %10030 = vmatpush1.msra.mxu0 0.0
  %10031 = vmatprep.subr.mxu0 0.0
  %10032 = vmatpush1.msra.mxu0 0.0
  %10033 = vmatprep.subr.mxu0 0.0
  %10034 = vmatpush1.msra.mxu0 0.0
  %10035 = vmatprep.subr.mxu0 0.0
  %10036 = vmatpush1.msra.mxu0 0.0
  %10037 = vmatprep.subr.mxu0 0.0
  %10038 = vmatpush1.msra.mxu0 0.0
  %10039 = vmatprep.subr.mxu0 0.0
  %10040 = vmatpush1.msra.mxu0 0.0
  %10041 = vmatprep.subr.mxu0 0.0
  %10042 = vmatpush1.msra.mxu0 0.0
  %10043 = vmatprep.subr.mxu0 0.0
  %10044 = vmatpush1.msra.mxu0 0.0
  %10045 = vmatprep.subr.mxu0 0.0
  %10046 = vmatpush1.msra.mxu0 0.0
  %10047 = vmatprep.subr.mxu0 0.0
  %10048 = vmatpush1.msra.mxu0 0.0
  %10049 = vmatprep.subr.mxu0 0.0
  %10050 = vmatpush1.msra.mxu0 0.0
  %10051 = vmatprep.subr.mxu0 0.0
  %10052 = vmatpush1.msra.mxu0 0.0
  %10053 = vmatprep.subr.mxu0 0.0
  %10054 = vmatpush1.msra.mxu0 0.0
  %10055 = vmatprep.subr.mxu0 0.0
  %10056 = vmatpush1.msra.mxu0 0.0
  %10057 = vmatprep.subr.mxu0 0.0
  %10058 = vmatpush1.msra.mxu0 0.0
  %10059 = vmatprep.subr.mxu0 0.0
  %10060 = vmatpush1.msra.mxu0 0.0
  %10061 = vmatprep.subr.mxu0 0.0
  %10062 = vmatpush1.msra.mxu0 0.0
  %10063 = vmatprep.subr.mxu0 0.0
  %10064 = vmatpush1.msra.mxu0 0.0
  %10065 = vmatprep.subr.mxu0 0.0
  %10066 = vmatpush1.msra.mxu0 0.0
  %10067 = vmatprep.subr.mxu0 0.0
  %10068 = vmatpush1.msra.mxu0 0.0
  %10069 = vmatprep.subr.mxu0 0.0
  %10070 = vmatpush1.msra.mxu0 0.0
  %10071 = vmatprep.subr.mxu0 0.0
  %10072 = vmatpush1.msra.mxu0 0.0
  %10073 = vmatprep.subr.mxu0 0.0
  %10074 = vmatpush1.msra.mxu0 0.0
  %10075 = vmatprep.subr.mxu0 0.0
  %10076 = vmatpush1.msra.mxu0 0.0
  %10077 = vmatprep.subr.mxu0 0.0
  %10078 = vmatpush1.msra.mxu0 0.0
  %10079 = vmatprep.subr.mxu0 0.0
  %10080 = vmatpush1.msra.mxu0 0.0
  %10081 = vmatprep.subr.mxu0 0.0
  %10082 = vmatpush1.msra.mxu0 0.0
  %10083 = vmatprep.subr.mxu0 0.0
  %10084 = vmatpush1.msra.mxu0 0.0
  %10085 = vmatprep.mubr.f32.mxu0 0.0
  %10086 = vmatmul.mubr.f32.gmra.mrb[0].mxu0 %v10013
  %v10087 = vpop.f32.mrb[0].mxu0
  %v10088 = vadd.f32 0.0, %v10087
  %v10089 = vpop.f32.mrb[0].mxu0
  %10090 = vmatprep.mubr.f32.mxu0 0.0
  %10091 = vmatmul.mubr.f32.gmra.mrb[0].mxu0 %v10015
  %v10092 = vpop.f32.mrb[0].mxu0
  %v10093 = vadd.f32 0.0, %v10092
  %v10094 = vpop.f32.mrb[0].mxu0
  %10095 = vmatprep.mubr.f32.mxu0 0.0
  %10096 = vmatmul.mubr.f32.gmra.mrb[0].mxu0 %v10017
  %v10097 = vpop.f32.mrb[0].mxu0
  %v10098 = vadd.f32 0.0, %v10097
  %v10099 = vpop.f32.mrb[0].mxu0
  %10100 = vmatprep.mubr.f32.mxu0 0.0
  %10101 = vmatmul.mubr.f32.gmra.mrb[0].mxu0 %v10019
  %v10102 = vpop.f32.mrb[0].mxu0
  %v10103 = vadd.f32 0.0, %v10102
  %v10104 = vpop.f32.mrb[0].mxu0
  %10105 = vdwg.mxu0
  %v10106 = vsel %vm3260, %v9977, 0
  %v10108 = vsel %vm3260, %v9978, 0
  %v10110 = vsel %vm3260, %v9979, 0
  %v10112 = vsel %vm3260, %v9980, 0
  %10114 = vmatprep.subr.mxu0 0.0
  %10115 = vmatpush1.msra.mxu0 %v9981
  %10116 = vmatprep.subr.mxu0 0.0
  %10117 = vmatpush1.msra.mxu0 %v9982
  %10118 = vmatprep.subr.mxu0 0.0
  %10119 = vmatpush1.msra.mxu0 %v9983
  %10120 = vmatprep.subr.mxu0 0.0
  %10121 = vmatpush1.msra.mxu0 %v9984
  %10122 = vmatprep.subr.mxu0 0.0
  %10123 = vmatpush1.msra.mxu0 0.0
  %10124 = vmatprep.subr.mxu0 0.0
  %10125 = vmatpush1.msra.mxu0 0.0
  %10126 = vmatprep.subr.mxu0 0.0
  %10127 = vmatpush1.msra.mxu0 0.0
  %10128 = vmatprep.subr.mxu0 0.0
  %10129 = vmatpush1.msra.mxu0 0.0
  %10130 = vmatprep.subr.mxu0 0.0
  %10131 = vmatpush1.msra.mxu0 0.0
  %10132 = vmatprep.subr.mxu0 0.0
  %10133 = vmatpush1.msra.mxu0 0.0
  %10134 = vmatprep.subr.mxu0 0.0
  %10135 = vmatpush1.msra.mxu0 0.0
  %10136 = vmatprep.subr.mxu0 0.0
  %10137 = vmatpush1.msra.mxu0 0.0
  %10138 = vmatprep.subr.mxu0 0.0
  %10139 = vmatpush1.msra.mxu0 0.0
  %10140 = vmatprep.subr.mxu0 0.0
  %10141 = vmatpush1.msra.mxu0 0.0
  %10142 = vmatprep.subr.mxu0 0.0
  %10143 = vmatpush1.msra.mxu0 0.0
  %10144 = vmatprep.subr.mxu0 0.0
  %10145 = vmatpush1.msra.mxu0 0.0
  %10146 = vmatprep.subr.mxu0 0.0
  %10147 = vmatpush1.msra.mxu0 0.0
  %10148 = vmatprep.subr.mxu0 0.0
  %10149 = vmatpush1.msra.mxu0 0.0
  %10150 = vmatprep.subr.mxu0 0.0
  %10151 = vmatpush1.msra.mxu0 0.0
  %10152 = vmatprep.subr.mxu0 0.0
  %10153 = vmatpush1.msra.mxu0 0.0
  %10154 = vmatprep.subr.mxu0 0.0
  %10155 = vmatpush1.msra.mxu0 0.0
  %10156 = vmatprep.subr.mxu0 0.0
  %10157 = vmatpush1.msra.mxu0 0.0
  %10158 = vmatprep.subr.mxu0 0.0
  %10159 = vmatpush1.msra.mxu0 0.0
  %10160 = vmatprep.subr.mxu0 0.0
  %10161 = vmatpush1.msra.mxu0 0.0
  %10162 = vmatprep.subr.mxu0 0.0
  %10163 = vmatpush1.msra.mxu0 0.0
  %10164 = vmatprep.subr.mxu0 0.0
  %10165 = vmatpush1.msra.mxu0 0.0
  %10166 = vmatprep.subr.mxu0 0.0
  %10167 = vmatpush1.msra.mxu0 0.0
  %10168 = vmatprep.subr.mxu0 0.0
  %10169 = vmatpush1.msra.mxu0 0.0
  %10170 = vmatprep.subr.mxu0 0.0
  %10171 = vmatpush1.msra.mxu0 0.0
  %10172 = vmatprep.subr.mxu0 0.0
  %10173 = vmatpush1.msra.mxu0 0.0
  %10174 = vmatprep.subr.mxu0 0.0
  %10175 = vmatpush1.msra.mxu0 0.0
  %10176 = vmatprep.subr.mxu0 0.0
  %10177 = vmatpush1.msra.mxu0 0.0
  %10178 = vmatprep.mubr.f32.mxu0 0.0
  %10179 = vmatmul.mubr.f32.gmra.mrb[0].mxu0 %v10106
  %v10180 = vpop.f32.mrb[0].mxu0
  %v10181 = vadd.f32 %v10088, %v10180
  %v10182 = vpop.f32.mrb[0].mxu0
  %10183 = vmatprep.mubr.f32.mxu0 0.0
  %10184 = vmatmul.mubr.f32.gmra.mrb[0].mxu0 %v10108
  %v10185 = vpop.f32.mrb[0].mxu0
  %v10186 = vadd.f32 %v10093, %v10185
  %v10187 = vpop.f32.mrb[0].mxu0
  %10188 = vmatprep.mubr.f32.mxu0 0.0
  %10189 = vmatmul.mubr.f32.gmra.mrb[0].mxu0 %v10110
  %v10190 = vpop.f32.mrb[0].mxu0
  %v10191 = vadd.f32 %v10098, %v10190
  %v10192 = vpop.f32.mrb[0].mxu0
  %10193 = vmatprep.mubr.f32.mxu0 0.0
  %10194 = vmatmul.mubr.f32.gmra.mrb[0].mxu0 %v10112
  %v10195 = vpop.f32.mrb[0].mxu0
  %v10196 = vadd.f32 %v10103, %v10195
  %v10197 = vpop.f32.mrb[0].mxu0
  %10198 = vdwg.mxu0
  %10199 = vrot.lane.b32.xlu0 %v9977, 64
  %v10200 = vpop.permute.xlu0 %10199
  %10201 = vrot.lane.b32.xlu0 %v9978, 64
  %v10202 = vpop.permute.xlu0 %10201
  %10203 = vrot.lane.b32.xlu0 %v9979, 64
  %v10204 = vpop.permute.xlu0 %10203
  %10205 = vrot.lane.b32.xlu0 %v9980, 64
  %v10206 = vpop.permute.xlu0 %10205
  %10207 = vrot.lane.b32.xlu0 %v9981, 126
  %v10208 = vpop.permute.xlu0 %10207
  %10209 = vrot.lane.b32.xlu0 %v9982, 126
  %v10210 = vpop.permute.xlu0 %10209
  %10211 = vrot.lane.b32.xlu0 %v9983, 126
  %v10212 = vpop.permute.xlu0 %10211
  %10213 = vrot.lane.b32.xlu0 %v9984, 126
  %v10214 = vpop.permute.xlu0 %10213
  %v10219 = vsel %vm3260, %v10200, 0
  %v10221 = vsel %vm3260, %v10202, 0
  %v10223 = vsel %vm3260, %v10204, 0
  %v10225 = vsel %vm3260, %v10206, 0
  %10227 = vmatprep.subr.mxu0 0.0
  %10228 = vmatpush1.msra.mxu0 %v10208
  %10229 = vmatprep.subr.mxu0 0.0
  %10230 = vmatpush1.msra.mxu0 %v10210
  %10231 = vmatprep.subr.mxu0 0.0
  %10232 = vmatpush1.msra.mxu0 %v10212
  %10233 = vmatprep.subr.mxu0 0.0
  %10234 = vmatpush1.msra.mxu0 %v10214
  %10235 = vmatprep.subr.mxu0 0.0
  %10236 = vmatpush1.msra.mxu0 0.0
  %10237 = vmatprep.subr.mxu0 0.0
  %10238 = vmatpush1.msra.mxu0 0.0
  %10239 = vmatprep.subr.mxu0 0.0
  %10240 = vmatpush1.msra.mxu0 0.0
  %10241 = vmatprep.subr.mxu0 0.0
  %10242 = vmatpush1.msra.mxu0 0.0
  %10243 = vmatprep.subr.mxu0 0.0
  %10244 = vmatpush1.msra.mxu0 0.0
  %10245 = vmatprep.subr.mxu0 0.0
  %10246 = vmatpush1.msra.mxu0 0.0
  %10247 = vmatprep.subr.mxu0 0.0
  %10248 = vmatpush1.msra.mxu0 0.0
  %10249 = vmatprep.subr.mxu0 0.0
  %10250 = vmatpush1.msra.mxu0 0.0
  %10251 = vmatprep.subr.mxu0 0.0
  %10252 = vmatpush1.msra.mxu0 0.0
  %10253 = vmatprep.subr.mxu0 0.0
  %10254 = vmatpush1.msra.mxu0 0.0
  %10255 = vmatprep.subr.mxu0 0.0
  %10256 = vmatpush1.msra.mxu0 0.0
  %10257 = vmatprep.subr.mxu0 0.0
  %10258 = vmatpush1.msra.mxu0 0.0
  %10259 = vmatprep.subr.mxu0 0.0
  %10260 = vmatpush1.msra.mxu0 0.0
  %10261 = vmatprep.subr.mxu0 0.0
  %10262 = vmatpush1.msra.mxu0 0.0
  %10263 = vmatprep.subr.mxu0 0.0
  %10264 = vmatpush1.msra.mxu0 0.0
  %10265 = vmatprep.subr.mxu0 0.0
  %10266 = vmatpush1.msra.mxu0 0.0
  %10267 = vmatprep.subr.mxu0 0.0
  %10268 = vmatpush1.msra.mxu0 0.0
  %10269 = vmatprep.subr.mxu0 0.0
  %10270 = vmatpush1.msra.mxu0 0.0
  %10271 = vmatprep.subr.mxu0 0.0
  %10272 = vmatpush1.msra.mxu0 0.0
  %10273 = vmatprep.subr.mxu0 0.0
  %10274 = vmatpush1.msra.mxu0 0.0
  %10275 = vmatprep.subr.mxu0 0.0
  %10276 = vmatpush1.msra.mxu0 0.0
  %10277 = vmatprep.subr.mxu0 0.0
  %10278 = vmatpush1.msra.mxu0 0.0
  %10279 = vmatprep.subr.mxu0 0.0
  %10280 = vmatpush1.msra.mxu0 0.0
  %10281 = vmatprep.subr.mxu0 0.0
  %10282 = vmatpush1.msra.mxu0 0.0
  %10283 = vmatprep.subr.mxu0 0.0
  %10284 = vmatpush1.msra.mxu0 0.0
  %10285 = vmatprep.subr.mxu0 0.0
  %10286 = vmatpush1.msra.mxu0 0.0
  %10287 = vmatprep.subr.mxu0 0.0
  %10288 = vmatpush1.msra.mxu0 0.0
  %10289 = vmatprep.subr.mxu0 0.0
  %10290 = vmatpush1.msra.mxu0 0.0
  %10291 = vmatprep.mubr.f32.mxu0 0.0
  %10292 = vmatmul.mubr.f32.gmra.mrb[0].mxu0 %v10219
  %v10293 = vpop.f32.mrb[0].mxu0
  %v10294 = vadd.f32 0.0, %v10293
  %v10295 = vpop.f32.mrb[0].mxu0
  %10296 = vmatprep.mubr.f32.mxu0 0.0
  %10297 = vmatmul.mubr.f32.gmra.mrb[0].mxu0 %v10221
  %v10298 = vpop.f32.mrb[0].mxu0
  %v10299 = vadd.f32 0.0, %v10298
  %v10300 = vpop.f32.mrb[0].mxu0
  %10301 = vmatprep.mubr.f32.mxu0 0.0
  %10302 = vmatmul.mubr.f32.gmra.mrb[0].mxu0 %v10223
  %v10303 = vpop.f32.mrb[0].mxu0
  %v10304 = vadd.f32 0.0, %v10303
  %v10305 = vpop.f32.mrb[0].mxu0
  %10306 = vmatprep.mubr.f32.mxu0 0.0
  %10307 = vmatmul.mubr.f32.gmra.mrb[0].mxu0 %v10225
  %v10308 = vpop.f32.mrb[0].mxu0
  %v10309 = vadd.f32 0.0, %v10308
  %v10310 = vpop.f32.mrb[0].mxu0
  %10311 = vdwg.mxu0
  %v10312 = vadd.f32 %v10181, %v10294
  %v10313 = vadd.f32 %v10186, %v10299
  %v10314 = vadd.f32 %v10191, %v10304
  %v10315 = vadd.f32 %v10196, %v10309
  %10316 = vrot.lane.b32.xlu0 %v9977, 32
  %v10317 = vpop.permute.xlu0 %10316
  %10318 = vrot.lane.b32.xlu0 %v9978, 32
  %v10319 = vpop.permute.xlu0 %10318
  %10320 = vrot.lane.b32.xlu0 %v9979, 32
  %v10321 = vpop.permute.xlu0 %10320
  %10322 = vrot.lane.b32.xlu0 %v9980, 32
  %v10323 = vpop.permute.xlu0 %10322
  %10324 = vrot.lane.b32.xlu0 %v9981, 124
  %v10325 = vpop.permute.xlu0 %10324
  %10326 = vrot.lane.b32.xlu0 %v9982, 124
  %v10327 = vpop.permute.xlu0 %10326
  %10328 = vrot.lane.b32.xlu0 %v9983, 124
  %v10329 = vpop.permute.xlu0 %10328
  %10330 = vrot.lane.b32.xlu0 %v9984, 124
  %v10331 = vpop.permute.xlu0 %10330
  %v10336 = vsel %vm3260, %v10317, 0
  %v10338 = vsel %vm3260, %v10319, 0
  %v10340 = vsel %vm3260, %v10321, 0
  %v10342 = vsel %vm3260, %v10323, 0
  %10344 = vmatprep.subr.mxu0 0.0
  %10345 = vmatpush1.msra.mxu0 %v10325
  %10346 = vmatprep.subr.mxu0 0.0
  %10347 = vmatpush1.msra.mxu0 %v10327
  %10348 = vmatprep.subr.mxu0 0.0
  %10349 = vmatpush1.msra.mxu0 %v10329
  %10350 = vmatprep.subr.mxu0 0.0
  %10351 = vmatpush1.msra.mxu0 %v10331
  %10352 = vmatprep.subr.mxu0 0.0
  %10353 = vmatpush1.msra.mxu0 0.0
  %10354 = vmatprep.subr.mxu0 0.0
  %10355 = vmatpush1.msra.mxu0 0.0
  %10356 = vmatprep.subr.mxu0 0.0
  %10357 = vmatpush1.msra.mxu0 0.0
  %10358 = vmatprep.subr.mxu0 0.0
  %10359 = vmatpush1.msra.mxu0 0.0
  %10360 = vmatprep.subr.mxu0 0.0
  %10361 = vmatpush1.msra.mxu0 0.0
  %10362 = vmatprep.subr.mxu0 0.0
  %10363 = vmatpush1.msra.mxu0 0.0
  %10364 = vmatprep.subr.mxu0 0.0
  %10365 = vmatpush1.msra.mxu0 0.0
  %10366 = vmatprep.subr.mxu0 0.0
  %10367 = vmatpush1.msra.mxu0 0.0
  %10368 = vmatprep.subr.mxu0 0.0
  %10369 = vmatpush1.msra.mxu0 0.0
  %10370 = vmatprep.subr.mxu0 0.0
  %10371 = vmatpush1.msra.mxu0 0.0
  %10372 = vmatprep.subr.mxu0 0.0
  %10373 = vmatpush1.msra.mxu0 0.0
  %10374 = vmatprep.subr.mxu0 0.0
  %10375 = vmatpush1.msra.mxu0 0.0
  %10376 = vmatprep.subr.mxu0 0.0
  %10377 = vmatpush1.msra.mxu0 0.0
  %10378 = vmatprep.subr.mxu0 0.0
  %10379 = vmatpush1.msra.mxu0 0.0
  %10380 = vmatprep.subr.mxu0 0.0
  %10381 = vmatpush1.msra.mxu0 0.0
  %10382 = vmatprep.subr.mxu0 0.0
  %10383 = vmatpush1.msra.mxu0 0.0
  %10384 = vmatprep.subr.mxu0 0.0
  %10385 = vmatpush1.msra.mxu0 0.0
  %10386 = vmatprep.subr.mxu0 0.0
  %10387 = vmatpush1.msra.mxu0 0.0
  %10388 = vmatprep.subr.mxu0 0.0
  %10389 = vmatpush1.msra.mxu0 0.0
  %10390 = vmatprep.subr.mxu0 0.0
  %10391 = vmatpush1.msra.mxu0 0.0
  %10392 = vmatprep.subr.mxu0 0.0
  %10393 = vmatpush1.msra.mxu0 0.0
  %10394 = vmatprep.subr.mxu0 0.0
  %10395 = vmatpush1.msra.mxu0 0.0
  %10396 = vmatprep.subr.mxu0 0.0
  %10397 = vmatpush1.msra.mxu0 0.0
  %10398 = vmatprep.subr.mxu0 0.0
  %10399 = vmatpush1.msra.mxu0 0.0
  %10400 = vmatprep.subr.mxu0 0.0
  %10401 = vmatpush1.msra.mxu0 0.0
  %10402 = vmatprep.subr.mxu0 0.0
  %10403 = vmatpush1.msra.mxu0 0.0
  %10404 = vmatprep.subr.mxu0 0.0
  %10405 = vmatpush1.msra.mxu0 0.0
  %10406 = vmatprep.subr.mxu0 0.0
  %10407 = vmatpush1.msra.mxu0 0.0
  %10408 = vmatprep.mubr.f32.mxu0 0.0
  %10409 = vmatmul.mubr.f32.gmra.mrb[0].mxu0 %v10336
  %v10410 = vpop.f32.mrb[0].mxu0
  %v10411 = vadd.f32 0.0, %v10410
  %v10412 = vpop.f32.mrb[0].mxu0
  %10413 = vmatprep.mubr.f32.mxu0 0.0
  %10414 = vmatmul.mubr.f32.gmra.mrb[0].mxu0 %v10338
  %v10415 = vpop.f32.mrb[0].mxu0
  %v10416 = vadd.f32 0.0, %v10415
  %v10417 = vpop.f32.mrb[0].mxu0
  %10418 = vmatprep.mubr.f32.mxu0 0.0
  %10419 = vmatmul.mubr.f32.gmra.mrb[0].mxu0 %v10340
  %v10420 = vpop.f32.mrb[0].mxu0
  %v10421 = vadd.f32 0.0, %v10420
  %v10422 = vpop.f32.mrb[0].mxu0
  %10423 = vmatprep.mubr.f32.mxu0 0.0
  %10424 = vmatmul.mubr.f32.gmra.mrb[0].mxu0 %v10342
  %v10425 = vpop.f32.mrb[0].mxu0
  %v10426 = vadd.f32 0.0, %v10425
  %v10427 = vpop.f32.mrb[0].mxu0
  %10428 = vdwg.mxu0
  %v10429 = vadd.f32 %v10312, %v10411
  %v10430 = vadd.f32 %v10313, %v10416
  %v10431 = vadd.f32 %v10314, %v10421
  %v10432 = vadd.f32 %v10315, %v10426
  %v10433 = vld [vmem:[%s5 + $0x8] sm:$0xff]
  %v10434 = vld [vmem:[%s5 + $0x20] sm:$0xff]
  %v10435 = vld [vmem:[%s5 + $0x38] sm:$0xff]
  %v10436 = vld [vmem:[%s5 + $0x50] sm:$0xff]
  %10437 = vrot.lane.b32.xlu0 %v9981, 123
  %v10438 = vpop.permute.xlu0 %10437
  %10439 = vrot.lane.b32.xlu0 %v9982, 123
  %v10440 = vpop.permute.xlu0 %10439
  %10441 = vrot.lane.b32.xlu0 %v9983, 123
  %v10442 = vpop.permute.xlu0 %10441
  %10443 = vrot.lane.b32.xlu0 %v9984, 123
  %v10444 = vpop.permute.xlu0 %10443
  %v10450 = vsel %vm3260, %v10433, 0
  %v10453 = vsel %vm3260, %v10434, 0
  %v10456 = vsel %vm3260, %v10435, 0
  %v10459 = vsel %vm3260, %v10436, 0
  %10461 = vmatprep.subr.mxu0 0.0
  %10462 = vmatpush1.msra.mxu0 %v10438
  %10463 = vmatprep.subr.mxu0 0.0
  %10464 = vmatpush1.msra.mxu0 %v10440
  %10465 = vmatprep.subr.mxu0 0.0
  %10466 = vmatpush1.msra.mxu0 %v10442
  %10467 = vmatprep.subr.mxu0 0.0
  %10468 = vmatpush1.msra.mxu0 %v10444
  %10469 = vmatprep.subr.mxu0 0.0
  %10470 = vmatpush1.msra.mxu0 0.0
  %10471 = vmatprep.subr.mxu0 0.0
  %10472 = vmatpush1.msra.mxu0 0.0
  %10473 = vmatprep.subr.mxu0 0.0
  %10474 = vmatpush1.msra.mxu0 0.0
  %10475 = vmatprep.subr.mxu0 0.0
  %10476 = vmatpush1.msra.mxu0 0.0
  %10477 = vmatprep.subr.mxu0 0.0
  %10478 = vmatpush1.msra.mxu0 0.0
  %10479 = vmatprep.subr.mxu0 0.0
  %10480 = vmatpush1.msra.mxu0 0.0
  %10481 = vmatprep.subr.mxu0 0.0
  %10482 = vmatpush1.msra.mxu0 0.0
  %10483 = vmatprep.subr.mxu0 0.0
  %10484 = vmatpush1.msra.mxu0 0.0
  %10485 = vmatprep.subr.mxu0 0.0
  %10486 = vmatpush1.msra.mxu0 0.0
  %10487 = vmatprep.subr.mxu0 0.0
  %10488 = vmatpush1.msra.mxu0 0.0
  %10489 = vmatprep.subr.mxu0 0.0
  %10490 = vmatpush1.msra.mxu0 0.0
  %10491 = vmatprep.subr.mxu0 0.0
  %10492 = vmatpush1.msra.mxu0 0.0
  %10493 = vmatprep.subr.mxu0 0.0
  %10494 = vmatpush1.msra.mxu0 0.0
  %10495 = vmatprep.subr.mxu0 0.0
  %10496 = vmatpush1.msra.mxu0 0.0
  %10497 = vmatprep.subr.mxu0 0.0
  %10498 = vmatpush1.msra.mxu0 0.0
  %10499 = vmatprep.subr.mxu0 0.0
  %10500 = vmatpush1.msra.mxu0 0.0
  %10501 = vmatprep.subr.mxu0 0.0
  %10502 = vmatpush1.msra.mxu0 0.0
  %10503 = vmatprep.subr.mxu0 0.0
  %10504 = vmatpush1.msra.mxu0 0.0
  %10505 = vmatprep.subr.mxu0 0.0
  %10506 = vmatpush1.msra.mxu0 0.0
  %10507 = vmatprep.subr.mxu0 0.0
  %10508 = vmatpush1.msra.mxu0 0.0
  %10509 = vmatprep.subr.mxu0 0.0
  %10510 = vmatpush1.msra.mxu0 0.0
  %10511 = vmatprep.subr.mxu0 0.0
  %10512 = vmatpush1.msra.mxu0 0.0
  %10513 = vmatprep.subr.mxu0 0.0
  %10514 = vmatpush1.msra.mxu0 0.0
  %10515 = vmatprep.subr.mxu0 0.0
  %10516 = vmatpush1.msra.mxu0 0.0
  %10517 = vmatprep.subr.mxu0 0.0
  %10518 = vmatpush1.msra.mxu0 0.0
  %10519 = vmatprep.subr.mxu0 0.0
  %10520 = vmatpush1.msra.mxu0 0.0
  %10521 = vmatprep.subr.mxu0 0.0
  %10522 = vmatpush1.msra.mxu0 0.0
  %10523 = vmatprep.subr.mxu0 0.0
  %10524 = vmatpush1.msra.mxu0 0.0
  %10525 = vmatprep.mubr.f32.mxu0 0.0
  %10526 = vmatmul.mubr.f32.gmra.mrb[0].mxu0 %v10450
  %v10527 = vpop.f32.mrb[0].mxu0
  %v10528 = vadd.f32 0.0, %v10527
  %v10529 = vpop.f32.mrb[0].mxu0
  %10530 = vmatprep.mubr.f32.mxu0 0.0
  %10531 = vmatmul.mubr.f32.gmra.mrb[0].mxu0 %v10453
  %v10532 = vpop.f32.mrb[0].mxu0
  %v10533 = vadd.f32 0.0, %v10532
  %v10534 = vpop.f32.mrb[0].mxu0
  %10535 = vmatprep.mubr.f32.mxu0 0.0
  %10536 = vmatmul.mubr.f32.gmra.mrb[0].mxu0 %v10456
  %v10537 = vpop.f32.mrb[0].mxu0
  %v10538 = vadd.f32 0.0, %v10537
  %v10539 = vpop.f32.mrb[0].mxu0
  %10540 = vmatprep.mubr.f32.mxu0 0.0
  %10541 = vmatmul.mubr.f32.gmra.mrb[0].mxu0 %v10459
  %v10542 = vpop.f32.mrb[0].mxu0
  %v10543 = vadd.f32 0.0, %v10542
  %v10544 = vpop.f32.mrb[0].mxu0
  %10545 = vdwg.mxu0
  %v10546 = vadd.f32 %v10429, %v10528
  %v10547 = vadd.f32 %v10430, %v10533
  %v10548 = vadd.f32 %v10431, %v10538
  %v10549 = vadd.f32 %v10432, %v10543
  %10550 = vrot.lane.b32.xlu0 %v10433, 96
  %v10551 = vpop.permute.xlu0 %10550
  %10552 = vrot.lane.b32.xlu0 %v10434, 96
  %v10553 = vpop.permute.xlu0 %10552
  %10554 = vrot.lane.b32.xlu0 %v10435, 96
  %v10555 = vpop.permute.xlu0 %10554
  %10556 = vrot.lane.b32.xlu0 %v10436, 96
  %v10557 = vpop.permute.xlu0 %10556
  %10558 = vrot.lane.b32.xlu0 %v9981, 122
  %v10559 = vpop.permute.xlu0 %10558
  %10560 = vrot.lane.b32.xlu0 %v9982, 122
  %v10561 = vpop.permute.xlu0 %10560
  %10562 = vrot.lane.b32.xlu0 %v9983, 122
  %v10563 = vpop.permute.xlu0 %10562
  %10564 = vrot.lane.b32.xlu0 %v9984, 122
  %v10565 = vpop.permute.xlu0 %10564
  %v10570 = vsel %vm3260, %v10551, 0
  %v10572 = vsel %vm3260, %v10553, 0
  %v10574 = vsel %vm3260, %v10555, 0
  %v10576 = vsel %vm3260, %v10557, 0
  %10578 = vmatprep.subr.mxu0 0.0
  %10579 = vmatpush1.msra.mxu0 %v10559
  %10580 = vmatprep.subr.mxu0 0.0
  %10581 = vmatpush1.msra.mxu0 %v10561
  %10582 = vmatprep.subr.mxu0 0.0
  %10583 = vmatpush1.msra.mxu0 %v10563
  %10584 = vmatprep.subr.mxu0 0.0
  %10585 = vmatpush1.msra.mxu0 %v10565
  %10586 = vmatprep.subr.mxu0 0.0
  %10587 = vmatpush1.msra.mxu0 0.0
  %10588 = vmatprep.subr.mxu0 0.0
  %10589 = vmatpush1.msra.mxu0 0.0
  %10590 = vmatprep.subr.mxu0 0.0
  %10591 = vmatpush1.msra.mxu0 0.0
  %10592 = vmatprep.subr.mxu0 0.0
  %10593 = vmatpush1.msra.mxu0 0.0
  %10594 = vmatprep.subr.mxu0 0.0
  %10595 = vmatpush1.msra.mxu0 0.0
  %10596 = vmatprep.subr.mxu0 0.0
  %10597 = vmatpush1.msra.mxu0 0.0
  %10598 = vmatprep.subr.mxu0 0.0
  %10599 = vmatpush1.msra.mxu0 0.0
  %10600 = vmatprep.subr.mxu0 0.0
  %10601 = vmatpush1.msra.mxu0 0.0
  %10602 = vmatprep.subr.mxu0 0.0
  %10603 = vmatpush1.msra.mxu0 0.0
  %10604 = vmatprep.subr.mxu0 0.0
  %10605 = vmatpush1.msra.mxu0 0.0
  %10606 = vmatprep.subr.mxu0 0.0
  %10607 = vmatpush1.msra.mxu0 0.0
  %10608 = vmatprep.subr.mxu0 0.0
  %10609 = vmatpush1.msra.mxu0 0.0
  %10610 = vmatprep.subr.mxu0 0.0
  %10611 = vmatpush1.msra.mxu0 0.0
  %10612 = vmatprep.subr.mxu0 0.0
  %10613 = vmatpush1.msra.mxu0 0.0
  %10614 = vmatprep.subr.mxu0 0.0
  %10615 = vmatpush1.msra.mxu0 0.0
  %10616 = vmatprep.subr.mxu0 0.0
  %10617 = vmatpush1.msra.mxu0 0.0
  %10618 = vmatprep.subr.mxu0 0.0
  %10619 = vmatpush1.msra.mxu0 0.0
  %10620 = vmatprep.subr.mxu0 0.0
  %10621 = vmatpush1.msra.mxu0 0.0
  %10622 = vmatprep.subr.mxu0 0.0
  %10623 = vmatpush1.msra.mxu0 0.0
  %10624 = vmatprep.subr.mxu0 0.0
  %10625 = vmatpush1.msra.mxu0 0.0
  %10626 = vmatprep.subr.mxu0 0.0
  %10627 = vmatpush1.msra.mxu0 0.0
  %10628 = vmatprep.subr.mxu0 0.0
  %10629 = vmatpush1.msra.mxu0 0.0
  %10630 = vmatprep.subr.mxu0 0.0
  %10631 = vmatpush1.msra.mxu0 0.0
  %10632 = vmatprep.subr.mxu0 0.0
  %10633 = vmatpush1.msra.mxu0 0.0
  %10634 = vmatprep.subr.mxu0 0.0
  %10635 = vmatpush1.msra.mxu0 0.0
  %10636 = vmatprep.subr.mxu0 0.0
  %10637 = vmatpush1.msra.mxu0 0.0
  %10638 = vmatprep.subr.mxu0 0.0
  %10639 = vmatpush1.msra.mxu0 0.0
  %10640 = vmatprep.subr.mxu0 0.0
  %10641 = vmatpush1.msra.mxu0 0.0
  %10642 = vmatprep.mubr.f32.mxu0 0.0
  %10643 = vmatmul.mubr.f32.gmra.mrb[0].mxu0 %v10570
  %v10644 = vpop.f32.mrb[0].mxu0
  %v10645 = vadd.f32 0.0, %v10644
  %v10646 = vpop.f32.mrb[0].mxu0
  %10647 = vmatprep.mubr.f32.mxu0 0.0
  %10648 = vmatmul.mubr.f32.gmra.mrb[0].mxu0 %v10572
  %v10649 = vpop.f32.mrb[0].mxu0
  %v10650 = vadd.f32 0.0, %v10649
  %v10651 = vpop.f32.mrb[0].mxu0
  %10652 = vmatprep.mubr.f32.mxu0 0.0
  %10653 = vmatmul.mubr.f32.gmra.mrb[0].mxu0 %v10574
  %v10654 = vpop.f32.mrb[0].mxu0
  %v10655 = vadd.f32 0.0, %v10654
  %v10656 = vpop.f32.mrb[0].mxu0
  %10657 = vmatprep.mubr.f32.mxu0 0.0
  %10658 = vmatmul.mubr.f32.gmra.mrb[0].mxu0 %v10576
  %v10659 = vpop.f32.mrb[0].mxu0
  %v10660 = vadd.f32 0.0, %v10659
  %v10661 = vpop.f32.mrb[0].mxu0
  %10662 = vdwg.mxu0
  %v10663 = vadd.f32 %v10546, %v10645
  %v10664 = vadd.f32 %v10547, %v10650
  %v10665 = vadd.f32 %v10548, %v10655
  %v10666 = vadd.f32 %v10549, %v10660
  %10667 = vrot.lane.b32.xlu0 %v10433, 64
  %v10668 = vpop.permute.xlu0 %10667
  %10669 = vrot.lane.b32.xlu0 %v10434, 64
  %v10670 = vpop.permute.xlu0 %10669
  %10671 = vrot.lane.b32.xlu0 %v10435, 64
  %v10672 = vpop.permute.xlu0 %10671
  %10673 = vrot.lane.b32.xlu0 %v10436, 64
  %v10674 = vpop.permute.xlu0 %10673
  %10675 = vrot.lane.b32.xlu0 %v9981, 120
  %v10676 = vpop.permute.xlu0 %10675
  %10677 = vrot.lane.b32.xlu0 %v9982, 120
  %v10678 = vpop.permute.xlu0 %10677
  %10679 = vrot.lane.b32.xlu0 %v9983, 120
  %v10680 = vpop.permute.xlu0 %10679
  %10681 = vrot.lane.b32.xlu0 %v9984, 120
  %v10682 = vpop.permute.xlu0 %10681
  %v10687 = vsel %vm3260, %v10668, 0
  %v10689 = vsel %vm3260, %v10670, 0
  %v10691 = vsel %vm3260, %v10672, 0
  %v10693 = vsel %vm3260, %v10674, 0
  %10695 = vmatprep.subr.mxu0 0.0
  %10696 = vmatpush1.msra.mxu0 %v10676
  %10697 = vmatprep.subr.mxu0 0.0
  %10698 = vmatpush1.msra.mxu0 %v10678
  %10699 = vmatprep.subr.mxu0 0.0
  %10700 = vmatpush1.msra.mxu0 %v10680
  %10701 = vmatprep.subr.mxu0 0.0
  %10702 = vmatpush1.msra.mxu0 %v10682
  %10703 = vmatprep.subr.mxu0 0.0
  %10704 = vmatpush1.msra.mxu0 0.0
  %10705 = vmatprep.subr.mxu0 0.0
  %10706 = vmatpush1.msra.mxu0 0.0
  %10707 = vmatprep.subr.mxu0 0.0
  %10708 = vmatpush1.msra.mxu0 0.0
  %10709 = vmatprep.subr.mxu0 0.0
  %10710 = vmatpush1.msra.mxu0 0.0
  %10711 = vmatprep.subr.mxu0 0.0
  %10712 = vmatpush1.msra.mxu0 0.0
  %10713 = vmatprep.subr.mxu0 0.0
  %10714 = vmatpush1.msra.mxu0 0.0
  %10715 = vmatprep.subr.mxu0 0.0
  %10716 = vmatpush1.msra.mxu0 0.0
  %10717 = vmatprep.subr.mxu0 0.0
  %10718 = vmatpush1.msra.mxu0 0.0
  %10719 = vmatprep.subr.mxu0 0.0
  %10720 = vmatpush1.msra.mxu0 0.0
  %10721 = vmatprep.subr.mxu0 0.0
  %10722 = vmatpush1.msra.mxu0 0.0
  %10723 = vmatprep.subr.mxu0 0.0
  %10724 = vmatpush1.msra.mxu0 0.0
  %10725 = vmatprep.subr.mxu0 0.0
  %10726 = vmatpush1.msra.mxu0 0.0
  %10727 = vmatprep.subr.mxu0 0.0
  %10728 = vmatpush1.msra.mxu0 0.0
  %10729 = vmatprep.subr.mxu0 0.0
  %10730 = vmatpush1.msra.mxu0 0.0
  %10731 = vmatprep.subr.mxu0 0.0
  %10732 = vmatpush1.msra.mxu0 0.0
  %10733 = vmatprep.subr.mxu0 0.0
  %10734 = vmatpush1.msra.mxu0 0.0
  %10735 = vmatprep.subr.mxu0 0.0
  %10736 = vmatpush1.msra.mxu0 0.0
  %10737 = vmatprep.subr.mxu0 0.0
  %10738 = vmatpush1.msra.mxu0 0.0
  %10739 = vmatprep.subr.mxu0 0.0
  %10740 = vmatpush1.msra.mxu0 0.0
  %10741 = vmatprep.subr.mxu0 0.0
  %10742 = vmatpush1.msra.mxu0 0.0
  %10743 = vmatprep.subr.mxu0 0.0
  %10744 = vmatpush1.msra.mxu0 0.0
  %10745 = vmatprep.subr.mxu0 0.0
  %10746 = vmatpush1.msra.mxu0 0.0
  %10747 = vmatprep.subr.mxu0 0.0
  %10748 = vmatpush1.msra.mxu0 0.0
  %10749 = vmatprep.subr.mxu0 0.0
  %10750 = vmatpush1.msra.mxu0 0.0
  %10751 = vmatprep.subr.mxu0 0.0
  %10752 = vmatpush1.msra.mxu0 0.0
  %10753 = vmatprep.subr.mxu0 0.0
  %10754 = vmatpush1.msra.mxu0 0.0
  %10755 = vmatprep.subr.mxu0 0.0
  %10756 = vmatpush1.msra.mxu0 0.0
  %10757 = vmatprep.subr.mxu0 0.0
  %10758 = vmatpush1.msra.mxu0 0.0
  %10759 = vmatprep.mubr.f32.mxu0 0.0
  %10760 = vmatmul.mubr.f32.gmra.mrb[0].mxu0 %v10687
  %v10761 = vpop.f32.mrb[0].mxu0
  %v10762 = vadd.f32 0.0, %v10761
  %v10763 = vpop.f32.mrb[0].mxu0
  %10764 = vmatprep.mubr.f32.mxu0 0.0
  %10765 = vmatmul.mubr.f32.gmra.mrb[0].mxu0 %v10689
  %v10766 = vpop.f32.mrb[0].mxu0
  %v10767 = vadd.f32 0.0, %v10766
  %v10768 = vpop.f32.mrb[0].mxu0
  %10769 = vmatprep.mubr.f32.mxu0 0.0
  %10770 = vmatmul.mubr.f32.gmra.mrb[0].mxu0 %v10691
  %v10771 = vpop.f32.mrb[0].mxu0
  %v10772 = vadd.f32 0.0, %v10771
  %v10773 = vpop.f32.mrb[0].mxu0
  %10774 = vmatprep.mubr.f32.mxu0 0.0
  %10775 = vmatmul.mubr.f32.gmra.mrb[0].mxu0 %v10693
  %v10776 = vpop.f32.mrb[0].mxu0
  %v10777 = vadd.f32 0.0, %v10776
  %v10778 = vpop.f32.mrb[0].mxu0
  %10779 = vdwg.mxu0
  %v10780 = vadd.f32 %v10663, %v10762
  %v10781 = vadd.f32 %v10664, %v10767
  %v10782 = vadd.f32 %v10665, %v10772
  %v10783 = vadd.f32 %v10666, %v10777
  %10784 = vrot.lane.b32.xlu0 %v10433, 32
  %v10785 = vpop.permute.xlu0 %10784
  %10786 = vrot.lane.b32.xlu0 %v10434, 32
  %v10787 = vpop.permute.xlu0 %10786
  %10788 = vrot.lane.b32.xlu0 %v10435, 32
  %v10789 = vpop.permute.xlu0 %10788
  %10790 = vrot.lane.b32.xlu0 %v10436, 32
  %v10791 = vpop.permute.xlu0 %10790
  %10792 = vrot.lane.b32.xlu0 %v9981, 119
  %v10793 = vpop.permute.xlu0 %10792
  %10794 = vrot.lane.b32.xlu0 %v9982, 119
  %v10795 = vpop.permute.xlu0 %10794
  %10796 = vrot.lane.b32.xlu0 %v9983, 119
  %v10797 = vpop.permute.xlu0 %10796
  %10798 = vrot.lane.b32.xlu0 %v9984, 119
  %v10799 = vpop.permute.xlu0 %10798
  %v10804 = vsel %vm3260, %v10785, 0
  %v10806 = vsel %vm3260, %v10787, 0
  %v10808 = vsel %vm3260, %v10789, 0
  %v10810 = vsel %vm3260, %v10791, 0
  %10812 = vmatprep.subr.mxu0 0.0
  %10813 = vmatpush1.msra.mxu0 %v10793
  %10814 = vmatprep.subr.mxu0 0.0
  %10815 = vmatpush1.msra.mxu0 %v10795
  %10816 = vmatprep.subr.mxu0 0.0
  %10817 = vmatpush1.msra.mxu0 %v10797
  %10818 = vmatprep.subr.mxu0 0.0
  %10819 = vmatpush1.msra.mxu0 %v10799
  %10820 = vmatprep.subr.mxu0 0.0
  %10821 = vmatpush1.msra.mxu0 0.0
  %10822 = vmatprep.subr.mxu0 0.0
  %10823 = vmatpush1.msra.mxu0 0.0
  %10824 = vmatprep.subr.mxu0 0.0
  %10825 = vmatpush1.msra.mxu0 0.0
  %10826 = vmatprep.subr.mxu0 0.0
  %10827 = vmatpush1.msra.mxu0 0.0
  %10828 = vmatprep.subr.mxu0 0.0
  %10829 = vmatpush1.msra.mxu0 0.0
  %10830 = vmatprep.subr.mxu0 0.0
  %10831 = vmatpush1.msra.mxu0 0.0
  %10832 = vmatprep.subr.mxu0 0.0
  %10833 = vmatpush1.msra.mxu0 0.0
  %10834 = vmatprep.subr.mxu0 0.0
  %10835 = vmatpush1.msra.mxu0 0.0
  %10836 = vmatprep.subr.mxu0 0.0
  %10837 = vmatpush1.msra.mxu0 0.0
  %10838 = vmatprep.subr.mxu0 0.0
  %10839 = vmatpush1.msra.mxu0 0.0
  %10840 = vmatprep.subr.mxu0 0.0
  %10841 = vmatpush1.msra.mxu0 0.0
  %10842 = vmatprep.subr.mxu0 0.0
  %10843 = vmatpush1.msra.mxu0 0.0
  %10844 = vmatprep.subr.mxu0 0.0
  %10845 = vmatpush1.msra.mxu0 0.0
  %10846 = vmatprep.subr.mxu0 0.0
  %10847 = vmatpush1.msra.mxu0 0.0
  %10848 = vmatprep.subr.mxu0 0.0
  %10849 = vmatpush1.msra.mxu0 0.0
  %10850 = vmatprep.subr.mxu0 0.0
  %10851 = vmatpush1.msra.mxu0 0.0
  %10852 = vmatprep.subr.mxu0 0.0
  %10853 = vmatpush1.msra.mxu0 0.0
  %10854 = vmatprep.subr.mxu0 0.0
  %10855 = vmatpush1.msra.mxu0 0.0
  %10856 = vmatprep.subr.mxu0 0.0
  %10857 = vmatpush1.msra.mxu0 0.0
  %10858 = vmatprep.subr.mxu0 0.0
  %10859 = vmatpush1.msra.mxu0 0.0
  %10860 = vmatprep.subr.mxu0 0.0
  %10861 = vmatpush1.msra.mxu0 0.0
  %10862 = vmatprep.subr.mxu0 0.0
  %10863 = vmatpush1.msra.mxu0 0.0
  %10864 = vmatprep.subr.mxu0 0.0
  %10865 = vmatpush1.msra.mxu0 0.0
  %10866 = vmatprep.subr.mxu0 0.0
  %10867 = vmatpush1.msra.mxu0 0.0
  %10868 = vmatprep.subr.mxu0 0.0
  %10869 = vmatpush1.msra.mxu0 0.0
  %10870 = vmatprep.subr.mxu0 0.0
  %10871 = vmatpush1.msra.mxu0 0.0
  %10872 = vmatprep.subr.mxu0 0.0
  %10873 = vmatpush1.msra.mxu0 0.0
  %10874 = vmatprep.subr.mxu0 0.0
  %10875 = vmatpush1.msra.mxu0 0.0
  %10876 = vmatprep.mubr.f32.mxu0 0.0
  %10877 = vmatmul.mubr.f32.gmra.mrb[0].mxu0 %v10804
  %v10878 = vpop.f32.mrb[0].mxu0
  %v10879 = vadd.f32 0.0, %v10878
  %v10880 = vpop.f32.mrb[0].mxu0
  %10881 = vmatprep.mubr.f32.mxu0 0.0
  %10882 = vmatmul.mubr.f32.gmra.mrb[0].mxu0 %v10806
  %v10883 = vpop.f32.mrb[0].mxu0
  %v10884 = vadd.f32 0.0, %v10883
  %v10885 = vpop.f32.mrb[0].mxu0
  %10886 = vmatprep.mubr.f32.mxu0 0.0
  %10887 = vmatmul.mubr.f32.gmra.mrb[0].mxu0 %v10808
  %v10888 = vpop.f32.mrb[0].mxu0
  %v10889 = vadd.f32 0.0, %v10888
  %v10890 = vpop.f32.mrb[0].mxu0
  %10891 = vmatprep.mubr.f32.mxu0 0.0
  %10892 = vmatmul.mubr.f32.gmra.mrb[0].mxu0 %v10810
  %v10893 = vpop.f32.mrb[0].mxu0
  %v10894 = vadd.f32 0.0, %v10893
  %v10895 = vpop.f32.mrb[0].mxu0
  %10896 = vdwg.mxu0
  %v10897 = vadd.f32 %v10780, %v10879
  %v10898 = vadd.f32 %v10781, %v10884
  %v10899 = vadd.f32 %v10782, %v10889
  %v10900 = vadd.f32 %v10783, %v10894
  %v10901 = vld [vmem:[%s5 + $0x10] sm:$0xff]
  %v10902 = vld [vmem:[%s5 + $0x28] sm:$0xff]
  %v10903 = vld [vmem:[%s5 + $0x40] sm:$0xff]
  %v10904 = vld [vmem:[%s5 + $0x58] sm:$0xff]
  %10905 = vrot.lane.b32.xlu0 %v9981, 118
  %v10906 = vpop.permute.xlu0 %10905
  %10907 = vrot.lane.b32.xlu0 %v9982, 118
  %v10908 = vpop.permute.xlu0 %10907
  %10909 = vrot.lane.b32.xlu0 %v9983, 118
  %v10910 = vpop.permute.xlu0 %10909
  %10911 = vrot.lane.b32.xlu0 %v9984, 118
  %v10912 = vpop.permute.xlu0 %10911
  %v10918 = vsel %vm3260, %v10901, 0
  %v10921 = vsel %vm3260, %v10902, 0
  %v10924 = vsel %vm3260, %v10903, 0
  %v10927 = vsel %vm3260, %v10904, 0
  %10929 = vmatprep.subr.mxu0 0.0
  %10930 = vmatpush1.msra.mxu0 %v10906
  %10931 = vmatprep.subr.mxu0 0.0
  %10932 = vmatpush1.msra.mxu0 %v10908
  %10933 = vmatprep.subr.mxu0 0.0
  %10934 = vmatpush1.msra.mxu0 %v10910
  %10935 = vmatprep.subr.mxu0 0.0
  %10936 = vmatpush1.msra.mxu0 %v10912
  %10937 = vmatprep.subr.mxu0 0.0
  %10938 = vmatpush1.msra.mxu0 0.0
  %10939 = vmatprep.subr.mxu0 0.0
  %10940 = vmatpush1.msra.mxu0 0.0
  %10941 = vmatprep.subr.mxu0 0.0
  %10942 = vmatpush1.msra.mxu0 0.0
  %10943 = vmatprep.subr.mxu0 0.0
  %10944 = vmatpush1.msra.mxu0 0.0
  %10945 = vmatprep.subr.mxu0 0.0
  %10946 = vmatpush1.msra.mxu0 0.0
  %10947 = vmatprep.subr.mxu0 0.0
  %10948 = vmatpush1.msra.mxu0 0.0
  %10949 = vmatprep.subr.mxu0 0.0
  %10950 = vmatpush1.msra.mxu0 0.0
  %10951 = vmatprep.subr.mxu0 0.0
  %10952 = vmatpush1.msra.mxu0 0.0
  %10953 = vmatprep.subr.mxu0 0.0
  %10954 = vmatpush1.msra.mxu0 0.0
  %10955 = vmatprep.subr.mxu0 0.0
  %10956 = vmatpush1.msra.mxu0 0.0
  %10957 = vmatprep.subr.mxu0 0.0
  %10958 = vmatpush1.msra.mxu0 0.0
  %10959 = vmatprep.subr.mxu0 0.0
  %10960 = vmatpush1.msra.mxu0 0.0
  %10961 = vmatprep.subr.mxu0 0.0
  %10962 = vmatpush1.msra.mxu0 0.0
  %10963 = vmatprep.subr.mxu0 0.0
  %10964 = vmatpush1.msra.mxu0 0.0
  %10965 = vmatprep.subr.mxu0 0.0
  %10966 = vmatpush1.msra.mxu0 0.0
  %10967 = vmatprep.subr.mxu0 0.0
  %10968 = vmatpush1.msra.mxu0 0.0
  %10969 = vmatprep.subr.mxu0 0.0
  %10970 = vmatpush1.msra.mxu0 0.0
  %10971 = vmatprep.subr.mxu0 0.0
  %10972 = vmatpush1.msra.mxu0 0.0
  %10973 = vmatprep.subr.mxu0 0.0
  %10974 = vmatpush1.msra.mxu0 0.0
  %10975 = vmatprep.subr.mxu0 0.0
  %10976 = vmatpush1.msra.mxu0 0.0
  %10977 = vmatprep.subr.mxu0 0.0
  %10978 = vmatpush1.msra.mxu0 0.0
  %10979 = vmatprep.subr.mxu0 0.0
  %10980 = vmatpush1.msra.mxu0 0.0
  %10981 = vmatprep.subr.mxu0 0.0
  %10982 = vmatpush1.msra.mxu0 0.0
  %10983 = vmatprep.subr.mxu0 0.0
  %10984 = vmatpush1.msra.mxu0 0.0
  %10985 = vmatprep.subr.mxu0 0.0
  %10986 = vmatpush1.msra.mxu0 0.0
  %10987 = vmatprep.subr.mxu0 0.0
  %10988 = vmatpush1.msra.mxu0 0.0
  %10989 = vmatprep.subr.mxu0 0.0
  %10990 = vmatpush1.msra.mxu0 0.0
  %10991 = vmatprep.subr.mxu0 0.0
  %10992 = vmatpush1.msra.mxu0 0.0
  %10993 = vmatprep.mubr.f32.mxu0 0.0
  %10994 = vmatmul.mubr.f32.gmra.mrb[0].mxu0 %v10918
  %v10995 = vpop.f32.mrb[0].mxu0
  %v10996 = vadd.f32 0.0, %v10995
  %v10997 = vpop.f32.mrb[0].mxu0
  %10998 = vmatprep.mubr.f32.mxu0 0.0
  %10999 = vmatmul.mubr.f32.gmra.mrb[0].mxu0 %v10921
  %v11000 = vpop.f32.mrb[0].mxu0
  %v11001 = vadd.f32 0.0, %v11000
  %v11002 = vpop.f32.mrb[0].mxu0
  %11003 = vmatprep.mubr.f32.mxu0 0.0
  %11004 = vmatmul.mubr.f32.gmra.mrb[0].mxu0 %v10924
  %v11005 = vpop.f32.mrb[0].mxu0
  %v11006 = vadd.f32 0.0, %v11005
  %v11007 = vpop.f32.mrb[0].mxu0
  %11008 = vmatprep.mubr.f32.mxu0 0.0
  %11009 = vmatmul.mubr.f32.gmra.mrb[0].mxu0 %v10927
  %v11010 = vpop.f32.mrb[0].mxu0
  %v11011 = vadd.f32 0.0, %v11010
  %v11012 = vpop.f32.mrb[0].mxu0
  %11013 = vdwg.mxu0
  %v11014 = vadd.f32 %v10897, %v10996
  %v11015 = vadd.f32 %v10898, %v11001
  %v11016 = vadd.f32 %v10899, %v11006
  %v11017 = vadd.f32 %v10900, %v11011
  %v11018 = vld [vmem:[%s11] sm:$0xff]
  %v11019 = vld [vmem:[%s11 + $0x8] sm:$0xff]
  %v11020 = vld [vmem:[%s11 + $0x10] sm:$0xff]
  %v11021 = vld [vmem:[%s11 + $0x18] sm:$0xff]
  %11023 = vset.pattern.permute.xlu0 0
  %11024 = vperm.xlu0 %11023, %v11018
  %v11025 = vpop.permute.xlu0 %11024
  %11028 = vset.pattern.permute.xlu0 0
  %11029 = vperm.xlu0 %11028, %v11019
  %v11030 = vpop.permute.xlu0 %11029
  %11033 = vset.pattern.permute.xlu0 0
  %11034 = vperm.xlu0 %11033, %v11020
  %v11035 = vpop.permute.xlu0 %11034
  %11038 = vset.pattern.permute.xlu0 0
  %11039 = vperm.xlu0 %11038, %v11021
  %v11040 = vpop.permute.xlu0 %11039
  %v11042 = vadd.f32 %v11014, %v11025
  %v11043 = vadd.f32 %v11015, %v11030
  %v11044 = vadd.f32 %v11016, %v11035
  %v11045 = vadd.f32 %v11017, %v11040
  %11050 = vrot.lane.b32.xlu0 %v11042, 127
  %v11051 = vpop.permute.xlu0 %11050
  %11052 = vrot.lane.b32.xlu0 %v11043, 127
  %v11053 = vpop.permute.xlu0 %11052
  %11054 = vrot.lane.b32.xlu0 %v11044, 127
  %v11055 = vpop.permute.xlu0 %11054
  %11056 = vrot.lane.b32.xlu0 %v11045, 127
  %v11057 = vpop.permute.xlu0 %11056
  %v11062 = vmax.f32 %v11042, %v11051
  %v11063 = vmax.f32 %v11043, %v11053
  %v11064 = vmax.f32 %v11044, %v11055
  %v11065 = vmax.f32 %v11045, %v11057
  %11070 = vrot.lane.b32.xlu0 %v11062, 124
  %v11071 = vpop.permute.xlu0 %11070
  %11072 = vrot.lane.b32.xlu0 %v11063, 124
  %v11073 = vpop.permute.xlu0 %11072
  %11074 = vrot.lane.b32.xlu0 %v11064, 124
  %v11075 = vpop.permute.xlu0 %11074
  %11076 = vrot.lane.b32.xlu0 %v11065, 124
  %v11077 = vpop.permute.xlu0 %11076
  %v11082 = vmax.f32 %v11062, %v11071
  %v11083 = vmax.f32 %v11063, %v11073
  %v11084 = vmax.f32 %v11064, %v11075
  %v11085 = vmax.f32 %v11065, %v11077
  %v11086 = vmax.f32 %v11082, 0.0
  %v11087 = vmax.f32 %v11083, 0.0
  %v11088 = vmax.f32 %v11084, 0.0
  %v11089 = vmax.f32 %v11085, 0.0
  %v11090 = vld [vmem:[%s17] sm:$0xff]
  %v11091 = vld [vmem:[%s17 + $0x8] sm:$0xff]
  %v11092 = vld [vmem:[%s17 + $0x10] sm:$0x1]
  %vm11093 = vcmask 138240
  %v11095 = vsel %vm11093, %v11086, 0
  %v11098 = vsel %vm11093, %v11087, 0
  %v11101 = vsel %vm11093, %v11088, 0
  %v11104 = vsel %vm11093, %v11089, 0
  %vm11106 = vcmask 1040384
  %v11108 = vsel %vm11106, %v11092, 0
  %11110 = vmatprep.subr.mxu0 0.0
  %11111 = vmatpush1.msra.mxu0 %v11090
  %11112 = vmatprep.subr.mxu0 0.0
  %11113 = vmatpush1.msra.mxu0 %v11091
  %11114 = vmatprep.subr.mxu0 0.0
  %11115 = vmatpush1.msra.mxu0 %v11108
  %11116 = vmatprep.subr.mxu0 0.0
  %11117 = vmatpush1.msra.mxu0 0.0
  %11118 = vmatprep.subr.mxu0 0.0
  %11119 = vmatpush1.msra.mxu0 0.0
  %11120 = vmatprep.subr.mxu0 0.0
  %11121 = vmatpush1.msra.mxu0 0.0
  %11122 = vmatprep.subr.mxu0 0.0
  %11123 = vmatpush1.msra.mxu0 0.0
  %11124 = vmatprep.subr.mxu0 0.0
  %11125 = vmatpush1.msra.mxu0 0.0
  %11126 = vmatprep.subr.mxu0 0.0
  %11127 = vmatpush1.msra.mxu0 0.0
  %11128 = vmatprep.subr.mxu0 0.0
  %11129 = vmatpush1.msra.mxu0 0.0
  %11130 = vmatprep.subr.mxu0 0.0
  %11131 = vmatpush1.msra.mxu0 0.0
  %11132 = vmatprep.subr.mxu0 0.0
  %11133 = vmatpush1.msra.mxu0 0.0
  %11134 = vmatprep.subr.mxu0 0.0
  %11135 = vmatpush1.msra.mxu0 0.0
  %11136 = vmatprep.subr.mxu0 0.0
  %11137 = vmatpush1.msra.mxu0 0.0
  %11138 = vmatprep.subr.mxu0 0.0
  %11139 = vmatpush1.msra.mxu0 0.0
  %11140 = vmatprep.subr.mxu0 0.0
  %11141 = vmatpush1.msra.mxu0 0.0
  %11142 = vmatprep.subr.mxu0 0.0
  %11143 = vmatpush1.msra.mxu0 0.0
  %11144 = vmatprep.subr.mxu0 0.0
  %11145 = vmatpush1.msra.mxu0 0.0
  %11146 = vmatprep.subr.mxu0 0.0
  %11147 = vmatpush1.msra.mxu0 0.0
  %11148 = vmatprep.subr.mxu0 0.0
  %11149 = vmatpush1.msra.mxu0 0.0
  %11150 = vmatprep.subr.mxu0 0.0
  %11151 = vmatpush1.msra.mxu0 0.0
  %11152 = vmatprep.subr.mxu0 0.0
  %11153 = vmatpush1.msra.mxu0 0.0
  %11154 = vmatprep.subr.mxu0 0.0
  %11155 = vmatpush1.msra.mxu0 0.0
  %11156 = vmatprep.subr.mxu0 0.0
  %11157 = vmatpush1.msra.mxu0 0.0
  %11158 = vmatprep.subr.mxu0 0.0
  %11159 = vmatpush1.msra.mxu0 0.0
  %11160 = vmatprep.subr.mxu0 0.0
  %11161 = vmatpush1.msra.mxu0 0.0
  %11162 = vmatprep.subr.mxu0 0.0
  %11163 = vmatpush1.msra.mxu0 0.0
  %11164 = vmatprep.subr.mxu0 0.0
  %11165 = vmatpush1.msra.mxu0 0.0
  %11166 = vmatprep.subr.mxu0 0.0
  %11167 = vmatpush1.msra.mxu0 0.0
  %11168 = vmatprep.subr.mxu0 0.0
  %11169 = vmatpush1.msra.mxu0 0.0
  %11170 = vmatprep.subr.mxu0 0.0
  %11171 = vmatpush1.msra.mxu0 0.0
  %11172 = vmatprep.subr.mxu0 0.0
  %11173 = vmatpush1.msra.mxu0 0.0
  %11174 = vmatprep.mubr.f32.mxu0 0.0
  %11175 = vmatmul.mubr.f32.gmra.mrb[0].mxu0 %v11095
  %v11176 = vpop.f32.mrb[0].mxu0
  %v11177 = vadd.f32 0.0, %v11176
  %v11178 = vpop.f32.mrb[0].mxu0
  %11179 = vmatprep.mubr.f32.mxu0 0.0
  %11180 = vmatmul.mubr.f32.gmra.mrb[0].mxu0 %v11098
  %v11181 = vpop.f32.mrb[0].mxu0
  %v11182 = vadd.f32 0.0, %v11181
  %v11183 = vpop.f32.mrb[0].mxu0
  %11184 = vmatprep.mubr.f32.mxu0 0.0
  %11185 = vmatmul.mubr.f32.gmra.mrb[0].mxu0 %v11101
  %v11186 = vpop.f32.mrb[0].mxu0
  %v11187 = vadd.f32 0.0, %v11186
  %v11188 = vpop.f32.mrb[0].mxu0
  %11189 = vmatprep.mubr.f32.mxu0 0.0
  %11190 = vmatmul.mubr.f32.gmra.mrb[0].mxu0 %v11104
  %v11191 = vpop.f32.mrb[0].mxu0
  %v11192 = vadd.f32 0.0, %v11191
  %v11193 = vpop.f32.mrb[0].mxu0
  %11194 = vdwg.mxu0
  %vm11195 = vcmask 146432
  %11196 = vst.msk [vmem:[#allocation6] sm:$0xff] %vm11195, %v11177
  %11197 = vst.msk [vmem:[#allocation6 + $0x8] sm:$0xff] %vm11195, %v11182
  %11198 = vst.msk [vmem:[#allocation6 + $0x10] sm:$0xff] %vm11195, %v11187
  %11199 = vst.msk [vmem:[#allocation6 + $0x18] sm:$0xff] %vm11195, %v11192
  %v11200 = vld [vmem:[%s6] sm:$0xff]
  %v11201 = vld [vmem:[%s6 + $0x18] sm:$0xff]
  %v11202 = vld [vmem:[%s6 + $0x30] sm:$0xff]
  %v11203 = vld [vmem:[%s6 + $0x48] sm:$0xff]
  %v11204 = vld [vmem:[#allocation6] sm:$0xff]
  %v11205 = vld [vmem:[#allocation6 + $0x8] sm:$0xff]
  %v11206 = vld [vmem:[#allocation6 + $0x10] sm:$0xff]
  %v11207 = vld [vmem:[#allocation6 + $0x18] sm:$0xff]
  %11212 = vrot.lane.b32.xlu0 %v11200, 96
  %v11213 = vpop.permute.xlu0 %11212
  %11214 = vrot.lane.b32.xlu0 %v11201, 96
  %v11215 = vpop.permute.xlu0 %11214
  %11216 = vrot.lane.b32.xlu0 %v11202, 96
  %v11217 = vpop.permute.xlu0 %11216
  %11218 = vrot.lane.b32.xlu0 %v11203, 96
  %v11219 = vpop.permute.xlu0 %11218
  %11224 = vrot.lane.b32.xlu0 %v11204, 127
  %v11225 = vpop.permute.xlu0 %11224
  %11226 = vrot.lane.b32.xlu0 %v11205, 127
  %v11227 = vpop.permute.xlu0 %11226
  %11228 = vrot.lane.b32.xlu0 %v11206, 127
  %v11229 = vpop.permute.xlu0 %11228
  %11230 = vrot.lane.b32.xlu0 %v11207, 127
  %v11231 = vpop.permute.xlu0 %11230
  %v11236 = vsel %vm3260, %v11213, 0
  %v11238 = vsel %vm3260, %v11215, 0
  %v11240 = vsel %vm3260, %v11217, 0
  %v11242 = vsel %vm3260, %v11219, 0
  %11244 = vmatprep.subr.mxu0 0.0
  %11245 = vmatpush1.msra.mxu0 %v11225
  %11246 = vmatprep.subr.mxu0 0.0
  %11247 = vmatpush1.msra.mxu0 %v11227
  %11248 = vmatprep.subr.mxu0 0.0
  %11249 = vmatpush1.msra.mxu0 %v11229
  %11250 = vmatprep.subr.mxu0 0.0
  %11251 = vmatpush1.msra.mxu0 %v11231
  %11252 = vmatprep.subr.mxu0 0.0
  %11253 = vmatpush1.msra.mxu0 0.0
  %11254 = vmatprep.subr.mxu0 0.0
  %11255 = vmatpush1.msra.mxu0 0.0
  %11256 = vmatprep.subr.mxu0 0.0
  %11257 = vmatpush1.msra.mxu0 0.0
  %11258 = vmatprep.subr.mxu0 0.0
  %11259 = vmatpush1.msra.mxu0 0.0
  %11260 = vmatprep.subr.mxu0 0.0
  %11261 = vmatpush1.msra.mxu0 0.0
  %11262 = vmatprep.subr.mxu0 0.0
  %11263 = vmatpush1.msra.mxu0 0.0
  %11264 = vmatprep.subr.mxu0 0.0
  %11265 = vmatpush1.msra.mxu0 0.0
  %11266 = vmatprep.subr.mxu0 0.0
  %11267 = vmatpush1.msra.mxu0 0.0
  %11268 = vmatprep.subr.mxu0 0.0
  %11269 = vmatpush1.msra.mxu0 0.0
  %11270 = vmatprep.subr.mxu0 0.0
  %11271 = vmatpush1.msra.mxu0 0.0
  %11272 = vmatprep.subr.mxu0 0.0
  %11273 = vmatpush1.msra.mxu0 0.0
  %11274 = vmatprep.subr.mxu0 0.0
  %11275 = vmatpush1.msra.mxu0 0.0
  %11276 = vmatprep.subr.mxu0 0.0
  %11277 = vmatpush1.msra.mxu0 0.0
  %11278 = vmatprep.subr.mxu0 0.0
  %11279 = vmatpush1.msra.mxu0 0.0
  %11280 = vmatprep.subr.mxu0 0.0
  %11281 = vmatpush1.msra.mxu0 0.0
  %11282 = vmatprep.subr.mxu0 0.0
  %11283 = vmatpush1.msra.mxu0 0.0
  %11284 = vmatprep.subr.mxu0 0.0
  %11285 = vmatpush1.msra.mxu0 0.0
  %11286 = vmatprep.subr.mxu0 0.0
  %11287 = vmatpush1.msra.mxu0 0.0
  %11288 = vmatprep.subr.mxu0 0.0
  %11289 = vmatpush1.msra.mxu0 0.0
  %11290 = vmatprep.subr.mxu0 0.0
  %11291 = vmatpush1.msra.mxu0 0.0
  %11292 = vmatprep.subr.mxu0 0.0
  %11293 = vmatpush1.msra.mxu0 0.0
  %11294 = vmatprep.subr.mxu0 0.0
  %11295 = vmatpush1.msra.mxu0 0.0
  %11296 = vmatprep.subr.mxu0 0.0
  %11297 = vmatpush1.msra.mxu0 0.0
  %11298 = vmatprep.subr.mxu0 0.0
  %11299 = vmatpush1.msra.mxu0 0.0
  %11300 = vmatprep.subr.mxu0 0.0
  %11301 = vmatpush1.msra.mxu0 0.0
  %11302 = vmatprep.subr.mxu0 0.0
  %11303 = vmatpush1.msra.mxu0 0.0
  %11304 = vmatprep.subr.mxu0 0.0
  %11305 = vmatpush1.msra.mxu0 0.0
  %11306 = vmatprep.subr.mxu0 0.0
  %11307 = vmatpush1.msra.mxu0 0.0
  %11308 = vmatprep.mubr.f32.mxu0 0.0
  %11309 = vmatmul.mubr.f32.gmra.mrb[0].mxu0 %v11236
  %v11310 = vpop.f32.mrb[0].mxu0
  %v11311 = vadd.f32 0.0, %v11310
  %v11312 = vpop.f32.mrb[0].mxu0
  %11313 = vmatprep.mubr.f32.mxu0 0.0
  %11314 = vmatmul.mubr.f32.gmra.mrb[0].mxu0 %v11238
  %v11315 = vpop.f32.mrb[0].mxu0
  %v11316 = vadd.f32 0.0, %v11315
  %v11317 = vpop.f32.mrb[0].mxu0
  %11318 = vmatprep.mubr.f32.mxu0 0.0
  %11319 = vmatmul.mubr.f32.gmra.mrb[0].mxu0 %v11240
  %v11320 = vpop.f32.mrb[0].mxu0
  %v11321 = vadd.f32 0.0, %v11320
  %v11322 = vpop.f32.mrb[0].mxu0
  %11323 = vmatprep.mubr.f32.mxu0 0.0
  %11324 = vmatmul.mubr.f32.gmra.mrb[0].mxu0 %v11242
  %v11325 = vpop.f32.mrb[0].mxu0
  %v11326 = vadd.f32 0.0, %v11325
  %v11327 = vpop.f32.mrb[0].mxu0
  %11328 = vdwg.mxu0
  %v11329 = vsel %vm3260, %v11200, 0
  %v11331 = vsel %vm3260, %v11201, 0
  %v11333 = vsel %vm3260, %v11202, 0
  %v11335 = vsel %vm3260, %v11203, 0
  %11337 = vmatprep.subr.mxu0 0.0
  %11338 = vmatpush1.msra.mxu0 %v11204
  %11339 = vmatprep.subr.mxu0 0.0
  %11340 = vmatpush1.msra.mxu0 %v11205
  %11341 = vmatprep.subr.mxu0 0.0
  %11342 = vmatpush1.msra.mxu0 %v11206
  %11343 = vmatprep.subr.mxu0 0.0
  %11344 = vmatpush1.msra.mxu0 %v11207
  %11345 = vmatprep.subr.mxu0 0.0
  %11346 = vmatpush1.msra.mxu0 0.0
  %11347 = vmatprep.subr.mxu0 0.0
  %11348 = vmatpush1.msra.mxu0 0.0
  %11349 = vmatprep.subr.mxu0 0.0
  %11350 = vmatpush1.msra.mxu0 0.0
  %11351 = vmatprep.subr.mxu0 0.0
  %11352 = vmatpush1.msra.mxu0 0.0
  %11353 = vmatprep.subr.mxu0 0.0
  %11354 = vmatpush1.msra.mxu0 0.0
  %11355 = vmatprep.subr.mxu0 0.0
  %11356 = vmatpush1.msra.mxu0 0.0
  %11357 = vmatprep.subr.mxu0 0.0
  %11358 = vmatpush1.msra.mxu0 0.0
  %11359 = vmatprep.subr.mxu0 0.0
  %11360 = vmatpush1.msra.mxu0 0.0
  %11361 = vmatprep.subr.mxu0 0.0
  %11362 = vmatpush1.msra.mxu0 0.0
  %11363 = vmatprep.subr.mxu0 0.0
  %11364 = vmatpush1.msra.mxu0 0.0
  %11365 = vmatprep.subr.mxu0 0.0
  %11366 = vmatpush1.msra.mxu0 0.0
  %11367 = vmatprep.subr.mxu0 0.0
  %11368 = vmatpush1.msra.mxu0 0.0
  %11369 = vmatprep.subr.mxu0 0.0
  %11370 = vmatpush1.msra.mxu0 0.0
  %11371 = vmatprep.subr.mxu0 0.0
  %11372 = vmatpush1.msra.mxu0 0.0
  %11373 = vmatprep.subr.mxu0 0.0
  %11374 = vmatpush1.msra.mxu0 0.0
  %11375 = vmatprep.subr.mxu0 0.0
  %11376 = vmatpush1.msra.mxu0 0.0
  %11377 = vmatprep.subr.mxu0 0.0
  %11378 = vmatpush1.msra.mxu0 0.0
  %11379 = vmatprep.subr.mxu0 0.0
  %11380 = vmatpush1.msra.mxu0 0.0
  %11381 = vmatprep.subr.mxu0 0.0
  %11382 = vmatpush1.msra.mxu0 0.0
  %11383 = vmatprep.subr.mxu0 0.0
  %11384 = vmatpush1.msra.mxu0 0.0
  %11385 = vmatprep.subr.mxu0 0.0
  %11386 = vmatpush1.msra.mxu0 0.0
  %11387 = vmatprep.subr.mxu0 0.0
  %11388 = vmatpush1.msra.mxu0 0.0
  %11389 = vmatprep.subr.mxu0 0.0
  %11390 = vmatpush1.msra.mxu0 0.0
  %11391 = vmatprep.subr.mxu0 0.0
  %11392 = vmatpush1.msra.mxu0 0.0
  %11393 = vmatprep.subr.mxu0 0.0
  %11394 = vmatpush1.msra.mxu0 0.0
  %11395 = vmatprep.subr.mxu0 0.0
  %11396 = vmatpush1.msra.mxu0 0.0
  %11397 = vmatprep.subr.mxu0 0.0
  %11398 = vmatpush1.msra.mxu0 0.0
  %11399 = vmatprep.subr.mxu0 0.0
  %11400 = vmatpush1.msra.mxu0 0.0
  %11401 = vmatprep.mubr.f32.mxu0 0.0
  %11402 = vmatmul.mubr.f32.gmra.mrb[0].mxu0 %v11329
  %v11403 = vpop.f32.mrb[0].mxu0
  %v11404 = vadd.f32 %v11311, %v11403
  %v11405 = vpop.f32.mrb[0].mxu0
  %11406 = vmatprep.mubr.f32.mxu0 0.0
  %11407 = vmatmul.mubr.f32.gmra.mrb[0].mxu0 %v11331
  %v11408 = vpop.f32.mrb[0].mxu0
  %v11409 = vadd.f32 %v11316, %v11408
  %v11410 = vpop.f32.mrb[0].mxu0
  %11411 = vmatprep.mubr.f32.mxu0 0.0
  %11412 = vmatmul.mubr.f32.gmra.mrb[0].mxu0 %v11333
  %v11413 = vpop.f32.mrb[0].mxu0
  %v11414 = vadd.f32 %v11321, %v11413
  %v11415 = vpop.f32.mrb[0].mxu0
  %11416 = vmatprep.mubr.f32.mxu0 0.0
  %11417 = vmatmul.mubr.f32.gmra.mrb[0].mxu0 %v11335
  %v11418 = vpop.f32.mrb[0].mxu0
  %v11419 = vadd.f32 %v11326, %v11418
  %v11420 = vpop.f32.mrb[0].mxu0
  %11421 = vdwg.mxu0
  %11422 = vrot.lane.b32.xlu0 %v11200, 64
  %v11423 = vpop.permute.xlu0 %11422
  %11424 = vrot.lane.b32.xlu0 %v11201, 64
  %v11425 = vpop.permute.xlu0 %11424
  %11426 = vrot.lane.b32.xlu0 %v11202, 64
  %v11427 = vpop.permute.xlu0 %11426
  %11428 = vrot.lane.b32.xlu0 %v11203, 64
  %v11429 = vpop.permute.xlu0 %11428
  %11430 = vrot.lane.b32.xlu0 %v11204, 126
  %v11431 = vpop.permute.xlu0 %11430
  %11432 = vrot.lane.b32.xlu0 %v11205, 126
  %v11433 = vpop.permute.xlu0 %11432
  %11434 = vrot.lane.b32.xlu0 %v11206, 126
  %v11435 = vpop.permute.xlu0 %11434
  %11436 = vrot.lane.b32.xlu0 %v11207, 126
  %v11437 = vpop.permute.xlu0 %11436
  %v11442 = vsel %vm3260, %v11423, 0
  %v11444 = vsel %vm3260, %v11425, 0
  %v11446 = vsel %vm3260, %v11427, 0
  %v11448 = vsel %vm3260, %v11429, 0
  %11450 = vmatprep.subr.mxu0 0.0
  %11451 = vmatpush1.msra.mxu0 %v11431
  %11452 = vmatprep.subr.mxu0 0.0
  %11453 = vmatpush1.msra.mxu0 %v11433
  %11454 = vmatprep.subr.mxu0 0.0
  %11455 = vmatpush1.msra.mxu0 %v11435
  %11456 = vmatprep.subr.mxu0 0.0
  %11457 = vmatpush1.msra.mxu0 %v11437
  %11458 = vmatprep.subr.mxu0 0.0
  %11459 = vmatpush1.msra.mxu0 0.0
  %11460 = vmatprep.subr.mxu0 0.0
  %11461 = vmatpush1.msra.mxu0 0.0
  %11462 = vmatprep.subr.mxu0 0.0
  %11463 = vmatpush1.msra.mxu0 0.0
  %11464 = vmatprep.subr.mxu0 0.0
  %11465 = vmatpush1.msra.mxu0 0.0
  %11466 = vmatprep.subr.mxu0 0.0
  %11467 = vmatpush1.msra.mxu0 0.0
  %11468 = vmatprep.subr.mxu0 0.0
  %11469 = vmatpush1.msra.mxu0 0.0
  %11470 = vmatprep.subr.mxu0 0.0
  %11471 = vmatpush1.msra.mxu0 0.0
  %11472 = vmatprep.subr.mxu0 0.0
  %11473 = vmatpush1.msra.mxu0 0.0
  %11474 = vmatprep.subr.mxu0 0.0
  %11475 = vmatpush1.msra.mxu0 0.0
  %11476 = vmatprep.subr.mxu0 0.0
  %11477 = vmatpush1.msra.mxu0 0.0
  %11478 = vmatprep.subr.mxu0 0.0
  %11479 = vmatpush1.msra.mxu0 0.0
  %11480 = vmatprep.subr.mxu0 0.0
  %11481 = vmatpush1.msra.mxu0 0.0
  %11482 = vmatprep.subr.mxu0 0.0
  %11483 = vmatpush1.msra.mxu0 0.0
  %11484 = vmatprep.subr.mxu0 0.0
  %11485 = vmatpush1.msra.mxu0 0.0
  %11486 = vmatprep.subr.mxu0 0.0
  %11487 = vmatpush1.msra.mxu0 0.0
  %11488 = vmatprep.subr.mxu0 0.0
  %11489 = vmatpush1.msra.mxu0 0.0
  %11490 = vmatprep.subr.mxu0 0.0
  %11491 = vmatpush1.msra.mxu0 0.0
  %11492 = vmatprep.subr.mxu0 0.0
  %11493 = vmatpush1.msra.mxu0 0.0
  %11494 = vmatprep.subr.mxu0 0.0
  %11495 = vmatpush1.msra.mxu0 0.0
  %11496 = vmatprep.subr.mxu0 0.0
  %11497 = vmatpush1.msra.mxu0 0.0
  %11498 = vmatprep.subr.mxu0 0.0
  %11499 = vmatpush1.msra.mxu0 0.0
  %11500 = vmatprep.subr.mxu0 0.0
  %11501 = vmatpush1.msra.mxu0 0.0
  %11502 = vmatprep.subr.mxu0 0.0
  %11503 = vmatpush1.msra.mxu0 0.0
  %11504 = vmatprep.subr.mxu0 0.0
  %11505 = vmatpush1.msra.mxu0 0.0
  %11506 = vmatprep.subr.mxu0 0.0
  %11507 = vmatpush1.msra.mxu0 0.0
  %11508 = vmatprep.subr.mxu0 0.0
  %11509 = vmatpush1.msra.mxu0 0.0
  %11510 = vmatprep.subr.mxu0 0.0
  %11511 = vmatpush1.msra.mxu0 0.0
  %11512 = vmatprep.subr.mxu0 0.0
  %11513 = vmatpush1.msra.mxu0 0.0
  %11514 = vmatprep.mubr.f32.mxu0 0.0
  %11515 = vmatmul.mubr.f32.gmra.mrb[0].mxu0 %v11442
  %v11516 = vpop.f32.mrb[0].mxu0
  %v11517 = vadd.f32 0.0, %v11516
  %v11518 = vpop.f32.mrb[0].mxu0
  %11519 = vmatprep.mubr.f32.mxu0 0.0
  %11520 = vmatmul.mubr.f32.gmra.mrb[0].mxu0 %v11444
  %v11521 = vpop.f32.mrb[0].mxu0
  %v11522 = vadd.f32 0.0, %v11521
  %v11523 = vpop.f32.mrb[0].mxu0
  %11524 = vmatprep.mubr.f32.mxu0 0.0
  %11525 = vmatmul.mubr.f32.gmra.mrb[0].mxu0 %v11446
  %v11526 = vpop.f32.mrb[0].mxu0
  %v11527 = vadd.f32 0.0, %v11526
  %v11528 = vpop.f32.mrb[0].mxu0
  %11529 = vmatprep.mubr.f32.mxu0 0.0
  %11530 = vmatmul.mubr.f32.gmra.mrb[0].mxu0 %v11448
  %v11531 = vpop.f32.mrb[0].mxu0
  %v11532 = vadd.f32 0.0, %v11531
  %v11533 = vpop.f32.mrb[0].mxu0
  %11534 = vdwg.mxu0
  %v11535 = vadd.f32 %v11404, %v11517
  %v11536 = vadd.f32 %v11409, %v11522
  %v11537 = vadd.f32 %v11414, %v11527
  %v11538 = vadd.f32 %v11419, %v11532
  %11539 = vrot.lane.b32.xlu0 %v11200, 32
  %v11540 = vpop.permute.xlu0 %11539
  %11541 = vrot.lane.b32.xlu0 %v11201, 32
  %v11542 = vpop.permute.xlu0 %11541
  %11543 = vrot.lane.b32.xlu0 %v11202, 32
  %v11544 = vpop.permute.xlu0 %11543
  %11545 = vrot.lane.b32.xlu0 %v11203, 32
  %v11546 = vpop.permute.xlu0 %11545
  %11547 = vrot.lane.b32.xlu0 %v11204, 125
  %v11548 = vpop.permute.xlu0 %11547
  %11549 = vrot.lane.b32.xlu0 %v11205, 125
  %v11550 = vpop.permute.xlu0 %11549
  %11551 = vrot.lane.b32.xlu0 %v11206, 125
  %v11552 = vpop.permute.xlu0 %11551
  %11553 = vrot.lane.b32.xlu0 %v11207, 125
  %v11554 = vpop.permute.xlu0 %11553
  %v11559 = vsel %vm3260, %v11540, 0
  %v11561 = vsel %vm3260, %v11542, 0
  %v11563 = vsel %vm3260, %v11544, 0
  %v11565 = vsel %vm3260, %v11546, 0
  %11567 = vmatprep.subr.mxu0 0.0
  %11568 = vmatpush1.msra.mxu0 %v11548
  %11569 = vmatprep.subr.mxu0 0.0
  %11570 = vmatpush1.msra.mxu0 %v11550
  %11571 = vmatprep.subr.mxu0 0.0
  %11572 = vmatpush1.msra.mxu0 %v11552
  %11573 = vmatprep.subr.mxu0 0.0
  %11574 = vmatpush1.msra.mxu0 %v11554
  %11575 = vmatprep.subr.mxu0 0.0
  %11576 = vmatpush1.msra.mxu0 0.0
  %11577 = vmatprep.subr.mxu0 0.0
  %11578 = vmatpush1.msra.mxu0 0.0
  %11579 = vmatprep.subr.mxu0 0.0
  %11580 = vmatpush1.msra.mxu0 0.0
  %11581 = vmatprep.subr.mxu0 0.0
  %11582 = vmatpush1.msra.mxu0 0.0
  %11583 = vmatprep.subr.mxu0 0.0
  %11584 = vmatpush1.msra.mxu0 0.0
  %11585 = vmatprep.subr.mxu0 0.0
  %11586 = vmatpush1.msra.mxu0 0.0
  %11587 = vmatprep.subr.mxu0 0.0
  %11588 = vmatpush1.msra.mxu0 0.0
  %11589 = vmatprep.subr.mxu0 0.0
  %11590 = vmatpush1.msra.mxu0 0.0
  %11591 = vmatprep.subr.mxu0 0.0
  %11592 = vmatpush1.msra.mxu0 0.0
  %11593 = vmatprep.subr.mxu0 0.0
  %11594 = vmatpush1.msra.mxu0 0.0
  %11595 = vmatprep.subr.mxu0 0.0
  %11596 = vmatpush1.msra.mxu0 0.0
  %11597 = vmatprep.subr.mxu0 0.0
  %11598 = vmatpush1.msra.mxu0 0.0
  %11599 = vmatprep.subr.mxu0 0.0
  %11600 = vmatpush1.msra.mxu0 0.0
  %11601 = vmatprep.subr.mxu0 0.0
  %11602 = vmatpush1.msra.mxu0 0.0
  %11603 = vmatprep.subr.mxu0 0.0
  %11604 = vmatpush1.msra.mxu0 0.0
  %11605 = vmatprep.subr.mxu0 0.0
  %11606 = vmatpush1.msra.mxu0 0.0
  %11607 = vmatprep.subr.mxu0 0.0
  %11608 = vmatpush1.msra.mxu0 0.0
  %11609 = vmatprep.subr.mxu0 0.0
  %11610 = vmatpush1.msra.mxu0 0.0
  %11611 = vmatprep.subr.mxu0 0.0
  %11612 = vmatpush1.msra.mxu0 0.0
  %11613 = vmatprep.subr.mxu0 0.0
  %11614 = vmatpush1.msra.mxu0 0.0
  %11615 = vmatprep.subr.mxu0 0.0
  %11616 = vmatpush1.msra.mxu0 0.0
  %11617 = vmatprep.subr.mxu0 0.0
  %11618 = vmatpush1.msra.mxu0 0.0
  %11619 = vmatprep.subr.mxu0 0.0
  %11620 = vmatpush1.msra.mxu0 0.0
  %11621 = vmatprep.subr.mxu0 0.0
  %11622 = vmatpush1.msra.mxu0 0.0
  %11623 = vmatprep.subr.mxu0 0.0
  %11624 = vmatpush1.msra.mxu0 0.0
  %11625 = vmatprep.subr.mxu0 0.0
  %11626 = vmatpush1.msra.mxu0 0.0
  %11627 = vmatprep.subr.mxu0 0.0
  %11628 = vmatpush1.msra.mxu0 0.0
  %11629 = vmatprep.subr.mxu0 0.0
  %11630 = vmatpush1.msra.mxu0 0.0
  %11631 = vmatprep.mubr.f32.mxu0 0.0
  %11632 = vmatmul.mubr.f32.gmra.mrb[0].mxu0 %v11559
  %v11633 = vpop.f32.mrb[0].mxu0
  %v11634 = vadd.f32 0.0, %v11633
  %v11635 = vpop.f32.mrb[0].mxu0
  %11636 = vmatprep.mubr.f32.mxu0 0.0
  %11637 = vmatmul.mubr.f32.gmra.mrb[0].mxu0 %v11561
  %v11638 = vpop.f32.mrb[0].mxu0
  %v11639 = vadd.f32 0.0, %v11638
  %v11640 = vpop.f32.mrb[0].mxu0
  %11641 = vmatprep.mubr.f32.mxu0 0.0
  %11642 = vmatmul.mubr.f32.gmra.mrb[0].mxu0 %v11563
  %v11643 = vpop.f32.mrb[0].mxu0
  %v11644 = vadd.f32 0.0, %v11643
  %v11645 = vpop.f32.mrb[0].mxu0
  %11646 = vmatprep.mubr.f32.mxu0 0.0
  %11647 = vmatmul.mubr.f32.gmra.mrb[0].mxu0 %v11565
  %v11648 = vpop.f32.mrb[0].mxu0
  %v11649 = vadd.f32 0.0, %v11648
  %v11650 = vpop.f32.mrb[0].mxu0
  %11651 = vdwg.mxu0
  %v11652 = vadd.f32 %v11535, %v11634
  %v11653 = vadd.f32 %v11536, %v11639
  %v11654 = vadd.f32 %v11537, %v11644
  %v11655 = vadd.f32 %v11538, %v11649
  %v11656 = vld [vmem:[%s6 + $0x8] sm:$0xff]
  %v11657 = vld [vmem:[%s6 + $0x20] sm:$0xff]
  %v11658 = vld [vmem:[%s6 + $0x38] sm:$0xff]
  %v11659 = vld [vmem:[%s6 + $0x50] sm:$0xff]
  %11660 = vrot.lane.b32.xlu0 %v11204, 124
  %v11661 = vpop.permute.xlu0 %11660
  %11662 = vrot.lane.b32.xlu0 %v11205, 124
  %v11663 = vpop.permute.xlu0 %11662
  %11664 = vrot.lane.b32.xlu0 %v11206, 124
  %v11665 = vpop.permute.xlu0 %11664
  %11666 = vrot.lane.b32.xlu0 %v11207, 124
  %v11667 = vpop.permute.xlu0 %11666
  %v11673 = vsel %vm3260, %v11656, 0
  %v11676 = vsel %vm3260, %v11657, 0
  %v11679 = vsel %vm3260, %v11658, 0
  %v11682 = vsel %vm3260, %v11659, 0
  %11684 = vmatprep.subr.mxu0 0.0
  %11685 = vmatpush1.msra.mxu0 %v11661
  %11686 = vmatprep.subr.mxu0 0.0
  %11687 = vmatpush1.msra.mxu0 %v11663
  %11688 = vmatprep.subr.mxu0 0.0
  %11689 = vmatpush1.msra.mxu0 %v11665
  %11690 = vmatprep.subr.mxu0 0.0
  %11691 = vmatpush1.msra.mxu0 %v11667
  %11692 = vmatprep.subr.mxu0 0.0
  %11693 = vmatpush1.msra.mxu0 0.0
  %11694 = vmatprep.subr.mxu0 0.0
  %11695 = vmatpush1.msra.mxu0 0.0
  %11696 = vmatprep.subr.mxu0 0.0
  %11697 = vmatpush1.msra.mxu0 0.0
  %11698 = vmatprep.subr.mxu0 0.0
  %11699 = vmatpush1.msra.mxu0 0.0
  %11700 = vmatprep.subr.mxu0 0.0
  %11701 = vmatpush1.msra.mxu0 0.0
  %11702 = vmatprep.subr.mxu0 0.0
  %11703 = vmatpush1.msra.mxu0 0.0
  %11704 = vmatprep.subr.mxu0 0.0
  %11705 = vmatpush1.msra.mxu0 0.0
  %11706 = vmatprep.subr.mxu0 0.0
  %11707 = vmatpush1.msra.mxu0 0.0
  %11708 = vmatprep.subr.mxu0 0.0
  %11709 = vmatpush1.msra.mxu0 0.0
  %11710 = vmatprep.subr.mxu0 0.0
  %11711 = vmatpush1.msra.mxu0 0.0
  %11712 = vmatprep.subr.mxu0 0.0
  %11713 = vmatpush1.msra.mxu0 0.0
  %11714 = vmatprep.subr.mxu0 0.0
  %11715 = vmatpush1.msra.mxu0 0.0
  %11716 = vmatprep.subr.mxu0 0.0
  %11717 = vmatpush1.msra.mxu0 0.0
  %11718 = vmatprep.subr.mxu0 0.0
  %11719 = vmatpush1.msra.mxu0 0.0
  %11720 = vmatprep.subr.mxu0 0.0
  %11721 = vmatpush1.msra.mxu0 0.0
  %11722 = vmatprep.subr.mxu0 0.0
  %11723 = vmatpush1.msra.mxu0 0.0
  %11724 = vmatprep.subr.mxu0 0.0
  %11725 = vmatpush1.msra.mxu0 0.0
  %11726 = vmatprep.subr.mxu0 0.0
  %11727 = vmatpush1.msra.mxu0 0.0
  %11728 = vmatprep.subr.mxu0 0.0
  %11729 = vmatpush1.msra.mxu0 0.0
  %11730 = vmatprep.subr.mxu0 0.0
  %11731 = vmatpush1.msra.mxu0 0.0
  %11732 = vmatprep.subr.mxu0 0.0
  %11733 = vmatpush1.msra.mxu0 0.0
  %11734 = vmatprep.subr.mxu0 0.0
  %11735 = vmatpush1.msra.mxu0 0.0
  %11736 = vmatprep.subr.mxu0 0.0
  %11737 = vmatpush1.msra.mxu0 0.0
  %11738 = vmatprep.subr.mxu0 0.0
  %11739 = vmatpush1.msra.mxu0 0.0
  %11740 = vmatprep.subr.mxu0 0.0
  %11741 = vmatpush1.msra.mxu0 0.0
  %11742 = vmatprep.subr.mxu0 0.0
  %11743 = vmatpush1.msra.mxu0 0.0
  %11744 = vmatprep.subr.mxu0 0.0
  %11745 = vmatpush1.msra.mxu0 0.0
  %11746 = vmatprep.subr.mxu0 0.0
  %11747 = vmatpush1.msra.mxu0 0.0
  %11748 = vmatprep.mubr.f32.mxu0 0.0
  %11749 = vmatmul.mubr.f32.gmra.mrb[0].mxu0 %v11673
  %v11750 = vpop.f32.mrb[0].mxu0
  %v11751 = vadd.f32 0.0, %v11750
  %v11752 = vpop.f32.mrb[0].mxu0
  %11753 = vmatprep.mubr.f32.mxu0 0.0
  %11754 = vmatmul.mubr.f32.gmra.mrb[0].mxu0 %v11676
  %v11755 = vpop.f32.mrb[0].mxu0
  %v11756 = vadd.f32 0.0, %v11755
  %v11757 = vpop.f32.mrb[0].mxu0
  %11758 = vmatprep.mubr.f32.mxu0 0.0
  %11759 = vmatmul.mubr.f32.gmra.mrb[0].mxu0 %v11679
  %v11760 = vpop.f32.mrb[0].mxu0
  %v11761 = vadd.f32 0.0, %v11760
  %v11762 = vpop.f32.mrb[0].mxu0
  %11763 = vmatprep.mubr.f32.mxu0 0.0
  %11764 = vmatmul.mubr.f32.gmra.mrb[0].mxu0 %v11682
  %v11765 = vpop.f32.mrb[0].mxu0
  %v11766 = vadd.f32 0.0, %v11765
  %v11767 = vpop.f32.mrb[0].mxu0
  %11768 = vdwg.mxu0
  %v11769 = vadd.f32 %v11652, %v11751
  %v11770 = vadd.f32 %v11653, %v11756
  %v11771 = vadd.f32 %v11654, %v11761
  %v11772 = vadd.f32 %v11655, %v11766
  %11773 = vrot.lane.b32.xlu0 %v11656, 96
  %v11774 = vpop.permute.xlu0 %11773
  %11775 = vrot.lane.b32.xlu0 %v11657, 96
  %v11776 = vpop.permute.xlu0 %11775
  %11777 = vrot.lane.b32.xlu0 %v11658, 96
  %v11778 = vpop.permute.xlu0 %11777
  %11779 = vrot.lane.b32.xlu0 %v11659, 96
  %v11780 = vpop.permute.xlu0 %11779
  %11781 = vrot.lane.b32.xlu0 %v11204, 123
  %v11782 = vpop.permute.xlu0 %11781
  %11783 = vrot.lane.b32.xlu0 %v11205, 123
  %v11784 = vpop.permute.xlu0 %11783
  %11785 = vrot.lane.b32.xlu0 %v11206, 123
  %v11786 = vpop.permute.xlu0 %11785
  %11787 = vrot.lane.b32.xlu0 %v11207, 123
  %v11788 = vpop.permute.xlu0 %11787
  %v11793 = vsel %vm3260, %v11774, 0
  %v11795 = vsel %vm3260, %v11776, 0
  %v11797 = vsel %vm3260, %v11778, 0
  %v11799 = vsel %vm3260, %v11780, 0
  %11801 = vmatprep.subr.mxu0 0.0
  %11802 = vmatpush1.msra.mxu0 %v11782
  %11803 = vmatprep.subr.mxu0 0.0
  %11804 = vmatpush1.msra.mxu0 %v11784
  %11805 = vmatprep.subr.mxu0 0.0
  %11806 = vmatpush1.msra.mxu0 %v11786
  %11807 = vmatprep.subr.mxu0 0.0
  %11808 = vmatpush1.msra.mxu0 %v11788
  %11809 = vmatprep.subr.mxu0 0.0
  %11810 = vmatpush1.msra.mxu0 0.0
  %11811 = vmatprep.subr.mxu0 0.0
  %11812 = vmatpush1.msra.mxu0 0.0
  %11813 = vmatprep.subr.mxu0 0.0
  %11814 = vmatpush1.msra.mxu0 0.0
  %11815 = vmatprep.subr.mxu0 0.0
  %11816 = vmatpush1.msra.mxu0 0.0
  %11817 = vmatprep.subr.mxu0 0.0
  %11818 = vmatpush1.msra.mxu0 0.0
  %11819 = vmatprep.subr.mxu0 0.0
  %11820 = vmatpush1.msra.mxu0 0.0
  %11821 = vmatprep.subr.mxu0 0.0
  %11822 = vmatpush1.msra.mxu0 0.0
  %11823 = vmatprep.subr.mxu0 0.0
  %11824 = vmatpush1.msra.mxu0 0.0
  %11825 = vmatprep.subr.mxu0 0.0
  %11826 = vmatpush1.msra.mxu0 0.0
  %11827 = vmatprep.subr.mxu0 0.0
  %11828 = vmatpush1.msra.mxu0 0.0
  %11829 = vmatprep.subr.mxu0 0.0
  %11830 = vmatpush1.msra.mxu0 0.0
  %11831 = vmatprep.subr.mxu0 0.0
  %11832 = vmatpush1.msra.mxu0 0.0
  %11833 = vmatprep.subr.mxu0 0.0
  %11834 = vmatpush1.msra.mxu0 0.0
  %11835 = vmatprep.subr.mxu0 0.0
  %11836 = vmatpush1.msra.mxu0 0.0
  %11837 = vmatprep.subr.mxu0 0.0
  %11838 = vmatpush1.msra.mxu0 0.0
  %11839 = vmatprep.subr.mxu0 0.0
  %11840 = vmatpush1.msra.mxu0 0.0
  %11841 = vmatprep.subr.mxu0 0.0
  %11842 = vmatpush1.msra.mxu0 0.0
  %11843 = vmatprep.subr.mxu0 0.0
  %11844 = vmatpush1.msra.mxu0 0.0
  %11845 = vmatprep.subr.mxu0 0.0
  %11846 = vmatpush1.msra.mxu0 0.0
  %11847 = vmatprep.subr.mxu0 0.0
  %11848 = vmatpush1.msra.mxu0 0.0
  %11849 = vmatprep.subr.mxu0 0.0
  %11850 = vmatpush1.msra.mxu0 0.0
  %11851 = vmatprep.subr.mxu0 0.0
  %11852 = vmatpush1.msra.mxu0 0.0
  %11853 = vmatprep.subr.mxu0 0.0
  %11854 = vmatpush1.msra.mxu0 0.0
  %11855 = vmatprep.subr.mxu0 0.0
  %11856 = vmatpush1.msra.mxu0 0.0
  %11857 = vmatprep.subr.mxu0 0.0
  %11858 = vmatpush1.msra.mxu0 0.0
  %11859 = vmatprep.subr.mxu0 0.0
  %11860 = vmatpush1.msra.mxu0 0.0
  %11861 = vmatprep.subr.mxu0 0.0
  %11862 = vmatpush1.msra.mxu0 0.0
  %11863 = vmatprep.subr.mxu0 0.0
  %11864 = vmatpush1.msra.mxu0 0.0
  %11865 = vmatprep.mubr.f32.mxu0 0.0
  %11866 = vmatmul.mubr.f32.gmra.mrb[0].mxu0 %v11793
  %v11867 = vpop.f32.mrb[0].mxu0
  %v11868 = vadd.f32 0.0, %v11867
  %v11869 = vpop.f32.mrb[0].mxu0
  %11870 = vmatprep.mubr.f32.mxu0 0.0
  %11871 = vmatmul.mubr.f32.gmra.mrb[0].mxu0 %v11795
  %v11872 = vpop.f32.mrb[0].mxu0
  %v11873 = vadd.f32 0.0, %v11872
  %v11874 = vpop.f32.mrb[0].mxu0
  %11875 = vmatprep.mubr.f32.mxu0 0.0
  %11876 = vmatmul.mubr.f32.gmra.mrb[0].mxu0 %v11797
  %v11877 = vpop.f32.mrb[0].mxu0
  %v11878 = vadd.f32 0.0, %v11877
  %v11879 = vpop.f32.mrb[0].mxu0
  %11880 = vmatprep.mubr.f32.mxu0 0.0
  %11881 = vmatmul.mubr.f32.gmra.mrb[0].mxu0 %v11799
  %v11882 = vpop.f32.mrb[0].mxu0
  %v11883 = vadd.f32 0.0, %v11882
  %v11884 = vpop.f32.mrb[0].mxu0
  %11885 = vdwg.mxu0
  %v11886 = vadd.f32 %v11769, %v11868
  %v11887 = vadd.f32 %v11770, %v11873
  %v11888 = vadd.f32 %v11771, %v11878
  %v11889 = vadd.f32 %v11772, %v11883
  %11890 = vrot.lane.b32.xlu0 %v11656, 64
  %v11891 = vpop.permute.xlu0 %11890
  %11892 = vrot.lane.b32.xlu0 %v11657, 64
  %v11893 = vpop.permute.xlu0 %11892
  %11894 = vrot.lane.b32.xlu0 %v11658, 64
  %v11895 = vpop.permute.xlu0 %11894
  %11896 = vrot.lane.b32.xlu0 %v11659, 64
  %v11897 = vpop.permute.xlu0 %11896
  %11898 = vrot.lane.b32.xlu0 %v11204, 122
  %v11899 = vpop.permute.xlu0 %11898
  %11900 = vrot.lane.b32.xlu0 %v11205, 122
  %v11901 = vpop.permute.xlu0 %11900
  %11902 = vrot.lane.b32.xlu0 %v11206, 122
  %v11903 = vpop.permute.xlu0 %11902
  %11904 = vrot.lane.b32.xlu0 %v11207, 122
  %v11905 = vpop.permute.xlu0 %11904
  %v11910 = vsel %vm3260, %v11891, 0
  %v11912 = vsel %vm3260, %v11893, 0
  %v11914 = vsel %vm3260, %v11895, 0
  %v11916 = vsel %vm3260, %v11897, 0
  %11918 = vmatprep.subr.mxu0 0.0
  %11919 = vmatpush1.msra.mxu0 %v11899
  %11920 = vmatprep.subr.mxu0 0.0
  %11921 = vmatpush1.msra.mxu0 %v11901
  %11922 = vmatprep.subr.mxu0 0.0
  %11923 = vmatpush1.msra.mxu0 %v11903
  %11924 = vmatprep.subr.mxu0 0.0
  %11925 = vmatpush1.msra.mxu0 %v11905
  %11926 = vmatprep.subr.mxu0 0.0
  %11927 = vmatpush1.msra.mxu0 0.0
  %11928 = vmatprep.subr.mxu0 0.0
  %11929 = vmatpush1.msra.mxu0 0.0
  %11930 = vmatprep.subr.mxu0 0.0
  %11931 = vmatpush1.msra.mxu0 0.0
  %11932 = vmatprep.subr.mxu0 0.0
  %11933 = vmatpush1.msra.mxu0 0.0
  %11934 = vmatprep.subr.mxu0 0.0
  %11935 = vmatpush1.msra.mxu0 0.0
  %11936 = vmatprep.subr.mxu0 0.0
  %11937 = vmatpush1.msra.mxu0 0.0
  %11938 = vmatprep.subr.mxu0 0.0
  %11939 = vmatpush1.msra.mxu0 0.0
  %11940 = vmatprep.subr.mxu0 0.0
  %11941 = vmatpush1.msra.mxu0 0.0
  %11942 = vmatprep.subr.mxu0 0.0
  %11943 = vmatpush1.msra.mxu0 0.0
  %11944 = vmatprep.subr.mxu0 0.0
  %11945 = vmatpush1.msra.mxu0 0.0
  %11946 = vmatprep.subr.mxu0 0.0
  %11947 = vmatpush1.msra.mxu0 0.0
  %11948 = vmatprep.subr.mxu0 0.0
  %11949 = vmatpush1.msra.mxu0 0.0
  %11950 = vmatprep.subr.mxu0 0.0
  %11951 = vmatpush1.msra.mxu0 0.0
  %11952 = vmatprep.subr.mxu0 0.0
  %11953 = vmatpush1.msra.mxu0 0.0
  %11954 = vmatprep.subr.mxu0 0.0
  %11955 = vmatpush1.msra.mxu0 0.0
  %11956 = vmatprep.subr.mxu0 0.0
  %11957 = vmatpush1.msra.mxu0 0.0
  %11958 = vmatprep.subr.mxu0 0.0
  %11959 = vmatpush1.msra.mxu0 0.0
  %11960 = vmatprep.subr.mxu0 0.0
  %11961 = vmatpush1.msra.mxu0 0.0
  %11962 = vmatprep.subr.mxu0 0.0
  %11963 = vmatpush1.msra.mxu0 0.0
  %11964 = vmatprep.subr.mxu0 0.0
  %11965 = vmatpush1.msra.mxu0 0.0
  %11966 = vmatprep.subr.mxu0 0.0
  %11967 = vmatpush1.msra.mxu0 0.0
  %11968 = vmatprep.subr.mxu0 0.0
  %11969 = vmatpush1.msra.mxu0 0.0
  %11970 = vmatprep.subr.mxu0 0.0
  %11971 = vmatpush1.msra.mxu0 0.0
  %11972 = vmatprep.subr.mxu0 0.0
  %11973 = vmatpush1.msra.mxu0 0.0
  %11974 = vmatprep.subr.mxu0 0.0
  %11975 = vmatpush1.msra.mxu0 0.0
  %11976 = vmatprep.subr.mxu0 0.0
  %11977 = vmatpush1.msra.mxu0 0.0
  %11978 = vmatprep.subr.mxu0 0.0
  %11979 = vmatpush1.msra.mxu0 0.0
  %11980 = vmatprep.subr.mxu0 0.0
  %11981 = vmatpush1.msra.mxu0 0.0
  %11982 = vmatprep.mubr.f32.mxu0 0.0
  %11983 = vmatmul.mubr.f32.gmra.mrb[0].mxu0 %v11910
  %v11984 = vpop.f32.mrb[0].mxu0
  %v11985 = vadd.f32 0.0, %v11984
  %v11986 = vpop.f32.mrb[0].mxu0
  %11987 = vmatprep.mubr.f32.mxu0 0.0
  %11988 = vmatmul.mubr.f32.gmra.mrb[0].mxu0 %v11912
  %v11989 = vpop.f32.mrb[0].mxu0
  %v11990 = vadd.f32 0.0, %v11989
  %v11991 = vpop.f32.mrb[0].mxu0
  %11992 = vmatprep.mubr.f32.mxu0 0.0
  %11993 = vmatmul.mubr.f32.gmra.mrb[0].mxu0 %v11914
  %v11994 = vpop.f32.mrb[0].mxu0
  %v11995 = vadd.f32 0.0, %v11994
  %v11996 = vpop.f32.mrb[0].mxu0
  %11997 = vmatprep.mubr.f32.mxu0 0.0
  %11998 = vmatmul.mubr.f32.gmra.mrb[0].mxu0 %v11916
  %v11999 = vpop.f32.mrb[0].mxu0
  %v12000 = vadd.f32 0.0, %v11999
  %v12001 = vpop.f32.mrb[0].mxu0
  %12002 = vdwg.mxu0
  %v12003 = vadd.f32 %v11886, %v11985
  %v12004 = vadd.f32 %v11887, %v11990
  %v12005 = vadd.f32 %v11888, %v11995
  %v12006 = vadd.f32 %v11889, %v12000
  %12007 = vrot.lane.b32.xlu0 %v11656, 32
  %v12008 = vpop.permute.xlu0 %12007
  %12009 = vrot.lane.b32.xlu0 %v11657, 32
  %v12010 = vpop.permute.xlu0 %12009
  %12011 = vrot.lane.b32.xlu0 %v11658, 32
  %v12012 = vpop.permute.xlu0 %12011
  %12013 = vrot.lane.b32.xlu0 %v11659, 32
  %v12014 = vpop.permute.xlu0 %12013
  %12015 = vrot.lane.b32.xlu0 %v11204, 121
  %v12016 = vpop.permute.xlu0 %12015
  %12017 = vrot.lane.b32.xlu0 %v11205, 121
  %v12018 = vpop.permute.xlu0 %12017
  %12019 = vrot.lane.b32.xlu0 %v11206, 121
  %v12020 = vpop.permute.xlu0 %12019
  %12021 = vrot.lane.b32.xlu0 %v11207, 121
  %v12022 = vpop.permute.xlu0 %12021
  %v12027 = vsel %vm3260, %v12008, 0
  %v12029 = vsel %vm3260, %v12010, 0
  %v12031 = vsel %vm3260, %v12012, 0
  %v12033 = vsel %vm3260, %v12014, 0
  %12035 = vmatprep.subr.mxu0 0.0
  %12036 = vmatpush1.msra.mxu0 %v12016
  %12037 = vmatprep.subr.mxu0 0.0
  %12038 = vmatpush1.msra.mxu0 %v12018
  %12039 = vmatprep.subr.mxu0 0.0
  %12040 = vmatpush1.msra.mxu0 %v12020
  %12041 = vmatprep.subr.mxu0 0.0
  %12042 = vmatpush1.msra.mxu0 %v12022
  %12043 = vmatprep.subr.mxu0 0.0
  %12044 = vmatpush1.msra.mxu0 0.0
  %12045 = vmatprep.subr.mxu0 0.0
  %12046 = vmatpush1.msra.mxu0 0.0
  %12047 = vmatprep.subr.mxu0 0.0
  %12048 = vmatpush1.msra.mxu0 0.0
  %12049 = vmatprep.subr.mxu0 0.0
  %12050 = vmatpush1.msra.mxu0 0.0
  %12051 = vmatprep.subr.mxu0 0.0
  %12052 = vmatpush1.msra.mxu0 0.0
  %12053 = vmatprep.subr.mxu0 0.0
  %12054 = vmatpush1.msra.mxu0 0.0
  %12055 = vmatprep.subr.mxu0 0.0
  %12056 = vmatpush1.msra.mxu0 0.0
  %12057 = vmatprep.subr.mxu0 0.0
  %12058 = vmatpush1.msra.mxu0 0.0
  %12059 = vmatprep.subr.mxu0 0.0
  %12060 = vmatpush1.msra.mxu0 0.0
  %12061 = vmatprep.subr.mxu0 0.0
  %12062 = vmatpush1.msra.mxu0 0.0
  %12063 = vmatprep.subr.mxu0 0.0
  %12064 = vmatpush1.msra.mxu0 0.0
  %12065 = vmatprep.subr.mxu0 0.0
  %12066 = vmatpush1.msra.mxu0 0.0
  %12067 = vmatprep.subr.mxu0 0.0
  %12068 = vmatpush1.msra.mxu0 0.0
  %12069 = vmatprep.subr.mxu0 0.0
  %12070 = vmatpush1.msra.mxu0 0.0
  %12071 = vmatprep.subr.mxu0 0.0
  %12072 = vmatpush1.msra.mxu0 0.0
  %12073 = vmatprep.subr.mxu0 0.0
  %12074 = vmatpush1.msra.mxu0 0.0
  %12075 = vmatprep.subr.mxu0 0.0
  %12076 = vmatpush1.msra.mxu0 0.0
  %12077 = vmatprep.subr.mxu0 0.0
  %12078 = vmatpush1.msra.mxu0 0.0
  %12079 = vmatprep.subr.mxu0 0.0
  %12080 = vmatpush1.msra.mxu0 0.0
  %12081 = vmatprep.subr.mxu0 0.0
  %12082 = vmatpush1.msra.mxu0 0.0
  %12083 = vmatprep.subr.mxu0 0.0
  %12084 = vmatpush1.msra.mxu0 0.0
  %12085 = vmatprep.subr.mxu0 0.0
  %12086 = vmatpush1.msra.mxu0 0.0
  %12087 = vmatprep.subr.mxu0 0.0
  %12088 = vmatpush1.msra.mxu0 0.0
  %12089 = vmatprep.subr.mxu0 0.0
  %12090 = vmatpush1.msra.mxu0 0.0
  %12091 = vmatprep.subr.mxu0 0.0
  %12092 = vmatpush1.msra.mxu0 0.0
  %12093 = vmatprep.subr.mxu0 0.0
  %12094 = vmatpush1.msra.mxu0 0.0
  %12095 = vmatprep.subr.mxu0 0.0
  %12096 = vmatpush1.msra.mxu0 0.0
  %12097 = vmatprep.subr.mxu0 0.0
  %12098 = vmatpush1.msra.mxu0 0.0
  %12099 = vmatprep.mubr.f32.mxu0 0.0
  %12100 = vmatmul.mubr.f32.gmra.mrb[0].mxu0 %v12027
  %v12101 = vpop.f32.mrb[0].mxu0
  %v12102 = vadd.f32 0.0, %v12101
  %v12103 = vpop.f32.mrb[0].mxu0
  %12104 = vmatprep.mubr.f32.mxu0 0.0
  %12105 = vmatmul.mubr.f32.gmra.mrb[0].mxu0 %v12029
  %v12106 = vpop.f32.mrb[0].mxu0
  %v12107 = vadd.f32 0.0, %v12106
  %v12108 = vpop.f32.mrb[0].mxu0
  %12109 = vmatprep.mubr.f32.mxu0 0.0
  %12110 = vmatmul.mubr.f32.gmra.mrb[0].mxu0 %v12031
  %v12111 = vpop.f32.mrb[0].mxu0
  %v12112 = vadd.f32 0.0, %v12111
  %v12113 = vpop.f32.mrb[0].mxu0
  %12114 = vmatprep.mubr.f32.mxu0 0.0
  %12115 = vmatmul.mubr.f32.gmra.mrb[0].mxu0 %v12033
  %v12116 = vpop.f32.mrb[0].mxu0
  %v12117 = vadd.f32 0.0, %v12116
  %v12118 = vpop.f32.mrb[0].mxu0
  %12119 = vdwg.mxu0
  %v12120 = vadd.f32 %v12003, %v12102
  %v12121 = vadd.f32 %v12004, %v12107
  %v12122 = vadd.f32 %v12005, %v12112
  %v12123 = vadd.f32 %v12006, %v12117
  %v12124 = vld [vmem:[%s6 + $0x10] sm:$0xff]
  %v12125 = vld [vmem:[%s6 + $0x28] sm:$0xff]
  %v12126 = vld [vmem:[%s6 + $0x40] sm:$0xff]
  %v12127 = vld [vmem:[%s6 + $0x58] sm:$0xff]
  %12128 = vrot.lane.b32.xlu0 %v11204, 120
  %v12129 = vpop.permute.xlu0 %12128
  %12130 = vrot.lane.b32.xlu0 %v11205, 120
  %v12131 = vpop.permute.xlu0 %12130
  %12132 = vrot.lane.b32.xlu0 %v11206, 120
  %v12133 = vpop.permute.xlu0 %12132
  %12134 = vrot.lane.b32.xlu0 %v11207, 120
  %v12135 = vpop.permute.xlu0 %12134
  %v12141 = vsel %vm3260, %v12124, 0
  %v12144 = vsel %vm3260, %v12125, 0
  %v12147 = vsel %vm3260, %v12126, 0
  %v12150 = vsel %vm3260, %v12127, 0
  %12152 = vmatprep.subr.mxu0 0.0
  %12153 = vmatpush1.msra.mxu0 %v12129
  %12154 = vmatprep.subr.mxu0 0.0
  %12155 = vmatpush1.msra.mxu0 %v12131
  %12156 = vmatprep.subr.mxu0 0.0
  %12157 = vmatpush1.msra.mxu0 %v12133
  %12158 = vmatprep.subr.mxu0 0.0
  %12159 = vmatpush1.msra.mxu0 %v12135
  %12160 = vmatprep.subr.mxu0 0.0
  %12161 = vmatpush1.msra.mxu0 0.0
  %12162 = vmatprep.subr.mxu0 0.0
  %12163 = vmatpush1.msra.mxu0 0.0
  %12164 = vmatprep.subr.mxu0 0.0
  %12165 = vmatpush1.msra.mxu0 0.0
  %12166 = vmatprep.subr.mxu0 0.0
  %12167 = vmatpush1.msra.mxu0 0.0
  %12168 = vmatprep.subr.mxu0 0.0
  %12169 = vmatpush1.msra.mxu0 0.0
  %12170 = vmatprep.subr.mxu0 0.0
  %12171 = vmatpush1.msra.mxu0 0.0
  %12172 = vmatprep.subr.mxu0 0.0
  %12173 = vmatpush1.msra.mxu0 0.0
  %12174 = vmatprep.subr.mxu0 0.0
  %12175 = vmatpush1.msra.mxu0 0.0
  %12176 = vmatprep.subr.mxu0 0.0
  %12177 = vmatpush1.msra.mxu0 0.0
  %12178 = vmatprep.subr.mxu0 0.0
  %12179 = vmatpush1.msra.mxu0 0.0
  %12180 = vmatprep.subr.mxu0 0.0
  %12181 = vmatpush1.msra.mxu0 0.0
  %12182 = vmatprep.subr.mxu0 0.0
  %12183 = vmatpush1.msra.mxu0 0.0
  %12184 = vmatprep.subr.mxu0 0.0
  %12185 = vmatpush1.msra.mxu0 0.0
  %12186 = vmatprep.subr.mxu0 0.0
  %12187 = vmatpush1.msra.mxu0 0.0
  %12188 = vmatprep.subr.mxu0 0.0
  %12189 = vmatpush1.msra.mxu0 0.0
  %12190 = vmatprep.subr.mxu0 0.0
  %12191 = vmatpush1.msra.mxu0 0.0
  %12192 = vmatprep.subr.mxu0 0.0
  %12193 = vmatpush1.msra.mxu0 0.0
  %12194 = vmatprep.subr.mxu0 0.0
  %12195 = vmatpush1.msra.mxu0 0.0
  %12196 = vmatprep.subr.mxu0 0.0
  %12197 = vmatpush1.msra.mxu0 0.0
  %12198 = vmatprep.subr.mxu0 0.0
  %12199 = vmatpush1.msra.mxu0 0.0
  %12200 = vmatprep.subr.mxu0 0.0
  %12201 = vmatpush1.msra.mxu0 0.0
  %12202 = vmatprep.subr.mxu0 0.0
  %12203 = vmatpush1.msra.mxu0 0.0
  %12204 = vmatprep.subr.mxu0 0.0
  %12205 = vmatpush1.msra.mxu0 0.0
  %12206 = vmatprep.subr.mxu0 0.0
  %12207 = vmatpush1.msra.mxu0 0.0
  %12208 = vmatprep.subr.mxu0 0.0
  %12209 = vmatpush1.msra.mxu0 0.0
  %12210 = vmatprep.subr.mxu0 0.0
  %12211 = vmatpush1.msra.mxu0 0.0
  %12212 = vmatprep.subr.mxu0 0.0
  %12213 = vmatpush1.msra.mxu0 0.0
  %12214 = vmatprep.subr.mxu0 0.0
  %12215 = vmatpush1.msra.mxu0 0.0
  %12216 = vmatprep.mubr.f32.mxu0 0.0
  %12217 = vmatmul.mubr.f32.gmra.mrb[0].mxu0 %v12141
  %v12218 = vpop.f32.mrb[0].mxu0
  %v12219 = vadd.f32 0.0, %v12218
  %v12220 = vpop.f32.mrb[0].mxu0
  %12221 = vmatprep.mubr.f32.mxu0 0.0
  %12222 = vmatmul.mubr.f32.gmra.mrb[0].mxu0 %v12144
  %v12223 = vpop.f32.mrb[0].mxu0
  %v12224 = vadd.f32 0.0, %v12223
  %v12225 = vpop.f32.mrb[0].mxu0
  %12226 = vmatprep.mubr.f32.mxu0 0.0
  %12227 = vmatmul.mubr.f32.gmra.mrb[0].mxu0 %v12147
  %v12228 = vpop.f32.mrb[0].mxu0
  %v12229 = vadd.f32 0.0, %v12228
  %v12230 = vpop.f32.mrb[0].mxu0
  %12231 = vmatprep.mubr.f32.mxu0 0.0
  %12232 = vmatmul.mubr.f32.gmra.mrb[0].mxu0 %v12150
  %v12233 = vpop.f32.mrb[0].mxu0
  %v12234 = vadd.f32 0.0, %v12233
  %v12235 = vpop.f32.mrb[0].mxu0
  %12236 = vdwg.mxu0
  %v12237 = vadd.f32 %v12120, %v12219
  %v12238 = vadd.f32 %v12121, %v12224
  %v12239 = vadd.f32 %v12122, %v12229
  %v12240 = vadd.f32 %v12123, %v12234
  %v12241 = vld [vmem:[%s12] sm:$0xff]
  %v12242 = vld [vmem:[%s12 + $0x8] sm:$0xff]
  %v12243 = vld [vmem:[%s12 + $0x10] sm:$0xff]
  %v12244 = vld [vmem:[%s12 + $0x18] sm:$0xff]
  %12246 = vset.pattern.permute.xlu0 0
  %12247 = vperm.xlu0 %12246, %v12241
  %v12248 = vpop.permute.xlu0 %12247
  %12251 = vset.pattern.permute.xlu0 0
  %12252 = vperm.xlu0 %12251, %v12242
  %v12253 = vpop.permute.xlu0 %12252
  %12256 = vset.pattern.permute.xlu0 0
  %12257 = vperm.xlu0 %12256, %v12243
  %v12258 = vpop.permute.xlu0 %12257
  %12261 = vset.pattern.permute.xlu0 0
  %12262 = vperm.xlu0 %12261, %v12244
  %v12263 = vpop.permute.xlu0 %12262
  %v12265 = vadd.f32 %v12237, %v12248
  %v12266 = vadd.f32 %v12238, %v12253
  %v12267 = vadd.f32 %v12239, %v12258
  %v12268 = vadd.f32 %v12240, %v12263
  %v12269 = vld [vmem:[%s18] sm:$0xff]
  %v12270 = vld [vmem:[%s18 + $0x8] sm:$0x3]
  %vm12271 = vcmask 80896
  %v12273 = vsel %vm12271, %v12265, 0
  %v12276 = vsel %vm12271, %v12266, 0
  %v12279 = vsel %vm12271, %v12267, 0
  %v12282 = vsel %vm12271, %v12268, 0
  %vm12284 = vcmask 1041408
  %v12286 = vsel %vm12284, %v12270, 0
  %12288 = vmatprep.subr.mxu0 0.0
  %12289 = vmatpush1.msra.mxu0 %v12269
  %12290 = vmatprep.subr.mxu0 0.0
  %12291 = vmatpush1.msra.mxu0 %v12286
  %12292 = vmatprep.subr.mxu0 0.0
  %12293 = vmatpush1.msra.mxu0 0.0
  %12294 = vmatprep.subr.mxu0 0.0
  %12295 = vmatpush1.msra.mxu0 0.0
  %12296 = vmatprep.subr.mxu0 0.0
  %12297 = vmatpush1.msra.mxu0 0.0
  %12298 = vmatprep.subr.mxu0 0.0
  %12299 = vmatpush1.msra.mxu0 0.0
  %12300 = vmatprep.subr.mxu0 0.0
  %12301 = vmatpush1.msra.mxu0 0.0
  %12302 = vmatprep.subr.mxu0 0.0
  %12303 = vmatpush1.msra.mxu0 0.0
  %12304 = vmatprep.subr.mxu0 0.0
  %12305 = vmatpush1.msra.mxu0 0.0
  %12306 = vmatprep.subr.mxu0 0.0
  %12307 = vmatpush1.msra.mxu0 0.0
  %12308 = vmatprep.subr.mxu0 0.0
  %12309 = vmatpush1.msra.mxu0 0.0
  %12310 = vmatprep.subr.mxu0 0.0
  %12311 = vmatpush1.msra.mxu0 0.0
  %12312 = vmatprep.subr.mxu0 0.0
  %12313 = vmatpush1.msra.mxu0 0.0
  %12314 = vmatprep.subr.mxu0 0.0
  %12315 = vmatpush1.msra.mxu0 0.0
  %12316 = vmatprep.subr.mxu0 0.0
  %12317 = vmatpush1.msra.mxu0 0.0
  %12318 = vmatprep.subr.mxu0 0.0
  %12319 = vmatpush1.msra.mxu0 0.0
  %12320 = vmatprep.subr.mxu0 0.0
  %12321 = vmatpush1.msra.mxu0 0.0
  %12322 = vmatprep.subr.mxu0 0.0
  %12323 = vmatpush1.msra.mxu0 0.0
  %12324 = vmatprep.subr.mxu0 0.0
  %12325 = vmatpush1.msra.mxu0 0.0
  %12326 = vmatprep.subr.mxu0 0.0
  %12327 = vmatpush1.msra.mxu0 0.0
  %12328 = vmatprep.subr.mxu0 0.0
  %12329 = vmatpush1.msra.mxu0 0.0
  %12330 = vmatprep.subr.mxu0 0.0
  %12331 = vmatpush1.msra.mxu0 0.0
  %12332 = vmatprep.subr.mxu0 0.0
  %12333 = vmatpush1.msra.mxu0 0.0
  %12334 = vmatprep.subr.mxu0 0.0
  %12335 = vmatpush1.msra.mxu0 0.0
  %12336 = vmatprep.subr.mxu0 0.0
  %12337 = vmatpush1.msra.mxu0 0.0
  %12338 = vmatprep.subr.mxu0 0.0
  %12339 = vmatpush1.msra.mxu0 0.0
  %12340 = vmatprep.subr.mxu0 0.0
  %12341 = vmatpush1.msra.mxu0 0.0
  %12342 = vmatprep.subr.mxu0 0.0
  %12343 = vmatpush1.msra.mxu0 0.0
  %12344 = vmatprep.subr.mxu0 0.0
  %12345 = vmatpush1.msra.mxu0 0.0
  %12346 = vmatprep.subr.mxu0 0.0
  %12347 = vmatpush1.msra.mxu0 0.0
  %12348 = vmatprep.subr.mxu0 0.0
  %12349 = vmatpush1.msra.mxu0 0.0
  %12350 = vmatprep.subr.mxu0 0.0
  %12351 = vmatpush1.msra.mxu0 0.0
  %12352 = vmatprep.mubr.f32.mxu0 0.0
  %12353 = vmatmul.mubr.f32.gmra.mrb[0].mxu0 %v12273
  %v12354 = vpop.f32.mrb[0].mxu0
  %v12355 = vadd.f32 0.0, %v12354
  %v12356 = vpop.f32.mrb[0].mxu0
  %12357 = vmatprep.mubr.f32.mxu0 0.0
  %12358 = vmatmul.mubr.f32.gmra.mrb[0].mxu0 %v12276
  %v12359 = vpop.f32.mrb[0].mxu0
  %v12360 = vadd.f32 0.0, %v12359
  %v12361 = vpop.f32.mrb[0].mxu0
  %12362 = vmatprep.mubr.f32.mxu0 0.0
  %12363 = vmatmul.mubr.f32.gmra.mrb[0].mxu0 %v12279
  %v12364 = vpop.f32.mrb[0].mxu0
  %v12365 = vadd.f32 0.0, %v12364
  %v12366 = vpop.f32.mrb[0].mxu0
  %12367 = vmatprep.mubr.f32.mxu0 0.0
  %12368 = vmatmul.mubr.f32.gmra.mrb[0].mxu0 %v12282
  %v12369 = vpop.f32.mrb[0].mxu0
  %v12370 = vadd.f32 0.0, %v12369
  %v12371 = vpop.f32.mrb[0].mxu0
  %12372 = vdwg.mxu0
  %vm12373 = vcmask 15360
  %12374 = vst.msk [vmem:[%s19] sm:$0xff] %vm12373, %v12355
  %12375 = vst.msk [vmem:[%s19 + $0x8] sm:$0xff] %vm12373, %v12360
  %12376 = vst.msk [vmem:[%s19 + $0x10] sm:$0xff] %vm12373, %v12365
  %12377 = vst.msk [vmem:[%s19 + $0x18] sm:$0xff] %vm12373, %v12370
  // Predicated region
  $region78: #{cnn_branch_forward.1} parent=0 // pred_check
    _
  $region79: #{cnn_branch_forward.1} parent=0 // pred_check_branch
    %12379 = sbr.rel (0) target = $region81
  $region80: #{cnn_branch_forward.1} parent=0 // pred_region
    _
  $region81: #{cnn_branch_forward.1} parent=0 // pred_fallthru
    _
  // Predicated region
  $region82: #{cnn_branch_forward.1} parent=0 // pred_check
    _
  $region83: #{cnn_branch_forward.1} parent=0 // pred_check_branch
    %12381 = sbr.rel (0) target = $region85
  $region84: #{cnn_branch_forward.1} parent=0 // pred_region
    _
  $region85: #{cnn_branch_forward.1} parent=0 // pred_fallthru
    _

</llo_original>
